<compile_context>
chip_gen: v6e
topology: v6e:2x2x1
jax: 0.10.0
libtpu: 0.0.40
codegen_flags: <defaults>
</compile_context>

<pallas_src>
import functools

import numpy as np
import jax
import jax.numpy as jnp
from jax.experimental import pallas as pl
from jax.experimental.pallas import tpu as pltpu

BN_EPS = 1e-5
_VMEM_LIMIT = 32 * 1024 * 1024


def _pick_tile(total, cap):
    """Largest power-of-two row tile <= cap dividing `total` that leaves at
    least two grid steps (keeps a sizeable 'parallel' axis for dual-TC v7x);
    falls back to the full extent."""
    t = cap
    while t >= 16:
        if total % t == 0 and total // t >= 2:
            return t
        t //= 2
    return total


def _pick_chunk(tile, pref):
    """Largest power-of-two in-kernel row chunk <= pref dividing `tile`."""
    c = pref
    while c > 1:
        if tile % c == 0:
            return c
        c //= 2
    return 1


# ----------------------------------------------------------------------------
# Kernels
# ----------------------------------------------------------------------------
def _conv3x3_kernel(x_ref, sc_ref, sh_ref, w_ref, o_ref, st_ref, xp_ref, acc_ref,
                    *, h, w, cin, tco, in_slope, th):
    """Fused (input BN-affine + LeakyReLU) -> zero-pad -> 3x3 conv, stride 1.

    grid = (Cout_tiles, N); one whole image per step, tap matmuls use
    M = th*w (>= 128) rows.

    x_ref  : (1, h, w, cin)   bf16  previous layer's pre-BN conv output
    sc/sh  : (1, cin)         f32   folded BN scale/shift of the previous layer
    w_ref  : (9, cin, tco)    bf16  taps, ky-major / kx-minor
    o_ref  : (1, h, w, tco)   bf16  this layer's pre-BN conv output
    st_ref : (1, 8, tco)      f32   packed stats: row0 = sum, row1 = sum(x^2)
    xp_ref : (h+2, w+2, cin)  bf16  scratch: zero-padded transformed input
    acc_ref: (th*w, tco)      f32   scratch accumulator
    """
    k = 3
    hp, wp = h + 2, w + 2
    nlc = cin // 128                     # lane chunks for the input transform

    # ---- build the zero-padded, transformed input in VMEM ------------------
    zrow = jnp.zeros((1, wp, cin), xp_ref.dtype)
    xp_ref[0:1, :, :] = zrow
    xp_ref[hp - 1:hp, :, :] = zrow
    for yb in range(h // th):
        r0 = yb * th
        for lc in range(nlc):
            c0 = lc * 128
            xc = x_ref[0, r0:r0 + th, :, c0:c0 + 128].astype(jnp.float32)
            a = xc * sc_ref[0:1, c0:c0 + 128] + sh_ref[0:1, c0:c0 + 128]
            a = jnp.where(a >= 0.0, a, in_slope * a).astype(xp_ref.dtype)
            zc = jnp.zeros((th, 1, 128), xp_ref.dtype)
            xp_ref[1 + r0:1 + r0 + th, :, c0:c0 + 128] = (
                jnp.concatenate([zc, a, zc], axis=1))          # (th, wp, 128)

    # ---- 3x3 conv: tap matmuls with M = th*w rows ---------------------------
    s_acc = jnp.zeros((1, tco), jnp.float32)
    q_acc = jnp.zeros((1, tco), jnp.float32)
    for yb in range(h // th):
        r0 = yb * th
        acc_ref[...] = jnp.zeros_like(acc_ref)
        for ky in range(k):
            xb = xp_ref[r0 + ky:r0 + ky + th, :, :]            # (th, wp, cin)
            for kx in range(k):
                xs = xb[:, kx:kx + w, :].reshape(th * w, cin)  # (th*w, cin)
                acc_ref[...] += jnp.dot(xs, w_ref[ky * k + kx],
                                        preferred_element_type=jnp.float32)
        # chunked bf16 writeback + packed channel stats (small live values)
        for rr in range(th):
            a = acc_ref[rr * w:(rr + 1) * w, :]                # (w, tco) f32
            o_ref[0, r0 + rr, :, :] = a.astype(o_ref.dtype)
            s_acc = s_acc + jnp.sum(a, axis=0, keepdims=True)
            q_acc = q_acc + jnp.sum(a * a, axis=0, keepdims=True)

    st_ref[0] = jnp.concatenate(
        [s_acc, q_acc, jnp.zeros((6, tco), jnp.float32)], axis=0)


def _conv1x1_kernel(x_ref, sc_ref, sh_ref, w_ref, o_ref, st_ref,
                    *, cin, tco, in_slope, rs):
    """Fused (input BN-affine + LeakyReLU) -> 1x1 conv (row-tiled matmul).

    x_ref  : (tr, cin)    bf16  previous layer's pre-BN conv output (flattened)
    sc/sh  : (1, cin)     f32
    w_ref  : (cin, tco)   bf16
    o_ref  : (tr, tco)    bf16  this layer's pre-BN conv output
    st_ref : (1, 8, tco)  f32   packed stats: row0 = sum, row1 = sum(x^2)
    """
    tr = o_ref.shape[0]
    nlc = cin // 128
    s_acc = jnp.zeros((1, tco), jnp.float32)
    q_acc = jnp.zeros((1, tco), jnp.float32)
    for rb in range(tr // rs):
        r0 = rb * rs
        acc = jnp.zeros((rs, tco), jnp.float32)
        for lc in range(nlc):                      # chunk the contraction dim
            c0 = lc * 128
            xc = x_ref[r0:r0 + rs, c0:c0 + 128].astype(jnp.float32)
            a = xc * sc_ref[0:1, c0:c0 + 128] + sh_ref[0:1, c0:c0 + 128]
            a = jnp.where(a >= 0.0, a, in_slope * a).astype(jnp.bfloat16)
            acc = acc + jnp.dot(a, w_ref[c0:c0 + 128, :],
                                preferred_element_type=jnp.float32)
        o_ref[r0:r0 + rs, :] = acc.astype(o_ref.dtype)
        s_acc = s_acc + jnp.sum(acc, axis=0, keepdims=True)
        q_acc = q_acc + jnp.sum(acc * acc, axis=0, keepdims=True)

    st_ref[0] = jnp.concatenate(
        [s_acc, q_acc, jnp.zeros((6, tco), jnp.float32)], axis=0)


def _bn_act_kernel(x_ref, sc_ref, sh_ref, o_ref, *, slope, rs):
    """Final layer only: row-tiled BatchNorm affine + Leaky/ReLU (bf16 -> f32)."""
    tr = o_ref.shape[0]
    for rb in range(tr // rs):
        r0 = rb * rs
        y = x_ref[r0:r0 + rs, :].astype(jnp.float32) * sc_ref[...] + sh_ref[...]
        o_ref[r0:r0 + rs, :] = jnp.where(y >= 0.0, y, slope * y)


# ----------------------------------------------------------------------------
# Wrappers
# ----------------------------------------------------------------------------
def _conv3x3_call(x, sc, sh, in_slope, w):
    n, h, wd, cin = x.shape
    kk, cin_w, cout = w.shape
    assert kk == 9 and cin_w == cin and cin % 128 == 0 and cout % 128 == 0
    assert wd % 8 == 0, "width must be sublane-aligned"  # TODO(synk): general W
    tco = 256 if cout % 256 == 0 else 128
    nc = cout // tco
    th = 8
    while h % th != 0:
        th //= 2

    kern = functools.partial(_conv3x3_kernel, h=h, w=wd, cin=cin, tco=tco,
                             in_slope=in_slope, th=th)
    y, st = pl.pallas_call(
        kern,
        out_shape=(jax.ShapeDtypeStruct((n, h, wd, cout), jnp.bfloat16),
                   jax.ShapeDtypeStruct((n, 8, cout), jnp.float32)),
        grid=(nc, n),
        in_specs=[pl.BlockSpec((1, h, wd, cin), lambda j, i: (i, 0, 0, 0)),
                  pl.BlockSpec((1, cin), lambda j, i: (0, 0)),
                  pl.BlockSpec((1, cin), lambda j, i: (0, 0)),
                  pl.BlockSpec((9, cin, tco), lambda j, i: (0, 0, j))],
        out_specs=(pl.BlockSpec((1, h, wd, tco), lambda j, i: (i, 0, 0, j)),
                   pl.BlockSpec((1, 8, tco), lambda j, i: (i, 0, j))),
        scratch_shapes=[pltpu.VMEM((h + 2, wd + 2, cin), jnp.bfloat16),
                        pltpu.VMEM((th * wd, tco), jnp.float32)],
        compiler_params=pltpu.CompilerParams(
            dimension_semantics=("parallel", "parallel"),
            vmem_limit_bytes=_VMEM_LIMIT),
    )(x, sc, sh, w)
    chan_sum = st[:, 0, :].sum(axis=0)
    chan_sq = st[:, 1, :].sum(axis=0)
    return y, chan_sum, chan_sq


def _conv1x1_call(x, sc, sh, in_slope, w):
    n, h, wd, cin = x.shape
    cin_w, cout = w.shape
    assert cin_w == cin and cin % 128 == 0 and cout % 128 == 0
    r = n * h * wd
    tco = 256 if cout % 256 == 0 else 128
    nc = cout // tco
    tr = _pick_tile(r, 512)
    rs = _pick_chunk(tr, 128)
    xf = x.reshape(r, cin)

    kern = functools.partial(_conv1x1_kernel, cin=cin, tco=tco,
                             in_slope=in_slope, rs=rs)
    y, st = pl.pallas_call(
        kern,
        out_shape=(jax.ShapeDtypeStruct((r, cout), jnp.bfloat16),
                   jax.ShapeDtypeStruct((r // tr, 8, cout), jnp.float32)),
        grid=(nc, r // tr),
        in_specs=[pl.BlockSpec((tr, cin), lambda j, i: (i, 0)),
                  pl.BlockSpec((1, cin), lambda j, i: (0, 0)),
                  pl.BlockSpec((1, cin), lambda j, i: (0, 0)),
                  pl.BlockSpec((cin, tco), lambda j, i: (0, j))],
        out_specs=(pl.BlockSpec((tr, tco), lambda j, i: (i, j)),
                   pl.BlockSpec((1, 8, tco), lambda j, i: (i, 0, j))),
        compiler_params=pltpu.CompilerParams(
            dimension_semantics=("parallel", "parallel"),
            vmem_limit_bytes=_VMEM_LIMIT),
    )(xf, sc, sh, w)
    chan_sum = st[:, 0, :].sum(axis=0)
    chan_sq = st[:, 1, :].sum(axis=0)
    return y.reshape(n, h, wd, cout), chan_sum, chan_sq


def _bn_affine(chan_sum, chan_sq, count, gamma, beta):
    """BatchNorm2d training-mode batch stats (biased variance) -> scale/shift."""
    mean = chan_sum / count
    var = jnp.maximum(chan_sq / count - mean * mean, 0.0)
    scale = gamma * jax.lax.rsqrt(var + BN_EPS)
    shift = beta - mean * scale
    c = scale.shape[0]
    return (scale.reshape(1, c).astype(jnp.float32),
            shift.reshape(1, c).astype(jnp.float32))


def _bn_act_call(x, sc, sh, slope):
    n, h, wd, c = x.shape
    r = n * h * wd
    tr = _pick_tile(r, 1024)
    rs = _pick_chunk(tr, 256)
    kern = functools.partial(_bn_act_kernel, slope=slope, rs=rs)
    y = pl.pallas_call(
        kern,
        out_shape=jax.ShapeDtypeStruct((r, c), jnp.float32),
        grid=(r // tr,),
        in_specs=[pl.BlockSpec((tr, c), lambda i: (i, 0)),
                  pl.BlockSpec((1, c), lambda i: (0, 0)),
                  pl.BlockSpec((1, c), lambda i: (0, 0))],
        out_specs=pl.BlockSpec((tr, c), lambda i: (i, 0)),
        compiler_params=pltpu.CompilerParams(
            dimension_semantics=("parallel",),
            vmem_limit_bytes=_VMEM_LIMIT),
    )(x.reshape(r, c), sc, sh)
    return y.reshape(n, h, wd, c)


def conv_block_forward(params, x):
    """ConvBlock forward.  x: (N, H, W, C) NHWC (PyTorch NCHW channels last)."""
    n, h, wd, c0 = x.shape
    count = float(n * h * wd)            # stride 1, same padding -> constant

    y_pre = x.astype(jnp.bfloat16)
    sc = jnp.ones((1, c0), jnp.float32)   # identity input transform for conv_1
    sh = jnp.zeros((1, c0), jnp.float32)
    in_slope = 1.0                        # slope 1.0 == identity activation

    for name in ("conv_1", "conv_2", "conv_3", "conv_4"):
        p = params[name]
        if p["k"] == 3:
            y_pre, s, q = _conv3x3_call(y_pre, sc, sh, in_slope, p["w"])
        else:
            y_pre, s, q = _conv1x1_call(y_pre, sc, sh, in_slope, p["w"])
        sc, sh = _bn_affine(s, q, count, p["gamma"], p["beta"])
        in_slope = p["slope"]

    # final layer's BatchNorm + activation (f32 output, like the reference)
    return _bn_act_call(y_pre, sc, sh, in_slope)


# ----------------------------------------------------------------------------
# Parameters
# ----------------------------------------------------------------------------
def init_conv_layer(key, cin, cout, k, slope):
    assert cin % 128 == 0 and cout % 128 == 0, "channels must be lane-aligned"
    if k == 3:
        w = jax.random.normal(key, (9, cin, cout), jnp.float32) / np.sqrt(9 * cin)
    else:
        w = jax.random.normal(key, (cin, cout), jnp.float32) / np.sqrt(cin)
    return {"w": w.astype(jnp.bfloat16),
            "gamma": jnp.ones((cout,), jnp.float32),   # BatchNorm2d default init
            "beta": jnp.zeros((cout,), jnp.float32),
            "k": k, "cout": cout, "slope": slope}


def init_conv_block(key, filters=256, negative_slope=0.1):
    half = filters // 2
    k1, k2, k3, k4 = jax.random.split(key, 4)
    return {"conv_1": init_conv_layer(k1, half, filters, 3, negative_slope),
            "conv_2": init_conv_layer(k2, filters, half, 1, negative_slope),
            "conv_3": init_conv_layer(k3, half, filters, 3, negative_slope),
            "conv_4": init_conv_layer(k4, filters, half, 1, negative_slope)}


if __name__ == "__main__":
    filters = 256                    # ConvBlock(filters=...); small, lane-aligned
    n, hgt, wid = 2, 16, 16

    key = jax.random.PRNGKey(0)
    kp, kx = jax.random.split(key)
    params = init_conv_block(kp, filters=filters, negative_slope=0.1)
    x = jax.random.normal(kx, (n, hgt, wid, filters // 2), jnp.float32)

    y = conv_block_forward(params, x)
    jax.block_until_ready(y)

    assert y.shape == (n, hgt, wid, filters // 2)
    assert y.dtype == jnp.float32
    assert bool(jnp.all(jnp.isfinite(y)))
    print("KERNEL_OK")
</pallas_src>

<mosaic_0001>
module attributes {stable_mosaic.version = 11 : i64} {
  func.func @_conv3x3_kernel(%arg0: i32, %arg1: i32, %arg2: memref<1x16x16x128xbf16, #tpu.memory_space<vmem>>, %arg3: memref<1x128xf32, #tpu.memory_space<vmem>>, %arg4: memref<1x128xf32, #tpu.memory_space<vmem>>, %arg5: memref<9x128x256xbf16, #tpu.memory_space<vmem>>, %arg6: memref<1x16x16x256xbf16, #tpu.memory_space<vmem>>, %arg7: memref<1x8x256xf32, #tpu.memory_space<vmem>>, %arg8: memref<18x18x128xbf16, #tpu.memory_space<vmem>>, %arg9: memref<128x256xf32, #tpu.memory_space<vmem>>) attributes {dimension_semantics = [#tpu.dimension_semantics<parallel>, #tpu.dimension_semantics<parallel>], iteration_bounds = array<i64: 1, 2>, scalar_prefetch = 0 : i64, scratch_operands = 2 : i64, tpu.core_type = #tpu.core_type<tc>, window_params = [{transform_indices = @transform_0, window_bounds = array<i64: 1, 16, 16, 128>}, {pipeline_mode = #tpu.pipeline_mode<synchronous>, transform_indices = @transform_1, window_bounds = array<i64: 1, 128>}, {pipeline_mode = #tpu.pipeline_mode<synchronous>, transform_indices = @transform_2, window_bounds = array<i64: 1, 128>}, {transform_indices = @transform_3, window_bounds = array<i64: 9, 128, 256>}, {transform_indices = @transform_4, window_bounds = array<i64: 1, 16, 16, 256>}, {transform_indices = @transform_5, window_bounds = array<i64: 1, 8, 256>}]} {
    %cst = arith.constant 0.000000e+00 : bf16
    %0 = vector.broadcast %cst : bf16 to vector<1x18x128xbf16>
    %c0 = arith.constant 0 : index
    %c0_0 = arith.constant 0 : index
    %c0_1 = arith.constant 0 : index
    %1 = vector.load %arg8[%c0, %c0_0, %c0_1] : memref<18x18x128xbf16, #tpu.memory_space<vmem>>, vector<1x18x128xbf16>
    tpu.vector_store %arg8[%c0, %c0_0, %c0_1], %0 {strides = array<i32>} : memref<18x18x128xbf16, #tpu.memory_space<vmem>>, vector<1x18x128xbf16>,
    %c17 = arith.constant 17 : index
    %c0_2 = arith.constant 0 : index
    %c0_3 = arith.constant 0 : index
    %2 = vector.load %arg8[%c17, %c0_2, %c0_3] : memref<18x18x128xbf16, #tpu.memory_space<vmem>>, vector<1x18x128xbf16>
    tpu.vector_store %arg8[%c17, %c0_2, %c0_3], %0 {strides = array<i32>} : memref<18x18x128xbf16, #tpu.memory_space<vmem>>, vector<1x18x128xbf16>,
    %c0_4 = arith.constant 0 : index
    %c0_5 = arith.constant 0 : index
    %c0_6 = arith.constant 0 : index
    %c0_7 = arith.constant 0 : index
    %3 = vector.load %arg2[%c0_4, %c0_5, %c0_6, %c0_7] : memref<1x16x16x128xbf16, #tpu.memory_space<vmem>>, vector<1x8x16x128xbf16>
    %4 = vector.shape_cast %3 : vector<1x8x16x128xbf16> to vector<8x16x128xbf16>
    %5 = arith.extf %4 : vector<8x16x128xbf16> to vector<8x16x128xf32>
    %c0_8 = arith.constant 0 : index
    %c0_9 = arith.constant 0 : index
    %6 = vector.load %arg3[%c0_8, %c0_9] : memref<1x128xf32, #tpu.memory_space<vmem>>, vector<1x128xf32>
    %7 = vector.shape_cast %6 : vector<1x128xf32> to vector<1x1x128xf32>
    %8 = vector.broadcast %7 : vector<1x1x128xf32> to vector<8x16x128xf32>
    %9 = arith.mulf %5, %8 : vector<8x16x128xf32>
    %c0_10 = arith.constant 0 : index
    %c0_11 = arith.constant 0 : index
    %10 = vector.load %arg4[%c0_10, %c0_11] : memref<1x128xf32, #tpu.memory_space<vmem>>, vector<1x128xf32>
    %11 = vector.shape_cast %10 : vector<1x128xf32> to vector<1x1x128xf32>
    %12 = vector.broadcast %11 : vector<1x1x128xf32> to vector<8x16x128xf32>
    %13 = arith.addf %9, %12 : vector<8x16x128xf32>
    %cst_12 = arith.constant 0.000000e+00 : f32
    %14 = vector.broadcast %cst_12 : f32 to vector<8x16x128xf32>
    %15 = arith.cmpf oge, %13, %14 : vector<8x16x128xf32>
    %cst_13 = arith.constant 1.000000e+00 : f32
    %16 = vector.broadcast %cst_13 : f32 to vector<8x16x128xf32>
    %17 = arith.mulf %16, %13 : vector<8x16x128xf32>
    %18 = arith.select %15, %13, %17 : vector<8x16x128xi1>, vector<8x16x128xf32>
    %19 = arith.truncf %18 : vector<8x16x128xf32> to vector<8x16x128xbf16>
    %cst_14 = arith.constant 0.000000e+00 : bf16
    %20 = vector.broadcast %cst_14 : bf16 to vector<8x1x128xbf16>
    %21 = tpu.concatenate %20, %19, %20 in 1 : vector<8x1x128xbf16>, vector<8x16x128xbf16>, vector<8x1x128xbf16> -> vector<8x18x128xbf16>
    %c1 = arith.constant 1 : index
    %c0_15 = arith.constant 0 : index
    %c0_16 = arith.constant 0 : index
    %22 = vector.load %arg8[%c1, %c0_15, %c0_16] : memref<18x18x128xbf16, #tpu.memory_space<vmem>>, vector<8x18x128xbf16>
    tpu.vector_store %arg8[%c1, %c0_15, %c0_16], %21 {strides = array<i32>} : memref<18x18x128xbf16, #tpu.memory_space<vmem>>, vector<8x18x128xbf16>,
    %c0_17 = arith.constant 0 : index
    %c8 = arith.constant 8 : index
    %c0_18 = arith.constant 0 : index
    %c0_19 = arith.constant 0 : index
    %23 = vector.load %arg2[%c0_17, %c8, %c0_18, %c0_19] : memref<1x16x16x128xbf16, #tpu.memory_space<vmem>>, vector<1x8x16x128xbf16>
    %24 = vector.shape_cast %23 : vector<1x8x16x128xbf16> to vector<8x16x128xbf16>
    %25 = arith.extf %24 : vector<8x16x128xbf16> to vector<8x16x128xf32>
    %c0_20 = arith.constant 0 : index
    %c0_21 = arith.constant 0 : index
    %26 = vector.load %arg3[%c0_20, %c0_21] : memref<1x128xf32, #tpu.memory_space<vmem>>, vector<1x128xf32>
    %27 = vector.shape_cast %26 : vector<1x128xf32> to vector<1x1x128xf32>
    %28 = vector.broadcast %27 : vector<1x1x128xf32> to vector<8x16x128xf32>
    %29 = arith.mulf %25, %28 : vector<8x16x128xf32>
    %c0_22 = arith.constant 0 : index
    %c0_23 = arith.constant 0 : index
    %30 = vector.load %arg4[%c0_22, %c0_23] : memref<1x128xf32, #tpu.memory_space<vmem>>, vector<1x128xf32>
    %31 = vector.shape_cast %30 : vector<1x128xf32> to vector<1x1x128xf32>
    %32 = vector.broadcast %31 : vector<1x1x128xf32> to vector<8x16x128xf32>
    %33 = arith.addf %29, %32 : vector<8x16x128xf32>
    %cst_24 = arith.constant 0.000000e+00 : f32
    %34 = vector.broadcast %cst_24 : f32 to vector<8x16x128xf32>
    %35 = arith.cmpf oge, %33, %34 : vector<8x16x128xf32>
    %cst_25 = arith.constant 1.000000e+00 : f32
    %36 = vector.broadcast %cst_25 : f32 to vector<8x16x128xf32>
    %37 = arith.mulf %36, %33 : vector<8x16x128xf32>
    %38 = arith.select %35, %33, %37 : vector<8x16x128xi1>, vector<8x16x128xf32>
    %39 = arith.truncf %38 : vector<8x16x128xf32> to vector<8x16x128xbf16>
    %cst_26 = arith.constant 0.000000e+00 : bf16
    %40 = vector.broadcast %cst_26 : bf16 to vector<8x1x128xbf16>
    %41 = tpu.concatenate %40, %39, %40 in 1 : vector<8x1x128xbf16>, vector<8x16x128xbf16>, vector<8x1x128xbf16> -> vector<8x18x128xbf16>
    %c9 = arith.constant 9 : index
    %c0_27 = arith.constant 0 : index
    %c0_28 = arith.constant 0 : index
    %42 = vector.load %arg8[%c9, %c0_27, %c0_28] : memref<18x18x128xbf16, #tpu.memory_space<vmem>>, vector<8x18x128xbf16>
    tpu.vector_store %arg8[%c9, %c0_27, %c0_28], %41 {strides = array<i32>} : memref<18x18x128xbf16, #tpu.memory_space<vmem>>, vector<8x18x128xbf16>,
    %cst_29 = arith.constant 0.000000e+00 : f32
    %43 = vector.broadcast %cst_29 : f32 to vector<1x256xf32>
    %cst_30 = arith.constant 0.000000e+00 : f32
    %44 = vector.broadcast %cst_30 : f32 to vector<1x256xf32>
    %cst_31 = arith.constant 0.000000e+00 : f32
    %45 = vector.broadcast %cst_31 : f32 to vector<128x256xf32>
    %c0_32 = arith.constant 0 : index
    %c0_33 = arith.constant 0 : index
    %46 = vector.load %arg9[%c0_32, %c0_33] : memref<128x256xf32, #tpu.memory_space<vmem>>, vector<128x256xf32>
    tpu.vector_store %arg9[%c0_32, %c0_33], %45 {strides = array<i32>} : memref<128x256xf32, #tpu.memory_space<vmem>>, vector<128x256xf32>,
    %c0_34 = arith.constant 0 : index
    %c0_35 = arith.constant 0 : index
    %c0_36 = arith.constant 0 : index
    %47 = vector.load %arg8[%c0_34, %c0_35, %c0_36] : memref<18x18x128xbf16, #tpu.memory_space<vmem>>, vector<8x18x128xbf16>
    %48 = vector.extract_strided_slice %47 {offsets = [0, 0, 0], sizes = [8, 16, 128], strides = [1, 1, 1]} : vector<8x18x128xbf16> to vector<8x16x128xbf16>
    %49 = vector.shape_cast %48 : vector<8x16x128xbf16> to vector<128x128xbf16>
    %c0_37 = arith.constant 0 : index
    %c0_38 = arith.constant 0 : index
    %50 = vector.load %arg9[%c0_37, %c0_38] : memref<128x256xf32, #tpu.memory_space<vmem>>, vector<128x256xf32>
    %c0_39 = arith.constant 0 : index
    %c0_40 = arith.constant 0 : index
    %c0_41 = arith.constant 0 : index
    %51 = vector.load %arg5[%c0_39, %c0_40, %c0_41] : memref<9x128x256xbf16, #tpu.memory_space<vmem>>, vector<1x128x256xbf16>
    %52 = vector.shape_cast %51 : vector<1x128x256xbf16> to vector<128x256xbf16>
    %cst_42 = arith.constant dense<0.000000e+00> : vector<128x256xf32>
    %53 = tpu.matmul %49, %52, %cst_42 {dimension_numbers = #tpu.dot_dimension_numbers<[1], [0], [0], [1], [0, 0, 1, 1], [], []>} : vector<128x128xbf16>, vector<128x256xbf16>, vector<128x256xf32> -> vector<128x256xf32>
    %54 = arith.addf %50, %53 : vector<128x256xf32>
    %c0_43 = arith.constant 0 : index
    %c0_44 = arith.constant 0 : index
    %55 = vector.load %arg9[%c0_43, %c0_44] : memref<128x256xf32, #tpu.memory_space<vmem>>, vector<128x256xf32>
    tpu.vector_store %arg9[%c0_43, %c0_44], %54 {strides = array<i32>} : memref<128x256xf32, #tpu.memory_space<vmem>>, vector<128x256xf32>,
    %56 = vector.extract_strided_slice %47 {offsets = [0, 1, 0], sizes = [8, 16, 128], strides = [1, 1, 1]} : vector<8x18x128xbf16> to vector<8x16x128xbf16>
    %57 = vector.shape_cast %56 : vector<8x16x128xbf16> to vector<128x128xbf16>
    %c0_45 = arith.constant 0 : index
    %c0_46 = arith.constant 0 : index
    %58 = vector.load %arg9[%c0_45, %c0_46] : memref<128x256xf32, #tpu.memory_space<vmem>>, vector<128x256xf32>
    %c1_47 = arith.constant 1 : index
    %c0_48 = arith.constant 0 : index
    %c0_49 = arith.constant 0 : index
    %59 = vector.load %arg5[%c1_47, %c0_48, %c0_49] : memref<9x128x256xbf16, #tpu.memory_space<vmem>>, vector<1x128x256xbf16>
    %60 = vector.shape_cast %59 : vector<1x128x256xbf16> to vector<128x256xbf16>
    %cst_50 = arith.constant dense<0.000000e+00> : vector<128x256xf32>
    %61 = tpu.matmul %57, %60, %cst_50 {dimension_numbers = #tpu.dot_dimension_numbers<[1], [0], [0], [1], [0, 0, 1, 1], [], []>} : vector<128x128xbf16>, vector<128x256xbf16>, vector<128x256xf32> -> vector<128x256xf32>
    %62 = arith.addf %58, %61 : vector<128x256xf32>
    %c0_51 = arith.constant 0 : index
    %c0_52 = arith.constant 0 : index
    %63 = vector.load %arg9[%c0_51, %c0_52] : memref<128x256xf32, #tpu.memory_space<vmem>>, vector<128x256xf32>
    tpu.vector_store %arg9[%c0_51, %c0_52], %62 {strides = array<i32>} : memref<128x256xf32, #tpu.memory_space<vmem>>, vector<128x256xf32>,
    %64 = vector.extract_strided_slice %47 {offsets = [0, 2, 0], sizes = [8, 16, 128], strides = [1, 1, 1]} : vector<8x18x128xbf16> to vector<8x16x128xbf16>
    %65 = vector.shape_cast %64 : vector<8x16x128xbf16> to vector<128x128xbf16>
    %c0_53 = arith.constant 0 : index
    %c0_54 = arith.constant 0 : index
    %66 = vector.load %arg9[%c0_53, %c0_54] : memref<128x256xf32, #tpu.memory_space<vmem>>, vector<128x256xf32>
    %c2 = arith.constant 2 : index
    %c0_55 = arith.constant 0 : index
    %c0_56 = arith.constant 0 : index
    %67 = vector.load %arg5[%c2, %c0_55, %c0_56] : memref<9x128x256xbf16, #tpu.memory_space<vmem>>, vector<1x128x256xbf16>
    %68 = vector.shape_cast %67 : vector<1x128x256xbf16> to vector<128x256xbf16>
    %cst_57 = arith.constant dense<0.000000e+00> : vector<128x256xf32>
    %69 = tpu.matmul %65, %68, %cst_57 {dimension_numbers = #tpu.dot_dimension_numbers<[1], [0], [0], [1], [0, 0, 1, 1], [], []>} : vector<128x128xbf16>, vector<128x256xbf16>, vector<128x256xf32> -> vector<128x256xf32>
    %70 = arith.addf %66, %69 : vector<128x256xf32>
    %c0_58 = arith.constant 0 : index
    %c0_59 = arith.constant 0 : index
    %71 = vector.load %arg9[%c0_58, %c0_59] : memref<128x256xf32, #tpu.memory_space<vmem>>, vector<128x256xf32>
    tpu.vector_store %arg9[%c0_58, %c0_59], %70 {strides = array<i32>} : memref<128x256xf32, #tpu.memory_space<vmem>>, vector<128x256xf32>,
    %c1_60 = arith.constant 1 : index
    %c0_61 = arith.constant 0 : index
    %c0_62 = arith.constant 0 : index
    %72 = vector.load %arg8[%c1_60, %c0_61, %c0_62] : memref<18x18x128xbf16, #tpu.memory_space<vmem>>, vector<8x18x128xbf16>
    %73 = vector.extract_strided_slice %72 {offsets = [0, 0, 0], sizes = [8, 16, 128], strides = [1, 1, 1]} : vector<8x18x128xbf16> to vector<8x16x128xbf16>
    %74 = vector.shape_cast %73 : vector<8x16x128xbf16> to vector<128x128xbf16>
    %c0_63 = arith.constant 0 : index
    %c0_64 = arith.constant 0 : index
    %75 = vector.load %arg9[%c0_63, %c0_64] : memref<128x256xf32, #tpu.memory_space<vmem>>, vector<128x256xf32>
    %c3 = arith.constant 3 : index
    %c0_65 = arith.constant 0 : index
    %c0_66 = arith.constant 0 : index
    %76 = vector.load %arg5[%c3, %c0_65, %c0_66] : memref<9x128x256xbf16, #tpu.memory_space<vmem>>, vector<1x128x256xbf16>
    %77 = vector.shape_cast %76 : vector<1x128x256xbf16> to vector<128x256xbf16>
    %cst_67 = arith.constant dense<0.000000e+00> : vector<128x256xf32>
    %78 = tpu.matmul %74, %77, %cst_67 {dimension_numbers = #tpu.dot_dimension_numbers<[1], [0], [0], [1], [0, 0, 1, 1], [], []>} : vector<128x128xbf16>, vector<128x256xbf16>, vector<128x256xf32> -> vector<128x256xf32>
    %79 = arith.addf %75, %78 : vector<128x256xf32>
    %c0_68 = arith.constant 0 : index
    %c0_69 = arith.constant 0 : index
    %80 = vector.load %arg9[%c0_68, %c0_69] : memref<128x256xf32, #tpu.memory_space<vmem>>, vector<128x256xf32>
    tpu.vector_store %arg9[%c0_68, %c0_69], %79 {strides = array<i32>} : memref<128x256xf32, #tpu.memory_space<vmem>>, vector<128x256xf32>,
    %81 = vector.extract_strided_slice %72 {offsets = [0, 1, 0], sizes = [8, 16, 128], strides = [1, 1, 1]} : vector<8x18x128xbf16> to vector<8x16x128xbf16>
    %82 = vector.shape_cast %81 : vector<8x16x128xbf16> to vector<128x128xbf16>
    %c0_70 = arith.constant 0 : index
    %c0_71 = arith.constant 0 : index
    %83 = vector.load %arg9[%c0_70, %c0_71] : memref<128x256xf32, #tpu.memory_space<vmem>>, vector<128x256xf32>
    %c4 = arith.constant 4 : index
    %c0_72 = arith.constant 0 : index
    %c0_73 = arith.constant 0 : index
    %84 = vector.load %arg5[%c4, %c0_72, %c0_73] : memref<9x128x256xbf16, #tpu.memory_space<vmem>>, vector<1x128x256xbf16>
    %85 = vector.shape_cast %84 : vector<1x128x256xbf16> to vector<128x256xbf16>
    %cst_74 = arith.constant dense<0.000000e+00> : vector<128x256xf32>
    %86 = tpu.matmul %82, %85, %cst_74 {dimension_numbers = #tpu.dot_dimension_numbers<[1], [0], [0], [1], [0, 0, 1, 1], [], []>} : vector<128x128xbf16>, vector<128x256xbf16>, vector<128x256xf32> -> vector<128x256xf32>
    %87 = arith.addf %83, %86 : vector<128x256xf32>
    %c0_75 = arith.constant 0 : index
    %c0_76 = arith.constant 0 : index
    %88 = vector.load %arg9[%c0_75, %c0_76] : memref<128x256xf32, #tpu.memory_space<vmem>>, vector<128x256xf32>
    tpu.vector_store %arg9[%c0_75, %c0_76], %87 {strides = array<i32>} : memref<128x256xf32, #tpu.memory_space<vmem>>, vector<128x256xf32>,
    %89 = vector.extract_strided_slice %72 {offsets = [0, 2, 0], sizes = [8, 16, 128], strides = [1, 1, 1]} : vector<8x18x128xbf16> to vector<8x16x128xbf16>
    %90 = vector.shape_cast %89 : vector<8x16x128xbf16> to vector<128x128xbf16>
    %c0_77 = arith.constant 0 : index
    %c0_78 = arith.constant 0 : index
    %91 = vector.load %arg9[%c0_77, %c0_78] : memref<128x256xf32, #tpu.memory_space<vmem>>, vector<128x256xf32>
    %c5 = arith.constant 5 : index
    %c0_79 = arith.constant 0 : index
    %c0_80 = arith.constant 0 : index
    %92 = vector.load %arg5[%c5, %c0_79, %c0_80] : memref<9x128x256xbf16, #tpu.memory_space<vmem>>, vector<1x128x256xbf16>
    %93 = vector.shape_cast %92 : vector<1x128x256xbf16> to vector<128x256xbf16>
    %cst_81 = arith.constant dense<0.000000e+00> : vector<128x256xf32>
    %94 = tpu.matmul %90, %93, %cst_81 {dimension_numbers = #tpu.dot_dimension_numbers<[1], [0], [0], [1], [0, 0, 1, 1], [], []>} : vector<128x128xbf16>, vector<128x256xbf16>, vector<128x256xf32> -> vector<128x256xf32>
    %95 = arith.addf %91, %94 : vector<128x256xf32>
    %c0_82 = arith.constant 0 : index
    %c0_83 = arith.constant 0 : index
    %96 = vector.load %arg9[%c0_82, %c0_83] : memref<128x256xf32, #tpu.memory_space<vmem>>, vector<128x256xf32>
    tpu.vector_store %arg9[%c0_82, %c0_83], %95 {strides = array<i32>} : memref<128x256xf32, #tpu.memory_space<vmem>>, vector<128x256xf32>,
    %c2_84 = arith.constant 2 : index
    %c0_85 = arith.constant 0 : index
    %c0_86 = arith.constant 0 : index
    %97 = vector.load %arg8[%c2_84, %c0_85, %c0_86] : memref<18x18x128xbf16, #tpu.memory_space<vmem>>, vector<8x18x128xbf16>
    %98 = vector.extract_strided_slice %97 {offsets = [0, 0, 0], sizes = [8, 16, 128], strides = [1, 1, 1]} : vector<8x18x128xbf16> to vector<8x16x128xbf16>
    %99 = vector.shape_cast %98 : vector<8x16x128xbf16> to vector<128x128xbf16>
    %c0_87 = arith.constant 0 : index
    %c0_88 = arith.constant 0 : index
    %100 = vector.load %arg9[%c0_87, %c0_88] : memref<128x256xf32, #tpu.memory_space<vmem>>, vector<128x256xf32>
    %c6 = arith.constant 6 : index
    %c0_89 = arith.constant 0 : index
    %c0_90 = arith.constant 0 : index
    %101 = vector.load %arg5[%c6, %c0_89, %c0_90] : memref<9x128x256xbf16, #tpu.memory_space<vmem>>, vector<1x128x256xbf16>
    %102 = vector.shape_cast %101 : vector<1x128x256xbf16> to vector<128x256xbf16>
    %cst_91 = arith.constant dense<0.000000e+00> : vector<128x256xf32>
    %103 = tpu.matmul %99, %102, %cst_91 {dimension_numbers = #tpu.dot_dimension_numbers<[1], [0], [0], [1], [0, 0, 1, 1], [], []>} : vector<128x128xbf16>, vector<128x256xbf16>, vector<128x256xf32> -> vector<128x256xf32>
    %104 = arith.addf %100, %103 : vector<128x256xf32>
    %c0_92 = arith.constant 0 : index
    %c0_93 = arith.constant 0 : index
    %105 = vector.load %arg9[%c0_92, %c0_93] : memref<128x256xf32, #tpu.memory_space<vmem>>, vector<128x256xf32>
    tpu.vector_store %arg9[%c0_92, %c0_93], %104 {strides = array<i32>} : memref<128x256xf32, #tpu.memory_space<vmem>>, vector<128x256xf32>,
    %106 = vector.extract_strided_slice %97 {offsets = [0, 1, 0], sizes = [8, 16, 128], strides = [1, 1, 1]} : vector<8x18x128xbf16> to vector<8x16x128xbf16>
    %107 = vector.shape_cast %106 : vector<8x16x128xbf16> to vector<128x128xbf16>
    %c0_94 = arith.constant 0 : index
    %c0_95 = arith.constant 0 : index
    %108 = vector.load %arg9[%c0_94, %c0_95] : memref<128x256xf32, #tpu.memory_space<vmem>>, vector<128x256xf32>
    %c7 = arith.constant 7 : index
    %c0_96 = arith.constant 0 : index
    %c0_97 = arith.constant 0 : index
    %109 = vector.load %arg5[%c7, %c0_96, %c0_97] : memref<9x128x256xbf16, #tpu.memory_space<vmem>>, vector<1x128x256xbf16>
    %110 = vector.shape_cast %109 : vector<1x128x256xbf16> to vector<128x256xbf16>
    %cst_98 = arith.constant dense<0.000000e+00> : vector<128x256xf32>
    %111 = tpu.matmul %107, %110, %cst_98 {dimension_numbers = #tpu.dot_dimension_numbers<[1], [0], [0], [1], [0, 0, 1, 1], [], []>} : vector<128x128xbf16>, vector<128x256xbf16>, vector<128x256xf32> -> vector<128x256xf32>
    %112 = arith.addf %108, %111 : vector<128x256xf32>
    %c0_99 = arith.constant 0 : index
    %c0_100 = arith.constant 0 : index
    %113 = vector.load %arg9[%c0_99, %c0_100] : memref<128x256xf32, #tpu.memory_space<vmem>>, vector<128x256xf32>
    tpu.vector_store %arg9[%c0_99, %c0_100], %112 {strides = array<i32>} : memref<128x256xf32, #tpu.memory_space<vmem>>, vector<128x256xf32>,
    %114 = vector.extract_strided_slice %97 {offsets = [0, 2, 0], sizes = [8, 16, 128], strides = [1, 1, 1]} : vector<8x18x128xbf16> to vector<8x16x128xbf16>
    %115 = vector.shape_cast %114 : vector<8x16x128xbf16> to vector<128x128xbf16>
    %c0_101 = arith.constant 0 : index
    %c0_102 = arith.constant 0 : index
    %116 = vector.load %arg9[%c0_101, %c0_102] : memref<128x256xf32, #tpu.memory_space<vmem>>, vector<128x256xf32>
    %c8_103 = arith.constant 8 : index
    %c0_104 = arith.constant 0 : index
    %c0_105 = arith.constant 0 : index
    %117 = vector.load %arg5[%c8_103, %c0_104, %c0_105] : memref<9x128x256xbf16, #tpu.memory_space<vmem>>, vector<1x128x256xbf16>
    %118 = vector.shape_cast %117 : vector<1x128x256xbf16> to vector<128x256xbf16>
    %cst_106 = arith.constant dense<0.000000e+00> : vector<128x256xf32>
    %119 = tpu.matmul %115, %118, %cst_106 {dimension_numbers = #tpu.dot_dimension_numbers<[1], [0], [0], [1], [0, 0, 1, 1], [], []>} : vector<128x128xbf16>, vector<128x256xbf16>, vector<128x256xf32> -> vector<128x256xf32>
    %120 = arith.addf %116, %119 : vector<128x256xf32>
    %c0_107 = arith.constant 0 : index
    %c0_108 = arith.constant 0 : index
    %121 = vector.load %arg9[%c0_107, %c0_108] : memref<128x256xf32, #tpu.memory_space<vmem>>, vector<128x256xf32>
    tpu.vector_store %arg9[%c0_107, %c0_108], %120 {strides = array<i32>} : memref<128x256xf32, #tpu.memory_space<vmem>>, vector<128x256xf32>,
    %c0_109 = arith.constant 0 : index
    %c0_110 = arith.constant 0 : index
    %122 = vector.load %arg9[%c0_109, %c0_110] : memref<128x256xf32, #tpu.memory_space<vmem>>, vector<16x256xf32>
    %123 = arith.truncf %122 : vector<16x256xf32> to vector<16x256xbf16>
    %c0_111 = arith.constant 0 : index
    %c0_112 = arith.constant 0 : index
    %c0_113 = arith.constant 0 : index
    %c0_114 = arith.constant 0 : index
    %124 = vector.load %arg6[%c0_111, %c0_112, %c0_113, %c0_114] : memref<1x16x16x256xbf16, #tpu.memory_space<vmem>>, vector<1x1x16x256xbf16>
    %125 = vector.shape_cast %124 : vector<1x1x16x256xbf16> to vector<16x256xbf16>
    %126 = vector.shape_cast %123 : vector<16x256xbf16> to vector<1x1x16x256xbf16>
    tpu.vector_store %arg6[%c0_111, %c0_112, %c0_113, %c0_114], %126 {strides = array<i32>} : memref<1x16x16x256xbf16, #tpu.memory_space<vmem>>, vector<1x1x16x256xbf16>,
    %cst_115 = arith.constant dense<0.000000e+00> : vector<256xf32>
    %127 = vector.multi_reduction <add>, %122, %cst_115 [0] : vector<16x256xf32> to vector<256xf32>
    %128 = vector.shape_cast %127 : vector<256xf32> to vector<1x256xf32>
    %129 = arith.addf %43, %128 : vector<1x256xf32>
    %130 = arith.mulf %122, %122 : vector<16x256xf32>
    %cst_116 = arith.constant dense<0.000000e+00> : vector<256xf32>
    %131 = vector.multi_reduction <add>, %130, %cst_116 [0] : vector<16x256xf32> to vector<256xf32>
    %132 = vector.shape_cast %131 : vector<256xf32> to vector<1x256xf32>
    %133 = arith.addf %44, %132 : vector<1x256xf32>
    %c16 = arith.constant 16 : index
    %c0_117 = arith.constant 0 : index
    %134 = vector.load %arg9[%c16, %c0_117] : memref<128x256xf32, #tpu.memory_space<vmem>>, vector<16x256xf32>
    %135 = arith.truncf %134 : vector<16x256xf32> to vector<16x256xbf16>
    %c0_118 = arith.constant 0 : index
    %c1_119 = arith.constant 1 : index
    %c0_120 = arith.constant 0 : index
    %c0_121 = arith.constant 0 : index
    %136 = vector.load %arg6[%c0_118, %c1_119, %c0_120, %c0_121] : memref<1x16x16x256xbf16, #tpu.memory_space<vmem>>, vector<1x1x16x256xbf16>
    %137 = vector.shape_cast %136 : vector<1x1x16x256xbf16> to vector<16x256xbf16>
    %138 = vector.shape_cast %135 : vector<16x256xbf16> to vector<1x1x16x256xbf16>
    tpu.vector_store %arg6[%c0_118, %c1_119, %c0_120, %c0_121], %138 {strides = array<i32>} : memref<1x16x16x256xbf16, #tpu.memory_space<vmem>>, vector<1x1x16x256xbf16>,
    %cst_122 = arith.constant dense<0.000000e+00> : vector<256xf32>
    %139 = vector.multi_reduction <add>, %134, %cst_122 [0] : vector<16x256xf32> to vector<256xf32>
    %140 = vector.shape_cast %139 : vector<256xf32> to vector<1x256xf32>
    %141 = arith.addf %129, %140 : vector<1x256xf32>
    %142 = arith.mulf %134, %134 : vector<16x256xf32>
    %cst_123 = arith.constant dense<0.000000e+00> : vector<256xf32>
    %143 = vector.multi_reduction <add>, %142, %cst_123 [0] : vector<16x256xf32> to vector<256xf32>
    %144 = vector.shape_cast %143 : vector<256xf32> to vector<1x256xf32>
    %145 = arith.addf %133, %144 : vector<1x256xf32>
    %c32 = arith.constant 32 : index
    %c0_124 = arith.constant 0 : index
    %146 = vector.load %arg9[%c32, %c0_124] : memref<128x256xf32, #tpu.memory_space<vmem>>, vector<16x256xf32>
    %147 = arith.truncf %146 : vector<16x256xf32> to vector<16x256xbf16>
    %c0_125 = arith.constant 0 : index
    %c2_126 = arith.constant 2 : index
    %c0_127 = arith.constant 0 : index
    %c0_128 = arith.constant 0 : index
    %148 = vector.load %arg6[%c0_125, %c2_126, %c0_127, %c0_128] : memref<1x16x16x256xbf16, #tpu.memory_space<vmem>>, vector<1x1x16x256xbf16>
    %149 = vector.shape_cast %148 : vector<1x1x16x256xbf16> to vector<16x256xbf16>
    %150 = vector.shape_cast %147 : vector<16x256xbf16> to vector<1x1x16x256xbf16>
    tpu.vector_store %arg6[%c0_125, %c2_126, %c0_127, %c0_128], %150 {strides = array<i32>} : memref<1x16x16x256xbf16, #tpu.memory_space<vmem>>, vector<1x1x16x256xbf16>,
    %cst_129 = arith.constant dense<0.000000e+00> : vector<256xf32>
    %151 = vector.multi_reduction <add>, %146, %cst_129 [0] : vector<16x256xf32> to vector<256xf32>
    %152 = vector.shape_cast %151 : vector<256xf32> to vector<1x256xf32>
    %153 = arith.addf %141, %152 : vector<1x256xf32>
    %154 = arith.mulf %146, %146 : vector<16x256xf32>
    %cst_130 = arith.constant dense<0.000000e+00> : vector<256xf32>
    %155 = vector.multi_reduction <add>, %154, %cst_130 [0] : vector<16x256xf32> to vector<256xf32>
    %156 = vector.shape_cast %155 : vector<256xf32> to vector<1x256xf32>
    %157 = arith.addf %145, %156 : vector<1x256xf32>
    %c48 = arith.constant 48 : index
    %c0_131 = arith.constant 0 : index
    %158 = vector.load %arg9[%c48, %c0_131] : memref<128x256xf32, #tpu.memory_space<vmem>>, vector<16x256xf32>
    %159 = arith.truncf %158 : vector<16x256xf32> to vector<16x256xbf16>
    %c0_132 = arith.constant 0 : index
    %c3_133 = arith.constant 3 : index
    %c0_134 = arith.constant 0 : index
    %c0_135 = arith.constant 0 : index
    %160 = vector.load %arg6[%c0_132, %c3_133, %c0_134, %c0_135] : memref<1x16x16x256xbf16, #tpu.memory_space<vmem>>, vector<1x1x16x256xbf16>
    %161 = vector.shape_cast %160 : vector<1x1x16x256xbf16> to vector<16x256xbf16>
    %162 = vector.shape_cast %159 : vector<16x256xbf16> to vector<1x1x16x256xbf16>
    tpu.vector_store %arg6[%c0_132, %c3_133, %c0_134, %c0_135], %162 {strides = array<i32>} : memref<1x16x16x256xbf16, #tpu.memory_space<vmem>>, vector<1x1x16x256xbf16>,
    %cst_136 = arith.constant dense<0.000000e+00> : vector<256xf32>
    %163 = vector.multi_reduction <add>, %158, %cst_136 [0] : vector<16x256xf32> to vector<256xf32>
    %164 = vector.shape_cast %163 : vector<256xf32> to vector<1x256xf32>
    %165 = arith.addf %153, %164 : vector<1x256xf32>
    %166 = arith.mulf %158, %158 : vector<16x256xf32>
    %cst_137 = arith.constant dense<0.000000e+00> : vector<256xf32>
    %167 = vector.multi_reduction <add>, %166, %cst_137 [0] : vector<16x256xf32> to vector<256xf32>
    %168 = vector.shape_cast %167 : vector<256xf32> to vector<1x256xf32>
    %169 = arith.addf %157, %168 : vector<1x256xf32>
    %c64 = arith.constant 64 : index
    %c0_138 = arith.constant 0 : index
    %170 = vector.load %arg9[%c64, %c0_138] : memref<128x256xf32, #tpu.memory_space<vmem>>, vector<16x256xf32>
    %171 = arith.truncf %170 : vector<16x256xf32> to vector<16x256xbf16>
    %c0_139 = arith.constant 0 : index
    %c4_140 = arith.constant 4 : index
    %c0_141 = arith.constant 0 : index
    %c0_142 = arith.constant 0 : index
    %172 = vector.load %arg6[%c0_139, %c4_140, %c0_141, %c0_142] : memref<1x16x16x256xbf16, #tpu.memory_space<vmem>>, vector<1x1x16x256xbf16>
    %173 = vector.shape_cast %172 : vector<1x1x16x256xbf16> to vector<16x256xbf16>
    %174 = vector.shape_cast %171 : vector<16x256xbf16> to vector<1x1x16x256xbf16>
    tpu.vector_store %arg6[%c0_139, %c4_140, %c0_141, %c0_142], %174 {strides = array<i32>} : memref<1x16x16x256xbf16, #tpu.memory_space<vmem>>, vector<1x1x16x256xbf16>,
    %cst_143 = arith.constant dense<0.000000e+00> : vector<256xf32>
    %175 = vector.multi_reduction <add>, %170, %cst_143 [0] : vector<16x256xf32> to vector<256xf32>
    %176 = vector.shape_cast %175 : vector<256xf32> to vector<1x256xf32>
    %177 = arith.addf %165, %176 : vector<1x256xf32>
    %178 = arith.mulf %170, %170 : vector<16x256xf32>
    %cst_144 = arith.constant dense<0.000000e+00> : vector<256xf32>
    %179 = vector.multi_reduction <add>, %178, %cst_144 [0] : vector<16x256xf32> to vector<256xf32>
    %180 = vector.shape_cast %179 : vector<256xf32> to vector<1x256xf32>
    %181 = arith.addf %169, %180 : vector<1x256xf32>
    %c80 = arith.constant 80 : index
    %c0_145 = arith.constant 0 : index
    %182 = vector.load %arg9[%c80, %c0_145] : memref<128x256xf32, #tpu.memory_space<vmem>>, vector<16x256xf32>
    %183 = arith.truncf %182 : vector<16x256xf32> to vector<16x256xbf16>
    %c0_146 = arith.constant 0 : index
    %c5_147 = arith.constant 5 : index
    %c0_148 = arith.constant 0 : index
    %c0_149 = arith.constant 0 : index
    %184 = vector.load %arg6[%c0_146, %c5_147, %c0_148, %c0_149] : memref<1x16x16x256xbf16, #tpu.memory_space<vmem>>, vector<1x1x16x256xbf16>
    %185 = vector.shape_cast %184 : vector<1x1x16x256xbf16> to vector<16x256xbf16>
    %186 = vector.shape_cast %183 : vector<16x256xbf16> to vector<1x1x16x256xbf16>
    tpu.vector_store %arg6[%c0_146, %c5_147, %c0_148, %c0_149], %186 {strides = array<i32>} : memref<1x16x16x256xbf16, #tpu.memory_space<vmem>>, vector<1x1x16x256xbf16>,
    %cst_150 = arith.constant dense<0.000000e+00> : vector<256xf32>
    %187 = vector.multi_reduction <add>, %182, %cst_150 [0] : vector<16x256xf32> to vector<256xf32>
    %188 = vector.shape_cast %187 : vector<256xf32> to vector<1x256xf32>
    %189 = arith.addf %177, %188 : vector<1x256xf32>
    %190 = arith.mulf %182, %182 : vector<16x256xf32>
    %cst_151 = arith.constant dense<0.000000e+00> : vector<256xf32>
    %191 = vector.multi_reduction <add>, %190, %cst_151 [0] : vector<16x256xf32> to vector<256xf32>
    %192 = vector.shape_cast %191 : vector<256xf32> to vector<1x256xf32>
    %193 = arith.addf %181, %192 : vector<1x256xf32>
    %c96 = arith.constant 96 : index
    %c0_152 = arith.constant 0 : index
    %194 = vector.load %arg9[%c96, %c0_152] : memref<128x256xf32, #tpu.memory_space<vmem>>, vector<16x256xf32>
    %195 = arith.truncf %194 : vector<16x256xf32> to vector<16x256xbf16>
    %c0_153 = arith.constant 0 : index
    %c6_154 = arith.constant 6 : index
    %c0_155 = arith.constant 0 : index
    %c0_156 = arith.constant 0 : index
    %196 = vector.load %arg6[%c0_153, %c6_154, %c0_155, %c0_156] : memref<1x16x16x256xbf16, #tpu.memory_space<vmem>>, vector<1x1x16x256xbf16>
    %197 = vector.shape_cast %196 : vector<1x1x16x256xbf16> to vector<16x256xbf16>
    %198 = vector.shape_cast %195 : vector<16x256xbf16> to vector<1x1x16x256xbf16>
    tpu.vector_store %arg6[%c0_153, %c6_154, %c0_155, %c0_156], %198 {strides = array<i32>} : memref<1x16x16x256xbf16, #tpu.memory_space<vmem>>, vector<1x1x16x256xbf16>,
    %cst_157 = arith.constant dense<0.000000e+00> : vector<256xf32>
    %199 = vector.multi_reduction <add>, %194, %cst_157 [0] : vector<16x256xf32> to vector<256xf32>
    %200 = vector.shape_cast %199 : vector<256xf32> to vector<1x256xf32>
    %201 = arith.addf %189, %200 : vector<1x256xf32>
    %202 = arith.mulf %194, %194 : vector<16x256xf32>
    %cst_158 = arith.constant dense<0.000000e+00> : vector<256xf32>
    %203 = vector.multi_reduction <add>, %202, %cst_158 [0] : vector<16x256xf32> to vector<256xf32>
    %204 = vector.shape_cast %203 : vector<256xf32> to vector<1x256xf32>
    %205 = arith.addf %193, %204 : vector<1x256xf32>
    %c112 = arith.constant 112 : index
    %c0_159 = arith.constant 0 : index
    %206 = vector.load %arg9[%c112, %c0_159] : memref<128x256xf32, #tpu.memory_space<vmem>>, vector<16x256xf32>
    %207 = arith.truncf %206 : vector<16x256xf32> to vector<16x256xbf16>
    %c0_160 = arith.constant 0 : index
    %c7_161 = arith.constant 7 : index
    %c0_162 = arith.constant 0 : index
    %c0_163 = arith.constant 0 : index
    %208 = vector.load %arg6[%c0_160, %c7_161, %c0_162, %c0_163] : memref<1x16x16x256xbf16, #tpu.memory_space<vmem>>, vector<1x1x16x256xbf16>
    %209 = vector.shape_cast %208 : vector<1x1x16x256xbf16> to vector<16x256xbf16>
    %210 = vector.shape_cast %207 : vector<16x256xbf16> to vector<1x1x16x256xbf16>
    tpu.vector_store %arg6[%c0_160, %c7_161, %c0_162, %c0_163], %210 {strides = array<i32>} : memref<1x16x16x256xbf16, #tpu.memory_space<vmem>>, vector<1x1x16x256xbf16>,
    %cst_164 = arith.constant dense<0.000000e+00> : vector<256xf32>
    %211 = vector.multi_reduction <add>, %206, %cst_164 [0] : vector<16x256xf32> to vector<256xf32>
    %212 = vector.shape_cast %211 : vector<256xf32> to vector<1x256xf32>
    %213 = arith.addf %201, %212 : vector<1x256xf32>
    %214 = arith.mulf %206, %206 : vector<16x256xf32>
    %cst_165 = arith.constant dense<0.000000e+00> : vector<256xf32>
    %215 = vector.multi_reduction <add>, %214, %cst_165 [0] : vector<16x256xf32> to vector<256xf32>
    %216 = vector.shape_cast %215 : vector<256xf32> to vector<1x256xf32>
    %217 = arith.addf %205, %216 : vector<1x256xf32>
    %cst_166 = arith.constant 0.000000e+00 : f32
    %218 = vector.broadcast %cst_166 : f32 to vector<128x256xf32>
    %c0_167 = arith.constant 0 : index
    %c0_168 = arith.constant 0 : index
    %219 = vector.load %arg9[%c0_167, %c0_168] : memref<128x256xf32, #tpu.memory_space<vmem>>, vector<128x256xf32>
    tpu.vector_store %arg9[%c0_167, %c0_168], %218 {strides = array<i32>} : memref<128x256xf32, #tpu.memory_space<vmem>>, vector<128x256xf32>,
    %c8_169 = arith.constant 8 : index
    %c0_170 = arith.constant 0 : index
    %c0_171 = arith.constant 0 : index
    %220 = vector.load %arg8[%c8_169, %c0_170, %c0_171] : memref<18x18x128xbf16, #tpu.memory_space<vmem>>, vector<8x18x128xbf16>
    %221 = vector.extract_strided_slice %220 {offsets = [0, 0, 0], sizes = [8, 16, 128], strides = [1, 1, 1]} : vector<8x18x128xbf16> to vector<8x16x128xbf16>
    %222 = vector.shape_cast %221 : vector<8x16x128xbf16> to vector<128x128xbf16>
    %c0_172 = arith.constant 0 : index
    %c0_173 = arith.constant 0 : index
    %223 = vector.load %arg9[%c0_172, %c0_173] : memref<128x256xf32, #tpu.memory_space<vmem>>, vector<128x256xf32>
    %c0_174 = arith.constant 0 : index
    %c0_175 = arith.constant 0 : index
    %c0_176 = arith.constant 0 : index
    %224 = vector.load %arg5[%c0_174, %c0_175, %c0_176] : memref<9x128x256xbf16, #tpu.memory_space<vmem>>, vector<1x128x256xbf16>
    %225 = vector.shape_cast %224 : vector<1x128x256xbf16> to vector<128x256xbf16>
    %cst_177 = arith.constant dense<0.000000e+00> : vector<128x256xf32>
    %226 = tpu.matmul %222, %225, %cst_177 {dimension_numbers = #tpu.dot_dimension_numbers<[1], [0], [0], [1], [0, 0, 1, 1], [], []>} : vector<128x128xbf16>, vector<128x256xbf16>, vector<128x256xf32> -> vector<128x256xf32>
    %227 = arith.addf %223, %226 : vector<128x256xf32>
    %c0_178 = arith.constant 0 : index
    %c0_179 = arith.constant 0 : index
    %228 = vector.load %arg9[%c0_178, %c0_179] : memref<128x256xf32, #tpu.memory_space<vmem>>, vector<128x256xf32>
    tpu.vector_store %arg9[%c0_178, %c0_179], %227 {strides = array<i32>} : memref<128x256xf32, #tpu.memory_space<vmem>>, vector<128x256xf32>,
    %229 = vector.extract_strided_slice %220 {offsets = [0, 1, 0], sizes = [8, 16, 128], strides = [1, 1, 1]} : vector<8x18x128xbf16> to vector<8x16x128xbf16>
    %230 = vector.shape_cast %229 : vector<8x16x128xbf16> to vector<128x128xbf16>
    %c0_180 = arith.constant 0 : index
    %c0_181 = arith.constant 0 : index
    %231 = vector.load %arg9[%c0_180, %c0_181] : memref<128x256xf32, #tpu.memory_space<vmem>>, vector<128x256xf32>
    %c1_182 = arith.constant 1 : index
    %c0_183 = arith.constant 0 : index
    %c0_184 = arith.constant 0 : index
    %232 = vector.load %arg5[%c1_182, %c0_183, %c0_184] : memref<9x128x256xbf16, #tpu.memory_space<vmem>>, vector<1x128x256xbf16>
    %233 = vector.shape_cast %232 : vector<1x128x256xbf16> to vector<128x256xbf16>
    %cst_185 = arith.constant dense<0.000000e+00> : vector<128x256xf32>
    %234 = tpu.matmul %230, %233, %cst_185 {dimension_numbers = #tpu.dot_dimension_numbers<[1], [0], [0], [1], [0, 0, 1, 1], [], []>} : vector<128x128xbf16>, vector<128x256xbf16>, vector<128x256xf32> -> vector<128x256xf32>
    %235 = arith.addf %231, %234 : vector<128x256xf32>
    %c0_186 = arith.constant 0 : index
    %c0_187 = arith.constant 0 : index
    %236 = vector.load %arg9[%c0_186, %c0_187] : memref<128x256xf32, #tpu.memory_space<vmem>>, vector<128x256xf32>
    tpu.vector_store %arg9[%c0_186, %c0_187], %235 {strides = array<i32>} : memref<128x256xf32, #tpu.memory_space<vmem>>, vector<128x256xf32>,
    %237 = vector.extract_strided_slice %220 {offsets = [0, 2, 0], sizes = [8, 16, 128], strides = [1, 1, 1]} : vector<8x18x128xbf16> to vector<8x16x128xbf16>
    %238 = vector.shape_cast %237 : vector<8x16x128xbf16> to vector<128x128xbf16>
    %c0_188 = arith.constant 0 : index
    %c0_189 = arith.constant 0 : index
    %239 = vector.load %arg9[%c0_188, %c0_189] : memref<128x256xf32, #tpu.memory_space<vmem>>, vector<128x256xf32>
    %c2_190 = arith.constant 2 : index
    %c0_191 = arith.constant 0 : index
    %c0_192 = arith.constant 0 : index
    %240 = vector.load %arg5[%c2_190, %c0_191, %c0_192] : memref<9x128x256xbf16, #tpu.memory_space<vmem>>, vector<1x128x256xbf16>
    %241 = vector.shape_cast %240 : vector<1x128x256xbf16> to vector<128x256xbf16>
    %cst_193 = arith.constant dense<0.000000e+00> : vector<128x256xf32>
    %242 = tpu.matmul %238, %241, %cst_193 {dimension_numbers = #tpu.dot_dimension_numbers<[1], [0], [0], [1], [0, 0, 1, 1], [], []>} : vector<128x128xbf16>, vector<128x256xbf16>, vector<128x256xf32> -> vector<128x256xf32>
    %243 = arith.addf %239, %242 : vector<128x256xf32>
    %c0_194 = arith.constant 0 : index
    %c0_195 = arith.constant 0 : index
    %244 = vector.load %arg9[%c0_194, %c0_195] : memref<128x256xf32, #tpu.memory_space<vmem>>, vector<128x256xf32>
    tpu.vector_store %arg9[%c0_194, %c0_195], %243 {strides = array<i32>} : memref<128x256xf32, #tpu.memory_space<vmem>>, vector<128x256xf32>,
    %c9_196 = arith.constant 9 : index
    %c0_197 = arith.constant 0 : index
    %c0_198 = arith.constant 0 : index
    %245 = vector.load %arg8[%c9_196, %c0_197, %c0_198] : memref<18x18x128xbf16, #tpu.memory_space<vmem>>, vector<8x18x128xbf16>
    %246 = vector.extract_strided_slice %245 {offsets = [0, 0, 0], sizes = [8, 16, 128], strides = [1, 1, 1]} : vector<8x18x128xbf16> to vector<8x16x128xbf16>
    %247 = vector.shape_cast %246 : vector<8x16x128xbf16> to vector<128x128xbf16>
    %c0_199 = arith.constant 0 : index
    %c0_200 = arith.constant 0 : index
    %248 = vector.load %arg9[%c0_199, %c0_200] : memref<128x256xf32, #tpu.memory_space<vmem>>, vector<128x256xf32>
    %c3_201 = arith.constant 3 : index
    %c0_202 = arith.constant 0 : index
    %c0_203 = arith.constant 0 : index
    %249 = vector.load %arg5[%c3_201, %c0_202, %c0_203] : memref<9x128x256xbf16, #tpu.memory_space<vmem>>, vector<1x128x256xbf16>
    %250 = vector.shape_cast %249 : vector<1x128x256xbf16> to vector<128x256xbf16>
    %cst_204 = arith.constant dense<0.000000e+00> : vector<128x256xf32>
    %251 = tpu.matmul %247, %250, %cst_204 {dimension_numbers = #tpu.dot_dimension_numbers<[1], [0], [0], [1], [0, 0, 1, 1], [], []>} : vector<128x128xbf16>, vector<128x256xbf16>, vector<128x256xf32> -> vector<128x256xf32>
    %252 = arith.addf %248, %251 : vector<128x256xf32>
    %c0_205 = arith.constant 0 : index
    %c0_206 = arith.constant 0 : index
    %253 = vector.load %arg9[%c0_205, %c0_206] : memref<128x256xf32, #tpu.memory_space<vmem>>, vector<128x256xf32>
    tpu.vector_store %arg9[%c0_205, %c0_206], %252 {strides = array<i32>} : memref<128x256xf32, #tpu.memory_space<vmem>>, vector<128x256xf32>,
    %254 = vector.extract_strided_slice %245 {offsets = [0, 1, 0], sizes = [8, 16, 128], strides = [1, 1, 1]} : vector<8x18x128xbf16> to vector<8x16x128xbf16>
    %255 = vector.shape_cast %254 : vector<8x16x128xbf16> to vector<128x128xbf16>
    %c0_207 = arith.constant 0 : index
    %c0_208 = arith.constant 0 : index
    %256 = vector.load %arg9[%c0_207, %c0_208] : memref<128x256xf32, #tpu.memory_space<vmem>>, vector<128x256xf32>
    %c4_209 = arith.constant 4 : index
    %c0_210 = arith.constant 0 : index
    %c0_211 = arith.constant 0 : index
    %257 = vector.load %arg5[%c4_209, %c0_210, %c0_211] : memref<9x128x256xbf16, #tpu.memory_space<vmem>>, vector<1x128x256xbf16>
    %258 = vector.shape_cast %257 : vector<1x128x256xbf16> to vector<128x256xbf16>
    %cst_212 = arith.constant dense<0.000000e+00> : vector<128x256xf32>
    %259 = tpu.matmul %255, %258, %cst_212 {dimension_numbers = #tpu.dot_dimension_numbers<[1], [0], [0], [1], [0, 0, 1, 1], [], []>} : vector<128x128xbf16>, vector<128x256xbf16>, vector<128x256xf32> -> vector<128x256xf32>
    %260 = arith.addf %256, %259 : vector<128x256xf32>
    %c0_213 = arith.constant 0 : index
    %c0_214 = arith.constant 0 : index
    %261 = vector.load %arg9[%c0_213, %c0_214] : memref<128x256xf32, #tpu.memory_space<vmem>>, vector<128x256xf32>
    tpu.vector_store %arg9[%c0_213, %c0_214], %260 {strides = array<i32>} : memref<128x256xf32, #tpu.memory_space<vmem>>, vector<128x256xf32>,
    %262 = vector.extract_strided_slice %245 {offsets = [0, 2, 0], sizes = [8, 16, 128], strides = [1, 1, 1]} : vector<8x18x128xbf16> to vector<8x16x128xbf16>
    %263 = vector.shape_cast %262 : vector<8x16x128xbf16> to vector<128x128xbf16>
    %c0_215 = arith.constant 0 : index
    %c0_216 = arith.constant 0 : index
    %264 = vector.load %arg9[%c0_215, %c0_216] : memref<128x256xf32, #tpu.memory_space<vmem>>, vector<128x256xf32>
    %c5_217 = arith.constant 5 : index
    %c0_218 = arith.constant 0 : index
    %c0_219 = arith.constant 0 : index
    %265 = vector.load %arg5[%c5_217, %c0_218, %c0_219] : memref<9x128x256xbf16, #tpu.memory_space<vmem>>, vector<1x128x256xbf16>
    %266 = vector.shape_cast %265 : vector<1x128x256xbf16> to vector<128x256xbf16>
    %cst_220 = arith.constant dense<0.000000e+00> : vector<128x256xf32>
    %267 = tpu.matmul %263, %266, %cst_220 {dimension_numbers = #tpu.dot_dimension_numbers<[1], [0], [0], [1], [0, 0, 1, 1], [], []>} : vector<128x128xbf16>, vector<128x256xbf16>, vector<128x256xf32> -> vector<128x256xf32>
    %268 = arith.addf %264, %267 : vector<128x256xf32>
    %c0_221 = arith.constant 0 : index
    %c0_222 = arith.constant 0 : index
    %269 = vector.load %arg9[%c0_221, %c0_222] : memref<128x256xf32, #tpu.memory_space<vmem>>, vector<128x256xf32>
    tpu.vector_store %arg9[%c0_221, %c0_222], %268 {strides = array<i32>} : memref<128x256xf32, #tpu.memory_space<vmem>>, vector<128x256xf32>,
    %c10 = arith.constant 10 : index
    %c0_223 = arith.constant 0 : index
    %c0_224 = arith.constant 0 : index
    %270 = vector.load %arg8[%c10, %c0_223, %c0_224] : memref<18x18x128xbf16, #tpu.memory_space<vmem>>, vector<8x18x128xbf16>
    %271 = vector.extract_strided_slice %270 {offsets = [0, 0, 0], sizes = [8, 16, 128], strides = [1, 1, 1]} : vector<8x18x128xbf16> to vector<8x16x128xbf16>
    %272 = vector.shape_cast %271 : vector<8x16x128xbf16> to vector<128x128xbf16>
    %c0_225 = arith.constant 0 : index
    %c0_226 = arith.constant 0 : index
    %273 = vector.load %arg9[%c0_225, %c0_226] : memref<128x256xf32, #tpu.memory_space<vmem>>, vector<128x256xf32>
    %c6_227 = arith.constant 6 : index
    %c0_228 = arith.constant 0 : index
    %c0_229 = arith.constant 0 : index
    %274 = vector.load %arg5[%c6_227, %c0_228, %c0_229] : memref<9x128x256xbf16, #tpu.memory_space<vmem>>, vector<1x128x256xbf16>
    %275 = vector.shape_cast %274 : vector<1x128x256xbf16> to vector<128x256xbf16>
    %cst_230 = arith.constant dense<0.000000e+00> : vector<128x256xf32>
    %276 = tpu.matmul %272, %275, %cst_230 {dimension_numbers = #tpu.dot_dimension_numbers<[1], [0], [0], [1], [0, 0, 1, 1], [], []>} : vector<128x128xbf16>, vector<128x256xbf16>, vector<128x256xf32> -> vector<128x256xf32>
    %277 = arith.addf %273, %276 : vector<128x256xf32>
    %c0_231 = arith.constant 0 : index
    %c0_232 = arith.constant 0 : index
    %278 = vector.load %arg9[%c0_231, %c0_232] : memref<128x256xf32, #tpu.memory_space<vmem>>, vector<128x256xf32>
    tpu.vector_store %arg9[%c0_231, %c0_232], %277 {strides = array<i32>} : memref<128x256xf32, #tpu.memory_space<vmem>>, vector<128x256xf32>,
    %279 = vector.extract_strided_slice %270 {offsets = [0, 1, 0], sizes = [8, 16, 128], strides = [1, 1, 1]} : vector<8x18x128xbf16> to vector<8x16x128xbf16>
    %280 = vector.shape_cast %279 : vector<8x16x128xbf16> to vector<128x128xbf16>
    %c0_233 = arith.constant 0 : index
    %c0_234 = arith.constant 0 : index
    %281 = vector.load %arg9[%c0_233, %c0_234] : memref<128x256xf32, #tpu.memory_space<vmem>>, vector<128x256xf32>
    %c7_235 = arith.constant 7 : index
    %c0_236 = arith.constant 0 : index
    %c0_237 = arith.constant 0 : index
    %282 = vector.load %arg5[%c7_235, %c0_236, %c0_237] : memref<9x128x256xbf16, #tpu.memory_space<vmem>>, vector<1x128x256xbf16>
    %283 = vector.shape_cast %282 : vector<1x128x256xbf16> to vector<128x256xbf16>
    %cst_238 = arith.constant dense<0.000000e+00> : vector<128x256xf32>
    %284 = tpu.matmul %280, %283, %cst_238 {dimension_numbers = #tpu.dot_dimension_numbers<[1], [0], [0], [1], [0, 0, 1, 1], [], []>} : vector<128x128xbf16>, vector<128x256xbf16>, vector<128x256xf32> -> vector<128x256xf32>
    %285 = arith.addf %281, %284 : vector<128x256xf32>
    %c0_239 = arith.constant 0 : index
    %c0_240 = arith.constant 0 : index
    %286 = vector.load %arg9[%c0_239, %c0_240] : memref<128x256xf32, #tpu.memory_space<vmem>>, vector<128x256xf32>
    tpu.vector_store %arg9[%c0_239, %c0_240], %285 {strides = array<i32>} : memref<128x256xf32, #tpu.memory_space<vmem>>, vector<128x256xf32>,
    %287 = vector.extract_strided_slice %270 {offsets = [0, 2, 0], sizes = [8, 16, 128], strides = [1, 1, 1]} : vector<8x18x128xbf16> to vector<8x16x128xbf16>
    %288 = vector.shape_cast %287 : vector<8x16x128xbf16> to vector<128x128xbf16>
    %c0_241 = arith.constant 0 : index
    %c0_242 = arith.constant 0 : index
    %289 = vector.load %arg9[%c0_241, %c0_242] : memref<128x256xf32, #tpu.memory_space<vmem>>, vector<128x256xf32>
    %c8_243 = arith.constant 8 : index
    %c0_244 = arith.constant 0 : index
    %c0_245 = arith.constant 0 : index
    %290 = vector.load %arg5[%c8_243, %c0_244, %c0_245] : memref<9x128x256xbf16, #tpu.memory_space<vmem>>, vector<1x128x256xbf16>
    %291 = vector.shape_cast %290 : vector<1x128x256xbf16> to vector<128x256xbf16>
    %cst_246 = arith.constant dense<0.000000e+00> : vector<128x256xf32>
    %292 = tpu.matmul %288, %291, %cst_246 {dimension_numbers = #tpu.dot_dimension_numbers<[1], [0], [0], [1], [0, 0, 1, 1], [], []>} : vector<128x128xbf16>, vector<128x256xbf16>, vector<128x256xf32> -> vector<128x256xf32>
    %293 = arith.addf %289, %292 : vector<128x256xf32>
    %c0_247 = arith.constant 0 : index
    %c0_248 = arith.constant 0 : index
    %294 = vector.load %arg9[%c0_247, %c0_248] : memref<128x256xf32, #tpu.memory_space<vmem>>, vector<128x256xf32>
    tpu.vector_store %arg9[%c0_247, %c0_248], %293 {strides = array<i32>} : memref<128x256xf32, #tpu.memory_space<vmem>>, vector<128x256xf32>,
    %c0_249 = arith.constant 0 : index
    %c0_250 = arith.constant 0 : index
    %295 = vector.load %arg9[%c0_249, %c0_250] : memref<128x256xf32, #tpu.memory_space<vmem>>, vector<16x256xf32>
    %296 = arith.truncf %295 : vector<16x256xf32> to vector<16x256xbf16>
    %c0_251 = arith.constant 0 : index
    %c8_252 = arith.constant 8 : index
    %c0_253 = arith.constant 0 : index
    %c0_254 = arith.constant 0 : index
    %297 = vector.load %arg6[%c0_251, %c8_252, %c0_253, %c0_254] : memref<1x16x16x256xbf16, #tpu.memory_space<vmem>>, vector<1x1x16x256xbf16>
    %298 = vector.shape_cast %297 : vector<1x1x16x256xbf16> to vector<16x256xbf16>
    %299 = vector.shape_cast %296 : vector<16x256xbf16> to vector<1x1x16x256xbf16>
    tpu.vector_store %arg6[%c0_251, %c8_252, %c0_253, %c0_254], %299 {strides = array<i32>} : memref<1x16x16x256xbf16, #tpu.memory_space<vmem>>, vector<1x1x16x256xbf16>,
    %cst_255 = arith.constant dense<0.000000e+00> : vector<256xf32>
    %300 = vector.multi_reduction <add>, %295, %cst_255 [0] : vector<16x256xf32> to vector<256xf32>
    %301 = vector.shape_cast %300 : vector<256xf32> to vector<1x256xf32>
    %302 = arith.addf %213, %301 : vector<1x256xf32>
    %303 = arith.mulf %295, %295 : vector<16x256xf32>
    %cst_256 = arith.constant dense<0.000000e+00> : vector<256xf32>
    %304 = vector.multi_reduction <add>, %303, %cst_256 [0] : vector<16x256xf32> to vector<256xf32>
    %305 = vector.shape_cast %304 : vector<256xf32> to vector<1x256xf32>
    %306 = arith.addf %217, %305 : vector<1x256xf32>
    %c16_257 = arith.constant 16 : index
    %c0_258 = arith.constant 0 : index
    %307 = vector.load %arg9[%c16_257, %c0_258] : memref<128x256xf32, #tpu.memory_space<vmem>>, vector<16x256xf32>
    %308 = arith.truncf %307 : vector<16x256xf32> to vector<16x256xbf16>
    %c0_259 = arith.constant 0 : index
    %c9_260 = arith.constant 9 : index
    %c0_261 = arith.constant 0 : index
    %c0_262 = arith.constant 0 : index
    %309 = vector.load %arg6[%c0_259, %c9_260, %c0_261, %c0_262] : memref<1x16x16x256xbf16, #tpu.memory_space<vmem>>, vector<1x1x16x256xbf16>
    %310 = vector.shape_cast %309 : vector<1x1x16x256xbf16> to vector<16x256xbf16>
    %311 = vector.shape_cast %308 : vector<16x256xbf16> to vector<1x1x16x256xbf16>
    tpu.vector_store %arg6[%c0_259, %c9_260, %c0_261, %c0_262], %311 {strides = array<i32>} : memref<1x16x16x256xbf16, #tpu.memory_space<vmem>>, vector<1x1x16x256xbf16>,
    %cst_263 = arith.constant dense<0.000000e+00> : vector<256xf32>
    %312 = vector.multi_reduction <add>, %307, %cst_263 [0] : vector<16x256xf32> to vector<256xf32>
    %313 = vector.shape_cast %312 : vector<256xf32> to vector<1x256xf32>
    %314 = arith.addf %302, %313 : vector<1x256xf32>
    %315 = arith.mulf %307, %307 : vector<16x256xf32>
    %cst_264 = arith.constant dense<0.000000e+00> : vector<256xf32>
    %316 = vector.multi_reduction <add>, %315, %cst_264 [0] : vector<16x256xf32> to vector<256xf32>
    %317 = vector.shape_cast %316 : vector<256xf32> to vector<1x256xf32>
    %318 = arith.addf %306, %317 : vector<1x256xf32>
    %c32_265 = arith.constant 32 : index
    %c0_266 = arith.constant 0 : index
    %319 = vector.load %arg9[%c32_265, %c0_266] : memref<128x256xf32, #tpu.memory_space<vmem>>, vector<16x256xf32>
    %320 = arith.truncf %319 : vector<16x256xf32> to vector<16x256xbf16>
    %c0_267 = arith.constant 0 : index
    %c10_268 = arith.constant 10 : index
    %c0_269 = arith.constant 0 : index
    %c0_270 = arith.constant 0 : index
    %321 = vector.load %arg6[%c0_267, %c10_268, %c0_269, %c0_270] : memref<1x16x16x256xbf16, #tpu.memory_space<vmem>>, vector<1x1x16x256xbf16>
    %322 = vector.shape_cast %321 : vector<1x1x16x256xbf16> to vector<16x256xbf16>
    %323 = vector.shape_cast %320 : vector<16x256xbf16> to vector<1x1x16x256xbf16>
    tpu.vector_store %arg6[%c0_267, %c10_268, %c0_269, %c0_270], %323 {strides = array<i32>} : memref<1x16x16x256xbf16, #tpu.memory_space<vmem>>, vector<1x1x16x256xbf16>,
    %cst_271 = arith.constant dense<0.000000e+00> : vector<256xf32>
    %324 = vector.multi_reduction <add>, %319, %cst_271 [0] : vector<16x256xf32> to vector<256xf32>
    %325 = vector.shape_cast %324 : vector<256xf32> to vector<1x256xf32>
    %326 = arith.addf %314, %325 : vector<1x256xf32>
    %327 = arith.mulf %319, %319 : vector<16x256xf32>
    %cst_272 = arith.constant dense<0.000000e+00> : vector<256xf32>
    %328 = vector.multi_reduction <add>, %327, %cst_272 [0] : vector<16x256xf32> to vector<256xf32>
    %329 = vector.shape_cast %328 : vector<256xf32> to vector<1x256xf32>
    %330 = arith.addf %318, %329 : vector<1x256xf32>
    %c48_273 = arith.constant 48 : index
    %c0_274 = arith.constant 0 : index
    %331 = vector.load %arg9[%c48_273, %c0_274] : memref<128x256xf32, #tpu.memory_space<vmem>>, vector<16x256xf32>
    %332 = arith.truncf %331 : vector<16x256xf32> to vector<16x256xbf16>
    %c0_275 = arith.constant 0 : index
    %c11 = arith.constant 11 : index
    %c0_276 = arith.constant 0 : index
    %c0_277 = arith.constant 0 : index
    %333 = vector.load %arg6[%c0_275, %c11, %c0_276, %c0_277] : memref<1x16x16x256xbf16, #tpu.memory_space<vmem>>, vector<1x1x16x256xbf16>
    %334 = vector.shape_cast %333 : vector<1x1x16x256xbf16> to vector<16x256xbf16>
    %335 = vector.shape_cast %332 : vector<16x256xbf16> to vector<1x1x16x256xbf16>
    tpu.vector_store %arg6[%c0_275, %c11, %c0_276, %c0_277], %335 {strides = array<i32>} : memref<1x16x16x256xbf16, #tpu.memory_space<vmem>>, vector<1x1x16x256xbf16>,
    %cst_278 = arith.constant dense<0.000000e+00> : vector<256xf32>
    %336 = vector.multi_reduction <add>, %331, %cst_278 [0] : vector<16x256xf32> to vector<256xf32>
    %337 = vector.shape_cast %336 : vector<256xf32> to vector<1x256xf32>
    %338 = arith.addf %326, %337 : vector<1x256xf32>
    %339 = arith.mulf %331, %331 : vector<16x256xf32>
    %cst_279 = arith.constant dense<0.000000e+00> : vector<256xf32>
    %340 = vector.multi_reduction <add>, %339, %cst_279 [0] : vector<16x256xf32> to vector<256xf32>
    %341 = vector.shape_cast %340 : vector<256xf32> to vector<1x256xf32>
    %342 = arith.addf %330, %341 : vector<1x256xf32>
    %c64_280 = arith.constant 64 : index
    %c0_281 = arith.constant 0 : index
    %343 = vector.load %arg9[%c64_280, %c0_281] : memref<128x256xf32, #tpu.memory_space<vmem>>, vector<16x256xf32>
    %344 = arith.truncf %343 : vector<16x256xf32> to vector<16x256xbf16>
    %c0_282 = arith.constant 0 : index
    %c12 = arith.constant 12 : index
    %c0_283 = arith.constant 0 : index
    %c0_284 = arith.constant 0 : index
    %345 = vector.load %arg6[%c0_282, %c12, %c0_283, %c0_284] : memref<1x16x16x256xbf16, #tpu.memory_space<vmem>>, vector<1x1x16x256xbf16>
    %346 = vector.shape_cast %345 : vector<1x1x16x256xbf16> to vector<16x256xbf16>
    %347 = vector.shape_cast %344 : vector<16x256xbf16> to vector<1x1x16x256xbf16>
    tpu.vector_store %arg6[%c0_282, %c12, %c0_283, %c0_284], %347 {strides = array<i32>} : memref<1x16x16x256xbf16, #tpu.memory_space<vmem>>, vector<1x1x16x256xbf16>,
    %cst_285 = arith.constant dense<0.000000e+00> : vector<256xf32>
    %348 = vector.multi_reduction <add>, %343, %cst_285 [0] : vector<16x256xf32> to vector<256xf32>
    %349 = vector.shape_cast %348 : vector<256xf32> to vector<1x256xf32>
    %350 = arith.addf %338, %349 : vector<1x256xf32>
    %351 = arith.mulf %343, %343 : vector<16x256xf32>
    %cst_286 = arith.constant dense<0.000000e+00> : vector<256xf32>
    %352 = vector.multi_reduction <add>, %351, %cst_286 [0] : vector<16x256xf32> to vector<256xf32>
    %353 = vector.shape_cast %352 : vector<256xf32> to vector<1x256xf32>
    %354 = arith.addf %342, %353 : vector<1x256xf32>
    %c80_287 = arith.constant 80 : index
    %c0_288 = arith.constant 0 : index
    %355 = vector.load %arg9[%c80_287, %c0_288] : memref<128x256xf32, #tpu.memory_space<vmem>>, vector<16x256xf32>
    %356 = arith.truncf %355 : vector<16x256xf32> to vector<16x256xbf16>
    %c0_289 = arith.constant 0 : index
    %c13 = arith.constant 13 : index
    %c0_290 = arith.constant 0 : index
    %c0_291 = arith.constant 0 : index
    %357 = vector.load %arg6[%c0_289, %c13, %c0_290, %c0_291] : memref<1x16x16x256xbf16, #tpu.memory_space<vmem>>, vector<1x1x16x256xbf16>
    %358 = vector.shape_cast %357 : vector<1x1x16x256xbf16> to vector<16x256xbf16>
    %359 = vector.shape_cast %356 : vector<16x256xbf16> to vector<1x1x16x256xbf16>
    tpu.vector_store %arg6[%c0_289, %c13, %c0_290, %c0_291], %359 {strides = array<i32>} : memref<1x16x16x256xbf16, #tpu.memory_space<vmem>>, vector<1x1x16x256xbf16>,
    %cst_292 = arith.constant dense<0.000000e+00> : vector<256xf32>
    %360 = vector.multi_reduction <add>, %355, %cst_292 [0] : vector<16x256xf32> to vector<256xf32>
    %361 = vector.shape_cast %360 : vector<256xf32> to vector<1x256xf32>
    %362 = arith.addf %350, %361 : vector<1x256xf32>
    %363 = arith.mulf %355, %355 : vector<16x256xf32>
    %cst_293 = arith.constant dense<0.000000e+00> : vector<256xf32>
    %364 = vector.multi_reduction <add>, %363, %cst_293 [0] : vector<16x256xf32> to vector<256xf32>
    %365 = vector.shape_cast %364 : vector<256xf32> to vector<1x256xf32>
    %366 = arith.addf %354, %365 : vector<1x256xf32>
    %c96_294 = arith.constant 96 : index
    %c0_295 = arith.constant 0 : index
    %367 = vector.load %arg9[%c96_294, %c0_295] : memref<128x256xf32, #tpu.memory_space<vmem>>, vector<16x256xf32>
    %368 = arith.truncf %367 : vector<16x256xf32> to vector<16x256xbf16>
    %c0_296 = arith.constant 0 : index
    %c14 = arith.constant 14 : index
    %c0_297 = arith.constant 0 : index
    %c0_298 = arith.constant 0 : index
    %369 = vector.load %arg6[%c0_296, %c14, %c0_297, %c0_298] : memref<1x16x16x256xbf16, #tpu.memory_space<vmem>>, vector<1x1x16x256xbf16>
    %370 = vector.shape_cast %369 : vector<1x1x16x256xbf16> to vector<16x256xbf16>
    %371 = vector.shape_cast %368 : vector<16x256xbf16> to vector<1x1x16x256xbf16>
    tpu.vector_store %arg6[%c0_296, %c14, %c0_297, %c0_298], %371 {strides = array<i32>} : memref<1x16x16x256xbf16, #tpu.memory_space<vmem>>, vector<1x1x16x256xbf16>,
    %cst_299 = arith.constant dense<0.000000e+00> : vector<256xf32>
    %372 = vector.multi_reduction <add>, %367, %cst_299 [0] : vector<16x256xf32> to vector<256xf32>
    %373 = vector.shape_cast %372 : vector<256xf32> to vector<1x256xf32>
    %374 = arith.addf %362, %373 : vector<1x256xf32>
    %375 = arith.mulf %367, %367 : vector<16x256xf32>
    %cst_300 = arith.constant dense<0.000000e+00> : vector<256xf32>
    %376 = vector.multi_reduction <add>, %375, %cst_300 [0] : vector<16x256xf32> to vector<256xf32>
    %377 = vector.shape_cast %376 : vector<256xf32> to vector<1x256xf32>
    %378 = arith.addf %366, %377 : vector<1x256xf32>
    %c112_301 = arith.constant 112 : index
    %c0_302 = arith.constant 0 : index
    %379 = vector.load %arg9[%c112_301, %c0_302] : memref<128x256xf32, #tpu.memory_space<vmem>>, vector<16x256xf32>
    %380 = arith.truncf %379 : vector<16x256xf32> to vector<16x256xbf16>
    %c0_303 = arith.constant 0 : index
    %c15 = arith.constant 15 : index
    %c0_304 = arith.constant 0 : index
    %c0_305 = arith.constant 0 : index
    %381 = vector.load %arg6[%c0_303, %c15, %c0_304, %c0_305] : memref<1x16x16x256xbf16, #tpu.memory_space<vmem>>, vector<1x1x16x256xbf16>
    %382 = vector.shape_cast %381 : vector<1x1x16x256xbf16> to vector<16x256xbf16>
    %383 = vector.shape_cast %380 : vector<16x256xbf16> to vector<1x1x16x256xbf16>
    tpu.vector_store %arg6[%c0_303, %c15, %c0_304, %c0_305], %383 {strides = array<i32>} : memref<1x16x16x256xbf16, #tpu.memory_space<vmem>>, vector<1x1x16x256xbf16>,
    %cst_306 = arith.constant dense<0.000000e+00> : vector<256xf32>
    %384 = vector.multi_reduction <add>, %379, %cst_306 [0] : vector<16x256xf32> to vector<256xf32>
    %385 = vector.shape_cast %384 : vector<256xf32> to vector<1x256xf32>
    %386 = arith.addf %374, %385 : vector<1x256xf32>
    %387 = arith.mulf %379, %379 : vector<16x256xf32>
    %cst_307 = arith.constant dense<0.000000e+00> : vector<256xf32>
    %388 = vector.multi_reduction <add>, %387, %cst_307 [0] : vector<16x256xf32> to vector<256xf32>
    %389 = vector.shape_cast %388 : vector<256xf32> to vector<1x256xf32>
    %390 = arith.addf %378, %389 : vector<1x256xf32>
    %cst_308 = arith.constant 0.000000e+00 : f32
    %391 = vector.broadcast %cst_308 : f32 to vector<6x256xf32>
    %392 = tpu.concatenate %386, %390, %391 in 0 : vector<1x256xf32>, vector<1x256xf32>, vector<6x256xf32> -> vector<8x256xf32>
    %c0_309 = arith.constant 0 : index
    %c0_310 = arith.constant 0 : index
    %c0_311 = arith.constant 0 : index
    %393 = vector.load %arg7[%c0_309, %c0_310, %c0_311] : memref<1x8x256xf32, #tpu.memory_space<vmem>>, vector<1x8x256xf32>
    %394 = vector.shape_cast %393 : vector<1x8x256xf32> to vector<8x256xf32>
    %395 = vector.shape_cast %392 : vector<8x256xf32> to vector<1x8x256xf32>
    tpu.vector_store %arg7[%c0_309, %c0_310, %c0_311], %395 {strides = array<i32>} : memref<1x8x256xf32, #tpu.memory_space<vmem>>, vector<1x8x256xf32>,
    return
  }
  func.func @transform_0(%arg0: i32, %arg1: i32) -> (i32, i32, i32, i32) {
    %c0_i32 = arith.constant 0 : i32
    %c0_i32_0 = arith.constant 0 : i32
    %c0_i32_1 = arith.constant 0 : i32
    %c0_i32_2 = arith.constant 0 : i32
    return %arg1, %c0_i32, %c0_i32_0, %c0_i32_1 : i32, i32, i32, i32
  }
  func.func @transform_1(%arg0: i32, %arg1: i32) -> (i32, i32) {
    %c0_i32 = arith.constant 0 : i32
    %c0_i32_0 = arith.constant 0 : i32
    %c0_i32_1 = arith.constant 0 : i32
    return %c0_i32, %c0_i32_0 : i32, i32
  }
  func.func @transform_2(%arg0: i32, %arg1: i32) -> (i32, i32) {
    %c0_i32 = arith.constant 0 : i32
    %c0_i32_0 = arith.constant 0 : i32
    %c0_i32_1 = arith.constant 0 : i32
    return %c0_i32, %c0_i32_0 : i32, i32
  }
  func.func @transform_3(%arg0: i32, %arg1: i32) -> (i32, i32, i32) {
    %c0_i32 = arith.constant 0 : i32
    %c0_i32_0 = arith.constant 0 : i32
    %c0_i32_1 = arith.constant 0 : i32
    return %c0_i32, %c0_i32_0, %arg0 : i32, i32, i32
  }
  func.func @transform_4(%arg0: i32, %arg1: i32) -> (i32, i32, i32, i32) {
    %c0_i32 = arith.constant 0 : i32
    %c0_i32_0 = arith.constant 0 : i32
    %c0_i32_1 = arith.constant 0 : i32
    return %arg1, %c0_i32, %c0_i32_0, %arg0 : i32, i32, i32, i32
  }
  func.func @transform_5(%arg0: i32, %arg1: i32) -> (i32, i32, i32) {
    %c0_i32 = arith.constant 0 : i32
    %c0_i32_0 = arith.constant 0 : i32
    return %arg1, %c0_i32, %arg0 : i32, i32, i32
  }
}

</mosaic_0001>

<llo_original>
// kernel: tpu_custom_call.1
$region0: #{tpu_custom_call.1}
  #allocation0 [shape = 'u32[]', space=smem, size = 0x4, offset = 0x4, fixed_abs, tag = 'smem constant byte address 0x4 - core index']
  #allocation1 [shape = 'u32[144,128]{1,0:T(1,128)}', space=vmem, size = 0x12000, scoped, tag = 'internal scratch']
  #allocation2 [shape = 'bf16[18,18,128]{2,1,0:T(8,128)(2,1)}', space=vmem, size = 0x1b000, scoped, tag = 'scratch operand']
  #allocation3 [shape = 'f32[128,256]{1,0:T(8,128)}', space=vmem, size = 0x20000, scoped, tag = 'scratch operand']
  %s0 = inlined_call_operand.hbm [shape: bf16[2,16,16,128], index: 0, kind: input, shape index: {}]
  %s1 = inlined_call_operand.vmem [shape: f32[1,128], index: 1, kind: input, shape index: {}]
  %s2 = inlined_call_operand.vmem [shape: f32[1,128], index: 2, kind: input, shape index: {}]
  %s3 = inlined_call_operand.hbm [shape: bf16[9,128,256], index: 3, kind: input, shape index: {}]
  %s4 = inlined_call_operand.hbm [shape: bf16[2,16,16,256], index: 4, kind: output, shape index: {0}]
  %s5 = inlined_call_operand.hbm [shape: f32[2,8,256], index: 5, kind: output, shape index: {1}]
  %6 = xla_tuple %s4, %s5
  %s7 = sld [smem:[#allocation0]]
  $region65: #{tpu_custom_call.1} parent=0
    _
  %s9 = ssub.s32 1, %s7
  %s10 = scalar_select 0, %s9, %s7
  $region1: #{tpu_custom_call.1} parent=0
    #allocation4 [shape = 'u8[131072]{0}', space=vmem, size = 0x20000, scoped, tag = 'input window, operand 0']
    #allocation5 [shape = 's32[2]{0}', space=sflag, size = 0x8, scoped, tag = 'scoped memory for tpu_custom_call.1']
    #allocation6 [shape = 's32[2]{0}', space=sflag, size = 0x8, scoped, tag = 'scoped memory for tpu_custom_call.1']
    #allocation7 [shape = 'u8[589824]{0}', space=vmem, size = 0x90000, scoped, tag = 'input window, operand 3, single buffered']
    #allocation8 [shape = 's32[1]{0}', space=sflag, size = 0x4, scoped, tag = 'scoped memory for tpu_custom_call.1']
    #allocation9 [shape = 'u8[262144]{0}', space=vmem, size = 0x40000, scoped, tag = 'output window, operand 0']
    #allocation10 [shape = 'u8[16384]{0}', space=vmem, size = 0x4000, scoped, tag = 'output window, operand 1']
    #allocation11 [shape = 's32[2]{0}', space=sflag, size = 0x8, scoped, tag = 'scoped memory for tpu_custom_call.1']
    %11 = vsyncpa [#allocation5], 0
    %s12 = scalar_lea.sflag [#allocation5], 1
    %13 = vsyncpa %s12, 0
    %14 = vsyncpa [#allocation8], 0
    %15 = vsyncpa [#allocation6], 0
    %s16 = scalar_lea.sflag [#allocation6], 1
    %17 = vsyncpa %s16, 0
    %18 = vsyncpa [#allocation11], 0
    %s19 = scalar_lea.sflag [#allocation11], 1
    %20 = vsyncpa %s19, 0
    loop: start=0, step=1, limit=4
    $region2: #{tpu_custom_call.1} parent=1 // loop_pre_header
      _
    $region3: #{tpu_custom_call.1} parent=1 // loop_header
      %s22 = sphi 0, %s26
      %p23 = scmp.ge.s32.totalorder %s22, 4
      %s29 = sphi 0, %s41
      %s30 = sphi 0, %s37
      %s31 = sphi 0, %s29
      %s32 = sphi 0, %s30
      %s33 = sphi 0, %s31
      %s34 = sphi 0, %s32
      %s44 = sphi 0, %s46
      %s47 = sphi 0, %s44
      %s48 = sphi 0, %s47
      %s64 = sphi 0, %s48
      %s68 = sphi 0, %s68
      %s70 = sphi 0, %s68
      %s71 = sphi 0, %s70
      %s85 = sphi 0, %s71
      %s89 = sphi 0, %s89
      %s91 = sphi 0, %s89
      %s92 = sphi 0, %s91
      %s106 = sphi 0, %s92
      %s112 = sphi 0, %s114
      %s115 = sphi 0, %s112
      %s116 = sphi 0, %s115
      %s132 = sphi 0, %s116
      %s140 = sphi 0, %s142
      %s143 = sphi 0, %s140
      %s144 = sphi 0, %s143
      %s160 = sphi 0, %s144
      %s168 = sphi 0, %s170
      %s171 = sphi 0, %s168
      %s172 = sphi 0, %s171
      %s188 = sphi 0, %s172
    $region4: #{tpu_custom_call.1} parent=1 // loop_header_branch
      %25 = sbr.rel (%p23) target = $region8
    $region5: #{tpu_custom_call.1} parent=1 // loop_body
      %s27 = ssub.s32 %s22, 1
      %s28 = ssub.s32 %s22, 2
      %s35 = sadd.s32 1, %s30
      %p36 = scmp.ge.s32.totalorder %s35, 2
      %s37 = scalar_select %p36, 0, %s35
      %s38 = sadd.s32 1, %s29
      %s39 = scalar_select %p36, %s38, %s29
      %p40 = scmp.ge.s32.totalorder %s39, 1
      %s41 = scalar_select %p40, 0, %s39
      %s42 = ssub.s32 %s30, %s37
      %p43 = scmp.eq.s32.totalorder %s42, 0
      %s45 = sadd.s32 %s44, 1
      %s46 = scalar_select %p43, %s44, %s45
      %p49 = pneg %p43
      %p50 = scmp.eq.s32.totalorder %s22, 1
      %p51 = por %p49, %p50
      %p52 = scmp.ne.s32.totalorder %s44, %s47
      %p53 = scmp.eq.s32.totalorder %s22, 0
      %p54 = por %p52, %p53
      %p55 = scmp.ne.s32.totalorder %s44, %s47
      %p56 = scmp.eq.s32.totalorder %s27, 1
      %p57 = por %p55, %p56
      %p58 = scmp.ne.s32.totalorder %s47, %s48
      %p59 = scmp.eq.s32.totalorder %s27, 0
      %p60 = por %p58, %p59
      %p61 = scmp.ne.s32.totalorder %s47, %s48
      %p62 = scmp.eq.s32.totalorder %s28, 1
      %p63 = por %p61, %p62
      %p65 = scmp.ne.s32.totalorder %s48, %s64
      %p66 = scmp.eq.s32.totalorder %s28, 0
      %p67 = por %p65, %p66
      %s69 = sadd.s32 %s68, 1
      %p72 = scmp.eq.s32.totalorder %s22, 1
      %p73 = scmp.ne.s32.totalorder %s68, %s70
      %p74 = scmp.eq.s32.totalorder %s22, 0
      %p75 = por %p73, %p74
      %p76 = scmp.ne.s32.totalorder %s68, %s70
      %p77 = scmp.eq.s32.totalorder %s27, 1
      %p78 = por %p76, %p77
      %p79 = scmp.ne.s32.totalorder %s70, %s71
      %p80 = scmp.eq.s32.totalorder %s27, 0
      %p81 = por %p79, %p80
      %p82 = scmp.ne.s32.totalorder %s70, %s71
      %p83 = scmp.eq.s32.totalorder %s28, 1
      %p84 = por %p82, %p83
      %p86 = scmp.ne.s32.totalorder %s71, %s85
      %p87 = scmp.eq.s32.totalorder %s28, 0
      %p88 = por %p86, %p87
      %s90 = sadd.s32 %s89, 1
      %p93 = scmp.eq.s32.totalorder %s22, 1
      %p94 = scmp.ne.s32.totalorder %s89, %s91
      %p95 = scmp.eq.s32.totalorder %s22, 0
      %p96 = por %p94, %p95
      %p97 = scmp.ne.s32.totalorder %s89, %s91
      %p98 = scmp.eq.s32.totalorder %s27, 1
      %p99 = por %p97, %p98
      %p100 = scmp.ne.s32.totalorder %s91, %s92
      %p101 = scmp.eq.s32.totalorder %s27, 0
      %p102 = por %p100, %p101
      %p103 = scmp.ne.s32.totalorder %s91, %s92
      %p104 = scmp.eq.s32.totalorder %s28, 1
      %p105 = por %p103, %p104
      %p107 = scmp.ne.s32.totalorder %s92, %s106
      %p108 = scmp.eq.s32.totalorder %s28, 0
      %p109 = por %p107, %p108
      %s110 = ssub.s32 %s29, %s41
      %p111 = scmp.eq.s32.totalorder %s110, 0
      %s113 = sadd.s32 %s112, 1
      %s114 = scalar_select %p111, %s112, %s113
      %p117 = pneg %p111
      %p118 = scmp.eq.s32.totalorder %s22, 1
      %p119 = por %p117, %p118
      %p120 = scmp.ne.s32.totalorder %s112, %s115
      %p121 = scmp.eq.s32.totalorder %s22, 0
      %p122 = por %p120, %p121
      %p123 = scmp.ne.s32.totalorder %s112, %s115
      %p124 = scmp.eq.s32.totalorder %s27, 1
      %p125 = por %p123, %p124
      %p126 = scmp.ne.s32.totalorder %s115, %s116
      %p127 = scmp.eq.s32.totalorder %s27, 0
      %p128 = por %p126, %p127
      %p129 = scmp.ne.s32.totalorder %s115, %s116
      %p130 = scmp.eq.s32.totalorder %s28, 1
      %p131 = por %p129, %p130
      %p133 = scmp.ne.s32.totalorder %s116, %s132
      %p134 = scmp.eq.s32.totalorder %s28, 0
      %p135 = por %p133, %p134
      %s136 = ssub.s32 %s30, %s37
      %s137 = ssub.s32 %s29, %s41
      %s138 = sor.u32 %s136, %s137
      %p139 = scmp.eq.s32.totalorder %s138, 0
      %s141 = sadd.s32 %s140, 1
      %s142 = scalar_select %p139, %s140, %s141
      %p145 = pneg %p139
      %p146 = scmp.eq.s32.totalorder %s22, 1
      %p147 = por %p145, %p146
      %p148 = scmp.ne.s32.totalorder %s140, %s143
      %p149 = scmp.eq.s32.totalorder %s22, 0
      %p150 = por %p148, %p149
      %p151 = scmp.ne.s32.totalorder %s140, %s143
      %p152 = scmp.eq.s32.totalorder %s27, 1
      %p153 = por %p151, %p152
      %p154 = scmp.ne.s32.totalorder %s143, %s144
      %p155 = scmp.eq.s32.totalorder %s27, 0
      %p156 = por %p154, %p155
      %p157 = scmp.ne.s32.totalorder %s143, %s144
      %p158 = scmp.eq.s32.totalorder %s28, 1
      %p159 = por %p157, %p158
      %p161 = scmp.ne.s32.totalorder %s144, %s160
      %p162 = scmp.eq.s32.totalorder %s28, 0
      %p163 = por %p161, %p162
      %s164 = ssub.s32 %s30, %s37
      %s165 = ssub.s32 %s29, %s41
      %s166 = sor.u32 %s164, %s165
      %p167 = scmp.eq.s32.totalorder %s166, 0
      %s169 = sadd.s32 %s168, 1
      %s170 = scalar_select %p167, %s168, %s169
      %p173 = pneg %p167
      %p174 = scmp.eq.s32.totalorder %s22, 1
      %p175 = por %p173, %p174
      %p176 = scmp.ne.s32.totalorder %s168, %s171
      %p177 = scmp.eq.s32.totalorder %s22, 0
      %p178 = por %p176, %p177
      %p179 = scmp.ne.s32.totalorder %s168, %s171
      %p180 = scmp.eq.s32.totalorder %s27, 1
      %p181 = por %p179, %p180
      %p182 = scmp.ne.s32.totalorder %s171, %s172
      %p183 = scmp.eq.s32.totalorder %s27, 0
      %p184 = por %p182, %p183
      %p185 = scmp.ne.s32.totalorder %s171, %s172
      %p186 = scmp.eq.s32.totalorder %s28, 1
      %p187 = por %p185, %p186
      %p189 = scmp.ne.s32.totalorder %s172, %s188
      %p190 = scmp.eq.s32.totalorder %s28, 0
      %p191 = por %p189, %p190
      %p192 = scmp.le.s32.totalorder 1, %s22
      %p193 = scmp.lt.s32.totalorder %s22, 3
      %p194 = pnand %p192, %p193
      %p195 = pneg %p194
      // Predicated region
      $region9: #{tpu_custom_call.1} parent=5 // pred_check
        _
      $region10: #{tpu_custom_call.1} parent=5 // pred_check_branch
        %197 = sbr.rel (%p194) target = $region12
      $region11: #{tpu_custom_call.1} parent=5 // pred_region
        %s198 = ssub.s32 %s22, 1
        // Predicated region
        $region13: #{tpu_custom_call.1} parent=11 // pred_check
          %p199 = pneg %p81
        $region14: #{tpu_custom_call.1} parent=11 // pred_check_branch
          %201 = sbr.rel (%p199) target = $region16
        $region15: #{tpu_custom_call.1} parent=11 // pred_region
          _
        $region16: #{tpu_custom_call.1} parent=11 // pred_fallthru
          _
        // Predicated region
        $region17: #{tpu_custom_call.1} parent=11 // pred_check
          %p202 = pneg %p102
        $region18: #{tpu_custom_call.1} parent=11 // pred_check_branch
          %204 = sbr.rel (%p202) target = $region20
        $region19: #{tpu_custom_call.1} parent=11 // pred_region
          _
        $region20: #{tpu_custom_call.1} parent=11 // pred_fallthru
          _
        // Predicated region
        $region21: #{tpu_custom_call.1} parent=11 // pred_check
          %p205 = pneg %p128
        $region22: #{tpu_custom_call.1} parent=11 // pred_check_branch
          %207 = sbr.rel (%p205) target = $region24
        $region23: #{tpu_custom_call.1} parent=11 // pred_region
          %s208 = smul.u32 2, %s31
          %s210 = ssub.s32 18432, 18432
          %211 = vsyncadd [#allocation8], %s210
          %s212 = smul.addr %s208, 64
          %s213 = scalar_lea.hbm %s3, %s212
          %s214 = sshll.u32 [#allocation7], 4
          %s215 = int_to_ptr.vmem [resolvable:$true] %s214
          %220 = dma.hbm_to_vmem [thread:$0]  %s213, 18432, %s215, [#allocation8], 128, 128, 8
        $region24: #{tpu_custom_call.1} parent=11 // pred_fallthru
          _
      $region12: #{tpu_custom_call.1} parent=5 // pred_fallthru
        _
      %p221 = scmp.lt.s32.totalorder %s22, 2
      // Predicated region
      $region25: #{tpu_custom_call.1} parent=5 // pred_check
        %p222 = pneg %p221
      $region26: #{tpu_custom_call.1} parent=5 // pred_check_branch
        %224 = sbr.rel (%p222) target = $region28
      $region27: #{tpu_custom_call.1} parent=5 // pred_region
        // Predicated region
        $region29: #{tpu_custom_call.1} parent=27 // pred_check
          %p225 = pneg %p54
        $region30: #{tpu_custom_call.1} parent=27 // pred_check_branch
          %227 = sbr.rel (%p225) target = $region32
        $region31: #{tpu_custom_call.1} parent=27 // pred_region
          %s228 = sand.u32 %s44, 1
          %s229 = scalar_lea.sflag [#allocation5], %s228
          %s230 = sand.u32 %s44, 1
          %s231 = smul.addr %s230, 128
          %s232 = scalar_lea.vmem [#allocation4], %s231
          %s234 = ssub.s32 2048, 2048
          %235 = vsyncadd %s229, %s234
          %s236 = smul.addr %s30, 32
          %s237 = smul.addr %s236, 64
          %s238 = scalar_lea.hbm %s0, %s237
          %s239 = sshll.u32 %s232, 4
          %s240 = int_to_ptr.vmem [resolvable:$true] %s239
          %245 = dma.hbm_to_vmem [thread:$0]  %s238, 2048, %s240, %s229, 64, 64, 4
        $region32: #{tpu_custom_call.1} parent=27 // pred_fallthru
          _
      $region28: #{tpu_custom_call.1} parent=5 // pred_fallthru
        _
      %p246 = scmp.le.s32.totalorder 1, %s22
      %p247 = scmp.lt.s32.totalorder %s22, 3
      %p248 = pnand %p246, %p247
      %p249 = pneg %p248
      // Predicated region
      $region33: #{tpu_custom_call.1} parent=5 // pred_check
        _
      $region34: #{tpu_custom_call.1} parent=5 // pred_check_branch
        %251 = sbr.rel (%p248) target = $region36
      $region35: #{tpu_custom_call.1} parent=5 // pred_region
        %s252 = ssub.s32 %s22, 1
        %s253 = sand.u32 %s47, 1
        %s254 = scalar_lea.sflag [#allocation5], %s253
        %s255 = sand.u32 %s47, 1
        %s256 = smul.addr %s255, 128
        %s257 = scalar_lea.vmem [#allocation4], %s256
        // Predicated region
        $region37: #{tpu_custom_call.1} parent=35 // pred_check
          %p258 = pneg %p60
        $region38: #{tpu_custom_call.1} parent=35 // pred_check_branch
          %260 = sbr.rel (%p258) target = $region40
        $region39: #{tpu_custom_call.1} parent=35 // pred_region
          %261 = dma.done %s254, 2048
        $region40: #{tpu_custom_call.1} parent=35 // pred_fallthru
          _
        // Predicated region
        $region41: #{tpu_custom_call.1} parent=35 // pred_check
          %p262 = pneg %p128
        $region42: #{tpu_custom_call.1} parent=35 // pred_check_branch
          %264 = sbr.rel (%p262) target = $region44
        $region43: #{tpu_custom_call.1} parent=35 // pred_region
          %265 = dma.done [#allocation8], 18432
        $region44: #{tpu_custom_call.1} parent=35 // pred_fallthru
          _
        %s266 = sand.u32 %s47, 1
        %s267 = scalar_lea.sflag [#allocation5], %s266
        %s268 = sand.u32 %s47, 1
        %s269 = smul.addr %s268, 128
        %s270 = scalar_lea.vmem [#allocation4], %s269
        %p271 = pneg %p60
        %p272 = pneg %p57
        %p273 = pneg %p81
        %p274 = pneg %p78
        %p275 = pneg %p102
        %p276 = pneg %p99
        %p277 = pneg %p128
        %p278 = pneg %p125
        %p279 = pneg %p156
        %p280 = pneg %p153
        %s281 = sand.u32 %s143, 1
        %s282 = scalar_lea.sflag [#allocation6], %s281
        %s283 = sand.u32 %s143, 1
        %s284 = smul.addr %s283, 256
        %s285 = scalar_lea.vmem [#allocation9], %s284
        %p286 = pneg %p184
        %p287 = pneg %p181
        %s288 = sand.u32 %s171, 1
        %s289 = scalar_lea.sflag [#allocation11], %s288
        %s290 = sand.u32 %s171, 1
        %s291 = smul.addr %s290, 16
        %s292 = scalar_lea.vmem [#allocation10], %s291
        %s293 = smul.u32 2, %s31
        %s294 = smul.u32 2, %s31
        %s295 = smul.u32 2, %s31
        %297 = vst [vmem:[#allocation2] sm:$0xf] 0
        %298 = vst [vmem:[#allocation2 + $0x4] sm:$0xf] 0
        %299 = vst [vmem:[#allocation2 + $0x8] sm:$0x1] 0
        %s300 = scalar_lea.vmem [#allocation2], 204
        %301 = vst [vmem:[%s300] sm:$0xf] 0
        %302 = vst [vmem:[%s300 + $0x4] sm:$0xf] 0
        %303 = vst [vmem:[%s300 + $0x8] sm:$0x1] 0
        %v304 = vld [vmem:[%s257] sm:$0xf]
        %v305 = vld [vmem:[%s257 + $0x4] sm:$0xf]
        %v306 = vld [vmem:[%s257 + $0x8] sm:$0xf]
        %v307 = vld [vmem:[%s257 + $0xc] sm:$0xf]
        %v308 = vld [vmem:[%s257 + $0x10] sm:$0xf]
        %v309 = vld [vmem:[%s257 + $0x14] sm:$0xf]
        %v310 = vld [vmem:[%s257 + $0x18] sm:$0xf]
        %v311 = vld [vmem:[%s257 + $0x1c] sm:$0xf]
        %v312 = vld [vmem:[%s257 + $0x20] sm:$0xf]
        %v313 = vld [vmem:[%s257 + $0x24] sm:$0xf]
        %v314 = vld [vmem:[%s257 + $0x28] sm:$0xf]
        %v315 = vld [vmem:[%s257 + $0x2c] sm:$0xf]
        %v316 = vld [vmem:[%s257 + $0x30] sm:$0xf]
        %v317 = vld [vmem:[%s257 + $0x34] sm:$0xf]
        %v318 = vld [vmem:[%s257 + $0x38] sm:$0xf]
        %v319 = vld [vmem:[%s257 + $0x3c] sm:$0xf]
        %v320 = vunpack.c.l.bf16 %v304
        %v321 = vunpack.c.l.bf16 %v305
        %v322 = vunpack.c.l.bf16 %v306
        %v323 = vunpack.c.l.bf16 %v307
        %v324 = vunpack.c.l.bf16 %v308
        %v325 = vunpack.c.l.bf16 %v309
        %v326 = vunpack.c.l.bf16 %v310
        %v327 = vunpack.c.l.bf16 %v311
        %v328 = vunpack.c.l.bf16 %v312
        %v329 = vunpack.c.l.bf16 %v313
        %v330 = vunpack.c.l.bf16 %v314
        %v331 = vunpack.c.l.bf16 %v315
        %v332 = vunpack.c.l.bf16 %v316
        %v333 = vunpack.c.l.bf16 %v317
        %v334 = vunpack.c.l.bf16 %v318
        %v335 = vunpack.c.l.bf16 %v319
        %v336 = vld [vmem:[%s1] sm:$0x1]
        %v338 = vlaneseq
        %v339 = vshrl.u32 %v338, 7
        %v340 = vsub.s32 0, %v339
        %v341 = vrot.slane %v336, %v340
        %v343 = vmul.f32 %v320, %v341
        %v344 = vmul.f32 %v321, %v341
        %v345 = vmul.f32 %v322, %v341
        %v346 = vmul.f32 %v323, %v341
        %v347 = vmul.f32 %v324, %v341
        %v348 = vmul.f32 %v325, %v341
        %v349 = vmul.f32 %v326, %v341
        %v350 = vmul.f32 %v327, %v341
        %v351 = vmul.f32 %v328, %v341
        %v352 = vmul.f32 %v329, %v341
        %v353 = vmul.f32 %v330, %v341
        %v354 = vmul.f32 %v331, %v341
        %v355 = vmul.f32 %v332, %v341
        %v356 = vmul.f32 %v333, %v341
        %v357 = vmul.f32 %v334, %v341
        %v358 = vmul.f32 %v335, %v341
        %v359 = vld [vmem:[%s2] sm:$0x1]
        %v361 = vlaneseq
        %v362 = vshrl.u32 %v361, 7
        %v363 = vsub.s32 0, %v362
        %v364 = vrot.slane %v359, %v363
        %v366 = vadd.f32 %v343, %v364
        %v367 = vadd.f32 %v344, %v364
        %v368 = vadd.f32 %v345, %v364
        %v369 = vadd.f32 %v346, %v364
        %v370 = vadd.f32 %v347, %v364
        %v371 = vadd.f32 %v348, %v364
        %v372 = vadd.f32 %v349, %v364
        %v373 = vadd.f32 %v350, %v364
        %v374 = vadd.f32 %v351, %v364
        %v375 = vadd.f32 %v352, %v364
        %v376 = vadd.f32 %v353, %v364
        %v377 = vadd.f32 %v354, %v364
        %v378 = vadd.f32 %v355, %v364
        %v379 = vadd.f32 %v356, %v364
        %v380 = vadd.f32 %v357, %v364
        %v381 = vadd.f32 %v358, %v364
        %v382 = vpack.c.bf16 %v367, %v366
        %v383 = vpack.c.bf16 %v369, %v368
        %v384 = vpack.c.bf16 %v371, %v370
        %v385 = vpack.c.bf16 %v373, %v372
        %v386 = vpack.c.bf16 %v375, %v374
        %v387 = vpack.c.bf16 %v377, %v376
        %v388 = vpack.c.bf16 %v379, %v378
        %v389 = vpack.c.bf16 %v381, %v380
        %v391 = vshrl.u32 %v382, 16
        %v393 = vrot.slane %v391, 7
        %v394 = vshll.u32 %v382, 16
        %v396 = vor.u32 %v393, %v394
        %v398 = vshrl.u32 %v383, 16
        %v400 = vrot.slane %v398, 7
        %v401 = vshll.u32 %v383, 16
        %v403 = vor.u32 %v400, %v401
        %v405 = vshrl.u32 %v384, 16
        %v407 = vrot.slane %v405, 7
        %v408 = vshll.u32 %v384, 16
        %v410 = vor.u32 %v407, %v408
        %v412 = vshrl.u32 %v385, 16
        %v414 = vrot.slane %v412, 7
        %v415 = vshll.u32 %v385, 16
        %v417 = vor.u32 %v414, %v415
        %v419 = vshrl.u32 %v386, 16
        %v421 = vrot.slane %v419, 7
        %v422 = vshll.u32 %v386, 16
        %v424 = vor.u32 %v421, %v422
        %v426 = vshrl.u32 %v387, 16
        %v428 = vrot.slane %v426, 7
        %v429 = vshll.u32 %v387, 16
        %v431 = vor.u32 %v428, %v429
        %v433 = vshrl.u32 %v388, 16
        %v435 = vrot.slane %v433, 7
        %v436 = vshll.u32 %v388, 16
        %v438 = vor.u32 %v435, %v436
        %v440 = vshrl.u32 %v389, 16
        %v442 = vrot.slane %v440, 7
        %v443 = vshll.u32 %v389, 16
        %v445 = vor.u32 %v442, %v443
        %vm462 = vcmask 1040384
        %vm463 = vsmask.f32 256
        %vm464 = vmand %vm462, %vm463
        %v465 = vsel %vm464, 0, %v396
        %v466 = vsel %vm464, 0, %v403
        %v467 = vsel %vm464, 0, %v410
        %v468 = vsel %vm464, 0, %v417
        %v469 = vsel %vm464, 0, %v424
        %v470 = vsel %vm464, 0, %v431
        %v471 = vsel %vm464, 0, %v438
        %v472 = vsel %vm464, 0, %v445
        %v473 = vsel %vm464, %v393, 0
        %v474 = vsel %vm464, %v400, 0
        %v475 = vsel %vm464, %v407, 0
        %v476 = vsel %vm464, %v414, 0
        %v477 = vsel %vm464, %v421, 0
        %v478 = vsel %vm464, %v428, 0
        %v479 = vsel %vm464, %v435, 0
        %v480 = vsel %vm464, %v442, 0
        %v497 = vunpack.c.l.b16 %v465
        %v498 = vunpack.c.h.b16 %v465
        %v499 = vunpack.c.l.b16 %v473
        %v500 = vunpack.c.l.b16 %v466
        %v501 = vunpack.c.h.b16 %v466
        %v502 = vunpack.c.l.b16 %v474
        %v503 = vunpack.c.l.b16 %v467
        %v504 = vunpack.c.h.b16 %v467
        %v505 = vunpack.c.l.b16 %v475
        %v506 = vunpack.c.l.b16 %v468
        %v507 = vunpack.c.h.b16 %v468
        %v508 = vunpack.c.l.b16 %v476
        %v509 = vunpack.c.l.b16 %v469
        %v510 = vunpack.c.h.b16 %v469
        %v511 = vunpack.c.l.b16 %v477
        %v512 = vunpack.c.l.b16 %v470
        %v513 = vunpack.c.h.b16 %v470
        %v514 = vunpack.c.l.b16 %v478
        %v515 = vunpack.c.l.b16 %v471
        %v516 = vunpack.c.h.b16 %v471
        %v517 = vunpack.c.l.b16 %v479
        %v518 = vunpack.c.l.b16 %v472
        %v519 = vunpack.c.h.b16 %v472
        %v520 = vunpack.c.l.b16 %v480
        %v521 = vpack.c.b16 %v497, %v497
        %v522 = vpack.c.b16 %v498, %v498
        %v523 = vpack.c.b16 %v499, %v499
        %v524 = vpack.c.b16 %v500, %v500
        %v525 = vpack.c.b16 %v501, %v501
        %v526 = vpack.c.b16 %v502, %v502
        %v527 = vpack.c.b16 %v503, %v503
        %v528 = vpack.c.b16 %v504, %v504
        %v529 = vpack.c.b16 %v505, %v505
        %v530 = vpack.c.b16 %v506, %v506
        %v531 = vpack.c.b16 %v507, %v507
        %v532 = vpack.c.b16 %v508, %v508
        %v533 = vpack.c.b16 %v509, %v509
        %v534 = vpack.c.b16 %v510, %v510
        %v535 = vpack.c.b16 %v511, %v511
        %v536 = vpack.c.b16 %v512, %v512
        %v537 = vpack.c.b16 %v513, %v513
        %v538 = vpack.c.b16 %v514, %v514
        %v539 = vpack.c.b16 %v515, %v515
        %v540 = vpack.c.b16 %v516, %v516
        %v541 = vpack.c.b16 %v517, %v517
        %v542 = vpack.c.b16 %v518, %v518
        %v543 = vpack.c.b16 %v519, %v519
        %v544 = vpack.c.b16 %v520, %v520
        %s569 = scalar_lea.vmem [#allocation2], 12
        %570 = vst [vmem:[%s569] sm:$0xf] %v521
        %571 = vst [vmem:[%s569 + $0x4] sm:$0xf] %v522
        %572 = vst [vmem:[%s569 + $0x8] sm:$0x1] %v523
        %573 = vst [vmem:[%s569 + $0xc] sm:$0xf] %v524
        %574 = vst [vmem:[%s569 + $0x10] sm:$0xf] %v525
        %575 = vst [vmem:[%s569 + $0x14] sm:$0x1] %v526
        %576 = vst [vmem:[%s569 + $0x18] sm:$0xf] %v527
        %577 = vst [vmem:[%s569 + $0x1c] sm:$0xf] %v528
        %578 = vst [vmem:[%s569 + $0x20] sm:$0x1] %v529
        %579 = vst [vmem:[%s569 + $0x24] sm:$0xf] %v530
        %580 = vst [vmem:[%s569 + $0x28] sm:$0xf] %v531
        %581 = vst [vmem:[%s569 + $0x2c] sm:$0x1] %v532
        %582 = vst [vmem:[%s569 + $0x30] sm:$0xf] %v533
        %583 = vst [vmem:[%s569 + $0x34] sm:$0xf] %v534
        %584 = vst [vmem:[%s569 + $0x38] sm:$0x1] %v535
        %585 = vst [vmem:[%s569 + $0x3c] sm:$0xf] %v536
        %586 = vst [vmem:[%s569 + $0x40] sm:$0xf] %v537
        %587 = vst [vmem:[%s569 + $0x44] sm:$0x1] %v538
        %588 = vst [vmem:[%s569 + $0x48] sm:$0xf] %v539
        %589 = vst [vmem:[%s569 + $0x4c] sm:$0xf] %v540
        %590 = vst [vmem:[%s569 + $0x50] sm:$0x1] %v541
        %591 = vst [vmem:[%s569 + $0x54] sm:$0xf] %v542
        %592 = vst [vmem:[%s569 + $0x58] sm:$0xf] %v543
        %593 = vst [vmem:[%s569 + $0x5c] sm:$0x1] %v544
        %s594 = scalar_lea.vmem %s257, 64 [#allocation4]
        %v595 = vld [vmem:[%s594] sm:$0xf]
        %v596 = vld [vmem:[%s594 + $0x4] sm:$0xf]
        %v597 = vld [vmem:[%s594 + $0x8] sm:$0xf]
        %v598 = vld [vmem:[%s594 + $0xc] sm:$0xf]
        %v599 = vld [vmem:[%s594 + $0x10] sm:$0xf]
        %v600 = vld [vmem:[%s594 + $0x14] sm:$0xf]
        %v601 = vld [vmem:[%s594 + $0x18] sm:$0xf]
        %v602 = vld [vmem:[%s594 + $0x1c] sm:$0xf]
        %v603 = vld [vmem:[%s594 + $0x20] sm:$0xf]
        %v604 = vld [vmem:[%s594 + $0x24] sm:$0xf]
        %v605 = vld [vmem:[%s594 + $0x28] sm:$0xf]
        %v606 = vld [vmem:[%s594 + $0x2c] sm:$0xf]
        %v607 = vld [vmem:[%s594 + $0x30] sm:$0xf]
        %v608 = vld [vmem:[%s594 + $0x34] sm:$0xf]
        %v609 = vld [vmem:[%s594 + $0x38] sm:$0xf]
        %v610 = vld [vmem:[%s594 + $0x3c] sm:$0xf]
        %v611 = vunpack.c.l.bf16 %v595
        %v612 = vunpack.c.l.bf16 %v596
        %v613 = vunpack.c.l.bf16 %v597
        %v614 = vunpack.c.l.bf16 %v598
        %v615 = vunpack.c.l.bf16 %v599
        %v616 = vunpack.c.l.bf16 %v600
        %v617 = vunpack.c.l.bf16 %v601
        %v618 = vunpack.c.l.bf16 %v602
        %v619 = vunpack.c.l.bf16 %v603
        %v620 = vunpack.c.l.bf16 %v604
        %v621 = vunpack.c.l.bf16 %v605
        %v622 = vunpack.c.l.bf16 %v606
        %v623 = vunpack.c.l.bf16 %v607
        %v624 = vunpack.c.l.bf16 %v608
        %v625 = vunpack.c.l.bf16 %v609
        %v626 = vunpack.c.l.bf16 %v610
        %v627 = vld [vmem:[%s1] sm:$0x1]
        %v629 = vlaneseq
        %v630 = vshrl.u32 %v629, 7
        %v631 = vsub.s32 0, %v630
        %v632 = vrot.slane %v627, %v631
        %v634 = vmul.f32 %v611, %v632
        %v635 = vmul.f32 %v612, %v632
        %v636 = vmul.f32 %v613, %v632
        %v637 = vmul.f32 %v614, %v632
        %v638 = vmul.f32 %v615, %v632
        %v639 = vmul.f32 %v616, %v632
        %v640 = vmul.f32 %v617, %v632
        %v641 = vmul.f32 %v618, %v632
        %v642 = vmul.f32 %v619, %v632
        %v643 = vmul.f32 %v620, %v632
        %v644 = vmul.f32 %v621, %v632
        %v645 = vmul.f32 %v622, %v632
        %v646 = vmul.f32 %v623, %v632
        %v647 = vmul.f32 %v624, %v632
        %v648 = vmul.f32 %v625, %v632
        %v649 = vmul.f32 %v626, %v632
        %v650 = vld [vmem:[%s2] sm:$0x1]
        %v652 = vlaneseq
        %v653 = vshrl.u32 %v652, 7
        %v654 = vsub.s32 0, %v653
        %v655 = vrot.slane %v650, %v654
        %v657 = vadd.f32 %v634, %v655
        %v658 = vadd.f32 %v635, %v655
        %v659 = vadd.f32 %v636, %v655
        %v660 = vadd.f32 %v637, %v655
        %v661 = vadd.f32 %v638, %v655
        %v662 = vadd.f32 %v639, %v655
        %v663 = vadd.f32 %v640, %v655
        %v664 = vadd.f32 %v641, %v655
        %v665 = vadd.f32 %v642, %v655
        %v666 = vadd.f32 %v643, %v655
        %v667 = vadd.f32 %v644, %v655
        %v668 = vadd.f32 %v645, %v655
        %v669 = vadd.f32 %v646, %v655
        %v670 = vadd.f32 %v647, %v655
        %v671 = vadd.f32 %v648, %v655
        %v672 = vadd.f32 %v649, %v655
        %v673 = vpack.c.bf16 %v658, %v657
        %v674 = vpack.c.bf16 %v660, %v659
        %v675 = vpack.c.bf16 %v662, %v661
        %v676 = vpack.c.bf16 %v664, %v663
        %v677 = vpack.c.bf16 %v666, %v665
        %v678 = vpack.c.bf16 %v668, %v667
        %v679 = vpack.c.bf16 %v670, %v669
        %v680 = vpack.c.bf16 %v672, %v671
        %v682 = vshrl.u32 %v673, 16
        %v684 = vrot.slane %v682, 7
        %v685 = vshll.u32 %v673, 16
        %v687 = vor.u32 %v684, %v685
        %v689 = vshrl.u32 %v674, 16
        %v691 = vrot.slane %v689, 7
        %v692 = vshll.u32 %v674, 16
        %v694 = vor.u32 %v691, %v692
        %v696 = vshrl.u32 %v675, 16
        %v698 = vrot.slane %v696, 7
        %v699 = vshll.u32 %v675, 16
        %v701 = vor.u32 %v698, %v699
        %v703 = vshrl.u32 %v676, 16
        %v705 = vrot.slane %v703, 7
        %v706 = vshll.u32 %v676, 16
        %v708 = vor.u32 %v705, %v706
        %v710 = vshrl.u32 %v677, 16
        %v712 = vrot.slane %v710, 7
        %v713 = vshll.u32 %v677, 16
        %v715 = vor.u32 %v712, %v713
        %v717 = vshrl.u32 %v678, 16
        %v719 = vrot.slane %v717, 7
        %v720 = vshll.u32 %v678, 16
        %v722 = vor.u32 %v719, %v720
        %v724 = vshrl.u32 %v679, 16
        %v726 = vrot.slane %v724, 7
        %v727 = vshll.u32 %v679, 16
        %v729 = vor.u32 %v726, %v727
        %v731 = vshrl.u32 %v680, 16
        %v733 = vrot.slane %v731, 7
        %v734 = vshll.u32 %v680, 16
        %v736 = vor.u32 %v733, %v734
        %v753 = vsel %vm464, 0, %v687
        %v754 = vsel %vm464, 0, %v694
        %v755 = vsel %vm464, 0, %v701
        %v756 = vsel %vm464, 0, %v708
        %v757 = vsel %vm464, 0, %v715
        %v758 = vsel %vm464, 0, %v722
        %v759 = vsel %vm464, 0, %v729
        %v760 = vsel %vm464, 0, %v736
        %v761 = vsel %vm464, %v684, 0
        %v762 = vsel %vm464, %v691, 0
        %v763 = vsel %vm464, %v698, 0
        %v764 = vsel %vm464, %v705, 0
        %v765 = vsel %vm464, %v712, 0
        %v766 = vsel %vm464, %v719, 0
        %v767 = vsel %vm464, %v726, 0
        %v768 = vsel %vm464, %v733, 0
        %v785 = vunpack.c.l.b16 %v753
        %v786 = vunpack.c.h.b16 %v753
        %v787 = vunpack.c.l.b16 %v761
        %v788 = vunpack.c.l.b16 %v754
        %v789 = vunpack.c.h.b16 %v754
        %v790 = vunpack.c.l.b16 %v762
        %v791 = vunpack.c.l.b16 %v755
        %v792 = vunpack.c.h.b16 %v755
        %v793 = vunpack.c.l.b16 %v763
        %v794 = vunpack.c.l.b16 %v756
        %v795 = vunpack.c.h.b16 %v756
        %v796 = vunpack.c.l.b16 %v764
        %v797 = vunpack.c.l.b16 %v757
        %v798 = vunpack.c.h.b16 %v757
        %v799 = vunpack.c.l.b16 %v765
        %v800 = vunpack.c.l.b16 %v758
        %v801 = vunpack.c.h.b16 %v758
        %v802 = vunpack.c.l.b16 %v766
        %v803 = vunpack.c.l.b16 %v759
        %v804 = vunpack.c.h.b16 %v759
        %v805 = vunpack.c.l.b16 %v767
        %v806 = vunpack.c.l.b16 %v760
        %v807 = vunpack.c.h.b16 %v760
        %v808 = vunpack.c.l.b16 %v768
        %v809 = vpack.c.b16 %v785, %v785
        %v810 = vpack.c.b16 %v786, %v786
        %v811 = vpack.c.b16 %v787, %v787
        %v812 = vpack.c.b16 %v788, %v788
        %v813 = vpack.c.b16 %v789, %v789
        %v814 = vpack.c.b16 %v790, %v790
        %v815 = vpack.c.b16 %v791, %v791
        %v816 = vpack.c.b16 %v792, %v792
        %v817 = vpack.c.b16 %v793, %v793
        %v818 = vpack.c.b16 %v794, %v794
        %v819 = vpack.c.b16 %v795, %v795
        %v820 = vpack.c.b16 %v796, %v796
        %v821 = vpack.c.b16 %v797, %v797
        %v822 = vpack.c.b16 %v798, %v798
        %v823 = vpack.c.b16 %v799, %v799
        %v824 = vpack.c.b16 %v800, %v800
        %v825 = vpack.c.b16 %v801, %v801
        %v826 = vpack.c.b16 %v802, %v802
        %v827 = vpack.c.b16 %v803, %v803
        %v828 = vpack.c.b16 %v804, %v804
        %v829 = vpack.c.b16 %v805, %v805
        %v830 = vpack.c.b16 %v806, %v806
        %v831 = vpack.c.b16 %v807, %v807
        %v832 = vpack.c.b16 %v808, %v808
        %s857 = scalar_lea.vmem [#allocation2], 108
        %858 = vst [vmem:[%s857] sm:$0xf] %v809
        %859 = vst [vmem:[%s857 + $0x4] sm:$0xf] %v810
        %860 = vst [vmem:[%s857 + $0x8] sm:$0x1] %v811
        %861 = vst [vmem:[%s857 + $0xc] sm:$0xf] %v812
        %862 = vst [vmem:[%s857 + $0x10] sm:$0xf] %v813
        %863 = vst [vmem:[%s857 + $0x14] sm:$0x1] %v814
        %864 = vst [vmem:[%s857 + $0x18] sm:$0xf] %v815
        %865 = vst [vmem:[%s857 + $0x1c] sm:$0xf] %v816
        %866 = vst [vmem:[%s857 + $0x20] sm:$0x1] %v817
        %867 = vst [vmem:[%s857 + $0x24] sm:$0xf] %v818
        %868 = vst [vmem:[%s857 + $0x28] sm:$0xf] %v819
        %869 = vst [vmem:[%s857 + $0x2c] sm:$0x1] %v820
        %870 = vst [vmem:[%s857 + $0x30] sm:$0xf] %v821
        %871 = vst [vmem:[%s857 + $0x34] sm:$0xf] %v822
        %872 = vst [vmem:[%s857 + $0x38] sm:$0x1] %v823
        %873 = vst [vmem:[%s857 + $0x3c] sm:$0xf] %v824
        %874 = vst [vmem:[%s857 + $0x40] sm:$0xf] %v825
        %875 = vst [vmem:[%s857 + $0x44] sm:$0x1] %v826
        %876 = vst [vmem:[%s857 + $0x48] sm:$0xf] %v827
        %877 = vst [vmem:[%s857 + $0x4c] sm:$0xf] %v828
        %878 = vst [vmem:[%s857 + $0x50] sm:$0x1] %v829
        %879 = vst [vmem:[%s857 + $0x54] sm:$0xf] %v830
        %880 = vst [vmem:[%s857 + $0x58] sm:$0xf] %v831
        %881 = vst [vmem:[%s857 + $0x5c] sm:$0x1] %v832
        %882 = vst [vmem:[#allocation3] sm:$0xff] 0.0
        %883 = vst [vmem:[#allocation3 + $0x8] sm:$0xff] 0.0
        %884 = vst [vmem:[#allocation3 + $0x10] sm:$0xff] 0.0
        %885 = vst [vmem:[#allocation3 + $0x18] sm:$0xff] 0.0
        %886 = vst [vmem:[#allocation3 + $0x20] sm:$0xff] 0.0
        %887 = vst [vmem:[#allocation3 + $0x28] sm:$0xff] 0.0
        %888 = vst [vmem:[#allocation3 + $0x30] sm:$0xff] 0.0
        %889 = vst [vmem:[#allocation3 + $0x38] sm:$0xff] 0.0
        %890 = vst [vmem:[#allocation3 + $0x40] sm:$0xff] 0.0
        %891 = vst [vmem:[#allocation3 + $0x48] sm:$0xff] 0.0
        %892 = vst [vmem:[#allocation3 + $0x50] sm:$0xff] 0.0
        %893 = vst [vmem:[#allocation3 + $0x58] sm:$0xff] 0.0
        %894 = vst [vmem:[#allocation3 + $0x60] sm:$0xff] 0.0
        %895 = vst [vmem:[#allocation3 + $0x68] sm:$0xff] 0.0
        %896 = vst [vmem:[#allocation3 + $0x70] sm:$0xff] 0.0
        %897 = vst [vmem:[#allocation3 + $0x78] sm:$0xff] 0.0
        %898 = vst [vmem:[#allocation3 + $0x80] sm:$0xff] 0.0
        %899 = vst [vmem:[#allocation3 + $0x88] sm:$0xff] 0.0
        %900 = vst [vmem:[#allocation3 + $0x90] sm:$0xff] 0.0
        %901 = vst [vmem:[#allocation3 + $0x98] sm:$0xff] 0.0
        %902 = vst [vmem:[#allocation3 + $0xa0] sm:$0xff] 0.0
        %903 = vst [vmem:[#allocation3 + $0xa8] sm:$0xff] 0.0
        %904 = vst [vmem:[#allocation3 + $0xb0] sm:$0xff] 0.0
        %905 = vst [vmem:[#allocation3 + $0xb8] sm:$0xff] 0.0
        %906 = vst [vmem:[#allocation3 + $0xc0] sm:$0xff] 0.0
        %907 = vst [vmem:[#allocation3 + $0xc8] sm:$0xff] 0.0
        %908 = vst [vmem:[#allocation3 + $0xd0] sm:$0xff] 0.0
        %909 = vst [vmem:[#allocation3 + $0xd8] sm:$0xff] 0.0
        %910 = vst [vmem:[#allocation3 + $0xe0] sm:$0xff] 0.0
        %911 = vst [vmem:[#allocation3 + $0xe8] sm:$0xff] 0.0
        %912 = vst [vmem:[#allocation3 + $0xf0] sm:$0xff] 0.0
        %913 = vst [vmem:[#allocation3 + $0xf8] sm:$0xff] 0.0
        %v914 = vld [vmem:[#allocation2] sm:$0xf]
        %v915 = vld [vmem:[#allocation2 + $0x4] sm:$0xf]
        %v916 = vld [vmem:[#allocation2 + $0x8] sm:$0x1]
        %v917 = vld [vmem:[#allocation2 + $0xc] sm:$0xf]
        %v918 = vld [vmem:[#allocation2 + $0x10] sm:$0xf]
        %v919 = vld [vmem:[#allocation2 + $0x14] sm:$0x1]
        %v920 = vld [vmem:[#allocation2 + $0x18] sm:$0xf]
        %v921 = vld [vmem:[#allocation2 + $0x1c] sm:$0xf]
        %v922 = vld [vmem:[#allocation2 + $0x20] sm:$0x1]
        %v923 = vld [vmem:[#allocation2 + $0x24] sm:$0xf]
        %v924 = vld [vmem:[#allocation2 + $0x28] sm:$0xf]
        %v925 = vld [vmem:[#allocation2 + $0x2c] sm:$0x1]
        %v926 = vld [vmem:[#allocation2 + $0x30] sm:$0xf]
        %v927 = vld [vmem:[#allocation2 + $0x34] sm:$0xf]
        %v928 = vld [vmem:[#allocation2 + $0x38] sm:$0x1]
        %v929 = vld [vmem:[#allocation2 + $0x3c] sm:$0xf]
        %v930 = vld [vmem:[#allocation2 + $0x40] sm:$0xf]
        %v931 = vld [vmem:[#allocation2 + $0x44] sm:$0x1]
        %v932 = vld [vmem:[#allocation2 + $0x48] sm:$0xf]
        %v933 = vld [vmem:[#allocation2 + $0x4c] sm:$0xf]
        %v934 = vld [vmem:[#allocation2 + $0x50] sm:$0x1]
        %v935 = vld [vmem:[#allocation2 + $0x54] sm:$0xf]
        %v936 = vld [vmem:[#allocation2 + $0x58] sm:$0xf]
        %v937 = vld [vmem:[#allocation2 + $0x5c] sm:$0x1]
        %v938 = vld [vmem:[#allocation3] sm:$0xff]
        %v939 = vld [vmem:[#allocation3 + $0x8] sm:$0xff]
        %v940 = vld [vmem:[#allocation3 + $0x10] sm:$0xff]
        %v941 = vld [vmem:[#allocation3 + $0x18] sm:$0xff]
        %v942 = vld [vmem:[#allocation3 + $0x20] sm:$0xff]
        %v943 = vld [vmem:[#allocation3 + $0x28] sm:$0xff]
        %v944 = vld [vmem:[#allocation3 + $0x30] sm:$0xff]
        %v945 = vld [vmem:[#allocation3 + $0x38] sm:$0xff]
        %v946 = vld [vmem:[#allocation3 + $0x40] sm:$0xff]
        %v947 = vld [vmem:[#allocation3 + $0x48] sm:$0xff]
        %v948 = vld [vmem:[#allocation3 + $0x50] sm:$0xff]
        %v949 = vld [vmem:[#allocation3 + $0x58] sm:$0xff]
        %v950 = vld [vmem:[#allocation3 + $0x60] sm:$0xff]
        %v951 = vld [vmem:[#allocation3 + $0x68] sm:$0xff]
        %v952 = vld [vmem:[#allocation3 + $0x70] sm:$0xff]
        %v953 = vld [vmem:[#allocation3 + $0x78] sm:$0xff]
        %v954 = vld [vmem:[#allocation3 + $0x80] sm:$0xff]
        %v955 = vld [vmem:[#allocation3 + $0x88] sm:$0xff]
        %v956 = vld [vmem:[#allocation3 + $0x90] sm:$0xff]
        %v957 = vld [vmem:[#allocation3 + $0x98] sm:$0xff]
        %v958 = vld [vmem:[#allocation3 + $0xa0] sm:$0xff]
        %v959 = vld [vmem:[#allocation3 + $0xa8] sm:$0xff]
        %v960 = vld [vmem:[#allocation3 + $0xb0] sm:$0xff]
        %v961 = vld [vmem:[#allocation3 + $0xb8] sm:$0xff]
        %v962 = vld [vmem:[#allocation3 + $0xc0] sm:$0xff]
        %v963 = vld [vmem:[#allocation3 + $0xc8] sm:$0xff]
        %v964 = vld [vmem:[#allocation3 + $0xd0] sm:$0xff]
        %v965 = vld [vmem:[#allocation3 + $0xd8] sm:$0xff]
        %v966 = vld [vmem:[#allocation3 + $0xe0] sm:$0xff]
        %v967 = vld [vmem:[#allocation3 + $0xe8] sm:$0xff]
        %v968 = vld [vmem:[#allocation3 + $0xf0] sm:$0xff]
        %v969 = vld [vmem:[#allocation3 + $0xf8] sm:$0xff]
        %v970 = vld [vmem:[#allocation7] sm:$0xff]
        %v971 = vld [vmem:[#allocation7 + $0x8] sm:$0xff]
        %v972 = vld [vmem:[#allocation7 + $0x10] sm:$0xff]
        %v973 = vld [vmem:[#allocation7 + $0x18] sm:$0xff]
        %v974 = vld [vmem:[#allocation7 + $0x20] sm:$0xff]
        %v975 = vld [vmem:[#allocation7 + $0x28] sm:$0xff]
        %v976 = vld [vmem:[#allocation7 + $0x30] sm:$0xff]
        %v977 = vld [vmem:[#allocation7 + $0x38] sm:$0xff]
        %v978 = vld [vmem:[#allocation7 + $0x40] sm:$0xff]
        %v979 = vld [vmem:[#allocation7 + $0x48] sm:$0xff]
        %v980 = vld [vmem:[#allocation7 + $0x50] sm:$0xff]
        %v981 = vld [vmem:[#allocation7 + $0x58] sm:$0xff]
        %v982 = vld [vmem:[#allocation7 + $0x60] sm:$0xff]
        %v983 = vld [vmem:[#allocation7 + $0x68] sm:$0xff]
        %v984 = vld [vmem:[#allocation7 + $0x70] sm:$0xff]
        %v985 = vld [vmem:[#allocation7 + $0x78] sm:$0xff]
        %v1002 = vunpack.c.l.b16 %v914
        %v1003 = vunpack.c.l.b16 %v915
        %v1004 = vunpack.c.l.b16 %v917
        %v1005 = vunpack.c.l.b16 %v918
        %v1006 = vunpack.c.l.b16 %v920
        %v1007 = vunpack.c.l.b16 %v921
        %v1008 = vunpack.c.l.b16 %v923
        %v1009 = vunpack.c.l.b16 %v924
        %v1010 = vunpack.c.l.b16 %v926
        %v1011 = vunpack.c.l.b16 %v927
        %v1012 = vunpack.c.l.b16 %v929
        %v1013 = vunpack.c.l.b16 %v930
        %v1014 = vunpack.c.l.b16 %v932
        %v1015 = vunpack.c.l.b16 %v933
        %v1016 = vunpack.c.l.b16 %v935
        %v1017 = vunpack.c.l.b16 %v936
        %v1018 = vpack.c.b16 %v1003, %v1002
        %v1019 = vpack.c.b16 %v1005, %v1004
        %v1020 = vpack.c.b16 %v1007, %v1006
        %v1021 = vpack.c.b16 %v1009, %v1008
        %v1022 = vpack.c.b16 %v1011, %v1010
        %v1023 = vpack.c.b16 %v1013, %v1012
        %v1024 = vpack.c.b16 %v1015, %v1014
        %v1025 = vpack.c.b16 %v1017, %v1016
        %v1050 = vunpack.c.l.b16 %v970
        %v1051 = vunpack.c.h.b16 %v970
        %v1052 = vunpack.c.l.b16 %v971
        %v1053 = vunpack.c.h.b16 %v971
        %v1054 = vunpack.c.l.b16 %v972
        %v1055 = vunpack.c.h.b16 %v972
        %v1056 = vunpack.c.l.b16 %v973
        %v1057 = vunpack.c.h.b16 %v973
        %v1058 = vunpack.c.l.b16 %v974
        %v1059 = vunpack.c.h.b16 %v974
        %v1060 = vunpack.c.l.b16 %v975
        %v1061 = vunpack.c.h.b16 %v975
        %v1062 = vunpack.c.l.b16 %v976
        %v1063 = vunpack.c.h.b16 %v976
        %v1064 = vunpack.c.l.b16 %v977
        %v1065 = vunpack.c.h.b16 %v977
        %v1066 = vunpack.c.l.b16 %v978
        %v1067 = vunpack.c.h.b16 %v978
        %v1068 = vunpack.c.l.b16 %v979
        %v1069 = vunpack.c.h.b16 %v979
        %v1070 = vunpack.c.l.b16 %v980
        %v1071 = vunpack.c.h.b16 %v980
        %v1072 = vunpack.c.l.b16 %v981
        %v1073 = vunpack.c.h.b16 %v981
        %v1074 = vunpack.c.l.b16 %v982
        %v1075 = vunpack.c.h.b16 %v982
        %v1076 = vunpack.c.l.b16 %v983
        %v1077 = vunpack.c.h.b16 %v983
        %v1078 = vunpack.c.l.b16 %v984
        %v1079 = vunpack.c.h.b16 %v984
        %v1080 = vunpack.c.l.b16 %v985
        %v1081 = vunpack.c.h.b16 %v985
        %v1082 = vpack.c.b16 %v1052, %v1050
        %v1083 = vpack.c.b16 %v1053, %v1051
        %v1084 = vpack.c.b16 %v1056, %v1054
        %v1085 = vpack.c.b16 %v1057, %v1055
        %v1086 = vpack.c.b16 %v1060, %v1058
        %v1087 = vpack.c.b16 %v1061, %v1059
        %v1088 = vpack.c.b16 %v1064, %v1062
        %v1089 = vpack.c.b16 %v1065, %v1063
        %v1090 = vpack.c.b16 %v1068, %v1066
        %v1091 = vpack.c.b16 %v1069, %v1067
        %v1092 = vpack.c.b16 %v1072, %v1070
        %v1093 = vpack.c.b16 %v1073, %v1071
        %v1094 = vpack.c.b16 %v1076, %v1074
        %v1095 = vpack.c.b16 %v1077, %v1075
        %v1096 = vpack.c.b16 %v1080, %v1078
        %v1097 = vpack.c.b16 %v1081, %v1079
        %1114 = vmatprep.subr.bf16.mxu0 %v1097
        %1115 = vmatpush1.bf16.msra.mxu0 %v1096
        %1116 = vmatprep.subr.bf16.mxu0 %v1095
        %1117 = vmatpush1.bf16.msra.mxu0 %v1094
        %1118 = vmatprep.subr.bf16.mxu0 %v1093
        %1119 = vmatpush1.bf16.msra.mxu0 %v1092
        %1120 = vmatprep.subr.bf16.mxu0 %v1091
        %1121 = vmatpush1.bf16.msra.mxu0 %v1090
        %1122 = vmatprep.subr.bf16.mxu0 %v1089
        %1123 = vmatpush1.bf16.msra.mxu0 %v1088
        %1124 = vmatprep.subr.bf16.mxu0 %v1087
        %1125 = vmatpush1.bf16.msra.mxu0 %v1086
        %1126 = vmatprep.subr.bf16.mxu0 %v1085
        %1127 = vmatpush1.bf16.msra.mxu0 %v1084
        %1128 = vmatprep.subr.bf16.mxu0 %v1083
        %1129 = vmatpush1.bf16.msra.mxu0 %v1082
        %1130 = vmatprep.subr.bf16.mxu0 0
        %1131 = vmatpush2.bf16.msra.mxu0 0
        %1132 = vmatprep.subr.bf16.mxu0 0
        %1133 = vmatpush2.bf16.msra.mxu0 0
        %1134 = vmatprep.subr.bf16.mxu0 0
        %1135 = vmatpush2.bf16.msra.mxu0 0
        %1136 = vmatprep.subr.bf16.mxu0 0
        %1137 = vmatpush2.bf16.msra.mxu0 0
        %1138 = vmatprep.subr.bf16.mxu0 0
        %1139 = vmatpush2.bf16.msra.mxu0 0
        %1140 = vmatprep.subr.bf16.mxu0 0
        %1141 = vmatpush2.bf16.msra.mxu0 0
        %1142 = vmatprep.subr.bf16.mxu0 0
        %1143 = vmatpush2.bf16.msra.mxu0 0
        %1144 = vmatprep.subr.bf16.mxu0 0
        %1145 = vmatpush2.bf16.msra.mxu0 0
        %1146 = vmatprep.mubr.bf16.mxu0 0
        %1147 = vmatmul.mubr.bf16.gmra.mxu0 %v1018
        %v1148 = vpop.f32.mrf.mxu0
        %v1149 = vadd.f32 0.0, %v1148
        %v1150 = vpop.f32.mrf.mxu0
        %v1151 = vadd.f32 0.0, %v1150
        %v1152 = vpop.f32.mrf.mxu0
        %v1153 = vadd.f32 0.0, %v1152
        %v1154 = vpop.f32.mrf.mxu0
        %v1155 = vadd.f32 0.0, %v1154
        %1156 = vmatprep.mubr.bf16.mxu0 0
        %1157 = vmatmul.mubr.bf16.gmra.mxu0 %v1019
        %v1158 = vpop.f32.mrf.mxu0
        %v1159 = vadd.f32 0.0, %v1158
        %v1160 = vpop.f32.mrf.mxu0
        %v1161 = vadd.f32 0.0, %v1160
        %v1162 = vpop.f32.mrf.mxu0
        %v1163 = vadd.f32 0.0, %v1162
        %v1164 = vpop.f32.mrf.mxu0
        %v1165 = vadd.f32 0.0, %v1164
        %1166 = vmatprep.mubr.bf16.mxu0 0
        %1167 = vmatmul.mubr.bf16.gmra.mxu0 %v1020
        %v1168 = vpop.f32.mrf.mxu0
        %v1169 = vadd.f32 0.0, %v1168
        %v1170 = vpop.f32.mrf.mxu0
        %v1171 = vadd.f32 0.0, %v1170
        %v1172 = vpop.f32.mrf.mxu0
        %v1173 = vadd.f32 0.0, %v1172
        %v1174 = vpop.f32.mrf.mxu0
        %v1175 = vadd.f32 0.0, %v1174
        %1176 = vmatprep.mubr.bf16.mxu0 0
        %1177 = vmatmul.mubr.bf16.gmra.mxu0 %v1021
        %v1178 = vpop.f32.mrf.mxu0
        %v1179 = vadd.f32 0.0, %v1178
        %v1180 = vpop.f32.mrf.mxu0
        %v1181 = vadd.f32 0.0, %v1180
        %v1182 = vpop.f32.mrf.mxu0
        %v1183 = vadd.f32 0.0, %v1182
        %v1184 = vpop.f32.mrf.mxu0
        %v1185 = vadd.f32 0.0, %v1184
        %1186 = vmatprep.mubr.bf16.mxu0 0
        %1187 = vmatmul.mubr.bf16.gmra.mxu0 %v1022
        %v1188 = vpop.f32.mrf.mxu0
        %v1189 = vadd.f32 0.0, %v1188
        %v1190 = vpop.f32.mrf.mxu0
        %v1191 = vadd.f32 0.0, %v1190
        %v1192 = vpop.f32.mrf.mxu0
        %v1193 = vadd.f32 0.0, %v1192
        %v1194 = vpop.f32.mrf.mxu0
        %v1195 = vadd.f32 0.0, %v1194
        %1196 = vmatprep.mubr.bf16.mxu0 0
        %1197 = vmatmul.mubr.bf16.gmra.mxu0 %v1023
        %v1198 = vpop.f32.mrf.mxu0
        %v1199 = vadd.f32 0.0, %v1198
        %v1200 = vpop.f32.mrf.mxu0
        %v1201 = vadd.f32 0.0, %v1200
        %v1202 = vpop.f32.mrf.mxu0
        %v1203 = vadd.f32 0.0, %v1202
        %v1204 = vpop.f32.mrf.mxu0
        %v1205 = vadd.f32 0.0, %v1204
        %1206 = vmatprep.mubr.bf16.mxu0 0
        %1207 = vmatmul.mubr.bf16.gmra.mxu0 %v1024
        %v1208 = vpop.f32.mrf.mxu0
        %v1209 = vadd.f32 0.0, %v1208
        %v1210 = vpop.f32.mrf.mxu0
        %v1211 = vadd.f32 0.0, %v1210
        %v1212 = vpop.f32.mrf.mxu0
        %v1213 = vadd.f32 0.0, %v1212
        %v1214 = vpop.f32.mrf.mxu0
        %v1215 = vadd.f32 0.0, %v1214
        %1216 = vmatprep.mubr.bf16.mxu0 0
        %1217 = vmatmul.mubr.bf16.gmra.mxu0 %v1025
        %v1218 = vpop.f32.mrf.mxu0
        %v1219 = vadd.f32 0.0, %v1218
        %v1220 = vpop.f32.mrf.mxu0
        %v1221 = vadd.f32 0.0, %v1220
        %v1222 = vpop.f32.mrf.mxu0
        %v1223 = vadd.f32 0.0, %v1222
        %v1224 = vpop.f32.mrf.mxu0
        %v1225 = vadd.f32 0.0, %v1224
        %1226 = vdwg.mxu0
        %v1227 = vadd.f32 %v938, %v1149
        %v1228 = vadd.f32 %v939, %v1151
        %v1229 = vadd.f32 %v940, %v1153
        %v1230 = vadd.f32 %v941, %v1155
        %v1231 = vadd.f32 %v942, %v1159
        %v1232 = vadd.f32 %v943, %v1161
        %v1233 = vadd.f32 %v944, %v1163
        %v1234 = vadd.f32 %v945, %v1165
        %v1235 = vadd.f32 %v946, %v1169
        %v1236 = vadd.f32 %v947, %v1171
        %v1237 = vadd.f32 %v948, %v1173
        %v1238 = vadd.f32 %v949, %v1175
        %v1239 = vadd.f32 %v950, %v1179
        %v1240 = vadd.f32 %v951, %v1181
        %v1241 = vadd.f32 %v952, %v1183
        %v1242 = vadd.f32 %v953, %v1185
        %v1243 = vadd.f32 %v954, %v1189
        %v1244 = vadd.f32 %v955, %v1191
        %v1245 = vadd.f32 %v956, %v1193
        %v1246 = vadd.f32 %v957, %v1195
        %v1247 = vadd.f32 %v958, %v1199
        %v1248 = vadd.f32 %v959, %v1201
        %v1249 = vadd.f32 %v960, %v1203
        %v1250 = vadd.f32 %v961, %v1205
        %v1251 = vadd.f32 %v962, %v1209
        %v1252 = vadd.f32 %v963, %v1211
        %v1253 = vadd.f32 %v964, %v1213
        %v1254 = vadd.f32 %v965, %v1215
        %v1255 = vadd.f32 %v966, %v1219
        %v1256 = vadd.f32 %v967, %v1221
        %v1257 = vadd.f32 %v968, %v1223
        %v1258 = vadd.f32 %v969, %v1225
        %1259 = vst [vmem:[#allocation3] sm:$0xff] %v1227
        %1260 = vst [vmem:[#allocation3 + $0x8] sm:$0xff] %v1228
        %1261 = vst [vmem:[#allocation3 + $0x10] sm:$0xff] %v1229
        %1262 = vst [vmem:[#allocation3 + $0x18] sm:$0xff] %v1230
        %1263 = vst [vmem:[#allocation3 + $0x20] sm:$0xff] %v1231
        %1264 = vst [vmem:[#allocation3 + $0x28] sm:$0xff] %v1232
        %1265 = vst [vmem:[#allocation3 + $0x30] sm:$0xff] %v1233
        %1266 = vst [vmem:[#allocation3 + $0x38] sm:$0xff] %v1234
        %1267 = vst [vmem:[#allocation3 + $0x40] sm:$0xff] %v1235
        %1268 = vst [vmem:[#allocation3 + $0x48] sm:$0xff] %v1236
        %1269 = vst [vmem:[#allocation3 + $0x50] sm:$0xff] %v1237
        %1270 = vst [vmem:[#allocation3 + $0x58] sm:$0xff] %v1238
        %1271 = vst [vmem:[#allocation3 + $0x60] sm:$0xff] %v1239
        %1272 = vst [vmem:[#allocation3 + $0x68] sm:$0xff] %v1240
        %1273 = vst [vmem:[#allocation3 + $0x70] sm:$0xff] %v1241
        %1274 = vst [vmem:[#allocation3 + $0x78] sm:$0xff] %v1242
        %1275 = vst [vmem:[#allocation3 + $0x80] sm:$0xff] %v1243
        %1276 = vst [vmem:[#allocation3 + $0x88] sm:$0xff] %v1244
        %1277 = vst [vmem:[#allocation3 + $0x90] sm:$0xff] %v1245
        %1278 = vst [vmem:[#allocation3 + $0x98] sm:$0xff] %v1246
        %1279 = vst [vmem:[#allocation3 + $0xa0] sm:$0xff] %v1247
        %1280 = vst [vmem:[#allocation3 + $0xa8] sm:$0xff] %v1248
        %1281 = vst [vmem:[#allocation3 + $0xb0] sm:$0xff] %v1249
        %1282 = vst [vmem:[#allocation3 + $0xb8] sm:$0xff] %v1250
        %1283 = vst [vmem:[#allocation3 + $0xc0] sm:$0xff] %v1251
        %1284 = vst [vmem:[#allocation3 + $0xc8] sm:$0xff] %v1252
        %1285 = vst [vmem:[#allocation3 + $0xd0] sm:$0xff] %v1253
        %1286 = vst [vmem:[#allocation3 + $0xd8] sm:$0xff] %v1254
        %1287 = vst [vmem:[#allocation3 + $0xe0] sm:$0xff] %v1255
        %1288 = vst [vmem:[#allocation3 + $0xe8] sm:$0xff] %v1256
        %1289 = vst [vmem:[#allocation3 + $0xf0] sm:$0xff] %v1257
        %1290 = vst [vmem:[#allocation3 + $0xf8] sm:$0xff] %v1258
        %vm1291 = vsmask.f32 3328
        %vm1292 = vsmask.f32 7440
        %vm1293 = vmor %vm1291, %vm1292
        %v1295 = vshrl.u32 %v914, 16
        %v1297 = vrot.slane %v1295, 4
        %v1298 = vshll.u32 %v914, 16
        %v1300 = vrot.slane %v1298, 5
        %v1301 = vor.u32 %v1297, %v1300
        %v1302 = vrot.slane %v1301, 4
        %v1304 = vshll.u32 %v915, 16
        %v1306 = vrot.slane %v1304, 5
        %v1307 = vsel %vm1293, %v1302, %v1306
        %v1308 = vshrl.u32 %v915, 16
        %v1310 = vrot.slane %v1308, 4
        %v1311 = vor.u32 %v1310, %v1306
        %v1312 = vrot.slane %v1311, 4
        %v1314 = vshll.u32 %v916, 16
        %v1316 = vrot.slane %v1314, 5
        %v1317 = vsel %vm1293, %v1312, %v1316
        %v1319 = vshrl.u32 %v917, 16
        %v1321 = vrot.slane %v1319, 4
        %v1322 = vshll.u32 %v917, 16
        %v1324 = vrot.slane %v1322, 5
        %v1325 = vor.u32 %v1321, %v1324
        %v1326 = vrot.slane %v1325, 4
        %v1328 = vshll.u32 %v918, 16
        %v1330 = vrot.slane %v1328, 5
        %v1331 = vsel %vm1293, %v1326, %v1330
        %v1332 = vshrl.u32 %v918, 16
        %v1334 = vrot.slane %v1332, 4
        %v1335 = vor.u32 %v1334, %v1330
        %v1336 = vrot.slane %v1335, 4
        %v1338 = vshll.u32 %v919, 16
        %v1340 = vrot.slane %v1338, 5
        %v1341 = vsel %vm1293, %v1336, %v1340
        %v1343 = vshrl.u32 %v920, 16
        %v1345 = vrot.slane %v1343, 4
        %v1346 = vshll.u32 %v920, 16
        %v1348 = vrot.slane %v1346, 5
        %v1349 = vor.u32 %v1345, %v1348
        %v1350 = vrot.slane %v1349, 4
        %v1352 = vshll.u32 %v921, 16
        %v1354 = vrot.slane %v1352, 5
        %v1355 = vsel %vm1293, %v1350, %v1354
        %v1356 = vshrl.u32 %v921, 16
        %v1358 = vrot.slane %v1356, 4
        %v1359 = vor.u32 %v1358, %v1354
        %v1360 = vrot.slane %v1359, 4
        %v1362 = vshll.u32 %v922, 16
        %v1364 = vrot.slane %v1362, 5
        %v1365 = vsel %vm1293, %v1360, %v1364
        %v1367 = vshrl.u32 %v923, 16
        %v1369 = vrot.slane %v1367, 4
        %v1370 = vshll.u32 %v923, 16
        %v1372 = vrot.slane %v1370, 5
        %v1373 = vor.u32 %v1369, %v1372
        %v1374 = vrot.slane %v1373, 4
        %v1376 = vshll.u32 %v924, 16
        %v1378 = vrot.slane %v1376, 5
        %v1379 = vsel %vm1293, %v1374, %v1378
        %v1380 = vshrl.u32 %v924, 16
        %v1382 = vrot.slane %v1380, 4
        %v1383 = vor.u32 %v1382, %v1378
        %v1384 = vrot.slane %v1383, 4
        %v1386 = vshll.u32 %v925, 16
        %v1388 = vrot.slane %v1386, 5
        %v1389 = vsel %vm1293, %v1384, %v1388
        %v1391 = vshrl.u32 %v926, 16
        %v1393 = vrot.slane %v1391, 4
        %v1394 = vshll.u32 %v926, 16
        %v1396 = vrot.slane %v1394, 5
        %v1397 = vor.u32 %v1393, %v1396
        %v1398 = vrot.slane %v1397, 4
        %v1400 = vshll.u32 %v927, 16
        %v1402 = vrot.slane %v1400, 5
        %v1403 = vsel %vm1293, %v1398, %v1402
        %v1404 = vshrl.u32 %v927, 16
        %v1406 = vrot.slane %v1404, 4
        %v1407 = vor.u32 %v1406, %v1402
        %v1408 = vrot.slane %v1407, 4
        %v1410 = vshll.u32 %v928, 16
        %v1412 = vrot.slane %v1410, 5
        %v1413 = vsel %vm1293, %v1408, %v1412
        %v1415 = vshrl.u32 %v929, 16
        %v1417 = vrot.slane %v1415, 4
        %v1418 = vshll.u32 %v929, 16
        %v1420 = vrot.slane %v1418, 5
        %v1421 = vor.u32 %v1417, %v1420
        %v1422 = vrot.slane %v1421, 4
        %v1424 = vshll.u32 %v930, 16
        %v1426 = vrot.slane %v1424, 5
        %v1427 = vsel %vm1293, %v1422, %v1426
        %v1428 = vshrl.u32 %v930, 16
        %v1430 = vrot.slane %v1428, 4
        %v1431 = vor.u32 %v1430, %v1426
        %v1432 = vrot.slane %v1431, 4
        %v1434 = vshll.u32 %v931, 16
        %v1436 = vrot.slane %v1434, 5
        %v1437 = vsel %vm1293, %v1432, %v1436
        %v1439 = vshrl.u32 %v932, 16
        %v1441 = vrot.slane %v1439, 4
        %v1442 = vshll.u32 %v932, 16
        %v1444 = vrot.slane %v1442, 5
        %v1445 = vor.u32 %v1441, %v1444
        %v1446 = vrot.slane %v1445, 4
        %v1448 = vshll.u32 %v933, 16
        %v1450 = vrot.slane %v1448, 5
        %v1451 = vsel %vm1293, %v1446, %v1450
        %v1452 = vshrl.u32 %v933, 16
        %v1454 = vrot.slane %v1452, 4
        %v1455 = vor.u32 %v1454, %v1450
        %v1456 = vrot.slane %v1455, 4
        %v1458 = vshll.u32 %v934, 16
        %v1460 = vrot.slane %v1458, 5
        %v1461 = vsel %vm1293, %v1456, %v1460
        %v1463 = vshrl.u32 %v935, 16
        %v1465 = vrot.slane %v1463, 4
        %v1466 = vshll.u32 %v935, 16
        %v1468 = vrot.slane %v1466, 5
        %v1469 = vor.u32 %v1465, %v1468
        %v1470 = vrot.slane %v1469, 4
        %v1472 = vshll.u32 %v936, 16
        %v1474 = vrot.slane %v1472, 5
        %v1475 = vsel %vm1293, %v1470, %v1474
        %v1476 = vshrl.u32 %v936, 16
        %v1478 = vrot.slane %v1476, 4
        %v1479 = vor.u32 %v1478, %v1474
        %v1480 = vrot.slane %v1479, 4
        %v1482 = vshll.u32 %v937, 16
        %v1484 = vrot.slane %v1482, 5
        %v1485 = vsel %vm1293, %v1480, %v1484
        %v1486 = vld [vmem:[#allocation3] sm:$0xff]
        %v1487 = vld [vmem:[#allocation3 + $0x8] sm:$0xff]
        %v1488 = vld [vmem:[#allocation3 + $0x10] sm:$0xff]
        %v1489 = vld [vmem:[#allocation3 + $0x18] sm:$0xff]
        %v1490 = vld [vmem:[#allocation3 + $0x20] sm:$0xff]
        %v1491 = vld [vmem:[#allocation3 + $0x28] sm:$0xff]
        %v1492 = vld [vmem:[#allocation3 + $0x30] sm:$0xff]
        %v1493 = vld [vmem:[#allocation3 + $0x38] sm:$0xff]
        %v1494 = vld [vmem:[#allocation3 + $0x40] sm:$0xff]
        %v1495 = vld [vmem:[#allocation3 + $0x48] sm:$0xff]
        %v1496 = vld [vmem:[#allocation3 + $0x50] sm:$0xff]
        %v1497 = vld [vmem:[#allocation3 + $0x58] sm:$0xff]
        %v1498 = vld [vmem:[#allocation3 + $0x60] sm:$0xff]
        %v1499 = vld [vmem:[#allocation3 + $0x68] sm:$0xff]
        %v1500 = vld [vmem:[#allocation3 + $0x70] sm:$0xff]
        %v1501 = vld [vmem:[#allocation3 + $0x78] sm:$0xff]
        %v1502 = vld [vmem:[#allocation3 + $0x80] sm:$0xff]
        %v1503 = vld [vmem:[#allocation3 + $0x88] sm:$0xff]
        %v1504 = vld [vmem:[#allocation3 + $0x90] sm:$0xff]
        %v1505 = vld [vmem:[#allocation3 + $0x98] sm:$0xff]
        %v1506 = vld [vmem:[#allocation3 + $0xa0] sm:$0xff]
        %v1507 = vld [vmem:[#allocation3 + $0xa8] sm:$0xff]
        %v1508 = vld [vmem:[#allocation3 + $0xb0] sm:$0xff]
        %v1509 = vld [vmem:[#allocation3 + $0xb8] sm:$0xff]
        %v1510 = vld [vmem:[#allocation3 + $0xc0] sm:$0xff]
        %v1511 = vld [vmem:[#allocation3 + $0xc8] sm:$0xff]
        %v1512 = vld [vmem:[#allocation3 + $0xd0] sm:$0xff]
        %v1513 = vld [vmem:[#allocation3 + $0xd8] sm:$0xff]
        %v1514 = vld [vmem:[#allocation3 + $0xe0] sm:$0xff]
        %v1515 = vld [vmem:[#allocation3 + $0xe8] sm:$0xff]
        %v1516 = vld [vmem:[#allocation3 + $0xf0] sm:$0xff]
        %v1517 = vld [vmem:[#allocation3 + $0xf8] sm:$0xff]
        %s1518 = scalar_lea.vmem [#allocation7], 128
        %v1519 = vld [vmem:[%s1518] sm:$0xff]
        %v1520 = vld [vmem:[%s1518 + $0x8] sm:$0xff]
        %v1521 = vld [vmem:[%s1518 + $0x10] sm:$0xff]
        %v1522 = vld [vmem:[%s1518 + $0x18] sm:$0xff]
        %v1523 = vld [vmem:[%s1518 + $0x20] sm:$0xff]
        %v1524 = vld [vmem:[%s1518 + $0x28] sm:$0xff]
        %v1525 = vld [vmem:[%s1518 + $0x30] sm:$0xff]
        %v1526 = vld [vmem:[%s1518 + $0x38] sm:$0xff]
        %v1527 = vld [vmem:[%s1518 + $0x40] sm:$0xff]
        %v1528 = vld [vmem:[%s1518 + $0x48] sm:$0xff]
        %v1529 = vld [vmem:[%s1518 + $0x50] sm:$0xff]
        %v1530 = vld [vmem:[%s1518 + $0x58] sm:$0xff]
        %v1531 = vld [vmem:[%s1518 + $0x60] sm:$0xff]
        %v1532 = vld [vmem:[%s1518 + $0x68] sm:$0xff]
        %v1533 = vld [vmem:[%s1518 + $0x70] sm:$0xff]
        %v1534 = vld [vmem:[%s1518 + $0x78] sm:$0xff]
        %v1535 = vunpack.c.l.b16 %v1307
        %v1536 = vunpack.c.l.b16 %v1317
        %v1537 = vunpack.c.l.b16 %v1331
        %v1538 = vunpack.c.l.b16 %v1341
        %v1539 = vunpack.c.l.b16 %v1355
        %v1540 = vunpack.c.l.b16 %v1365
        %v1541 = vunpack.c.l.b16 %v1379
        %v1542 = vunpack.c.l.b16 %v1389
        %v1543 = vunpack.c.l.b16 %v1403
        %v1544 = vunpack.c.l.b16 %v1413
        %v1545 = vunpack.c.l.b16 %v1427
        %v1546 = vunpack.c.l.b16 %v1437
        %v1547 = vunpack.c.l.b16 %v1451
        %v1548 = vunpack.c.l.b16 %v1461
        %v1549 = vunpack.c.l.b16 %v1475
        %v1550 = vunpack.c.l.b16 %v1485
        %v1551 = vpack.c.b16 %v1536, %v1535
        %v1552 = vpack.c.b16 %v1538, %v1537
        %v1553 = vpack.c.b16 %v1540, %v1539
        %v1554 = vpack.c.b16 %v1542, %v1541
        %v1555 = vpack.c.b16 %v1544, %v1543
        %v1556 = vpack.c.b16 %v1546, %v1545
        %v1557 = vpack.c.b16 %v1548, %v1547
        %v1558 = vpack.c.b16 %v1550, %v1549
        %v1583 = vunpack.c.l.b16 %v1519
        %v1584 = vunpack.c.h.b16 %v1519
        %v1585 = vunpack.c.l.b16 %v1520
        %v1586 = vunpack.c.h.b16 %v1520
        %v1587 = vunpack.c.l.b16 %v1521
        %v1588 = vunpack.c.h.b16 %v1521
        %v1589 = vunpack.c.l.b16 %v1522
        %v1590 = vunpack.c.h.b16 %v1522
        %v1591 = vunpack.c.l.b16 %v1523
        %v1592 = vunpack.c.h.b16 %v1523
        %v1593 = vunpack.c.l.b16 %v1524
        %v1594 = vunpack.c.h.b16 %v1524
        %v1595 = vunpack.c.l.b16 %v1525
        %v1596 = vunpack.c.h.b16 %v1525
        %v1597 = vunpack.c.l.b16 %v1526
        %v1598 = vunpack.c.h.b16 %v1526
        %v1599 = vunpack.c.l.b16 %v1527
        %v1600 = vunpack.c.h.b16 %v1527
        %v1601 = vunpack.c.l.b16 %v1528
        %v1602 = vunpack.c.h.b16 %v1528
        %v1603 = vunpack.c.l.b16 %v1529
        %v1604 = vunpack.c.h.b16 %v1529
        %v1605 = vunpack.c.l.b16 %v1530
        %v1606 = vunpack.c.h.b16 %v1530
        %v1607 = vunpack.c.l.b16 %v1531
        %v1608 = vunpack.c.h.b16 %v1531
        %v1609 = vunpack.c.l.b16 %v1532
        %v1610 = vunpack.c.h.b16 %v1532
        %v1611 = vunpack.c.l.b16 %v1533
        %v1612 = vunpack.c.h.b16 %v1533
        %v1613 = vunpack.c.l.b16 %v1534
        %v1614 = vunpack.c.h.b16 %v1534
        %v1615 = vpack.c.b16 %v1585, %v1583
        %v1616 = vpack.c.b16 %v1586, %v1584
        %v1617 = vpack.c.b16 %v1589, %v1587
        %v1618 = vpack.c.b16 %v1590, %v1588
        %v1619 = vpack.c.b16 %v1593, %v1591
        %v1620 = vpack.c.b16 %v1594, %v1592
        %v1621 = vpack.c.b16 %v1597, %v1595
        %v1622 = vpack.c.b16 %v1598, %v1596
        %v1623 = vpack.c.b16 %v1601, %v1599
        %v1624 = vpack.c.b16 %v1602, %v1600
        %v1625 = vpack.c.b16 %v1605, %v1603
        %v1626 = vpack.c.b16 %v1606, %v1604
        %v1627 = vpack.c.b16 %v1609, %v1607
        %v1628 = vpack.c.b16 %v1610, %v1608
        %v1629 = vpack.c.b16 %v1613, %v1611
        %v1630 = vpack.c.b16 %v1614, %v1612
        %1647 = vmatprep.subr.bf16.mxu0 %v1630
        %1648 = vmatpush1.bf16.msra.mxu0 %v1629
        %1649 = vmatprep.subr.bf16.mxu0 %v1628
        %1650 = vmatpush1.bf16.msra.mxu0 %v1627
        %1651 = vmatprep.subr.bf16.mxu0 %v1626
        %1652 = vmatpush1.bf16.msra.mxu0 %v1625
        %1653 = vmatprep.subr.bf16.mxu0 %v1624
        %1654 = vmatpush1.bf16.msra.mxu0 %v1623
        %1655 = vmatprep.subr.bf16.mxu0 %v1622
        %1656 = vmatpush1.bf16.msra.mxu0 %v1621
        %1657 = vmatprep.subr.bf16.mxu0 %v1620
        %1658 = vmatpush1.bf16.msra.mxu0 %v1619
        %1659 = vmatprep.subr.bf16.mxu0 %v1618
        %1660 = vmatpush1.bf16.msra.mxu0 %v1617
        %1661 = vmatprep.subr.bf16.mxu0 %v1616
        %1662 = vmatpush1.bf16.msra.mxu0 %v1615
        %1663 = vmatprep.subr.bf16.mxu0 0
        %1664 = vmatpush2.bf16.msra.mxu0 0
        %1665 = vmatprep.subr.bf16.mxu0 0
        %1666 = vmatpush2.bf16.msra.mxu0 0
        %1667 = vmatprep.subr.bf16.mxu0 0
        %1668 = vmatpush2.bf16.msra.mxu0 0
        %1669 = vmatprep.subr.bf16.mxu0 0
        %1670 = vmatpush2.bf16.msra.mxu0 0
        %1671 = vmatprep.subr.bf16.mxu0 0
        %1672 = vmatpush2.bf16.msra.mxu0 0
        %1673 = vmatprep.subr.bf16.mxu0 0
        %1674 = vmatpush2.bf16.msra.mxu0 0
        %1675 = vmatprep.subr.bf16.mxu0 0
        %1676 = vmatpush2.bf16.msra.mxu0 0
        %1677 = vmatprep.subr.bf16.mxu0 0
        %1678 = vmatpush2.bf16.msra.mxu0 0
        %1679 = vmatprep.mubr.bf16.mxu0 0
        %1680 = vmatmul.mubr.bf16.gmra.mxu0 %v1551
        %v1681 = vpop.f32.mrf.mxu0
        %v1682 = vadd.f32 0.0, %v1681
        %v1683 = vpop.f32.mrf.mxu0
        %v1684 = vadd.f32 0.0, %v1683
        %v1685 = vpop.f32.mrf.mxu0
        %v1686 = vadd.f32 0.0, %v1685
        %v1687 = vpop.f32.mrf.mxu0
        %v1688 = vadd.f32 0.0, %v1687
        %1689 = vmatprep.mubr.bf16.mxu0 0
        %1690 = vmatmul.mubr.bf16.gmra.mxu0 %v1552
        %v1691 = vpop.f32.mrf.mxu0
        %v1692 = vadd.f32 0.0, %v1691
        %v1693 = vpop.f32.mrf.mxu0
        %v1694 = vadd.f32 0.0, %v1693
        %v1695 = vpop.f32.mrf.mxu0
        %v1696 = vadd.f32 0.0, %v1695
        %v1697 = vpop.f32.mrf.mxu0
        %v1698 = vadd.f32 0.0, %v1697
        %1699 = vmatprep.mubr.bf16.mxu0 0
        %1700 = vmatmul.mubr.bf16.gmra.mxu0 %v1553
        %v1701 = vpop.f32.mrf.mxu0
        %v1702 = vadd.f32 0.0, %v1701
        %v1703 = vpop.f32.mrf.mxu0
        %v1704 = vadd.f32 0.0, %v1703
        %v1705 = vpop.f32.mrf.mxu0
        %v1706 = vadd.f32 0.0, %v1705
        %v1707 = vpop.f32.mrf.mxu0
        %v1708 = vadd.f32 0.0, %v1707
        %1709 = vmatprep.mubr.bf16.mxu0 0
        %1710 = vmatmul.mubr.bf16.gmra.mxu0 %v1554
        %v1711 = vpop.f32.mrf.mxu0
        %v1712 = vadd.f32 0.0, %v1711
        %v1713 = vpop.f32.mrf.mxu0
        %v1714 = vadd.f32 0.0, %v1713
        %v1715 = vpop.f32.mrf.mxu0
        %v1716 = vadd.f32 0.0, %v1715
        %v1717 = vpop.f32.mrf.mxu0
        %v1718 = vadd.f32 0.0, %v1717
        %1719 = vmatprep.mubr.bf16.mxu0 0
        %1720 = vmatmul.mubr.bf16.gmra.mxu0 %v1555
        %v1721 = vpop.f32.mrf.mxu0
        %v1722 = vadd.f32 0.0, %v1721
        %v1723 = vpop.f32.mrf.mxu0
        %v1724 = vadd.f32 0.0, %v1723
        %v1725 = vpop.f32.mrf.mxu0
        %v1726 = vadd.f32 0.0, %v1725
        %v1727 = vpop.f32.mrf.mxu0
        %v1728 = vadd.f32 0.0, %v1727
        %1729 = vmatprep.mubr.bf16.mxu0 0
        %1730 = vmatmul.mubr.bf16.gmra.mxu0 %v1556
        %v1731 = vpop.f32.mrf.mxu0
        %v1732 = vadd.f32 0.0, %v1731
        %v1733 = vpop.f32.mrf.mxu0
        %v1734 = vadd.f32 0.0, %v1733
        %v1735 = vpop.f32.mrf.mxu0
        %v1736 = vadd.f32 0.0, %v1735
        %v1737 = vpop.f32.mrf.mxu0
        %v1738 = vadd.f32 0.0, %v1737
        %1739 = vmatprep.mubr.bf16.mxu0 0
        %1740 = vmatmul.mubr.bf16.gmra.mxu0 %v1557
        %v1741 = vpop.f32.mrf.mxu0
        %v1742 = vadd.f32 0.0, %v1741
        %v1743 = vpop.f32.mrf.mxu0
        %v1744 = vadd.f32 0.0, %v1743
        %v1745 = vpop.f32.mrf.mxu0
        %v1746 = vadd.f32 0.0, %v1745
        %v1747 = vpop.f32.mrf.mxu0
        %v1748 = vadd.f32 0.0, %v1747
        %1749 = vmatprep.mubr.bf16.mxu0 0
        %1750 = vmatmul.mubr.bf16.gmra.mxu0 %v1558
        %v1751 = vpop.f32.mrf.mxu0
        %v1752 = vadd.f32 0.0, %v1751
        %v1753 = vpop.f32.mrf.mxu0
        %v1754 = vadd.f32 0.0, %v1753
        %v1755 = vpop.f32.mrf.mxu0
        %v1756 = vadd.f32 0.0, %v1755
        %v1757 = vpop.f32.mrf.mxu0
        %v1758 = vadd.f32 0.0, %v1757
        %1759 = vdwg.mxu0
        %v1760 = vadd.f32 %v1486, %v1682
        %v1761 = vadd.f32 %v1487, %v1684
        %v1762 = vadd.f32 %v1488, %v1686
        %v1763 = vadd.f32 %v1489, %v1688
        %v1764 = vadd.f32 %v1490, %v1692
        %v1765 = vadd.f32 %v1491, %v1694
        %v1766 = vadd.f32 %v1492, %v1696
        %v1767 = vadd.f32 %v1493, %v1698
        %v1768 = vadd.f32 %v1494, %v1702
        %v1769 = vadd.f32 %v1495, %v1704
        %v1770 = vadd.f32 %v1496, %v1706
        %v1771 = vadd.f32 %v1497, %v1708
        %v1772 = vadd.f32 %v1498, %v1712
        %v1773 = vadd.f32 %v1499, %v1714
        %v1774 = vadd.f32 %v1500, %v1716
        %v1775 = vadd.f32 %v1501, %v1718
        %v1776 = vadd.f32 %v1502, %v1722
        %v1777 = vadd.f32 %v1503, %v1724
        %v1778 = vadd.f32 %v1504, %v1726
        %v1779 = vadd.f32 %v1505, %v1728
        %v1780 = vadd.f32 %v1506, %v1732
        %v1781 = vadd.f32 %v1507, %v1734
        %v1782 = vadd.f32 %v1508, %v1736
        %v1783 = vadd.f32 %v1509, %v1738
        %v1784 = vadd.f32 %v1510, %v1742
        %v1785 = vadd.f32 %v1511, %v1744
        %v1786 = vadd.f32 %v1512, %v1746
        %v1787 = vadd.f32 %v1513, %v1748
        %v1788 = vadd.f32 %v1514, %v1752
        %v1789 = vadd.f32 %v1515, %v1754
        %v1790 = vadd.f32 %v1516, %v1756
        %v1791 = vadd.f32 %v1517, %v1758
        %1792 = vst [vmem:[#allocation3] sm:$0xff] %v1760
        %1793 = vst [vmem:[#allocation3 + $0x8] sm:$0xff] %v1761
        %1794 = vst [vmem:[#allocation3 + $0x10] sm:$0xff] %v1762
        %1795 = vst [vmem:[#allocation3 + $0x18] sm:$0xff] %v1763
        %1796 = vst [vmem:[#allocation3 + $0x20] sm:$0xff] %v1764
        %1797 = vst [vmem:[#allocation3 + $0x28] sm:$0xff] %v1765
        %1798 = vst [vmem:[#allocation3 + $0x30] sm:$0xff] %v1766
        %1799 = vst [vmem:[#allocation3 + $0x38] sm:$0xff] %v1767
        %1800 = vst [vmem:[#allocation3 + $0x40] sm:$0xff] %v1768
        %1801 = vst [vmem:[#allocation3 + $0x48] sm:$0xff] %v1769
        %1802 = vst [vmem:[#allocation3 + $0x50] sm:$0xff] %v1770
        %1803 = vst [vmem:[#allocation3 + $0x58] sm:$0xff] %v1771
        %1804 = vst [vmem:[#allocation3 + $0x60] sm:$0xff] %v1772
        %1805 = vst [vmem:[#allocation3 + $0x68] sm:$0xff] %v1773
        %1806 = vst [vmem:[#allocation3 + $0x70] sm:$0xff] %v1774
        %1807 = vst [vmem:[#allocation3 + $0x78] sm:$0xff] %v1775
        %1808 = vst [vmem:[#allocation3 + $0x80] sm:$0xff] %v1776
        %1809 = vst [vmem:[#allocation3 + $0x88] sm:$0xff] %v1777
        %1810 = vst [vmem:[#allocation3 + $0x90] sm:$0xff] %v1778
        %1811 = vst [vmem:[#allocation3 + $0x98] sm:$0xff] %v1779
        %1812 = vst [vmem:[#allocation3 + $0xa0] sm:$0xff] %v1780
        %1813 = vst [vmem:[#allocation3 + $0xa8] sm:$0xff] %v1781
        %1814 = vst [vmem:[#allocation3 + $0xb0] sm:$0xff] %v1782
        %1815 = vst [vmem:[#allocation3 + $0xb8] sm:$0xff] %v1783
        %1816 = vst [vmem:[#allocation3 + $0xc0] sm:$0xff] %v1784
        %1817 = vst [vmem:[#allocation3 + $0xc8] sm:$0xff] %v1785
        %1818 = vst [vmem:[#allocation3 + $0xd0] sm:$0xff] %v1786
        %1819 = vst [vmem:[#allocation3 + $0xd8] sm:$0xff] %v1787
        %1820 = vst [vmem:[#allocation3 + $0xe0] sm:$0xff] %v1788
        %1821 = vst [vmem:[#allocation3 + $0xe8] sm:$0xff] %v1789
        %1822 = vst [vmem:[#allocation3 + $0xf0] sm:$0xff] %v1790
        %1823 = vst [vmem:[#allocation3 + $0xf8] sm:$0xff] %v1791
        %vm1832 = vcmask 1042432
        %vm1833 = vcmask 1046532
        %vm1834 = vmor %vm1832, %vm1833
        %v1835 = vrot.slane %v914, 5
        %v1836 = vrot.slane %v1835, 4
        %v1837 = vrot.slane %v915, 5
        %v1838 = vsel %vm1834, %v1836, %v1837
        %v1839 = vrot.slane %v1837, 4
        %v1840 = vrot.slane %v916, 5
        %v1841 = vsel %vm1834, %v1839, %v1840
        %v1842 = vrot.slane %v917, 5
        %v1843 = vrot.slane %v1842, 4
        %v1844 = vrot.slane %v918, 5
        %v1845 = vsel %vm1834, %v1843, %v1844
        %v1846 = vrot.slane %v1844, 4
        %v1847 = vrot.slane %v919, 5
        %v1848 = vsel %vm1834, %v1846, %v1847
        %v1849 = vrot.slane %v920, 5
        %v1850 = vrot.slane %v1849, 4
        %v1851 = vrot.slane %v921, 5
        %v1852 = vsel %vm1834, %v1850, %v1851
        %v1853 = vrot.slane %v1851, 4
        %v1854 = vrot.slane %v922, 5
        %v1855 = vsel %vm1834, %v1853, %v1854
        %v1856 = vrot.slane %v923, 5
        %v1857 = vrot.slane %v1856, 4
        %v1858 = vrot.slane %v924, 5
        %v1859 = vsel %vm1834, %v1857, %v1858
        %v1860 = vrot.slane %v1858, 4
        %v1861 = vrot.slane %v925, 5
        %v1862 = vsel %vm1834, %v1860, %v1861
        %v1863 = vrot.slane %v926, 5
        %v1864 = vrot.slane %v1863, 4
        %v1865 = vrot.slane %v927, 5
        %v1866 = vsel %vm1834, %v1864, %v1865
        %v1867 = vrot.slane %v1865, 4
        %v1868 = vrot.slane %v928, 5
        %v1869 = vsel %vm1834, %v1867, %v1868
        %v1870 = vrot.slane %v929, 5
        %v1871 = vrot.slane %v1870, 4
        %v1872 = vrot.slane %v930, 5
        %v1873 = vsel %vm1834, %v1871, %v1872
        %v1874 = vrot.slane %v1872, 4
        %v1875 = vrot.slane %v931, 5
        %v1876 = vsel %vm1834, %v1874, %v1875
        %v1877 = vrot.slane %v932, 5
        %v1878 = vrot.slane %v1877, 4
        %v1879 = vrot.slane %v933, 5
        %v1880 = vsel %vm1834, %v1878, %v1879
        %v1881 = vrot.slane %v1879, 4
        %v1882 = vrot.slane %v934, 5
        %v1883 = vsel %vm1834, %v1881, %v1882
        %v1884 = vrot.slane %v935, 5
        %v1885 = vrot.slane %v1884, 4
        %v1886 = vrot.slane %v936, 5
        %v1887 = vsel %vm1834, %v1885, %v1886
        %v1888 = vrot.slane %v1886, 4
        %v1889 = vrot.slane %v937, 5
        %v1890 = vsel %vm1834, %v1888, %v1889
        %v1891 = vld [vmem:[#allocation3] sm:$0xff]
        %v1892 = vld [vmem:[#allocation3 + $0x8] sm:$0xff]
        %v1893 = vld [vmem:[#allocation3 + $0x10] sm:$0xff]
        %v1894 = vld [vmem:[#allocation3 + $0x18] sm:$0xff]
        %v1895 = vld [vmem:[#allocation3 + $0x20] sm:$0xff]
        %v1896 = vld [vmem:[#allocation3 + $0x28] sm:$0xff]
        %v1897 = vld [vmem:[#allocation3 + $0x30] sm:$0xff]
        %v1898 = vld [vmem:[#allocation3 + $0x38] sm:$0xff]
        %v1899 = vld [vmem:[#allocation3 + $0x40] sm:$0xff]
        %v1900 = vld [vmem:[#allocation3 + $0x48] sm:$0xff]
        %v1901 = vld [vmem:[#allocation3 + $0x50] sm:$0xff]
        %v1902 = vld [vmem:[#allocation3 + $0x58] sm:$0xff]
        %v1903 = vld [vmem:[#allocation3 + $0x60] sm:$0xff]
        %v1904 = vld [vmem:[#allocation3 + $0x68] sm:$0xff]
        %v1905 = vld [vmem:[#allocation3 + $0x70] sm:$0xff]
        %v1906 = vld [vmem:[#allocation3 + $0x78] sm:$0xff]
        %v1907 = vld [vmem:[#allocation3 + $0x80] sm:$0xff]
        %v1908 = vld [vmem:[#allocation3 + $0x88] sm:$0xff]
        %v1909 = vld [vmem:[#allocation3 + $0x90] sm:$0xff]
        %v1910 = vld [vmem:[#allocation3 + $0x98] sm:$0xff]
        %v1911 = vld [vmem:[#allocation3 + $0xa0] sm:$0xff]
        %v1912 = vld [vmem:[#allocation3 + $0xa8] sm:$0xff]
        %v1913 = vld [vmem:[#allocation3 + $0xb0] sm:$0xff]
        %v1914 = vld [vmem:[#allocation3 + $0xb8] sm:$0xff]
        %v1915 = vld [vmem:[#allocation3 + $0xc0] sm:$0xff]
        %v1916 = vld [vmem:[#allocation3 + $0xc8] sm:$0xff]
        %v1917 = vld [vmem:[#allocation3 + $0xd0] sm:$0xff]
        %v1918 = vld [vmem:[#allocation3 + $0xd8] sm:$0xff]
        %v1919 = vld [vmem:[#allocation3 + $0xe0] sm:$0xff]
        %v1920 = vld [vmem:[#allocation3 + $0xe8] sm:$0xff]
        %v1921 = vld [vmem:[#allocation3 + $0xf0] sm:$0xff]
        %v1922 = vld [vmem:[#allocation3 + $0xf8] sm:$0xff]
        %s1923 = scalar_lea.vmem [#allocation7], 256
        %v1924 = vld [vmem:[%s1923] sm:$0xff]
        %v1925 = vld [vmem:[%s1923 + $0x8] sm:$0xff]
        %v1926 = vld [vmem:[%s1923 + $0x10] sm:$0xff]
        %v1927 = vld [vmem:[%s1923 + $0x18] sm:$0xff]
        %v1928 = vld [vmem:[%s1923 + $0x20] sm:$0xff]
        %v1929 = vld [vmem:[%s1923 + $0x28] sm:$0xff]
        %v1930 = vld [vmem:[%s1923 + $0x30] sm:$0xff]
        %v1931 = vld [vmem:[%s1923 + $0x38] sm:$0xff]
        %v1932 = vld [vmem:[%s1923 + $0x40] sm:$0xff]
        %v1933 = vld [vmem:[%s1923 + $0x48] sm:$0xff]
        %v1934 = vld [vmem:[%s1923 + $0x50] sm:$0xff]
        %v1935 = vld [vmem:[%s1923 + $0x58] sm:$0xff]
        %v1936 = vld [vmem:[%s1923 + $0x60] sm:$0xff]
        %v1937 = vld [vmem:[%s1923 + $0x68] sm:$0xff]
        %v1938 = vld [vmem:[%s1923 + $0x70] sm:$0xff]
        %v1939 = vld [vmem:[%s1923 + $0x78] sm:$0xff]
        %v1940 = vunpack.c.l.b16 %v1838
        %v1941 = vunpack.c.l.b16 %v1841
        %v1942 = vunpack.c.l.b16 %v1845
        %v1943 = vunpack.c.l.b16 %v1848
        %v1944 = vunpack.c.l.b16 %v1852
        %v1945 = vunpack.c.l.b16 %v1855
        %v1946 = vunpack.c.l.b16 %v1859
        %v1947 = vunpack.c.l.b16 %v1862
        %v1948 = vunpack.c.l.b16 %v1866
        %v1949 = vunpack.c.l.b16 %v1869
        %v1950 = vunpack.c.l.b16 %v1873
        %v1951 = vunpack.c.l.b16 %v1876
        %v1952 = vunpack.c.l.b16 %v1880
        %v1953 = vunpack.c.l.b16 %v1883
        %v1954 = vunpack.c.l.b16 %v1887
        %v1955 = vunpack.c.l.b16 %v1890
        %v1956 = vpack.c.b16 %v1941, %v1940
        %v1957 = vpack.c.b16 %v1943, %v1942
        %v1958 = vpack.c.b16 %v1945, %v1944
        %v1959 = vpack.c.b16 %v1947, %v1946
        %v1960 = vpack.c.b16 %v1949, %v1948
        %v1961 = vpack.c.b16 %v1951, %v1950
        %v1962 = vpack.c.b16 %v1953, %v1952
        %v1963 = vpack.c.b16 %v1955, %v1954
        %v1988 = vunpack.c.l.b16 %v1924
        %v1989 = vunpack.c.h.b16 %v1924
        %v1990 = vunpack.c.l.b16 %v1925
        %v1991 = vunpack.c.h.b16 %v1925
        %v1992 = vunpack.c.l.b16 %v1926
        %v1993 = vunpack.c.h.b16 %v1926
        %v1994 = vunpack.c.l.b16 %v1927
        %v1995 = vunpack.c.h.b16 %v1927
        %v1996 = vunpack.c.l.b16 %v1928
        %v1997 = vunpack.c.h.b16 %v1928
        %v1998 = vunpack.c.l.b16 %v1929
        %v1999 = vunpack.c.h.b16 %v1929
        %v2000 = vunpack.c.l.b16 %v1930
        %v2001 = vunpack.c.h.b16 %v1930
        %v2002 = vunpack.c.l.b16 %v1931
        %v2003 = vunpack.c.h.b16 %v1931
        %v2004 = vunpack.c.l.b16 %v1932
        %v2005 = vunpack.c.h.b16 %v1932
        %v2006 = vunpack.c.l.b16 %v1933
        %v2007 = vunpack.c.h.b16 %v1933
        %v2008 = vunpack.c.l.b16 %v1934
        %v2009 = vunpack.c.h.b16 %v1934
        %v2010 = vunpack.c.l.b16 %v1935
        %v2011 = vunpack.c.h.b16 %v1935
        %v2012 = vunpack.c.l.b16 %v1936
        %v2013 = vunpack.c.h.b16 %v1936
        %v2014 = vunpack.c.l.b16 %v1937
        %v2015 = vunpack.c.h.b16 %v1937
        %v2016 = vunpack.c.l.b16 %v1938
        %v2017 = vunpack.c.h.b16 %v1938
        %v2018 = vunpack.c.l.b16 %v1939
        %v2019 = vunpack.c.h.b16 %v1939
        %v2020 = vpack.c.b16 %v1990, %v1988
        %v2021 = vpack.c.b16 %v1991, %v1989
        %v2022 = vpack.c.b16 %v1994, %v1992
        %v2023 = vpack.c.b16 %v1995, %v1993
        %v2024 = vpack.c.b16 %v1998, %v1996
        %v2025 = vpack.c.b16 %v1999, %v1997
        %v2026 = vpack.c.b16 %v2002, %v2000
        %v2027 = vpack.c.b16 %v2003, %v2001
        %v2028 = vpack.c.b16 %v2006, %v2004
        %v2029 = vpack.c.b16 %v2007, %v2005
        %v2030 = vpack.c.b16 %v2010, %v2008
        %v2031 = vpack.c.b16 %v2011, %v2009
        %v2032 = vpack.c.b16 %v2014, %v2012
        %v2033 = vpack.c.b16 %v2015, %v2013
        %v2034 = vpack.c.b16 %v2018, %v2016
        %v2035 = vpack.c.b16 %v2019, %v2017
        %2052 = vmatprep.subr.bf16.mxu0 %v2035
        %2053 = vmatpush1.bf16.msra.mxu0 %v2034
        %2054 = vmatprep.subr.bf16.mxu0 %v2033
        %2055 = vmatpush1.bf16.msra.mxu0 %v2032
        %2056 = vmatprep.subr.bf16.mxu0 %v2031
        %2057 = vmatpush1.bf16.msra.mxu0 %v2030
        %2058 = vmatprep.subr.bf16.mxu0 %v2029
        %2059 = vmatpush1.bf16.msra.mxu0 %v2028
        %2060 = vmatprep.subr.bf16.mxu0 %v2027
        %2061 = vmatpush1.bf16.msra.mxu0 %v2026
        %2062 = vmatprep.subr.bf16.mxu0 %v2025
        %2063 = vmatpush1.bf16.msra.mxu0 %v2024
        %2064 = vmatprep.subr.bf16.mxu0 %v2023
        %2065 = vmatpush1.bf16.msra.mxu0 %v2022
        %2066 = vmatprep.subr.bf16.mxu0 %v2021
        %2067 = vmatpush1.bf16.msra.mxu0 %v2020
        %2068 = vmatprep.subr.bf16.mxu0 0
        %2069 = vmatpush2.bf16.msra.mxu0 0
        %2070 = vmatprep.subr.bf16.mxu0 0
        %2071 = vmatpush2.bf16.msra.mxu0 0
        %2072 = vmatprep.subr.bf16.mxu0 0
        %2073 = vmatpush2.bf16.msra.mxu0 0
        %2074 = vmatprep.subr.bf16.mxu0 0
        %2075 = vmatpush2.bf16.msra.mxu0 0
        %2076 = vmatprep.subr.bf16.mxu0 0
        %2077 = vmatpush2.bf16.msra.mxu0 0
        %2078 = vmatprep.subr.bf16.mxu0 0
        %2079 = vmatpush2.bf16.msra.mxu0 0
        %2080 = vmatprep.subr.bf16.mxu0 0
        %2081 = vmatpush2.bf16.msra.mxu0 0
        %2082 = vmatprep.subr.bf16.mxu0 0
        %2083 = vmatpush2.bf16.msra.mxu0 0
        %2084 = vmatprep.mubr.bf16.mxu0 0
        %2085 = vmatmul.mubr.bf16.gmra.mxu0 %v1956
        %v2086 = vpop.f32.mrf.mxu0
        %v2087 = vadd.f32 0.0, %v2086
        %v2088 = vpop.f32.mrf.mxu0
        %v2089 = vadd.f32 0.0, %v2088
        %v2090 = vpop.f32.mrf.mxu0
        %v2091 = vadd.f32 0.0, %v2090
        %v2092 = vpop.f32.mrf.mxu0
        %v2093 = vadd.f32 0.0, %v2092
        %2094 = vmatprep.mubr.bf16.mxu0 0
        %2095 = vmatmul.mubr.bf16.gmra.mxu0 %v1957
        %v2096 = vpop.f32.mrf.mxu0
        %v2097 = vadd.f32 0.0, %v2096
        %v2098 = vpop.f32.mrf.mxu0
        %v2099 = vadd.f32 0.0, %v2098
        %v2100 = vpop.f32.mrf.mxu0
        %v2101 = vadd.f32 0.0, %v2100
        %v2102 = vpop.f32.mrf.mxu0
        %v2103 = vadd.f32 0.0, %v2102
        %2104 = vmatprep.mubr.bf16.mxu0 0
        %2105 = vmatmul.mubr.bf16.gmra.mxu0 %v1958
        %v2106 = vpop.f32.mrf.mxu0
        %v2107 = vadd.f32 0.0, %v2106
        %v2108 = vpop.f32.mrf.mxu0
        %v2109 = vadd.f32 0.0, %v2108
        %v2110 = vpop.f32.mrf.mxu0
        %v2111 = vadd.f32 0.0, %v2110
        %v2112 = vpop.f32.mrf.mxu0
        %v2113 = vadd.f32 0.0, %v2112
        %2114 = vmatprep.mubr.bf16.mxu0 0
        %2115 = vmatmul.mubr.bf16.gmra.mxu0 %v1959
        %v2116 = vpop.f32.mrf.mxu0
        %v2117 = vadd.f32 0.0, %v2116
        %v2118 = vpop.f32.mrf.mxu0
        %v2119 = vadd.f32 0.0, %v2118
        %v2120 = vpop.f32.mrf.mxu0
        %v2121 = vadd.f32 0.0, %v2120
        %v2122 = vpop.f32.mrf.mxu0
        %v2123 = vadd.f32 0.0, %v2122
        %2124 = vmatprep.mubr.bf16.mxu0 0
        %2125 = vmatmul.mubr.bf16.gmra.mxu0 %v1960
        %v2126 = vpop.f32.mrf.mxu0
        %v2127 = vadd.f32 0.0, %v2126
        %v2128 = vpop.f32.mrf.mxu0
        %v2129 = vadd.f32 0.0, %v2128
        %v2130 = vpop.f32.mrf.mxu0
        %v2131 = vadd.f32 0.0, %v2130
        %v2132 = vpop.f32.mrf.mxu0
        %v2133 = vadd.f32 0.0, %v2132
        %2134 = vmatprep.mubr.bf16.mxu0 0
        %2135 = vmatmul.mubr.bf16.gmra.mxu0 %v1961
        %v2136 = vpop.f32.mrf.mxu0
        %v2137 = vadd.f32 0.0, %v2136
        %v2138 = vpop.f32.mrf.mxu0
        %v2139 = vadd.f32 0.0, %v2138
        %v2140 = vpop.f32.mrf.mxu0
        %v2141 = vadd.f32 0.0, %v2140
        %v2142 = vpop.f32.mrf.mxu0
        %v2143 = vadd.f32 0.0, %v2142
        %2144 = vmatprep.mubr.bf16.mxu0 0
        %2145 = vmatmul.mubr.bf16.gmra.mxu0 %v1962
        %v2146 = vpop.f32.mrf.mxu0
        %v2147 = vadd.f32 0.0, %v2146
        %v2148 = vpop.f32.mrf.mxu0
        %v2149 = vadd.f32 0.0, %v2148
        %v2150 = vpop.f32.mrf.mxu0
        %v2151 = vadd.f32 0.0, %v2150
        %v2152 = vpop.f32.mrf.mxu0
        %v2153 = vadd.f32 0.0, %v2152
        %2154 = vmatprep.mubr.bf16.mxu0 0
        %2155 = vmatmul.mubr.bf16.gmra.mxu0 %v1963
        %v2156 = vpop.f32.mrf.mxu0
        %v2157 = vadd.f32 0.0, %v2156
        %v2158 = vpop.f32.mrf.mxu0
        %v2159 = vadd.f32 0.0, %v2158
        %v2160 = vpop.f32.mrf.mxu0
        %v2161 = vadd.f32 0.0, %v2160
        %v2162 = vpop.f32.mrf.mxu0
        %v2163 = vadd.f32 0.0, %v2162
        %2164 = vdwg.mxu0
        %v2165 = vadd.f32 %v1891, %v2087
        %v2166 = vadd.f32 %v1892, %v2089
        %v2167 = vadd.f32 %v1893, %v2091
        %v2168 = vadd.f32 %v1894, %v2093
        %v2169 = vadd.f32 %v1895, %v2097
        %v2170 = vadd.f32 %v1896, %v2099
        %v2171 = vadd.f32 %v1897, %v2101
        %v2172 = vadd.f32 %v1898, %v2103
        %v2173 = vadd.f32 %v1899, %v2107
        %v2174 = vadd.f32 %v1900, %v2109
        %v2175 = vadd.f32 %v1901, %v2111
        %v2176 = vadd.f32 %v1902, %v2113
        %v2177 = vadd.f32 %v1903, %v2117
        %v2178 = vadd.f32 %v1904, %v2119
        %v2179 = vadd.f32 %v1905, %v2121
        %v2180 = vadd.f32 %v1906, %v2123
        %v2181 = vadd.f32 %v1907, %v2127
        %v2182 = vadd.f32 %v1908, %v2129
        %v2183 = vadd.f32 %v1909, %v2131
        %v2184 = vadd.f32 %v1910, %v2133
        %v2185 = vadd.f32 %v1911, %v2137
        %v2186 = vadd.f32 %v1912, %v2139
        %v2187 = vadd.f32 %v1913, %v2141
        %v2188 = vadd.f32 %v1914, %v2143
        %v2189 = vadd.f32 %v1915, %v2147
        %v2190 = vadd.f32 %v1916, %v2149
        %v2191 = vadd.f32 %v1917, %v2151
        %v2192 = vadd.f32 %v1918, %v2153
        %v2193 = vadd.f32 %v1919, %v2157
        %v2194 = vadd.f32 %v1920, %v2159
        %v2195 = vadd.f32 %v1921, %v2161
        %v2196 = vadd.f32 %v1922, %v2163
        %2197 = vst [vmem:[#allocation3] sm:$0xff] %v2165
        %2198 = vst [vmem:[#allocation3 + $0x8] sm:$0xff] %v2166
        %2199 = vst [vmem:[#allocation3 + $0x10] sm:$0xff] %v2167
        %2200 = vst [vmem:[#allocation3 + $0x18] sm:$0xff] %v2168
        %2201 = vst [vmem:[#allocation3 + $0x20] sm:$0xff] %v2169
        %2202 = vst [vmem:[#allocation3 + $0x28] sm:$0xff] %v2170
        %2203 = vst [vmem:[#allocation3 + $0x30] sm:$0xff] %v2171
        %2204 = vst [vmem:[#allocation3 + $0x38] sm:$0xff] %v2172
        %2205 = vst [vmem:[#allocation3 + $0x40] sm:$0xff] %v2173
        %2206 = vst [vmem:[#allocation3 + $0x48] sm:$0xff] %v2174
        %2207 = vst [vmem:[#allocation3 + $0x50] sm:$0xff] %v2175
        %2208 = vst [vmem:[#allocation3 + $0x58] sm:$0xff] %v2176
        %2209 = vst [vmem:[#allocation3 + $0x60] sm:$0xff] %v2177
        %2210 = vst [vmem:[#allocation3 + $0x68] sm:$0xff] %v2178
        %2211 = vst [vmem:[#allocation3 + $0x70] sm:$0xff] %v2179
        %2212 = vst [vmem:[#allocation3 + $0x78] sm:$0xff] %v2180
        %2213 = vst [vmem:[#allocation3 + $0x80] sm:$0xff] %v2181
        %2214 = vst [vmem:[#allocation3 + $0x88] sm:$0xff] %v2182
        %2215 = vst [vmem:[#allocation3 + $0x90] sm:$0xff] %v2183
        %2216 = vst [vmem:[#allocation3 + $0x98] sm:$0xff] %v2184
        %2217 = vst [vmem:[#allocation3 + $0xa0] sm:$0xff] %v2185
        %2218 = vst [vmem:[#allocation3 + $0xa8] sm:$0xff] %v2186
        %2219 = vst [vmem:[#allocation3 + $0xb0] sm:$0xff] %v2187
        %2220 = vst [vmem:[#allocation3 + $0xb8] sm:$0xff] %v2188
        %2221 = vst [vmem:[#allocation3 + $0xc0] sm:$0xff] %v2189
        %2222 = vst [vmem:[#allocation3 + $0xc8] sm:$0xff] %v2190
        %2223 = vst [vmem:[#allocation3 + $0xd0] sm:$0xff] %v2191
        %2224 = vst [vmem:[#allocation3 + $0xd8] sm:$0xff] %v2192
        %2225 = vst [vmem:[#allocation3 + $0xe0] sm:$0xff] %v2193
        %2226 = vst [vmem:[#allocation3 + $0xe8] sm:$0xff] %v2194
        %2227 = vst [vmem:[#allocation3 + $0xf0] sm:$0xff] %v2195
        %2228 = vst [vmem:[#allocation3 + $0xf8] sm:$0xff] %v2196
        %v2229 = vld [vmem:[%s569] sm:$0xf]
        %v2230 = vld [vmem:[%s569 + $0x4] sm:$0xf]
        %v2231 = vld [vmem:[%s569 + $0x8] sm:$0x1]
        %v2232 = vld [vmem:[%s569 + $0xc] sm:$0xf]
        %v2233 = vld [vmem:[%s569 + $0x10] sm:$0xf]
        %v2234 = vld [vmem:[%s569 + $0x14] sm:$0x1]
        %v2235 = vld [vmem:[%s569 + $0x18] sm:$0xf]
        %v2236 = vld [vmem:[%s569 + $0x1c] sm:$0xf]
        %v2237 = vld [vmem:[%s569 + $0x20] sm:$0x1]
        %v2238 = vld [vmem:[%s569 + $0x24] sm:$0xf]
        %v2239 = vld [vmem:[%s569 + $0x28] sm:$0xf]
        %v2240 = vld [vmem:[%s569 + $0x2c] sm:$0x1]
        %v2241 = vld [vmem:[%s569 + $0x30] sm:$0xf]
        %v2242 = vld [vmem:[%s569 + $0x34] sm:$0xf]
        %v2243 = vld [vmem:[%s569 + $0x38] sm:$0x1]
        %v2244 = vld [vmem:[%s569 + $0x3c] sm:$0xf]
        %v2245 = vld [vmem:[%s569 + $0x40] sm:$0xf]
        %v2246 = vld [vmem:[%s569 + $0x44] sm:$0x1]
        %v2247 = vld [vmem:[%s569 + $0x48] sm:$0xf]
        %v2248 = vld [vmem:[%s569 + $0x4c] sm:$0xf]
        %v2249 = vld [vmem:[%s569 + $0x50] sm:$0x1]
        %v2250 = vld [vmem:[%s569 + $0x54] sm:$0xf]
        %v2251 = vld [vmem:[%s569 + $0x58] sm:$0xf]
        %v2252 = vld [vmem:[%s569 + $0x5c] sm:$0x1]
        %v2253 = vld [vmem:[#allocation3] sm:$0xff]
        %v2254 = vld [vmem:[#allocation3 + $0x8] sm:$0xff]
        %v2255 = vld [vmem:[#allocation3 + $0x10] sm:$0xff]
        %v2256 = vld [vmem:[#allocation3 + $0x18] sm:$0xff]
        %v2257 = vld [vmem:[#allocation3 + $0x20] sm:$0xff]
        %v2258 = vld [vmem:[#allocation3 + $0x28] sm:$0xff]
        %v2259 = vld [vmem:[#allocation3 + $0x30] sm:$0xff]
        %v2260 = vld [vmem:[#allocation3 + $0x38] sm:$0xff]
        %v2261 = vld [vmem:[#allocation3 + $0x40] sm:$0xff]
        %v2262 = vld [vmem:[#allocation3 + $0x48] sm:$0xff]
        %v2263 = vld [vmem:[#allocation3 + $0x50] sm:$0xff]
        %v2264 = vld [vmem:[#allocation3 + $0x58] sm:$0xff]
        %v2265 = vld [vmem:[#allocation3 + $0x60] sm:$0xff]
        %v2266 = vld [vmem:[#allocation3 + $0x68] sm:$0xff]
        %v2267 = vld [vmem:[#allocation3 + $0x70] sm:$0xff]
        %v2268 = vld [vmem:[#allocation3 + $0x78] sm:$0xff]
        %v2269 = vld [vmem:[#allocation3 + $0x80] sm:$0xff]
        %v2270 = vld [vmem:[#allocation3 + $0x88] sm:$0xff]
        %v2271 = vld [vmem:[#allocation3 + $0x90] sm:$0xff]
        %v2272 = vld [vmem:[#allocation3 + $0x98] sm:$0xff]
        %v2273 = vld [vmem:[#allocation3 + $0xa0] sm:$0xff]
        %v2274 = vld [vmem:[#allocation3 + $0xa8] sm:$0xff]
        %v2275 = vld [vmem:[#allocation3 + $0xb0] sm:$0xff]
        %v2276 = vld [vmem:[#allocation3 + $0xb8] sm:$0xff]
        %v2277 = vld [vmem:[#allocation3 + $0xc0] sm:$0xff]
        %v2278 = vld [vmem:[#allocation3 + $0xc8] sm:$0xff]
        %v2279 = vld [vmem:[#allocation3 + $0xd0] sm:$0xff]
        %v2280 = vld [vmem:[#allocation3 + $0xd8] sm:$0xff]
        %v2281 = vld [vmem:[#allocation3 + $0xe0] sm:$0xff]
        %v2282 = vld [vmem:[#allocation3 + $0xe8] sm:$0xff]
        %v2283 = vld [vmem:[#allocation3 + $0xf0] sm:$0xff]
        %v2284 = vld [vmem:[#allocation3 + $0xf8] sm:$0xff]
        %s2285 = scalar_lea.vmem [#allocation7], 384
        %v2286 = vld [vmem:[%s2285] sm:$0xff]
        %v2287 = vld [vmem:[%s2285 + $0x8] sm:$0xff]
        %v2288 = vld [vmem:[%s2285 + $0x10] sm:$0xff]
        %v2289 = vld [vmem:[%s2285 + $0x18] sm:$0xff]
        %v2290 = vld [vmem:[%s2285 + $0x20] sm:$0xff]
        %v2291 = vld [vmem:[%s2285 + $0x28] sm:$0xff]
        %v2292 = vld [vmem:[%s2285 + $0x30] sm:$0xff]
        %v2293 = vld [vmem:[%s2285 + $0x38] sm:$0xff]
        %v2294 = vld [vmem:[%s2285 + $0x40] sm:$0xff]
        %v2295 = vld [vmem:[%s2285 + $0x48] sm:$0xff]
        %v2296 = vld [vmem:[%s2285 + $0x50] sm:$0xff]
        %v2297 = vld [vmem:[%s2285 + $0x58] sm:$0xff]
        %v2298 = vld [vmem:[%s2285 + $0x60] sm:$0xff]
        %v2299 = vld [vmem:[%s2285 + $0x68] sm:$0xff]
        %v2300 = vld [vmem:[%s2285 + $0x70] sm:$0xff]
        %v2301 = vld [vmem:[%s2285 + $0x78] sm:$0xff]
        %v2318 = vunpack.c.l.b16 %v2229
        %v2319 = vunpack.c.l.b16 %v2230
        %v2320 = vunpack.c.l.b16 %v2232
        %v2321 = vunpack.c.l.b16 %v2233
        %v2322 = vunpack.c.l.b16 %v2235
        %v2323 = vunpack.c.l.b16 %v2236
        %v2324 = vunpack.c.l.b16 %v2238
        %v2325 = vunpack.c.l.b16 %v2239
        %v2326 = vunpack.c.l.b16 %v2241
        %v2327 = vunpack.c.l.b16 %v2242
        %v2328 = vunpack.c.l.b16 %v2244
        %v2329 = vunpack.c.l.b16 %v2245
        %v2330 = vunpack.c.l.b16 %v2247
        %v2331 = vunpack.c.l.b16 %v2248
        %v2332 = vunpack.c.l.b16 %v2250
        %v2333 = vunpack.c.l.b16 %v2251
        %v2334 = vpack.c.b16 %v2319, %v2318
        %v2335 = vpack.c.b16 %v2321, %v2320
        %v2336 = vpack.c.b16 %v2323, %v2322
        %v2337 = vpack.c.b16 %v2325, %v2324
        %v2338 = vpack.c.b16 %v2327, %v2326
        %v2339 = vpack.c.b16 %v2329, %v2328
        %v2340 = vpack.c.b16 %v2331, %v2330
        %v2341 = vpack.c.b16 %v2333, %v2332
        %v2366 = vunpack.c.l.b16 %v2286
        %v2367 = vunpack.c.h.b16 %v2286
        %v2368 = vunpack.c.l.b16 %v2287
        %v2369 = vunpack.c.h.b16 %v2287
        %v2370 = vunpack.c.l.b16 %v2288
        %v2371 = vunpack.c.h.b16 %v2288
        %v2372 = vunpack.c.l.b16 %v2289
        %v2373 = vunpack.c.h.b16 %v2289
        %v2374 = vunpack.c.l.b16 %v2290
        %v2375 = vunpack.c.h.b16 %v2290
        %v2376 = vunpack.c.l.b16 %v2291
        %v2377 = vunpack.c.h.b16 %v2291
        %v2378 = vunpack.c.l.b16 %v2292
        %v2379 = vunpack.c.h.b16 %v2292
        %v2380 = vunpack.c.l.b16 %v2293
        %v2381 = vunpack.c.h.b16 %v2293
        %v2382 = vunpack.c.l.b16 %v2294
        %v2383 = vunpack.c.h.b16 %v2294
        %v2384 = vunpack.c.l.b16 %v2295
        %v2385 = vunpack.c.h.b16 %v2295
        %v2386 = vunpack.c.l.b16 %v2296
        %v2387 = vunpack.c.h.b16 %v2296
        %v2388 = vunpack.c.l.b16 %v2297
        %v2389 = vunpack.c.h.b16 %v2297
        %v2390 = vunpack.c.l.b16 %v2298
        %v2391 = vunpack.c.h.b16 %v2298
        %v2392 = vunpack.c.l.b16 %v2299
        %v2393 = vunpack.c.h.b16 %v2299
        %v2394 = vunpack.c.l.b16 %v2300
        %v2395 = vunpack.c.h.b16 %v2300
        %v2396 = vunpack.c.l.b16 %v2301
        %v2397 = vunpack.c.h.b16 %v2301
        %v2398 = vpack.c.b16 %v2368, %v2366
        %v2399 = vpack.c.b16 %v2369, %v2367
        %v2400 = vpack.c.b16 %v2372, %v2370
        %v2401 = vpack.c.b16 %v2373, %v2371
        %v2402 = vpack.c.b16 %v2376, %v2374
        %v2403 = vpack.c.b16 %v2377, %v2375
        %v2404 = vpack.c.b16 %v2380, %v2378
        %v2405 = vpack.c.b16 %v2381, %v2379
        %v2406 = vpack.c.b16 %v2384, %v2382
        %v2407 = vpack.c.b16 %v2385, %v2383
        %v2408 = vpack.c.b16 %v2388, %v2386
        %v2409 = vpack.c.b16 %v2389, %v2387
        %v2410 = vpack.c.b16 %v2392, %v2390
        %v2411 = vpack.c.b16 %v2393, %v2391
        %v2412 = vpack.c.b16 %v2396, %v2394
        %v2413 = vpack.c.b16 %v2397, %v2395
        %2430 = vmatprep.subr.bf16.mxu0 %v2413
        %2431 = vmatpush1.bf16.msra.mxu0 %v2412
        %2432 = vmatprep.subr.bf16.mxu0 %v2411
        %2433 = vmatpush1.bf16.msra.mxu0 %v2410
        %2434 = vmatprep.subr.bf16.mxu0 %v2409
        %2435 = vmatpush1.bf16.msra.mxu0 %v2408
        %2436 = vmatprep.subr.bf16.mxu0 %v2407
        %2437 = vmatpush1.bf16.msra.mxu0 %v2406
        %2438 = vmatprep.subr.bf16.mxu0 %v2405
        %2439 = vmatpush1.bf16.msra.mxu0 %v2404
        %2440 = vmatprep.subr.bf16.mxu0 %v2403
        %2441 = vmatpush1.bf16.msra.mxu0 %v2402
        %2442 = vmatprep.subr.bf16.mxu0 %v2401
        %2443 = vmatpush1.bf16.msra.mxu0 %v2400
        %2444 = vmatprep.subr.bf16.mxu0 %v2399
        %2445 = vmatpush1.bf16.msra.mxu0 %v2398
        %2446 = vmatprep.subr.bf16.mxu0 0
        %2447 = vmatpush2.bf16.msra.mxu0 0
        %2448 = vmatprep.subr.bf16.mxu0 0
        %2449 = vmatpush2.bf16.msra.mxu0 0
        %2450 = vmatprep.subr.bf16.mxu0 0
        %2451 = vmatpush2.bf16.msra.mxu0 0
        %2452 = vmatprep.subr.bf16.mxu0 0
        %2453 = vmatpush2.bf16.msra.mxu0 0
        %2454 = vmatprep.subr.bf16.mxu0 0
        %2455 = vmatpush2.bf16.msra.mxu0 0
        %2456 = vmatprep.subr.bf16.mxu0 0
        %2457 = vmatpush2.bf16.msra.mxu0 0
        %2458 = vmatprep.subr.bf16.mxu0 0
        %2459 = vmatpush2.bf16.msra.mxu0 0
        %2460 = vmatprep.subr.bf16.mxu0 0
        %2461 = vmatpush2.bf16.msra.mxu0 0
        %2462 = vmatprep.mubr.bf16.mxu0 0
        %2463 = vmatmul.mubr.bf16.gmra.mxu0 %v2334
        %v2464 = vpop.f32.mrf.mxu0
        %v2465 = vadd.f32 0.0, %v2464
        %v2466 = vpop.f32.mrf.mxu0
        %v2467 = vadd.f32 0.0, %v2466
        %v2468 = vpop.f32.mrf.mxu0
        %v2469 = vadd.f32 0.0, %v2468
        %v2470 = vpop.f32.mrf.mxu0
        %v2471 = vadd.f32 0.0, %v2470
        %2472 = vmatprep.mubr.bf16.mxu0 0
        %2473 = vmatmul.mubr.bf16.gmra.mxu0 %v2335
        %v2474 = vpop.f32.mrf.mxu0
        %v2475 = vadd.f32 0.0, %v2474
        %v2476 = vpop.f32.mrf.mxu0
        %v2477 = vadd.f32 0.0, %v2476
        %v2478 = vpop.f32.mrf.mxu0
        %v2479 = vadd.f32 0.0, %v2478
        %v2480 = vpop.f32.mrf.mxu0
        %v2481 = vadd.f32 0.0, %v2480
        %2482 = vmatprep.mubr.bf16.mxu0 0
        %2483 = vmatmul.mubr.bf16.gmra.mxu0 %v2336
        %v2484 = vpop.f32.mrf.mxu0
        %v2485 = vadd.f32 0.0, %v2484
        %v2486 = vpop.f32.mrf.mxu0
        %v2487 = vadd.f32 0.0, %v2486
        %v2488 = vpop.f32.mrf.mxu0
        %v2489 = vadd.f32 0.0, %v2488
        %v2490 = vpop.f32.mrf.mxu0
        %v2491 = vadd.f32 0.0, %v2490
        %2492 = vmatprep.mubr.bf16.mxu0 0
        %2493 = vmatmul.mubr.bf16.gmra.mxu0 %v2337
        %v2494 = vpop.f32.mrf.mxu0
        %v2495 = vadd.f32 0.0, %v2494
        %v2496 = vpop.f32.mrf.mxu0
        %v2497 = vadd.f32 0.0, %v2496
        %v2498 = vpop.f32.mrf.mxu0
        %v2499 = vadd.f32 0.0, %v2498
        %v2500 = vpop.f32.mrf.mxu0
        %v2501 = vadd.f32 0.0, %v2500
        %2502 = vmatprep.mubr.bf16.mxu0 0
        %2503 = vmatmul.mubr.bf16.gmra.mxu0 %v2338
        %v2504 = vpop.f32.mrf.mxu0
        %v2505 = vadd.f32 0.0, %v2504
        %v2506 = vpop.f32.mrf.mxu0
        %v2507 = vadd.f32 0.0, %v2506
        %v2508 = vpop.f32.mrf.mxu0
        %v2509 = vadd.f32 0.0, %v2508
        %v2510 = vpop.f32.mrf.mxu0
        %v2511 = vadd.f32 0.0, %v2510
        %2512 = vmatprep.mubr.bf16.mxu0 0
        %2513 = vmatmul.mubr.bf16.gmra.mxu0 %v2339
        %v2514 = vpop.f32.mrf.mxu0
        %v2515 = vadd.f32 0.0, %v2514
        %v2516 = vpop.f32.mrf.mxu0
        %v2517 = vadd.f32 0.0, %v2516
        %v2518 = vpop.f32.mrf.mxu0
        %v2519 = vadd.f32 0.0, %v2518
        %v2520 = vpop.f32.mrf.mxu0
        %v2521 = vadd.f32 0.0, %v2520
        %2522 = vmatprep.mubr.bf16.mxu0 0
        %2523 = vmatmul.mubr.bf16.gmra.mxu0 %v2340
        %v2524 = vpop.f32.mrf.mxu0
        %v2525 = vadd.f32 0.0, %v2524
        %v2526 = vpop.f32.mrf.mxu0
        %v2527 = vadd.f32 0.0, %v2526
        %v2528 = vpop.f32.mrf.mxu0
        %v2529 = vadd.f32 0.0, %v2528
        %v2530 = vpop.f32.mrf.mxu0
        %v2531 = vadd.f32 0.0, %v2530
        %2532 = vmatprep.mubr.bf16.mxu0 0
        %2533 = vmatmul.mubr.bf16.gmra.mxu0 %v2341
        %v2534 = vpop.f32.mrf.mxu0
        %v2535 = vadd.f32 0.0, %v2534
        %v2536 = vpop.f32.mrf.mxu0
        %v2537 = vadd.f32 0.0, %v2536
        %v2538 = vpop.f32.mrf.mxu0
        %v2539 = vadd.f32 0.0, %v2538
        %v2540 = vpop.f32.mrf.mxu0
        %v2541 = vadd.f32 0.0, %v2540
        %2542 = vdwg.mxu0
        %v2543 = vadd.f32 %v2253, %v2465
        %v2544 = vadd.f32 %v2254, %v2467
        %v2545 = vadd.f32 %v2255, %v2469
        %v2546 = vadd.f32 %v2256, %v2471
        %v2547 = vadd.f32 %v2257, %v2475
        %v2548 = vadd.f32 %v2258, %v2477
        %v2549 = vadd.f32 %v2259, %v2479
        %v2550 = vadd.f32 %v2260, %v2481
        %v2551 = vadd.f32 %v2261, %v2485
        %v2552 = vadd.f32 %v2262, %v2487
        %v2553 = vadd.f32 %v2263, %v2489
        %v2554 = vadd.f32 %v2264, %v2491
        %v2555 = vadd.f32 %v2265, %v2495
        %v2556 = vadd.f32 %v2266, %v2497
        %v2557 = vadd.f32 %v2267, %v2499
        %v2558 = vadd.f32 %v2268, %v2501
        %v2559 = vadd.f32 %v2269, %v2505
        %v2560 = vadd.f32 %v2270, %v2507
        %v2561 = vadd.f32 %v2271, %v2509
        %v2562 = vadd.f32 %v2272, %v2511
        %v2563 = vadd.f32 %v2273, %v2515
        %v2564 = vadd.f32 %v2274, %v2517
        %v2565 = vadd.f32 %v2275, %v2519
        %v2566 = vadd.f32 %v2276, %v2521
        %v2567 = vadd.f32 %v2277, %v2525
        %v2568 = vadd.f32 %v2278, %v2527
        %v2569 = vadd.f32 %v2279, %v2529
        %v2570 = vadd.f32 %v2280, %v2531
        %v2571 = vadd.f32 %v2281, %v2535
        %v2572 = vadd.f32 %v2282, %v2537
        %v2573 = vadd.f32 %v2283, %v2539
        %v2574 = vadd.f32 %v2284, %v2541
        %2575 = vst [vmem:[#allocation3] sm:$0xff] %v2543
        %2576 = vst [vmem:[#allocation3 + $0x8] sm:$0xff] %v2544
        %2577 = vst [vmem:[#allocation3 + $0x10] sm:$0xff] %v2545
        %2578 = vst [vmem:[#allocation3 + $0x18] sm:$0xff] %v2546
        %2579 = vst [vmem:[#allocation3 + $0x20] sm:$0xff] %v2547
        %2580 = vst [vmem:[#allocation3 + $0x28] sm:$0xff] %v2548
        %2581 = vst [vmem:[#allocation3 + $0x30] sm:$0xff] %v2549
        %2582 = vst [vmem:[#allocation3 + $0x38] sm:$0xff] %v2550
        %2583 = vst [vmem:[#allocation3 + $0x40] sm:$0xff] %v2551
        %2584 = vst [vmem:[#allocation3 + $0x48] sm:$0xff] %v2552
        %2585 = vst [vmem:[#allocation3 + $0x50] sm:$0xff] %v2553
        %2586 = vst [vmem:[#allocation3 + $0x58] sm:$0xff] %v2554
        %2587 = vst [vmem:[#allocation3 + $0x60] sm:$0xff] %v2555
        %2588 = vst [vmem:[#allocation3 + $0x68] sm:$0xff] %v2556
        %2589 = vst [vmem:[#allocation3 + $0x70] sm:$0xff] %v2557
        %2590 = vst [vmem:[#allocation3 + $0x78] sm:$0xff] %v2558
        %2591 = vst [vmem:[#allocation3 + $0x80] sm:$0xff] %v2559
        %2592 = vst [vmem:[#allocation3 + $0x88] sm:$0xff] %v2560
        %2593 = vst [vmem:[#allocation3 + $0x90] sm:$0xff] %v2561
        %2594 = vst [vmem:[#allocation3 + $0x98] sm:$0xff] %v2562
        %2595 = vst [vmem:[#allocation3 + $0xa0] sm:$0xff] %v2563
        %2596 = vst [vmem:[#allocation3 + $0xa8] sm:$0xff] %v2564
        %2597 = vst [vmem:[#allocation3 + $0xb0] sm:$0xff] %v2565
        %2598 = vst [vmem:[#allocation3 + $0xb8] sm:$0xff] %v2566
        %2599 = vst [vmem:[#allocation3 + $0xc0] sm:$0xff] %v2567
        %2600 = vst [vmem:[#allocation3 + $0xc8] sm:$0xff] %v2568
        %2601 = vst [vmem:[#allocation3 + $0xd0] sm:$0xff] %v2569
        %2602 = vst [vmem:[#allocation3 + $0xd8] sm:$0xff] %v2570
        %2603 = vst [vmem:[#allocation3 + $0xe0] sm:$0xff] %v2571
        %2604 = vst [vmem:[#allocation3 + $0xe8] sm:$0xff] %v2572
        %2605 = vst [vmem:[#allocation3 + $0xf0] sm:$0xff] %v2573
        %2606 = vst [vmem:[#allocation3 + $0xf8] sm:$0xff] %v2574
        %v2608 = vshrl.u32 %v2229, 16
        %v2610 = vrot.slane %v2608, 4
        %v2611 = vshll.u32 %v2229, 16
        %v2613 = vrot.slane %v2611, 5
        %v2614 = vor.u32 %v2610, %v2613
        %v2615 = vrot.slane %v2614, 4
        %v2617 = vshll.u32 %v2230, 16
        %v2619 = vrot.slane %v2617, 5
        %v2620 = vsel %vm1293, %v2615, %v2619
        %v2621 = vshrl.u32 %v2230, 16
        %v2623 = vrot.slane %v2621, 4
        %v2624 = vor.u32 %v2623, %v2619
        %v2625 = vrot.slane %v2624, 4
        %v2627 = vshll.u32 %v2231, 16
        %v2629 = vrot.slane %v2627, 5
        %v2630 = vsel %vm1293, %v2625, %v2629
        %v2632 = vshrl.u32 %v2232, 16
        %v2634 = vrot.slane %v2632, 4
        %v2635 = vshll.u32 %v2232, 16
        %v2637 = vrot.slane %v2635, 5
        %v2638 = vor.u32 %v2634, %v2637
        %v2639 = vrot.slane %v2638, 4
        %v2641 = vshll.u32 %v2233, 16
        %v2643 = vrot.slane %v2641, 5
        %v2644 = vsel %vm1293, %v2639, %v2643
        %v2645 = vshrl.u32 %v2233, 16
        %v2647 = vrot.slane %v2645, 4
        %v2648 = vor.u32 %v2647, %v2643
        %v2649 = vrot.slane %v2648, 4
        %v2651 = vshll.u32 %v2234, 16
        %v2653 = vrot.slane %v2651, 5
        %v2654 = vsel %vm1293, %v2649, %v2653
        %v2656 = vshrl.u32 %v2235, 16
        %v2658 = vrot.slane %v2656, 4
        %v2659 = vshll.u32 %v2235, 16
        %v2661 = vrot.slane %v2659, 5
        %v2662 = vor.u32 %v2658, %v2661
        %v2663 = vrot.slane %v2662, 4
        %v2665 = vshll.u32 %v2236, 16
        %v2667 = vrot.slane %v2665, 5
        %v2668 = vsel %vm1293, %v2663, %v2667
        %v2669 = vshrl.u32 %v2236, 16
        %v2671 = vrot.slane %v2669, 4
        %v2672 = vor.u32 %v2671, %v2667
        %v2673 = vrot.slane %v2672, 4
        %v2675 = vshll.u32 %v2237, 16
        %v2677 = vrot.slane %v2675, 5
        %v2678 = vsel %vm1293, %v2673, %v2677
        %v2680 = vshrl.u32 %v2238, 16
        %v2682 = vrot.slane %v2680, 4
        %v2683 = vshll.u32 %v2238, 16
        %v2685 = vrot.slane %v2683, 5
        %v2686 = vor.u32 %v2682, %v2685
        %v2687 = vrot.slane %v2686, 4
        %v2689 = vshll.u32 %v2239, 16
        %v2691 = vrot.slane %v2689, 5
        %v2692 = vsel %vm1293, %v2687, %v2691
        %v2693 = vshrl.u32 %v2239, 16
        %v2695 = vrot.slane %v2693, 4
        %v2696 = vor.u32 %v2695, %v2691
        %v2697 = vrot.slane %v2696, 4
        %v2699 = vshll.u32 %v2240, 16
        %v2701 = vrot.slane %v2699, 5
        %v2702 = vsel %vm1293, %v2697, %v2701
        %v2704 = vshrl.u32 %v2241, 16
        %v2706 = vrot.slane %v2704, 4
        %v2707 = vshll.u32 %v2241, 16
        %v2709 = vrot.slane %v2707, 5
        %v2710 = vor.u32 %v2706, %v2709
        %v2711 = vrot.slane %v2710, 4
        %v2713 = vshll.u32 %v2242, 16
        %v2715 = vrot.slane %v2713, 5
        %v2716 = vsel %vm1293, %v2711, %v2715
        %v2717 = vshrl.u32 %v2242, 16
        %v2719 = vrot.slane %v2717, 4
        %v2720 = vor.u32 %v2719, %v2715
        %v2721 = vrot.slane %v2720, 4
        %v2723 = vshll.u32 %v2243, 16
        %v2725 = vrot.slane %v2723, 5
        %v2726 = vsel %vm1293, %v2721, %v2725
        %v2728 = vshrl.u32 %v2244, 16
        %v2730 = vrot.slane %v2728, 4
        %v2731 = vshll.u32 %v2244, 16
        %v2733 = vrot.slane %v2731, 5
        %v2734 = vor.u32 %v2730, %v2733
        %v2735 = vrot.slane %v2734, 4
        %v2737 = vshll.u32 %v2245, 16
        %v2739 = vrot.slane %v2737, 5
        %v2740 = vsel %vm1293, %v2735, %v2739
        %v2741 = vshrl.u32 %v2245, 16
        %v2743 = vrot.slane %v2741, 4
        %v2744 = vor.u32 %v2743, %v2739
        %v2745 = vrot.slane %v2744, 4
        %v2747 = vshll.u32 %v2246, 16
        %v2749 = vrot.slane %v2747, 5
        %v2750 = vsel %vm1293, %v2745, %v2749
        %v2752 = vshrl.u32 %v2247, 16
        %v2754 = vrot.slane %v2752, 4
        %v2755 = vshll.u32 %v2247, 16
        %v2757 = vrot.slane %v2755, 5
        %v2758 = vor.u32 %v2754, %v2757
        %v2759 = vrot.slane %v2758, 4
        %v2761 = vshll.u32 %v2248, 16
        %v2763 = vrot.slane %v2761, 5
        %v2764 = vsel %vm1293, %v2759, %v2763
        %v2765 = vshrl.u32 %v2248, 16
        %v2767 = vrot.slane %v2765, 4
        %v2768 = vor.u32 %v2767, %v2763
        %v2769 = vrot.slane %v2768, 4
        %v2771 = vshll.u32 %v2249, 16
        %v2773 = vrot.slane %v2771, 5
        %v2774 = vsel %vm1293, %v2769, %v2773
        %v2776 = vshrl.u32 %v2250, 16
        %v2778 = vrot.slane %v2776, 4
        %v2779 = vshll.u32 %v2250, 16
        %v2781 = vrot.slane %v2779, 5
        %v2782 = vor.u32 %v2778, %v2781
        %v2783 = vrot.slane %v2782, 4
        %v2785 = vshll.u32 %v2251, 16
        %v2787 = vrot.slane %v2785, 5
        %v2788 = vsel %vm1293, %v2783, %v2787
        %v2789 = vshrl.u32 %v2251, 16
        %v2791 = vrot.slane %v2789, 4
        %v2792 = vor.u32 %v2791, %v2787
        %v2793 = vrot.slane %v2792, 4
        %v2795 = vshll.u32 %v2252, 16
        %v2797 = vrot.slane %v2795, 5
        %v2798 = vsel %vm1293, %v2793, %v2797
        %v2799 = vld [vmem:[#allocation3] sm:$0xff]
        %v2800 = vld [vmem:[#allocation3 + $0x8] sm:$0xff]
        %v2801 = vld [vmem:[#allocation3 + $0x10] sm:$0xff]
        %v2802 = vld [vmem:[#allocation3 + $0x18] sm:$0xff]
        %v2803 = vld [vmem:[#allocation3 + $0x20] sm:$0xff]
        %v2804 = vld [vmem:[#allocation3 + $0x28] sm:$0xff]
        %v2805 = vld [vmem:[#allocation3 + $0x30] sm:$0xff]
        %v2806 = vld [vmem:[#allocation3 + $0x38] sm:$0xff]
        %v2807 = vld [vmem:[#allocation3 + $0x40] sm:$0xff]
        %v2808 = vld [vmem:[#allocation3 + $0x48] sm:$0xff]
        %v2809 = vld [vmem:[#allocation3 + $0x50] sm:$0xff]
        %v2810 = vld [vmem:[#allocation3 + $0x58] sm:$0xff]
        %v2811 = vld [vmem:[#allocation3 + $0x60] sm:$0xff]
        %v2812 = vld [vmem:[#allocation3 + $0x68] sm:$0xff]
        %v2813 = vld [vmem:[#allocation3 + $0x70] sm:$0xff]
        %v2814 = vld [vmem:[#allocation3 + $0x78] sm:$0xff]
        %v2815 = vld [vmem:[#allocation3 + $0x80] sm:$0xff]
        %v2816 = vld [vmem:[#allocation3 + $0x88] sm:$0xff]
        %v2817 = vld [vmem:[#allocation3 + $0x90] sm:$0xff]
        %v2818 = vld [vmem:[#allocation3 + $0x98] sm:$0xff]
        %v2819 = vld [vmem:[#allocation3 + $0xa0] sm:$0xff]
        %v2820 = vld [vmem:[#allocation3 + $0xa8] sm:$0xff]
        %v2821 = vld [vmem:[#allocation3 + $0xb0] sm:$0xff]
        %v2822 = vld [vmem:[#allocation3 + $0xb8] sm:$0xff]
        %v2823 = vld [vmem:[#allocation3 + $0xc0] sm:$0xff]
        %v2824 = vld [vmem:[#allocation3 + $0xc8] sm:$0xff]
        %v2825 = vld [vmem:[#allocation3 + $0xd0] sm:$0xff]
        %v2826 = vld [vmem:[#allocation3 + $0xd8] sm:$0xff]
        %v2827 = vld [vmem:[#allocation3 + $0xe0] sm:$0xff]
        %v2828 = vld [vmem:[#allocation3 + $0xe8] sm:$0xff]
        %v2829 = vld [vmem:[#allocation3 + $0xf0] sm:$0xff]
        %v2830 = vld [vmem:[#allocation3 + $0xf8] sm:$0xff]
        %s2831 = scalar_lea.vmem [#allocation7], 512
        %v2832 = vld [vmem:[%s2831] sm:$0xff]
        %v2833 = vld [vmem:[%s2831 + $0x8] sm:$0xff]
        %v2834 = vld [vmem:[%s2831 + $0x10] sm:$0xff]
        %v2835 = vld [vmem:[%s2831 + $0x18] sm:$0xff]
        %v2836 = vld [vmem:[%s2831 + $0x20] sm:$0xff]
        %v2837 = vld [vmem:[%s2831 + $0x28] sm:$0xff]
        %v2838 = vld [vmem:[%s2831 + $0x30] sm:$0xff]
        %v2839 = vld [vmem:[%s2831 + $0x38] sm:$0xff]
        %v2840 = vld [vmem:[%s2831 + $0x40] sm:$0xff]
        %v2841 = vld [vmem:[%s2831 + $0x48] sm:$0xff]
        %v2842 = vld [vmem:[%s2831 + $0x50] sm:$0xff]
        %v2843 = vld [vmem:[%s2831 + $0x58] sm:$0xff]
        %v2844 = vld [vmem:[%s2831 + $0x60] sm:$0xff]
        %v2845 = vld [vmem:[%s2831 + $0x68] sm:$0xff]
        %v2846 = vld [vmem:[%s2831 + $0x70] sm:$0xff]
        %v2847 = vld [vmem:[%s2831 + $0x78] sm:$0xff]
        %v2848 = vunpack.c.l.b16 %v2620
        %v2849 = vunpack.c.l.b16 %v2630
        %v2850 = vunpack.c.l.b16 %v2644
        %v2851 = vunpack.c.l.b16 %v2654
        %v2852 = vunpack.c.l.b16 %v2668
        %v2853 = vunpack.c.l.b16 %v2678
        %v2854 = vunpack.c.l.b16 %v2692
        %v2855 = vunpack.c.l.b16 %v2702
        %v2856 = vunpack.c.l.b16 %v2716
        %v2857 = vunpack.c.l.b16 %v2726
        %v2858 = vunpack.c.l.b16 %v2740
        %v2859 = vunpack.c.l.b16 %v2750
        %v2860 = vunpack.c.l.b16 %v2764
        %v2861 = vunpack.c.l.b16 %v2774
        %v2862 = vunpack.c.l.b16 %v2788
        %v2863 = vunpack.c.l.b16 %v2798
        %v2864 = vpack.c.b16 %v2849, %v2848
        %v2865 = vpack.c.b16 %v2851, %v2850
        %v2866 = vpack.c.b16 %v2853, %v2852
        %v2867 = vpack.c.b16 %v2855, %v2854
        %v2868 = vpack.c.b16 %v2857, %v2856
        %v2869 = vpack.c.b16 %v2859, %v2858
        %v2870 = vpack.c.b16 %v2861, %v2860
        %v2871 = vpack.c.b16 %v2863, %v2862
        %v2896 = vunpack.c.l.b16 %v2832
        %v2897 = vunpack.c.h.b16 %v2832
        %v2898 = vunpack.c.l.b16 %v2833
        %v2899 = vunpack.c.h.b16 %v2833
        %v2900 = vunpack.c.l.b16 %v2834
        %v2901 = vunpack.c.h.b16 %v2834
        %v2902 = vunpack.c.l.b16 %v2835
        %v2903 = vunpack.c.h.b16 %v2835
        %v2904 = vunpack.c.l.b16 %v2836
        %v2905 = vunpack.c.h.b16 %v2836
        %v2906 = vunpack.c.l.b16 %v2837
        %v2907 = vunpack.c.h.b16 %v2837
        %v2908 = vunpack.c.l.b16 %v2838
        %v2909 = vunpack.c.h.b16 %v2838
        %v2910 = vunpack.c.l.b16 %v2839
        %v2911 = vunpack.c.h.b16 %v2839
        %v2912 = vunpack.c.l.b16 %v2840
        %v2913 = vunpack.c.h.b16 %v2840
        %v2914 = vunpack.c.l.b16 %v2841
        %v2915 = vunpack.c.h.b16 %v2841
        %v2916 = vunpack.c.l.b16 %v2842
        %v2917 = vunpack.c.h.b16 %v2842
        %v2918 = vunpack.c.l.b16 %v2843
        %v2919 = vunpack.c.h.b16 %v2843
        %v2920 = vunpack.c.l.b16 %v2844
        %v2921 = vunpack.c.h.b16 %v2844
        %v2922 = vunpack.c.l.b16 %v2845
        %v2923 = vunpack.c.h.b16 %v2845
        %v2924 = vunpack.c.l.b16 %v2846
        %v2925 = vunpack.c.h.b16 %v2846
        %v2926 = vunpack.c.l.b16 %v2847
        %v2927 = vunpack.c.h.b16 %v2847
        %v2928 = vpack.c.b16 %v2898, %v2896
        %v2929 = vpack.c.b16 %v2899, %v2897
        %v2930 = vpack.c.b16 %v2902, %v2900
        %v2931 = vpack.c.b16 %v2903, %v2901
        %v2932 = vpack.c.b16 %v2906, %v2904
        %v2933 = vpack.c.b16 %v2907, %v2905
        %v2934 = vpack.c.b16 %v2910, %v2908
        %v2935 = vpack.c.b16 %v2911, %v2909
        %v2936 = vpack.c.b16 %v2914, %v2912
        %v2937 = vpack.c.b16 %v2915, %v2913
        %v2938 = vpack.c.b16 %v2918, %v2916
        %v2939 = vpack.c.b16 %v2919, %v2917
        %v2940 = vpack.c.b16 %v2922, %v2920
        %v2941 = vpack.c.b16 %v2923, %v2921
        %v2942 = vpack.c.b16 %v2926, %v2924
        %v2943 = vpack.c.b16 %v2927, %v2925
        %2960 = vmatprep.subr.bf16.mxu0 %v2943
        %2961 = vmatpush1.bf16.msra.mxu0 %v2942
        %2962 = vmatprep.subr.bf16.mxu0 %v2941
        %2963 = vmatpush1.bf16.msra.mxu0 %v2940
        %2964 = vmatprep.subr.bf16.mxu0 %v2939
        %2965 = vmatpush1.bf16.msra.mxu0 %v2938
        %2966 = vmatprep.subr.bf16.mxu0 %v2937
        %2967 = vmatpush1.bf16.msra.mxu0 %v2936
        %2968 = vmatprep.subr.bf16.mxu0 %v2935
        %2969 = vmatpush1.bf16.msra.mxu0 %v2934
        %2970 = vmatprep.subr.bf16.mxu0 %v2933
        %2971 = vmatpush1.bf16.msra.mxu0 %v2932
        %2972 = vmatprep.subr.bf16.mxu0 %v2931
        %2973 = vmatpush1.bf16.msra.mxu0 %v2930
        %2974 = vmatprep.subr.bf16.mxu0 %v2929
        %2975 = vmatpush1.bf16.msra.mxu0 %v2928
        %2976 = vmatprep.subr.bf16.mxu0 0
        %2977 = vmatpush2.bf16.msra.mxu0 0
        %2978 = vmatprep.subr.bf16.mxu0 0
        %2979 = vmatpush2.bf16.msra.mxu0 0
        %2980 = vmatprep.subr.bf16.mxu0 0
        %2981 = vmatpush2.bf16.msra.mxu0 0
        %2982 = vmatprep.subr.bf16.mxu0 0
        %2983 = vmatpush2.bf16.msra.mxu0 0
        %2984 = vmatprep.subr.bf16.mxu0 0
        %2985 = vmatpush2.bf16.msra.mxu0 0
        %2986 = vmatprep.subr.bf16.mxu0 0
        %2987 = vmatpush2.bf16.msra.mxu0 0
        %2988 = vmatprep.subr.bf16.mxu0 0
        %2989 = vmatpush2.bf16.msra.mxu0 0
        %2990 = vmatprep.subr.bf16.mxu0 0
        %2991 = vmatpush2.bf16.msra.mxu0 0
        %2992 = vmatprep.mubr.bf16.mxu0 0
        %2993 = vmatmul.mubr.bf16.gmra.mxu0 %v2864
        %v2994 = vpop.f32.mrf.mxu0
        %v2995 = vadd.f32 0.0, %v2994
        %v2996 = vpop.f32.mrf.mxu0
        %v2997 = vadd.f32 0.0, %v2996
        %v2998 = vpop.f32.mrf.mxu0
        %v2999 = vadd.f32 0.0, %v2998
        %v3000 = vpop.f32.mrf.mxu0
        %v3001 = vadd.f32 0.0, %v3000
        %3002 = vmatprep.mubr.bf16.mxu0 0
        %3003 = vmatmul.mubr.bf16.gmra.mxu0 %v2865
        %v3004 = vpop.f32.mrf.mxu0
        %v3005 = vadd.f32 0.0, %v3004
        %v3006 = vpop.f32.mrf.mxu0
        %v3007 = vadd.f32 0.0, %v3006
        %v3008 = vpop.f32.mrf.mxu0
        %v3009 = vadd.f32 0.0, %v3008
        %v3010 = vpop.f32.mrf.mxu0
        %v3011 = vadd.f32 0.0, %v3010
        %3012 = vmatprep.mubr.bf16.mxu0 0
        %3013 = vmatmul.mubr.bf16.gmra.mxu0 %v2866
        %v3014 = vpop.f32.mrf.mxu0
        %v3015 = vadd.f32 0.0, %v3014
        %v3016 = vpop.f32.mrf.mxu0
        %v3017 = vadd.f32 0.0, %v3016
        %v3018 = vpop.f32.mrf.mxu0
        %v3019 = vadd.f32 0.0, %v3018
        %v3020 = vpop.f32.mrf.mxu0
        %v3021 = vadd.f32 0.0, %v3020
        %3022 = vmatprep.mubr.bf16.mxu0 0
        %3023 = vmatmul.mubr.bf16.gmra.mxu0 %v2867
        %v3024 = vpop.f32.mrf.mxu0
        %v3025 = vadd.f32 0.0, %v3024
        %v3026 = vpop.f32.mrf.mxu0
        %v3027 = vadd.f32 0.0, %v3026
        %v3028 = vpop.f32.mrf.mxu0
        %v3029 = vadd.f32 0.0, %v3028
        %v3030 = vpop.f32.mrf.mxu0
        %v3031 = vadd.f32 0.0, %v3030
        %3032 = vmatprep.mubr.bf16.mxu0 0
        %3033 = vmatmul.mubr.bf16.gmra.mxu0 %v2868
        %v3034 = vpop.f32.mrf.mxu0
        %v3035 = vadd.f32 0.0, %v3034
        %v3036 = vpop.f32.mrf.mxu0
        %v3037 = vadd.f32 0.0, %v3036
        %v3038 = vpop.f32.mrf.mxu0
        %v3039 = vadd.f32 0.0, %v3038
        %v3040 = vpop.f32.mrf.mxu0
        %v3041 = vadd.f32 0.0, %v3040
        %3042 = vmatprep.mubr.bf16.mxu0 0
        %3043 = vmatmul.mubr.bf16.gmra.mxu0 %v2869
        %v3044 = vpop.f32.mrf.mxu0
        %v3045 = vadd.f32 0.0, %v3044
        %v3046 = vpop.f32.mrf.mxu0
        %v3047 = vadd.f32 0.0, %v3046
        %v3048 = vpop.f32.mrf.mxu0
        %v3049 = vadd.f32 0.0, %v3048
        %v3050 = vpop.f32.mrf.mxu0
        %v3051 = vadd.f32 0.0, %v3050
        %3052 = vmatprep.mubr.bf16.mxu0 0
        %3053 = vmatmul.mubr.bf16.gmra.mxu0 %v2870
        %v3054 = vpop.f32.mrf.mxu0
        %v3055 = vadd.f32 0.0, %v3054
        %v3056 = vpop.f32.mrf.mxu0
        %v3057 = vadd.f32 0.0, %v3056
        %v3058 = vpop.f32.mrf.mxu0
        %v3059 = vadd.f32 0.0, %v3058
        %v3060 = vpop.f32.mrf.mxu0
        %v3061 = vadd.f32 0.0, %v3060
        %3062 = vmatprep.mubr.bf16.mxu0 0
        %3063 = vmatmul.mubr.bf16.gmra.mxu0 %v2871
        %v3064 = vpop.f32.mrf.mxu0
        %v3065 = vadd.f32 0.0, %v3064
        %v3066 = vpop.f32.mrf.mxu0
        %v3067 = vadd.f32 0.0, %v3066
        %v3068 = vpop.f32.mrf.mxu0
        %v3069 = vadd.f32 0.0, %v3068
        %v3070 = vpop.f32.mrf.mxu0
        %v3071 = vadd.f32 0.0, %v3070
        %3072 = vdwg.mxu0
        %v3073 = vadd.f32 %v2799, %v2995
        %v3074 = vadd.f32 %v2800, %v2997
        %v3075 = vadd.f32 %v2801, %v2999
        %v3076 = vadd.f32 %v2802, %v3001
        %v3077 = vadd.f32 %v2803, %v3005
        %v3078 = vadd.f32 %v2804, %v3007
        %v3079 = vadd.f32 %v2805, %v3009
        %v3080 = vadd.f32 %v2806, %v3011
        %v3081 = vadd.f32 %v2807, %v3015
        %v3082 = vadd.f32 %v2808, %v3017
        %v3083 = vadd.f32 %v2809, %v3019
        %v3084 = vadd.f32 %v2810, %v3021
        %v3085 = vadd.f32 %v2811, %v3025
        %v3086 = vadd.f32 %v2812, %v3027
        %v3087 = vadd.f32 %v2813, %v3029
        %v3088 = vadd.f32 %v2814, %v3031
        %v3089 = vadd.f32 %v2815, %v3035
        %v3090 = vadd.f32 %v2816, %v3037
        %v3091 = vadd.f32 %v2817, %v3039
        %v3092 = vadd.f32 %v2818, %v3041
        %v3093 = vadd.f32 %v2819, %v3045
        %v3094 = vadd.f32 %v2820, %v3047
        %v3095 = vadd.f32 %v2821, %v3049
        %v3096 = vadd.f32 %v2822, %v3051
        %v3097 = vadd.f32 %v2823, %v3055
        %v3098 = vadd.f32 %v2824, %v3057
        %v3099 = vadd.f32 %v2825, %v3059
        %v3100 = vadd.f32 %v2826, %v3061
        %v3101 = vadd.f32 %v2827, %v3065
        %v3102 = vadd.f32 %v2828, %v3067
        %v3103 = vadd.f32 %v2829, %v3069
        %v3104 = vadd.f32 %v2830, %v3071
        %3105 = vst [vmem:[#allocation3] sm:$0xff] %v3073
        %3106 = vst [vmem:[#allocation3 + $0x8] sm:$0xff] %v3074
        %3107 = vst [vmem:[#allocation3 + $0x10] sm:$0xff] %v3075
        %3108 = vst [vmem:[#allocation3 + $0x18] sm:$0xff] %v3076
        %3109 = vst [vmem:[#allocation3 + $0x20] sm:$0xff] %v3077
        %3110 = vst [vmem:[#allocation3 + $0x28] sm:$0xff] %v3078
        %3111 = vst [vmem:[#allocation3 + $0x30] sm:$0xff] %v3079
        %3112 = vst [vmem:[#allocation3 + $0x38] sm:$0xff] %v3080
        %3113 = vst [vmem:[#allocation3 + $0x40] sm:$0xff] %v3081
        %3114 = vst [vmem:[#allocation3 + $0x48] sm:$0xff] %v3082
        %3115 = vst [vmem:[#allocation3 + $0x50] sm:$0xff] %v3083
        %3116 = vst [vmem:[#allocation3 + $0x58] sm:$0xff] %v3084
        %3117 = vst [vmem:[#allocation3 + $0x60] sm:$0xff] %v3085
        %3118 = vst [vmem:[#allocation3 + $0x68] sm:$0xff] %v3086
        %3119 = vst [vmem:[#allocation3 + $0x70] sm:$0xff] %v3087
        %3120 = vst [vmem:[#allocation3 + $0x78] sm:$0xff] %v3088
        %3121 = vst [vmem:[#allocation3 + $0x80] sm:$0xff] %v3089
        %3122 = vst [vmem:[#allocation3 + $0x88] sm:$0xff] %v3090
        %3123 = vst [vmem:[#allocation3 + $0x90] sm:$0xff] %v3091
        %3124 = vst [vmem:[#allocation3 + $0x98] sm:$0xff] %v3092
        %3125 = vst [vmem:[#allocation3 + $0xa0] sm:$0xff] %v3093
        %3126 = vst [vmem:[#allocation3 + $0xa8] sm:$0xff] %v3094
        %3127 = vst [vmem:[#allocation3 + $0xb0] sm:$0xff] %v3095
        %3128 = vst [vmem:[#allocation3 + $0xb8] sm:$0xff] %v3096
        %3129 = vst [vmem:[#allocation3 + $0xc0] sm:$0xff] %v3097
        %3130 = vst [vmem:[#allocation3 + $0xc8] sm:$0xff] %v3098
        %3131 = vst [vmem:[#allocation3 + $0xd0] sm:$0xff] %v3099
        %3132 = vst [vmem:[#allocation3 + $0xd8] sm:$0xff] %v3100
        %3133 = vst [vmem:[#allocation3 + $0xe0] sm:$0xff] %v3101
        %3134 = vst [vmem:[#allocation3 + $0xe8] sm:$0xff] %v3102
        %3135 = vst [vmem:[#allocation3 + $0xf0] sm:$0xff] %v3103
        %3136 = vst [vmem:[#allocation3 + $0xf8] sm:$0xff] %v3104
        %v3145 = vrot.slane %v2229, 5
        %v3146 = vrot.slane %v3145, 4
        %v3147 = vrot.slane %v2230, 5
        %v3148 = vsel %vm1834, %v3146, %v3147
        %v3149 = vrot.slane %v3147, 4
        %v3150 = vrot.slane %v2231, 5
        %v3151 = vsel %vm1834, %v3149, %v3150
        %v3152 = vrot.slane %v2232, 5
        %v3153 = vrot.slane %v3152, 4
        %v3154 = vrot.slane %v2233, 5
        %v3155 = vsel %vm1834, %v3153, %v3154
        %v3156 = vrot.slane %v3154, 4
        %v3157 = vrot.slane %v2234, 5
        %v3158 = vsel %vm1834, %v3156, %v3157
        %v3159 = vrot.slane %v2235, 5
        %v3160 = vrot.slane %v3159, 4
        %v3161 = vrot.slane %v2236, 5
        %v3162 = vsel %vm1834, %v3160, %v3161
        %v3163 = vrot.slane %v3161, 4
        %v3164 = vrot.slane %v2237, 5
        %v3165 = vsel %vm1834, %v3163, %v3164
        %v3166 = vrot.slane %v2238, 5
        %v3167 = vrot.slane %v3166, 4
        %v3168 = vrot.slane %v2239, 5
        %v3169 = vsel %vm1834, %v3167, %v3168
        %v3170 = vrot.slane %v3168, 4
        %v3171 = vrot.slane %v2240, 5
        %v3172 = vsel %vm1834, %v3170, %v3171
        %v3173 = vrot.slane %v2241, 5
        %v3174 = vrot.slane %v3173, 4
        %v3175 = vrot.slane %v2242, 5
        %v3176 = vsel %vm1834, %v3174, %v3175
        %v3177 = vrot.slane %v3175, 4
        %v3178 = vrot.slane %v2243, 5
        %v3179 = vsel %vm1834, %v3177, %v3178
        %v3180 = vrot.slane %v2244, 5
        %v3181 = vrot.slane %v3180, 4
        %v3182 = vrot.slane %v2245, 5
        %v3183 = vsel %vm1834, %v3181, %v3182
        %v3184 = vrot.slane %v3182, 4
        %v3185 = vrot.slane %v2246, 5
        %v3186 = vsel %vm1834, %v3184, %v3185
        %v3187 = vrot.slane %v2247, 5
        %v3188 = vrot.slane %v3187, 4
        %v3189 = vrot.slane %v2248, 5
        %v3190 = vsel %vm1834, %v3188, %v3189
        %v3191 = vrot.slane %v3189, 4
        %v3192 = vrot.slane %v2249, 5
        %v3193 = vsel %vm1834, %v3191, %v3192
        %v3194 = vrot.slane %v2250, 5
        %v3195 = vrot.slane %v3194, 4
        %v3196 = vrot.slane %v2251, 5
        %v3197 = vsel %vm1834, %v3195, %v3196
        %v3198 = vrot.slane %v3196, 4
        %v3199 = vrot.slane %v2252, 5
        %v3200 = vsel %vm1834, %v3198, %v3199
        %v3201 = vld [vmem:[#allocation3] sm:$0xff]
        %v3202 = vld [vmem:[#allocation3 + $0x8] sm:$0xff]
        %v3203 = vld [vmem:[#allocation3 + $0x10] sm:$0xff]
        %v3204 = vld [vmem:[#allocation3 + $0x18] sm:$0xff]
        %v3205 = vld [vmem:[#allocation3 + $0x20] sm:$0xff]
        %v3206 = vld [vmem:[#allocation3 + $0x28] sm:$0xff]
        %v3207 = vld [vmem:[#allocation3 + $0x30] sm:$0xff]
        %v3208 = vld [vmem:[#allocation3 + $0x38] sm:$0xff]
        %v3209 = vld [vmem:[#allocation3 + $0x40] sm:$0xff]
        %v3210 = vld [vmem:[#allocation3 + $0x48] sm:$0xff]
        %v3211 = vld [vmem:[#allocation3 + $0x50] sm:$0xff]
        %v3212 = vld [vmem:[#allocation3 + $0x58] sm:$0xff]
        %v3213 = vld [vmem:[#allocation3 + $0x60] sm:$0xff]
        %v3214 = vld [vmem:[#allocation3 + $0x68] sm:$0xff]
        %v3215 = vld [vmem:[#allocation3 + $0x70] sm:$0xff]
        %v3216 = vld [vmem:[#allocation3 + $0x78] sm:$0xff]
        %v3217 = vld [vmem:[#allocation3 + $0x80] sm:$0xff]
        %v3218 = vld [vmem:[#allocation3 + $0x88] sm:$0xff]
        %v3219 = vld [vmem:[#allocation3 + $0x90] sm:$0xff]
        %v3220 = vld [vmem:[#allocation3 + $0x98] sm:$0xff]
        %v3221 = vld [vmem:[#allocation3 + $0xa0] sm:$0xff]
        %v3222 = vld [vmem:[#allocation3 + $0xa8] sm:$0xff]
        %v3223 = vld [vmem:[#allocation3 + $0xb0] sm:$0xff]
        %v3224 = vld [vmem:[#allocation3 + $0xb8] sm:$0xff]
        %v3225 = vld [vmem:[#allocation3 + $0xc0] sm:$0xff]
        %v3226 = vld [vmem:[#allocation3 + $0xc8] sm:$0xff]
        %v3227 = vld [vmem:[#allocation3 + $0xd0] sm:$0xff]
        %v3228 = vld [vmem:[#allocation3 + $0xd8] sm:$0xff]
        %v3229 = vld [vmem:[#allocation3 + $0xe0] sm:$0xff]
        %v3230 = vld [vmem:[#allocation3 + $0xe8] sm:$0xff]
        %v3231 = vld [vmem:[#allocation3 + $0xf0] sm:$0xff]
        %v3232 = vld [vmem:[#allocation3 + $0xf8] sm:$0xff]
        %s3233 = scalar_lea.vmem [#allocation7], 640
        %v3234 = vld [vmem:[%s3233] sm:$0xff]
        %v3235 = vld [vmem:[%s3233 + $0x8] sm:$0xff]
        %v3236 = vld [vmem:[%s3233 + $0x10] sm:$0xff]
        %v3237 = vld [vmem:[%s3233 + $0x18] sm:$0xff]
        %v3238 = vld [vmem:[%s3233 + $0x20] sm:$0xff]
        %v3239 = vld [vmem:[%s3233 + $0x28] sm:$0xff]
        %v3240 = vld [vmem:[%s3233 + $0x30] sm:$0xff]
        %v3241 = vld [vmem:[%s3233 + $0x38] sm:$0xff]
        %v3242 = vld [vmem:[%s3233 + $0x40] sm:$0xff]
        %v3243 = vld [vmem:[%s3233 + $0x48] sm:$0xff]
        %v3244 = vld [vmem:[%s3233 + $0x50] sm:$0xff]
        %v3245 = vld [vmem:[%s3233 + $0x58] sm:$0xff]
        %v3246 = vld [vmem:[%s3233 + $0x60] sm:$0xff]
        %v3247 = vld [vmem:[%s3233 + $0x68] sm:$0xff]
        %v3248 = vld [vmem:[%s3233 + $0x70] sm:$0xff]
        %v3249 = vld [vmem:[%s3233 + $0x78] sm:$0xff]
        %v3250 = vunpack.c.l.b16 %v3148
        %v3251 = vunpack.c.l.b16 %v3151
        %v3252 = vunpack.c.l.b16 %v3155
        %v3253 = vunpack.c.l.b16 %v3158
        %v3254 = vunpack.c.l.b16 %v3162
        %v3255 = vunpack.c.l.b16 %v3165
        %v3256 = vunpack.c.l.b16 %v3169
        %v3257 = vunpack.c.l.b16 %v3172
        %v3258 = vunpack.c.l.b16 %v3176
        %v3259 = vunpack.c.l.b16 %v3179
        %v3260 = vunpack.c.l.b16 %v3183
        %v3261 = vunpack.c.l.b16 %v3186
        %v3262 = vunpack.c.l.b16 %v3190
        %v3263 = vunpack.c.l.b16 %v3193
        %v3264 = vunpack.c.l.b16 %v3197
        %v3265 = vunpack.c.l.b16 %v3200
        %v3266 = vpack.c.b16 %v3251, %v3250
        %v3267 = vpack.c.b16 %v3253, %v3252
        %v3268 = vpack.c.b16 %v3255, %v3254
        %v3269 = vpack.c.b16 %v3257, %v3256
        %v3270 = vpack.c.b16 %v3259, %v3258
        %v3271 = vpack.c.b16 %v3261, %v3260
        %v3272 = vpack.c.b16 %v3263, %v3262
        %v3273 = vpack.c.b16 %v3265, %v3264
        %v3298 = vunpack.c.l.b16 %v3234
        %v3299 = vunpack.c.h.b16 %v3234
        %v3300 = vunpack.c.l.b16 %v3235
        %v3301 = vunpack.c.h.b16 %v3235
        %v3302 = vunpack.c.l.b16 %v3236
        %v3303 = vunpack.c.h.b16 %v3236
        %v3304 = vunpack.c.l.b16 %v3237
        %v3305 = vunpack.c.h.b16 %v3237
        %v3306 = vunpack.c.l.b16 %v3238
        %v3307 = vunpack.c.h.b16 %v3238
        %v3308 = vunpack.c.l.b16 %v3239
        %v3309 = vunpack.c.h.b16 %v3239
        %v3310 = vunpack.c.l.b16 %v3240
        %v3311 = vunpack.c.h.b16 %v3240
        %v3312 = vunpack.c.l.b16 %v3241
        %v3313 = vunpack.c.h.b16 %v3241
        %v3314 = vunpack.c.l.b16 %v3242
        %v3315 = vunpack.c.h.b16 %v3242
        %v3316 = vunpack.c.l.b16 %v3243
        %v3317 = vunpack.c.h.b16 %v3243
        %v3318 = vunpack.c.l.b16 %v3244
        %v3319 = vunpack.c.h.b16 %v3244
        %v3320 = vunpack.c.l.b16 %v3245
        %v3321 = vunpack.c.h.b16 %v3245
        %v3322 = vunpack.c.l.b16 %v3246
        %v3323 = vunpack.c.h.b16 %v3246
        %v3324 = vunpack.c.l.b16 %v3247
        %v3325 = vunpack.c.h.b16 %v3247
        %v3326 = vunpack.c.l.b16 %v3248
        %v3327 = vunpack.c.h.b16 %v3248
        %v3328 = vunpack.c.l.b16 %v3249
        %v3329 = vunpack.c.h.b16 %v3249
        %v3330 = vpack.c.b16 %v3300, %v3298
        %v3331 = vpack.c.b16 %v3301, %v3299
        %v3332 = vpack.c.b16 %v3304, %v3302
        %v3333 = vpack.c.b16 %v3305, %v3303
        %v3334 = vpack.c.b16 %v3308, %v3306
        %v3335 = vpack.c.b16 %v3309, %v3307
        %v3336 = vpack.c.b16 %v3312, %v3310
        %v3337 = vpack.c.b16 %v3313, %v3311
        %v3338 = vpack.c.b16 %v3316, %v3314
        %v3339 = vpack.c.b16 %v3317, %v3315
        %v3340 = vpack.c.b16 %v3320, %v3318
        %v3341 = vpack.c.b16 %v3321, %v3319
        %v3342 = vpack.c.b16 %v3324, %v3322
        %v3343 = vpack.c.b16 %v3325, %v3323
        %v3344 = vpack.c.b16 %v3328, %v3326
        %v3345 = vpack.c.b16 %v3329, %v3327
        %3362 = vmatprep.subr.bf16.mxu0 %v3345
        %3363 = vmatpush1.bf16.msra.mxu0 %v3344
        %3364 = vmatprep.subr.bf16.mxu0 %v3343
        %3365 = vmatpush1.bf16.msra.mxu0 %v3342
        %3366 = vmatprep.subr.bf16.mxu0 %v3341
        %3367 = vmatpush1.bf16.msra.mxu0 %v3340
        %3368 = vmatprep.subr.bf16.mxu0 %v3339
        %3369 = vmatpush1.bf16.msra.mxu0 %v3338
        %3370 = vmatprep.subr.bf16.mxu0 %v3337
        %3371 = vmatpush1.bf16.msra.mxu0 %v3336
        %3372 = vmatprep.subr.bf16.mxu0 %v3335
        %3373 = vmatpush1.bf16.msra.mxu0 %v3334
        %3374 = vmatprep.subr.bf16.mxu0 %v3333
        %3375 = vmatpush1.bf16.msra.mxu0 %v3332
        %3376 = vmatprep.subr.bf16.mxu0 %v3331
        %3377 = vmatpush1.bf16.msra.mxu0 %v3330
        %3378 = vmatprep.subr.bf16.mxu0 0
        %3379 = vmatpush2.bf16.msra.mxu0 0
        %3380 = vmatprep.subr.bf16.mxu0 0
        %3381 = vmatpush2.bf16.msra.mxu0 0
        %3382 = vmatprep.subr.bf16.mxu0 0
        %3383 = vmatpush2.bf16.msra.mxu0 0
        %3384 = vmatprep.subr.bf16.mxu0 0
        %3385 = vmatpush2.bf16.msra.mxu0 0
        %3386 = vmatprep.subr.bf16.mxu0 0
        %3387 = vmatpush2.bf16.msra.mxu0 0
        %3388 = vmatprep.subr.bf16.mxu0 0
        %3389 = vmatpush2.bf16.msra.mxu0 0
        %3390 = vmatprep.subr.bf16.mxu0 0
        %3391 = vmatpush2.bf16.msra.mxu0 0
        %3392 = vmatprep.subr.bf16.mxu0 0
        %3393 = vmatpush2.bf16.msra.mxu0 0
        %3394 = vmatprep.mubr.bf16.mxu0 0
        %3395 = vmatmul.mubr.bf16.gmra.mxu0 %v3266
        %v3396 = vpop.f32.mrf.mxu0
        %v3397 = vadd.f32 0.0, %v3396
        %v3398 = vpop.f32.mrf.mxu0
        %v3399 = vadd.f32 0.0, %v3398
        %v3400 = vpop.f32.mrf.mxu0
        %v3401 = vadd.f32 0.0, %v3400
        %v3402 = vpop.f32.mrf.mxu0
        %v3403 = vadd.f32 0.0, %v3402
        %3404 = vmatprep.mubr.bf16.mxu0 0
        %3405 = vmatmul.mubr.bf16.gmra.mxu0 %v3267
        %v3406 = vpop.f32.mrf.mxu0
        %v3407 = vadd.f32 0.0, %v3406
        %v3408 = vpop.f32.mrf.mxu0
        %v3409 = vadd.f32 0.0, %v3408
        %v3410 = vpop.f32.mrf.mxu0
        %v3411 = vadd.f32 0.0, %v3410
        %v3412 = vpop.f32.mrf.mxu0
        %v3413 = vadd.f32 0.0, %v3412
        %3414 = vmatprep.mubr.bf16.mxu0 0
        %3415 = vmatmul.mubr.bf16.gmra.mxu0 %v3268
        %v3416 = vpop.f32.mrf.mxu0
        %v3417 = vadd.f32 0.0, %v3416
        %v3418 = vpop.f32.mrf.mxu0
        %v3419 = vadd.f32 0.0, %v3418
        %v3420 = vpop.f32.mrf.mxu0
        %v3421 = vadd.f32 0.0, %v3420
        %v3422 = vpop.f32.mrf.mxu0
        %v3423 = vadd.f32 0.0, %v3422
        %3424 = vmatprep.mubr.bf16.mxu0 0
        %3425 = vmatmul.mubr.bf16.gmra.mxu0 %v3269
        %v3426 = vpop.f32.mrf.mxu0
        %v3427 = vadd.f32 0.0, %v3426
        %v3428 = vpop.f32.mrf.mxu0
        %v3429 = vadd.f32 0.0, %v3428
        %v3430 = vpop.f32.mrf.mxu0
        %v3431 = vadd.f32 0.0, %v3430
        %v3432 = vpop.f32.mrf.mxu0
        %v3433 = vadd.f32 0.0, %v3432
        %3434 = vmatprep.mubr.bf16.mxu0 0
        %3435 = vmatmul.mubr.bf16.gmra.mxu0 %v3270
        %v3436 = vpop.f32.mrf.mxu0
        %v3437 = vadd.f32 0.0, %v3436
        %v3438 = vpop.f32.mrf.mxu0
        %v3439 = vadd.f32 0.0, %v3438
        %v3440 = vpop.f32.mrf.mxu0
        %v3441 = vadd.f32 0.0, %v3440
        %v3442 = vpop.f32.mrf.mxu0
        %v3443 = vadd.f32 0.0, %v3442
        %3444 = vmatprep.mubr.bf16.mxu0 0
        %3445 = vmatmul.mubr.bf16.gmra.mxu0 %v3271
        %v3446 = vpop.f32.mrf.mxu0
        %v3447 = vadd.f32 0.0, %v3446
        %v3448 = vpop.f32.mrf.mxu0
        %v3449 = vadd.f32 0.0, %v3448
        %v3450 = vpop.f32.mrf.mxu0
        %v3451 = vadd.f32 0.0, %v3450
        %v3452 = vpop.f32.mrf.mxu0
        %v3453 = vadd.f32 0.0, %v3452
        %3454 = vmatprep.mubr.bf16.mxu0 0
        %3455 = vmatmul.mubr.bf16.gmra.mxu0 %v3272
        %v3456 = vpop.f32.mrf.mxu0
        %v3457 = vadd.f32 0.0, %v3456
        %v3458 = vpop.f32.mrf.mxu0
        %v3459 = vadd.f32 0.0, %v3458
        %v3460 = vpop.f32.mrf.mxu0
        %v3461 = vadd.f32 0.0, %v3460
        %v3462 = vpop.f32.mrf.mxu0
        %v3463 = vadd.f32 0.0, %v3462
        %3464 = vmatprep.mubr.bf16.mxu0 0
        %3465 = vmatmul.mubr.bf16.gmra.mxu0 %v3273
        %v3466 = vpop.f32.mrf.mxu0
        %v3467 = vadd.f32 0.0, %v3466
        %v3468 = vpop.f32.mrf.mxu0
        %v3469 = vadd.f32 0.0, %v3468
        %v3470 = vpop.f32.mrf.mxu0
        %v3471 = vadd.f32 0.0, %v3470
        %v3472 = vpop.f32.mrf.mxu0
        %v3473 = vadd.f32 0.0, %v3472
        %3474 = vdwg.mxu0
        %v3475 = vadd.f32 %v3201, %v3397
        %v3476 = vadd.f32 %v3202, %v3399
        %v3477 = vadd.f32 %v3203, %v3401
        %v3478 = vadd.f32 %v3204, %v3403
        %v3479 = vadd.f32 %v3205, %v3407
        %v3480 = vadd.f32 %v3206, %v3409
        %v3481 = vadd.f32 %v3207, %v3411
        %v3482 = vadd.f32 %v3208, %v3413
        %v3483 = vadd.f32 %v3209, %v3417
        %v3484 = vadd.f32 %v3210, %v3419
        %v3485 = vadd.f32 %v3211, %v3421
        %v3486 = vadd.f32 %v3212, %v3423
        %v3487 = vadd.f32 %v3213, %v3427
        %v3488 = vadd.f32 %v3214, %v3429
        %v3489 = vadd.f32 %v3215, %v3431
        %v3490 = vadd.f32 %v3216, %v3433
        %v3491 = vadd.f32 %v3217, %v3437
        %v3492 = vadd.f32 %v3218, %v3439
        %v3493 = vadd.f32 %v3219, %v3441
        %v3494 = vadd.f32 %v3220, %v3443
        %v3495 = vadd.f32 %v3221, %v3447
        %v3496 = vadd.f32 %v3222, %v3449
        %v3497 = vadd.f32 %v3223, %v3451
        %v3498 = vadd.f32 %v3224, %v3453
        %v3499 = vadd.f32 %v3225, %v3457
        %v3500 = vadd.f32 %v3226, %v3459
        %v3501 = vadd.f32 %v3227, %v3461
        %v3502 = vadd.f32 %v3228, %v3463
        %v3503 = vadd.f32 %v3229, %v3467
        %v3504 = vadd.f32 %v3230, %v3469
        %v3505 = vadd.f32 %v3231, %v3471
        %v3506 = vadd.f32 %v3232, %v3473
        %3507 = vst [vmem:[#allocation3] sm:$0xff] %v3475
        %3508 = vst [vmem:[#allocation3 + $0x8] sm:$0xff] %v3476
        %3509 = vst [vmem:[#allocation3 + $0x10] sm:$0xff] %v3477
        %3510 = vst [vmem:[#allocation3 + $0x18] sm:$0xff] %v3478
        %3511 = vst [vmem:[#allocation3 + $0x20] sm:$0xff] %v3479
        %3512 = vst [vmem:[#allocation3 + $0x28] sm:$0xff] %v3480
        %3513 = vst [vmem:[#allocation3 + $0x30] sm:$0xff] %v3481
        %3514 = vst [vmem:[#allocation3 + $0x38] sm:$0xff] %v3482
        %3515 = vst [vmem:[#allocation3 + $0x40] sm:$0xff] %v3483
        %3516 = vst [vmem:[#allocation3 + $0x48] sm:$0xff] %v3484
        %3517 = vst [vmem:[#allocation3 + $0x50] sm:$0xff] %v3485
        %3518 = vst [vmem:[#allocation3 + $0x58] sm:$0xff] %v3486
        %3519 = vst [vmem:[#allocation3 + $0x60] sm:$0xff] %v3487
        %3520 = vst [vmem:[#allocation3 + $0x68] sm:$0xff] %v3488
        %3521 = vst [vmem:[#allocation3 + $0x70] sm:$0xff] %v3489
        %3522 = vst [vmem:[#allocation3 + $0x78] sm:$0xff] %v3490
        %3523 = vst [vmem:[#allocation3 + $0x80] sm:$0xff] %v3491
        %3524 = vst [vmem:[#allocation3 + $0x88] sm:$0xff] %v3492
        %3525 = vst [vmem:[#allocation3 + $0x90] sm:$0xff] %v3493
        %3526 = vst [vmem:[#allocation3 + $0x98] sm:$0xff] %v3494
        %3527 = vst [vmem:[#allocation3 + $0xa0] sm:$0xff] %v3495
        %3528 = vst [vmem:[#allocation3 + $0xa8] sm:$0xff] %v3496
        %3529 = vst [vmem:[#allocation3 + $0xb0] sm:$0xff] %v3497
        %3530 = vst [vmem:[#allocation3 + $0xb8] sm:$0xff] %v3498
        %3531 = vst [vmem:[#allocation3 + $0xc0] sm:$0xff] %v3499
        %3532 = vst [vmem:[#allocation3 + $0xc8] sm:$0xff] %v3500
        %3533 = vst [vmem:[#allocation3 + $0xd0] sm:$0xff] %v3501
        %3534 = vst [vmem:[#allocation3 + $0xd8] sm:$0xff] %v3502
        %3535 = vst [vmem:[#allocation3 + $0xe0] sm:$0xff] %v3503
        %3536 = vst [vmem:[#allocation3 + $0xe8] sm:$0xff] %v3504
        %3537 = vst [vmem:[#allocation3 + $0xf0] sm:$0xff] %v3505
        %3538 = vst [vmem:[#allocation3 + $0xf8] sm:$0xff] %v3506
        %s3539 = scalar_lea.vmem [#allocation2], 24
        %v3540 = vld [vmem:[%s3539] sm:$0xf]
        %v3541 = vld [vmem:[%s3539 + $0x4] sm:$0xf]
        %v3542 = vld [vmem:[%s3539 + $0x8] sm:$0x1]
        %v3543 = vld [vmem:[%s3539 + $0xc] sm:$0xf]
        %v3544 = vld [vmem:[%s3539 + $0x10] sm:$0xf]
        %v3545 = vld [vmem:[%s3539 + $0x14] sm:$0x1]
        %v3546 = vld [vmem:[%s3539 + $0x18] sm:$0xf]
        %v3547 = vld [vmem:[%s3539 + $0x1c] sm:$0xf]
        %v3548 = vld [vmem:[%s3539 + $0x20] sm:$0x1]
        %v3549 = vld [vmem:[%s3539 + $0x24] sm:$0xf]
        %v3550 = vld [vmem:[%s3539 + $0x28] sm:$0xf]
        %v3551 = vld [vmem:[%s3539 + $0x2c] sm:$0x1]
        %v3552 = vld [vmem:[%s3539 + $0x30] sm:$0xf]
        %v3553 = vld [vmem:[%s3539 + $0x34] sm:$0xf]
        %v3554 = vld [vmem:[%s3539 + $0x38] sm:$0x1]
        %v3555 = vld [vmem:[%s3539 + $0x3c] sm:$0xf]
        %v3556 = vld [vmem:[%s3539 + $0x40] sm:$0xf]
        %v3557 = vld [vmem:[%s3539 + $0x44] sm:$0x1]
        %v3558 = vld [vmem:[%s3539 + $0x48] sm:$0xf]
        %v3559 = vld [vmem:[%s3539 + $0x4c] sm:$0xf]
        %v3560 = vld [vmem:[%s3539 + $0x50] sm:$0x1]
        %v3561 = vld [vmem:[%s3539 + $0x54] sm:$0xf]
        %v3562 = vld [vmem:[%s3539 + $0x58] sm:$0xf]
        %v3563 = vld [vmem:[%s3539 + $0x5c] sm:$0x1]
        %v3564 = vld [vmem:[#allocation3] sm:$0xff]
        %v3565 = vld [vmem:[#allocation3 + $0x8] sm:$0xff]
        %v3566 = vld [vmem:[#allocation3 + $0x10] sm:$0xff]
        %v3567 = vld [vmem:[#allocation3 + $0x18] sm:$0xff]
        %v3568 = vld [vmem:[#allocation3 + $0x20] sm:$0xff]
        %v3569 = vld [vmem:[#allocation3 + $0x28] sm:$0xff]
        %v3570 = vld [vmem:[#allocation3 + $0x30] sm:$0xff]
        %v3571 = vld [vmem:[#allocation3 + $0x38] sm:$0xff]
        %v3572 = vld [vmem:[#allocation3 + $0x40] sm:$0xff]
        %v3573 = vld [vmem:[#allocation3 + $0x48] sm:$0xff]
        %v3574 = vld [vmem:[#allocation3 + $0x50] sm:$0xff]
        %v3575 = vld [vmem:[#allocation3 + $0x58] sm:$0xff]
        %v3576 = vld [vmem:[#allocation3 + $0x60] sm:$0xff]
        %v3577 = vld [vmem:[#allocation3 + $0x68] sm:$0xff]
        %v3578 = vld [vmem:[#allocation3 + $0x70] sm:$0xff]
        %v3579 = vld [vmem:[#allocation3 + $0x78] sm:$0xff]
        %v3580 = vld [vmem:[#allocation3 + $0x80] sm:$0xff]
        %v3581 = vld [vmem:[#allocation3 + $0x88] sm:$0xff]
        %v3582 = vld [vmem:[#allocation3 + $0x90] sm:$0xff]
        %v3583 = vld [vmem:[#allocation3 + $0x98] sm:$0xff]
        %v3584 = vld [vmem:[#allocation3 + $0xa0] sm:$0xff]
        %v3585 = vld [vmem:[#allocation3 + $0xa8] sm:$0xff]
        %v3586 = vld [vmem:[#allocation3 + $0xb0] sm:$0xff]
        %v3587 = vld [vmem:[#allocation3 + $0xb8] sm:$0xff]
        %v3588 = vld [vmem:[#allocation3 + $0xc0] sm:$0xff]
        %v3589 = vld [vmem:[#allocation3 + $0xc8] sm:$0xff]
        %v3590 = vld [vmem:[#allocation3 + $0xd0] sm:$0xff]
        %v3591 = vld [vmem:[#allocation3 + $0xd8] sm:$0xff]
        %v3592 = vld [vmem:[#allocation3 + $0xe0] sm:$0xff]
        %v3593 = vld [vmem:[#allocation3 + $0xe8] sm:$0xff]
        %v3594 = vld [vmem:[#allocation3 + $0xf0] sm:$0xff]
        %v3595 = vld [vmem:[#allocation3 + $0xf8] sm:$0xff]
        %s3596 = scalar_lea.vmem [#allocation7], 768
        %v3597 = vld [vmem:[%s3596] sm:$0xff]
        %v3598 = vld [vmem:[%s3596 + $0x8] sm:$0xff]
        %v3599 = vld [vmem:[%s3596 + $0x10] sm:$0xff]
        %v3600 = vld [vmem:[%s3596 + $0x18] sm:$0xff]
        %v3601 = vld [vmem:[%s3596 + $0x20] sm:$0xff]
        %v3602 = vld [vmem:[%s3596 + $0x28] sm:$0xff]
        %v3603 = vld [vmem:[%s3596 + $0x30] sm:$0xff]
        %v3604 = vld [vmem:[%s3596 + $0x38] sm:$0xff]
        %v3605 = vld [vmem:[%s3596 + $0x40] sm:$0xff]
        %v3606 = vld [vmem:[%s3596 + $0x48] sm:$0xff]
        %v3607 = vld [vmem:[%s3596 + $0x50] sm:$0xff]
        %v3608 = vld [vmem:[%s3596 + $0x58] sm:$0xff]
        %v3609 = vld [vmem:[%s3596 + $0x60] sm:$0xff]
        %v3610 = vld [vmem:[%s3596 + $0x68] sm:$0xff]
        %v3611 = vld [vmem:[%s3596 + $0x70] sm:$0xff]
        %v3612 = vld [vmem:[%s3596 + $0x78] sm:$0xff]
        %v3629 = vunpack.c.l.b16 %v3540
        %v3630 = vunpack.c.l.b16 %v3541
        %v3631 = vunpack.c.l.b16 %v3543
        %v3632 = vunpack.c.l.b16 %v3544
        %v3633 = vunpack.c.l.b16 %v3546
        %v3634 = vunpack.c.l.b16 %v3547
        %v3635 = vunpack.c.l.b16 %v3549
        %v3636 = vunpack.c.l.b16 %v3550
        %v3637 = vunpack.c.l.b16 %v3552
        %v3638 = vunpack.c.l.b16 %v3553
        %v3639 = vunpack.c.l.b16 %v3555
        %v3640 = vunpack.c.l.b16 %v3556
        %v3641 = vunpack.c.l.b16 %v3558
        %v3642 = vunpack.c.l.b16 %v3559
        %v3643 = vunpack.c.l.b16 %v3561
        %v3644 = vunpack.c.l.b16 %v3562
        %v3645 = vpack.c.b16 %v3630, %v3629
        %v3646 = vpack.c.b16 %v3632, %v3631
        %v3647 = vpack.c.b16 %v3634, %v3633
        %v3648 = vpack.c.b16 %v3636, %v3635
        %v3649 = vpack.c.b16 %v3638, %v3637
        %v3650 = vpack.c.b16 %v3640, %v3639
        %v3651 = vpack.c.b16 %v3642, %v3641
        %v3652 = vpack.c.b16 %v3644, %v3643
        %v3677 = vunpack.c.l.b16 %v3597
        %v3678 = vunpack.c.h.b16 %v3597
        %v3679 = vunpack.c.l.b16 %v3598
        %v3680 = vunpack.c.h.b16 %v3598
        %v3681 = vunpack.c.l.b16 %v3599
        %v3682 = vunpack.c.h.b16 %v3599
        %v3683 = vunpack.c.l.b16 %v3600
        %v3684 = vunpack.c.h.b16 %v3600
        %v3685 = vunpack.c.l.b16 %v3601
        %v3686 = vunpack.c.h.b16 %v3601
        %v3687 = vunpack.c.l.b16 %v3602
        %v3688 = vunpack.c.h.b16 %v3602
        %v3689 = vunpack.c.l.b16 %v3603
        %v3690 = vunpack.c.h.b16 %v3603
        %v3691 = vunpack.c.l.b16 %v3604
        %v3692 = vunpack.c.h.b16 %v3604
        %v3693 = vunpack.c.l.b16 %v3605
        %v3694 = vunpack.c.h.b16 %v3605
        %v3695 = vunpack.c.l.b16 %v3606
        %v3696 = vunpack.c.h.b16 %v3606
        %v3697 = vunpack.c.l.b16 %v3607
        %v3698 = vunpack.c.h.b16 %v3607
        %v3699 = vunpack.c.l.b16 %v3608
        %v3700 = vunpack.c.h.b16 %v3608
        %v3701 = vunpack.c.l.b16 %v3609
        %v3702 = vunpack.c.h.b16 %v3609
        %v3703 = vunpack.c.l.b16 %v3610
        %v3704 = vunpack.c.h.b16 %v3610
        %v3705 = vunpack.c.l.b16 %v3611
        %v3706 = vunpack.c.h.b16 %v3611
        %v3707 = vunpack.c.l.b16 %v3612
        %v3708 = vunpack.c.h.b16 %v3612
        %v3709 = vpack.c.b16 %v3679, %v3677
        %v3710 = vpack.c.b16 %v3680, %v3678
        %v3711 = vpack.c.b16 %v3683, %v3681
        %v3712 = vpack.c.b16 %v3684, %v3682
        %v3713 = vpack.c.b16 %v3687, %v3685
        %v3714 = vpack.c.b16 %v3688, %v3686
        %v3715 = vpack.c.b16 %v3691, %v3689
        %v3716 = vpack.c.b16 %v3692, %v3690
        %v3717 = vpack.c.b16 %v3695, %v3693
        %v3718 = vpack.c.b16 %v3696, %v3694
        %v3719 = vpack.c.b16 %v3699, %v3697
        %v3720 = vpack.c.b16 %v3700, %v3698
        %v3721 = vpack.c.b16 %v3703, %v3701
        %v3722 = vpack.c.b16 %v3704, %v3702
        %v3723 = vpack.c.b16 %v3707, %v3705
        %v3724 = vpack.c.b16 %v3708, %v3706
        %3741 = vmatprep.subr.bf16.mxu0 %v3724
        %3742 = vmatpush1.bf16.msra.mxu0 %v3723
        %3743 = vmatprep.subr.bf16.mxu0 %v3722
        %3744 = vmatpush1.bf16.msra.mxu0 %v3721
        %3745 = vmatprep.subr.bf16.mxu0 %v3720
        %3746 = vmatpush1.bf16.msra.mxu0 %v3719
        %3747 = vmatprep.subr.bf16.mxu0 %v3718
        %3748 = vmatpush1.bf16.msra.mxu0 %v3717
        %3749 = vmatprep.subr.bf16.mxu0 %v3716
        %3750 = vmatpush1.bf16.msra.mxu0 %v3715
        %3751 = vmatprep.subr.bf16.mxu0 %v3714
        %3752 = vmatpush1.bf16.msra.mxu0 %v3713
        %3753 = vmatprep.subr.bf16.mxu0 %v3712
        %3754 = vmatpush1.bf16.msra.mxu0 %v3711
        %3755 = vmatprep.subr.bf16.mxu0 %v3710
        %3756 = vmatpush1.bf16.msra.mxu0 %v3709
        %3757 = vmatprep.subr.bf16.mxu0 0
        %3758 = vmatpush2.bf16.msra.mxu0 0
        %3759 = vmatprep.subr.bf16.mxu0 0
        %3760 = vmatpush2.bf16.msra.mxu0 0
        %3761 = vmatprep.subr.bf16.mxu0 0
        %3762 = vmatpush2.bf16.msra.mxu0 0
        %3763 = vmatprep.subr.bf16.mxu0 0
        %3764 = vmatpush2.bf16.msra.mxu0 0
        %3765 = vmatprep.subr.bf16.mxu0 0
        %3766 = vmatpush2.bf16.msra.mxu0 0
        %3767 = vmatprep.subr.bf16.mxu0 0
        %3768 = vmatpush2.bf16.msra.mxu0 0
        %3769 = vmatprep.subr.bf16.mxu0 0
        %3770 = vmatpush2.bf16.msra.mxu0 0
        %3771 = vmatprep.subr.bf16.mxu0 0
        %3772 = vmatpush2.bf16.msra.mxu0 0
        %3773 = vmatprep.mubr.bf16.mxu0 0
        %3774 = vmatmul.mubr.bf16.gmra.mxu0 %v3645
        %v3775 = vpop.f32.mrf.mxu0
        %v3776 = vadd.f32 0.0, %v3775
        %v3777 = vpop.f32.mrf.mxu0
        %v3778 = vadd.f32 0.0, %v3777
        %v3779 = vpop.f32.mrf.mxu0
        %v3780 = vadd.f32 0.0, %v3779
        %v3781 = vpop.f32.mrf.mxu0
        %v3782 = vadd.f32 0.0, %v3781
        %3783 = vmatprep.mubr.bf16.mxu0 0
        %3784 = vmatmul.mubr.bf16.gmra.mxu0 %v3646
        %v3785 = vpop.f32.mrf.mxu0
        %v3786 = vadd.f32 0.0, %v3785
        %v3787 = vpop.f32.mrf.mxu0
        %v3788 = vadd.f32 0.0, %v3787
        %v3789 = vpop.f32.mrf.mxu0
        %v3790 = vadd.f32 0.0, %v3789
        %v3791 = vpop.f32.mrf.mxu0
        %v3792 = vadd.f32 0.0, %v3791
        %3793 = vmatprep.mubr.bf16.mxu0 0
        %3794 = vmatmul.mubr.bf16.gmra.mxu0 %v3647
        %v3795 = vpop.f32.mrf.mxu0
        %v3796 = vadd.f32 0.0, %v3795
        %v3797 = vpop.f32.mrf.mxu0
        %v3798 = vadd.f32 0.0, %v3797
        %v3799 = vpop.f32.mrf.mxu0
        %v3800 = vadd.f32 0.0, %v3799
        %v3801 = vpop.f32.mrf.mxu0
        %v3802 = vadd.f32 0.0, %v3801
        %3803 = vmatprep.mubr.bf16.mxu0 0
        %3804 = vmatmul.mubr.bf16.gmra.mxu0 %v3648
        %v3805 = vpop.f32.mrf.mxu0
        %v3806 = vadd.f32 0.0, %v3805
        %v3807 = vpop.f32.mrf.mxu0
        %v3808 = vadd.f32 0.0, %v3807
        %v3809 = vpop.f32.mrf.mxu0
        %v3810 = vadd.f32 0.0, %v3809
        %v3811 = vpop.f32.mrf.mxu0
        %v3812 = vadd.f32 0.0, %v3811
        %3813 = vmatprep.mubr.bf16.mxu0 0
        %3814 = vmatmul.mubr.bf16.gmra.mxu0 %v3649
        %v3815 = vpop.f32.mrf.mxu0
        %v3816 = vadd.f32 0.0, %v3815
        %v3817 = vpop.f32.mrf.mxu0
        %v3818 = vadd.f32 0.0, %v3817
        %v3819 = vpop.f32.mrf.mxu0
        %v3820 = vadd.f32 0.0, %v3819
        %v3821 = vpop.f32.mrf.mxu0
        %v3822 = vadd.f32 0.0, %v3821
        %3823 = vmatprep.mubr.bf16.mxu0 0
        %3824 = vmatmul.mubr.bf16.gmra.mxu0 %v3650
        %v3825 = vpop.f32.mrf.mxu0
        %v3826 = vadd.f32 0.0, %v3825
        %v3827 = vpop.f32.mrf.mxu0
        %v3828 = vadd.f32 0.0, %v3827
        %v3829 = vpop.f32.mrf.mxu0
        %v3830 = vadd.f32 0.0, %v3829
        %v3831 = vpop.f32.mrf.mxu0
        %v3832 = vadd.f32 0.0, %v3831
        %3833 = vmatprep.mubr.bf16.mxu0 0
        %3834 = vmatmul.mubr.bf16.gmra.mxu0 %v3651
        %v3835 = vpop.f32.mrf.mxu0
        %v3836 = vadd.f32 0.0, %v3835
        %v3837 = vpop.f32.mrf.mxu0
        %v3838 = vadd.f32 0.0, %v3837
        %v3839 = vpop.f32.mrf.mxu0
        %v3840 = vadd.f32 0.0, %v3839
        %v3841 = vpop.f32.mrf.mxu0
        %v3842 = vadd.f32 0.0, %v3841
        %3843 = vmatprep.mubr.bf16.mxu0 0
        %3844 = vmatmul.mubr.bf16.gmra.mxu0 %v3652
        %v3845 = vpop.f32.mrf.mxu0
        %v3846 = vadd.f32 0.0, %v3845
        %v3847 = vpop.f32.mrf.mxu0
        %v3848 = vadd.f32 0.0, %v3847
        %v3849 = vpop.f32.mrf.mxu0
        %v3850 = vadd.f32 0.0, %v3849
        %v3851 = vpop.f32.mrf.mxu0
        %v3852 = vadd.f32 0.0, %v3851
        %3853 = vdwg.mxu0
        %v3854 = vadd.f32 %v3564, %v3776
        %v3855 = vadd.f32 %v3565, %v3778
        %v3856 = vadd.f32 %v3566, %v3780
        %v3857 = vadd.f32 %v3567, %v3782
        %v3858 = vadd.f32 %v3568, %v3786
        %v3859 = vadd.f32 %v3569, %v3788
        %v3860 = vadd.f32 %v3570, %v3790
        %v3861 = vadd.f32 %v3571, %v3792
        %v3862 = vadd.f32 %v3572, %v3796
        %v3863 = vadd.f32 %v3573, %v3798
        %v3864 = vadd.f32 %v3574, %v3800
        %v3865 = vadd.f32 %v3575, %v3802
        %v3866 = vadd.f32 %v3576, %v3806
        %v3867 = vadd.f32 %v3577, %v3808
        %v3868 = vadd.f32 %v3578, %v3810
        %v3869 = vadd.f32 %v3579, %v3812
        %v3870 = vadd.f32 %v3580, %v3816
        %v3871 = vadd.f32 %v3581, %v3818
        %v3872 = vadd.f32 %v3582, %v3820
        %v3873 = vadd.f32 %v3583, %v3822
        %v3874 = vadd.f32 %v3584, %v3826
        %v3875 = vadd.f32 %v3585, %v3828
        %v3876 = vadd.f32 %v3586, %v3830
        %v3877 = vadd.f32 %v3587, %v3832
        %v3878 = vadd.f32 %v3588, %v3836
        %v3879 = vadd.f32 %v3589, %v3838
        %v3880 = vadd.f32 %v3590, %v3840
        %v3881 = vadd.f32 %v3591, %v3842
        %v3882 = vadd.f32 %v3592, %v3846
        %v3883 = vadd.f32 %v3593, %v3848
        %v3884 = vadd.f32 %v3594, %v3850
        %v3885 = vadd.f32 %v3595, %v3852
        %3886 = vst [vmem:[#allocation3] sm:$0xff] %v3854
        %3887 = vst [vmem:[#allocation3 + $0x8] sm:$0xff] %v3855
        %3888 = vst [vmem:[#allocation3 + $0x10] sm:$0xff] %v3856
        %3889 = vst [vmem:[#allocation3 + $0x18] sm:$0xff] %v3857
        %3890 = vst [vmem:[#allocation3 + $0x20] sm:$0xff] %v3858
        %3891 = vst [vmem:[#allocation3 + $0x28] sm:$0xff] %v3859
        %3892 = vst [vmem:[#allocation3 + $0x30] sm:$0xff] %v3860
        %3893 = vst [vmem:[#allocation3 + $0x38] sm:$0xff] %v3861
        %3894 = vst [vmem:[#allocation3 + $0x40] sm:$0xff] %v3862
        %3895 = vst [vmem:[#allocation3 + $0x48] sm:$0xff] %v3863
        %3896 = vst [vmem:[#allocation3 + $0x50] sm:$0xff] %v3864
        %3897 = vst [vmem:[#allocation3 + $0x58] sm:$0xff] %v3865
        %3898 = vst [vmem:[#allocation3 + $0x60] sm:$0xff] %v3866
        %3899 = vst [vmem:[#allocation3 + $0x68] sm:$0xff] %v3867
        %3900 = vst [vmem:[#allocation3 + $0x70] sm:$0xff] %v3868
        %3901 = vst [vmem:[#allocation3 + $0x78] sm:$0xff] %v3869
        %3902 = vst [vmem:[#allocation3 + $0x80] sm:$0xff] %v3870
        %3903 = vst [vmem:[#allocation3 + $0x88] sm:$0xff] %v3871
        %3904 = vst [vmem:[#allocation3 + $0x90] sm:$0xff] %v3872
        %3905 = vst [vmem:[#allocation3 + $0x98] sm:$0xff] %v3873
        %3906 = vst [vmem:[#allocation3 + $0xa0] sm:$0xff] %v3874
        %3907 = vst [vmem:[#allocation3 + $0xa8] sm:$0xff] %v3875
        %3908 = vst [vmem:[#allocation3 + $0xb0] sm:$0xff] %v3876
        %3909 = vst [vmem:[#allocation3 + $0xb8] sm:$0xff] %v3877
        %3910 = vst [vmem:[#allocation3 + $0xc0] sm:$0xff] %v3878
        %3911 = vst [vmem:[#allocation3 + $0xc8] sm:$0xff] %v3879
        %3912 = vst [vmem:[#allocation3 + $0xd0] sm:$0xff] %v3880
        %3913 = vst [vmem:[#allocation3 + $0xd8] sm:$0xff] %v3881
        %3914 = vst [vmem:[#allocation3 + $0xe0] sm:$0xff] %v3882
        %3915 = vst [vmem:[#allocation3 + $0xe8] sm:$0xff] %v3883
        %3916 = vst [vmem:[#allocation3 + $0xf0] sm:$0xff] %v3884
        %3917 = vst [vmem:[#allocation3 + $0xf8] sm:$0xff] %v3885
        %v3919 = vshrl.u32 %v3540, 16
        %v3921 = vrot.slane %v3919, 4
        %v3922 = vshll.u32 %v3540, 16
        %v3924 = vrot.slane %v3922, 5
        %v3925 = vor.u32 %v3921, %v3924
        %v3926 = vrot.slane %v3925, 4
        %v3928 = vshll.u32 %v3541, 16
        %v3930 = vrot.slane %v3928, 5
        %v3931 = vsel %vm1293, %v3926, %v3930
        %v3932 = vshrl.u32 %v3541, 16
        %v3934 = vrot.slane %v3932, 4
        %v3935 = vor.u32 %v3934, %v3930
        %v3936 = vrot.slane %v3935, 4
        %v3938 = vshll.u32 %v3542, 16
        %v3940 = vrot.slane %v3938, 5
        %v3941 = vsel %vm1293, %v3936, %v3940
        %v3943 = vshrl.u32 %v3543, 16
        %v3945 = vrot.slane %v3943, 4
        %v3946 = vshll.u32 %v3543, 16
        %v3948 = vrot.slane %v3946, 5
        %v3949 = vor.u32 %v3945, %v3948
        %v3950 = vrot.slane %v3949, 4
        %v3952 = vshll.u32 %v3544, 16
        %v3954 = vrot.slane %v3952, 5
        %v3955 = vsel %vm1293, %v3950, %v3954
        %v3956 = vshrl.u32 %v3544, 16
        %v3958 = vrot.slane %v3956, 4
        %v3959 = vor.u32 %v3958, %v3954
        %v3960 = vrot.slane %v3959, 4
        %v3962 = vshll.u32 %v3545, 16
        %v3964 = vrot.slane %v3962, 5
        %v3965 = vsel %vm1293, %v3960, %v3964
        %v3967 = vshrl.u32 %v3546, 16
        %v3969 = vrot.slane %v3967, 4
        %v3970 = vshll.u32 %v3546, 16
        %v3972 = vrot.slane %v3970, 5
        %v3973 = vor.u32 %v3969, %v3972
        %v3974 = vrot.slane %v3973, 4
        %v3976 = vshll.u32 %v3547, 16
        %v3978 = vrot.slane %v3976, 5
        %v3979 = vsel %vm1293, %v3974, %v3978
        %v3980 = vshrl.u32 %v3547, 16
        %v3982 = vrot.slane %v3980, 4
        %v3983 = vor.u32 %v3982, %v3978
        %v3984 = vrot.slane %v3983, 4
        %v3986 = vshll.u32 %v3548, 16
        %v3988 = vrot.slane %v3986, 5
        %v3989 = vsel %vm1293, %v3984, %v3988
        %v3991 = vshrl.u32 %v3549, 16
        %v3993 = vrot.slane %v3991, 4
        %v3994 = vshll.u32 %v3549, 16
        %v3996 = vrot.slane %v3994, 5
        %v3997 = vor.u32 %v3993, %v3996
        %v3998 = vrot.slane %v3997, 4
        %v4000 = vshll.u32 %v3550, 16
        %v4002 = vrot.slane %v4000, 5
        %v4003 = vsel %vm1293, %v3998, %v4002
        %v4004 = vshrl.u32 %v3550, 16
        %v4006 = vrot.slane %v4004, 4
        %v4007 = vor.u32 %v4006, %v4002
        %v4008 = vrot.slane %v4007, 4
        %v4010 = vshll.u32 %v3551, 16
        %v4012 = vrot.slane %v4010, 5
        %v4013 = vsel %vm1293, %v4008, %v4012
        %v4015 = vshrl.u32 %v3552, 16
        %v4017 = vrot.slane %v4015, 4
        %v4018 = vshll.u32 %v3552, 16
        %v4020 = vrot.slane %v4018, 5
        %v4021 = vor.u32 %v4017, %v4020
        %v4022 = vrot.slane %v4021, 4
        %v4024 = vshll.u32 %v3553, 16
        %v4026 = vrot.slane %v4024, 5
        %v4027 = vsel %vm1293, %v4022, %v4026
        %v4028 = vshrl.u32 %v3553, 16
        %v4030 = vrot.slane %v4028, 4
        %v4031 = vor.u32 %v4030, %v4026
        %v4032 = vrot.slane %v4031, 4
        %v4034 = vshll.u32 %v3554, 16
        %v4036 = vrot.slane %v4034, 5
        %v4037 = vsel %vm1293, %v4032, %v4036
        %v4039 = vshrl.u32 %v3555, 16
        %v4041 = vrot.slane %v4039, 4
        %v4042 = vshll.u32 %v3555, 16
        %v4044 = vrot.slane %v4042, 5
        %v4045 = vor.u32 %v4041, %v4044
        %v4046 = vrot.slane %v4045, 4
        %v4048 = vshll.u32 %v3556, 16
        %v4050 = vrot.slane %v4048, 5
        %v4051 = vsel %vm1293, %v4046, %v4050
        %v4052 = vshrl.u32 %v3556, 16
        %v4054 = vrot.slane %v4052, 4
        %v4055 = vor.u32 %v4054, %v4050
        %v4056 = vrot.slane %v4055, 4
        %v4058 = vshll.u32 %v3557, 16
        %v4060 = vrot.slane %v4058, 5
        %v4061 = vsel %vm1293, %v4056, %v4060
        %v4063 = vshrl.u32 %v3558, 16
        %v4065 = vrot.slane %v4063, 4
        %v4066 = vshll.u32 %v3558, 16
        %v4068 = vrot.slane %v4066, 5
        %v4069 = vor.u32 %v4065, %v4068
        %v4070 = vrot.slane %v4069, 4
        %v4072 = vshll.u32 %v3559, 16
        %v4074 = vrot.slane %v4072, 5
        %v4075 = vsel %vm1293, %v4070, %v4074
        %v4076 = vshrl.u32 %v3559, 16
        %v4078 = vrot.slane %v4076, 4
        %v4079 = vor.u32 %v4078, %v4074
        %v4080 = vrot.slane %v4079, 4
        %v4082 = vshll.u32 %v3560, 16
        %v4084 = vrot.slane %v4082, 5
        %v4085 = vsel %vm1293, %v4080, %v4084
        %v4087 = vshrl.u32 %v3561, 16
        %v4089 = vrot.slane %v4087, 4
        %v4090 = vshll.u32 %v3561, 16
        %v4092 = vrot.slane %v4090, 5
        %v4093 = vor.u32 %v4089, %v4092
        %v4094 = vrot.slane %v4093, 4
        %v4096 = vshll.u32 %v3562, 16
        %v4098 = vrot.slane %v4096, 5
        %v4099 = vsel %vm1293, %v4094, %v4098
        %v4100 = vshrl.u32 %v3562, 16
        %v4102 = vrot.slane %v4100, 4
        %v4103 = vor.u32 %v4102, %v4098
        %v4104 = vrot.slane %v4103, 4
        %v4106 = vshll.u32 %v3563, 16
        %v4108 = vrot.slane %v4106, 5
        %v4109 = vsel %vm1293, %v4104, %v4108
        %v4110 = vld [vmem:[#allocation3] sm:$0xff]
        %v4111 = vld [vmem:[#allocation3 + $0x8] sm:$0xff]
        %v4112 = vld [vmem:[#allocation3 + $0x10] sm:$0xff]
        %v4113 = vld [vmem:[#allocation3 + $0x18] sm:$0xff]
        %v4114 = vld [vmem:[#allocation3 + $0x20] sm:$0xff]
        %v4115 = vld [vmem:[#allocation3 + $0x28] sm:$0xff]
        %v4116 = vld [vmem:[#allocation3 + $0x30] sm:$0xff]
        %v4117 = vld [vmem:[#allocation3 + $0x38] sm:$0xff]
        %v4118 = vld [vmem:[#allocation3 + $0x40] sm:$0xff]
        %v4119 = vld [vmem:[#allocation3 + $0x48] sm:$0xff]
        %v4120 = vld [vmem:[#allocation3 + $0x50] sm:$0xff]
        %v4121 = vld [vmem:[#allocation3 + $0x58] sm:$0xff]
        %v4122 = vld [vmem:[#allocation3 + $0x60] sm:$0xff]
        %v4123 = vld [vmem:[#allocation3 + $0x68] sm:$0xff]
        %v4124 = vld [vmem:[#allocation3 + $0x70] sm:$0xff]
        %v4125 = vld [vmem:[#allocation3 + $0x78] sm:$0xff]
        %v4126 = vld [vmem:[#allocation3 + $0x80] sm:$0xff]
        %v4127 = vld [vmem:[#allocation3 + $0x88] sm:$0xff]
        %v4128 = vld [vmem:[#allocation3 + $0x90] sm:$0xff]
        %v4129 = vld [vmem:[#allocation3 + $0x98] sm:$0xff]
        %v4130 = vld [vmem:[#allocation3 + $0xa0] sm:$0xff]
        %v4131 = vld [vmem:[#allocation3 + $0xa8] sm:$0xff]
        %v4132 = vld [vmem:[#allocation3 + $0xb0] sm:$0xff]
        %v4133 = vld [vmem:[#allocation3 + $0xb8] sm:$0xff]
        %v4134 = vld [vmem:[#allocation3 + $0xc0] sm:$0xff]
        %v4135 = vld [vmem:[#allocation3 + $0xc8] sm:$0xff]
        %v4136 = vld [vmem:[#allocation3 + $0xd0] sm:$0xff]
        %v4137 = vld [vmem:[#allocation3 + $0xd8] sm:$0xff]
        %v4138 = vld [vmem:[#allocation3 + $0xe0] sm:$0xff]
        %v4139 = vld [vmem:[#allocation3 + $0xe8] sm:$0xff]
        %v4140 = vld [vmem:[#allocation3 + $0xf0] sm:$0xff]
        %v4141 = vld [vmem:[#allocation3 + $0xf8] sm:$0xff]
        %s4142 = scalar_lea.vmem [#allocation7], 896
        %v4143 = vld [vmem:[%s4142] sm:$0xff]
        %v4144 = vld [vmem:[%s4142 + $0x8] sm:$0xff]
        %v4145 = vld [vmem:[%s4142 + $0x10] sm:$0xff]
        %v4146 = vld [vmem:[%s4142 + $0x18] sm:$0xff]
        %v4147 = vld [vmem:[%s4142 + $0x20] sm:$0xff]
        %v4148 = vld [vmem:[%s4142 + $0x28] sm:$0xff]
        %v4149 = vld [vmem:[%s4142 + $0x30] sm:$0xff]
        %v4150 = vld [vmem:[%s4142 + $0x38] sm:$0xff]
        %v4151 = vld [vmem:[%s4142 + $0x40] sm:$0xff]
        %v4152 = vld [vmem:[%s4142 + $0x48] sm:$0xff]
        %v4153 = vld [vmem:[%s4142 + $0x50] sm:$0xff]
        %v4154 = vld [vmem:[%s4142 + $0x58] sm:$0xff]
        %v4155 = vld [vmem:[%s4142 + $0x60] sm:$0xff]
        %v4156 = vld [vmem:[%s4142 + $0x68] sm:$0xff]
        %v4157 = vld [vmem:[%s4142 + $0x70] sm:$0xff]
        %v4158 = vld [vmem:[%s4142 + $0x78] sm:$0xff]
        %v4159 = vunpack.c.l.b16 %v3931
        %v4160 = vunpack.c.l.b16 %v3941
        %v4161 = vunpack.c.l.b16 %v3955
        %v4162 = vunpack.c.l.b16 %v3965
        %v4163 = vunpack.c.l.b16 %v3979
        %v4164 = vunpack.c.l.b16 %v3989
        %v4165 = vunpack.c.l.b16 %v4003
        %v4166 = vunpack.c.l.b16 %v4013
        %v4167 = vunpack.c.l.b16 %v4027
        %v4168 = vunpack.c.l.b16 %v4037
        %v4169 = vunpack.c.l.b16 %v4051
        %v4170 = vunpack.c.l.b16 %v4061
        %v4171 = vunpack.c.l.b16 %v4075
        %v4172 = vunpack.c.l.b16 %v4085
        %v4173 = vunpack.c.l.b16 %v4099
        %v4174 = vunpack.c.l.b16 %v4109
        %v4175 = vpack.c.b16 %v4160, %v4159
        %v4176 = vpack.c.b16 %v4162, %v4161
        %v4177 = vpack.c.b16 %v4164, %v4163
        %v4178 = vpack.c.b16 %v4166, %v4165
        %v4179 = vpack.c.b16 %v4168, %v4167
        %v4180 = vpack.c.b16 %v4170, %v4169
        %v4181 = vpack.c.b16 %v4172, %v4171
        %v4182 = vpack.c.b16 %v4174, %v4173
        %v4207 = vunpack.c.l.b16 %v4143
        %v4208 = vunpack.c.h.b16 %v4143
        %v4209 = vunpack.c.l.b16 %v4144
        %v4210 = vunpack.c.h.b16 %v4144
        %v4211 = vunpack.c.l.b16 %v4145
        %v4212 = vunpack.c.h.b16 %v4145
        %v4213 = vunpack.c.l.b16 %v4146
        %v4214 = vunpack.c.h.b16 %v4146
        %v4215 = vunpack.c.l.b16 %v4147
        %v4216 = vunpack.c.h.b16 %v4147
        %v4217 = vunpack.c.l.b16 %v4148
        %v4218 = vunpack.c.h.b16 %v4148
        %v4219 = vunpack.c.l.b16 %v4149
        %v4220 = vunpack.c.h.b16 %v4149
        %v4221 = vunpack.c.l.b16 %v4150
        %v4222 = vunpack.c.h.b16 %v4150
        %v4223 = vunpack.c.l.b16 %v4151
        %v4224 = vunpack.c.h.b16 %v4151
        %v4225 = vunpack.c.l.b16 %v4152
        %v4226 = vunpack.c.h.b16 %v4152
        %v4227 = vunpack.c.l.b16 %v4153
        %v4228 = vunpack.c.h.b16 %v4153
        %v4229 = vunpack.c.l.b16 %v4154
        %v4230 = vunpack.c.h.b16 %v4154
        %v4231 = vunpack.c.l.b16 %v4155
        %v4232 = vunpack.c.h.b16 %v4155
        %v4233 = vunpack.c.l.b16 %v4156
        %v4234 = vunpack.c.h.b16 %v4156
        %v4235 = vunpack.c.l.b16 %v4157
        %v4236 = vunpack.c.h.b16 %v4157
        %v4237 = vunpack.c.l.b16 %v4158
        %v4238 = vunpack.c.h.b16 %v4158
        %v4239 = vpack.c.b16 %v4209, %v4207
        %v4240 = vpack.c.b16 %v4210, %v4208
        %v4241 = vpack.c.b16 %v4213, %v4211
        %v4242 = vpack.c.b16 %v4214, %v4212
        %v4243 = vpack.c.b16 %v4217, %v4215
        %v4244 = vpack.c.b16 %v4218, %v4216
        %v4245 = vpack.c.b16 %v4221, %v4219
        %v4246 = vpack.c.b16 %v4222, %v4220
        %v4247 = vpack.c.b16 %v4225, %v4223
        %v4248 = vpack.c.b16 %v4226, %v4224
        %v4249 = vpack.c.b16 %v4229, %v4227
        %v4250 = vpack.c.b16 %v4230, %v4228
        %v4251 = vpack.c.b16 %v4233, %v4231
        %v4252 = vpack.c.b16 %v4234, %v4232
        %v4253 = vpack.c.b16 %v4237, %v4235
        %v4254 = vpack.c.b16 %v4238, %v4236
        %4271 = vmatprep.subr.bf16.mxu0 %v4254
        %4272 = vmatpush1.bf16.msra.mxu0 %v4253
        %4273 = vmatprep.subr.bf16.mxu0 %v4252
        %4274 = vmatpush1.bf16.msra.mxu0 %v4251
        %4275 = vmatprep.subr.bf16.mxu0 %v4250
        %4276 = vmatpush1.bf16.msra.mxu0 %v4249
        %4277 = vmatprep.subr.bf16.mxu0 %v4248
        %4278 = vmatpush1.bf16.msra.mxu0 %v4247
        %4279 = vmatprep.subr.bf16.mxu0 %v4246
        %4280 = vmatpush1.bf16.msra.mxu0 %v4245
        %4281 = vmatprep.subr.bf16.mxu0 %v4244
        %4282 = vmatpush1.bf16.msra.mxu0 %v4243
        %4283 = vmatprep.subr.bf16.mxu0 %v4242
        %4284 = vmatpush1.bf16.msra.mxu0 %v4241
        %4285 = vmatprep.subr.bf16.mxu0 %v4240
        %4286 = vmatpush1.bf16.msra.mxu0 %v4239
        %4287 = vmatprep.subr.bf16.mxu0 0
        %4288 = vmatpush2.bf16.msra.mxu0 0
        %4289 = vmatprep.subr.bf16.mxu0 0
        %4290 = vmatpush2.bf16.msra.mxu0 0
        %4291 = vmatprep.subr.bf16.mxu0 0
        %4292 = vmatpush2.bf16.msra.mxu0 0
        %4293 = vmatprep.subr.bf16.mxu0 0
        %4294 = vmatpush2.bf16.msra.mxu0 0
        %4295 = vmatprep.subr.bf16.mxu0 0
        %4296 = vmatpush2.bf16.msra.mxu0 0
        %4297 = vmatprep.subr.bf16.mxu0 0
        %4298 = vmatpush2.bf16.msra.mxu0 0
        %4299 = vmatprep.subr.bf16.mxu0 0
        %4300 = vmatpush2.bf16.msra.mxu0 0
        %4301 = vmatprep.subr.bf16.mxu0 0
        %4302 = vmatpush2.bf16.msra.mxu0 0
        %4303 = vmatprep.mubr.bf16.mxu0 0
        %4304 = vmatmul.mubr.bf16.gmra.mxu0 %v4175
        %v4305 = vpop.f32.mrf.mxu0
        %v4306 = vadd.f32 0.0, %v4305
        %v4307 = vpop.f32.mrf.mxu0
        %v4308 = vadd.f32 0.0, %v4307
        %v4309 = vpop.f32.mrf.mxu0
        %v4310 = vadd.f32 0.0, %v4309
        %v4311 = vpop.f32.mrf.mxu0
        %v4312 = vadd.f32 0.0, %v4311
        %4313 = vmatprep.mubr.bf16.mxu0 0
        %4314 = vmatmul.mubr.bf16.gmra.mxu0 %v4176
        %v4315 = vpop.f32.mrf.mxu0
        %v4316 = vadd.f32 0.0, %v4315
        %v4317 = vpop.f32.mrf.mxu0
        %v4318 = vadd.f32 0.0, %v4317
        %v4319 = vpop.f32.mrf.mxu0
        %v4320 = vadd.f32 0.0, %v4319
        %v4321 = vpop.f32.mrf.mxu0
        %v4322 = vadd.f32 0.0, %v4321
        %4323 = vmatprep.mubr.bf16.mxu0 0
        %4324 = vmatmul.mubr.bf16.gmra.mxu0 %v4177
        %v4325 = vpop.f32.mrf.mxu0
        %v4326 = vadd.f32 0.0, %v4325
        %v4327 = vpop.f32.mrf.mxu0
        %v4328 = vadd.f32 0.0, %v4327
        %v4329 = vpop.f32.mrf.mxu0
        %v4330 = vadd.f32 0.0, %v4329
        %v4331 = vpop.f32.mrf.mxu0
        %v4332 = vadd.f32 0.0, %v4331
        %4333 = vmatprep.mubr.bf16.mxu0 0
        %4334 = vmatmul.mubr.bf16.gmra.mxu0 %v4178
        %v4335 = vpop.f32.mrf.mxu0
        %v4336 = vadd.f32 0.0, %v4335
        %v4337 = vpop.f32.mrf.mxu0
        %v4338 = vadd.f32 0.0, %v4337
        %v4339 = vpop.f32.mrf.mxu0
        %v4340 = vadd.f32 0.0, %v4339
        %v4341 = vpop.f32.mrf.mxu0
        %v4342 = vadd.f32 0.0, %v4341
        %4343 = vmatprep.mubr.bf16.mxu0 0
        %4344 = vmatmul.mubr.bf16.gmra.mxu0 %v4179
        %v4345 = vpop.f32.mrf.mxu0
        %v4346 = vadd.f32 0.0, %v4345
        %v4347 = vpop.f32.mrf.mxu0
        %v4348 = vadd.f32 0.0, %v4347
        %v4349 = vpop.f32.mrf.mxu0
        %v4350 = vadd.f32 0.0, %v4349
        %v4351 = vpop.f32.mrf.mxu0
        %v4352 = vadd.f32 0.0, %v4351
        %4353 = vmatprep.mubr.bf16.mxu0 0
        %4354 = vmatmul.mubr.bf16.gmra.mxu0 %v4180
        %v4355 = vpop.f32.mrf.mxu0
        %v4356 = vadd.f32 0.0, %v4355
        %v4357 = vpop.f32.mrf.mxu0
        %v4358 = vadd.f32 0.0, %v4357
        %v4359 = vpop.f32.mrf.mxu0
        %v4360 = vadd.f32 0.0, %v4359
        %v4361 = vpop.f32.mrf.mxu0
        %v4362 = vadd.f32 0.0, %v4361
        %4363 = vmatprep.mubr.bf16.mxu0 0
        %4364 = vmatmul.mubr.bf16.gmra.mxu0 %v4181
        %v4365 = vpop.f32.mrf.mxu0
        %v4366 = vadd.f32 0.0, %v4365
        %v4367 = vpop.f32.mrf.mxu0
        %v4368 = vadd.f32 0.0, %v4367
        %v4369 = vpop.f32.mrf.mxu0
        %v4370 = vadd.f32 0.0, %v4369
        %v4371 = vpop.f32.mrf.mxu0
        %v4372 = vadd.f32 0.0, %v4371
        %4373 = vmatprep.mubr.bf16.mxu0 0
        %4374 = vmatmul.mubr.bf16.gmra.mxu0 %v4182
        %v4375 = vpop.f32.mrf.mxu0
        %v4376 = vadd.f32 0.0, %v4375
        %v4377 = vpop.f32.mrf.mxu0
        %v4378 = vadd.f32 0.0, %v4377
        %v4379 = vpop.f32.mrf.mxu0
        %v4380 = vadd.f32 0.0, %v4379
        %v4381 = vpop.f32.mrf.mxu0
        %v4382 = vadd.f32 0.0, %v4381
        %4383 = vdwg.mxu0
        %v4384 = vadd.f32 %v4110, %v4306
        %v4385 = vadd.f32 %v4111, %v4308
        %v4386 = vadd.f32 %v4112, %v4310
        %v4387 = vadd.f32 %v4113, %v4312
        %v4388 = vadd.f32 %v4114, %v4316
        %v4389 = vadd.f32 %v4115, %v4318
        %v4390 = vadd.f32 %v4116, %v4320
        %v4391 = vadd.f32 %v4117, %v4322
        %v4392 = vadd.f32 %v4118, %v4326
        %v4393 = vadd.f32 %v4119, %v4328
        %v4394 = vadd.f32 %v4120, %v4330
        %v4395 = vadd.f32 %v4121, %v4332
        %v4396 = vadd.f32 %v4122, %v4336
        %v4397 = vadd.f32 %v4123, %v4338
        %v4398 = vadd.f32 %v4124, %v4340
        %v4399 = vadd.f32 %v4125, %v4342
        %v4400 = vadd.f32 %v4126, %v4346
        %v4401 = vadd.f32 %v4127, %v4348
        %v4402 = vadd.f32 %v4128, %v4350
        %v4403 = vadd.f32 %v4129, %v4352
        %v4404 = vadd.f32 %v4130, %v4356
        %v4405 = vadd.f32 %v4131, %v4358
        %v4406 = vadd.f32 %v4132, %v4360
        %v4407 = vadd.f32 %v4133, %v4362
        %v4408 = vadd.f32 %v4134, %v4366
        %v4409 = vadd.f32 %v4135, %v4368
        %v4410 = vadd.f32 %v4136, %v4370
        %v4411 = vadd.f32 %v4137, %v4372
        %v4412 = vadd.f32 %v4138, %v4376
        %v4413 = vadd.f32 %v4139, %v4378
        %v4414 = vadd.f32 %v4140, %v4380
        %v4415 = vadd.f32 %v4141, %v4382
        %4416 = vst [vmem:[#allocation3] sm:$0xff] %v4384
        %4417 = vst [vmem:[#allocation3 + $0x8] sm:$0xff] %v4385
        %4418 = vst [vmem:[#allocation3 + $0x10] sm:$0xff] %v4386
        %4419 = vst [vmem:[#allocation3 + $0x18] sm:$0xff] %v4387
        %4420 = vst [vmem:[#allocation3 + $0x20] sm:$0xff] %v4388
        %4421 = vst [vmem:[#allocation3 + $0x28] sm:$0xff] %v4389
        %4422 = vst [vmem:[#allocation3 + $0x30] sm:$0xff] %v4390
        %4423 = vst [vmem:[#allocation3 + $0x38] sm:$0xff] %v4391
        %4424 = vst [vmem:[#allocation3 + $0x40] sm:$0xff] %v4392
        %4425 = vst [vmem:[#allocation3 + $0x48] sm:$0xff] %v4393
        %4426 = vst [vmem:[#allocation3 + $0x50] sm:$0xff] %v4394
        %4427 = vst [vmem:[#allocation3 + $0x58] sm:$0xff] %v4395
        %4428 = vst [vmem:[#allocation3 + $0x60] sm:$0xff] %v4396
        %4429 = vst [vmem:[#allocation3 + $0x68] sm:$0xff] %v4397
        %4430 = vst [vmem:[#allocation3 + $0x70] sm:$0xff] %v4398
        %4431 = vst [vmem:[#allocation3 + $0x78] sm:$0xff] %v4399
        %4432 = vst [vmem:[#allocation3 + $0x80] sm:$0xff] %v4400
        %4433 = vst [vmem:[#allocation3 + $0x88] sm:$0xff] %v4401
        %4434 = vst [vmem:[#allocation3 + $0x90] sm:$0xff] %v4402
        %4435 = vst [vmem:[#allocation3 + $0x98] sm:$0xff] %v4403
        %4436 = vst [vmem:[#allocation3 + $0xa0] sm:$0xff] %v4404
        %4437 = vst [vmem:[#allocation3 + $0xa8] sm:$0xff] %v4405
        %4438 = vst [vmem:[#allocation3 + $0xb0] sm:$0xff] %v4406
        %4439 = vst [vmem:[#allocation3 + $0xb8] sm:$0xff] %v4407
        %4440 = vst [vmem:[#allocation3 + $0xc0] sm:$0xff] %v4408
        %4441 = vst [vmem:[#allocation3 + $0xc8] sm:$0xff] %v4409
        %4442 = vst [vmem:[#allocation3 + $0xd0] sm:$0xff] %v4410
        %4443 = vst [vmem:[#allocation3 + $0xd8] sm:$0xff] %v4411
        %4444 = vst [vmem:[#allocation3 + $0xe0] sm:$0xff] %v4412
        %4445 = vst [vmem:[#allocation3 + $0xe8] sm:$0xff] %v4413
        %4446 = vst [vmem:[#allocation3 + $0xf0] sm:$0xff] %v4414
        %4447 = vst [vmem:[#allocation3 + $0xf8] sm:$0xff] %v4415
        %v4456 = vrot.slane %v3540, 5
        %v4457 = vrot.slane %v4456, 4
        %v4458 = vrot.slane %v3541, 5
        %v4459 = vsel %vm1834, %v4457, %v4458
        %v4460 = vrot.slane %v4458, 4
        %v4461 = vrot.slane %v3542, 5
        %v4462 = vsel %vm1834, %v4460, %v4461
        %v4463 = vrot.slane %v3543, 5
        %v4464 = vrot.slane %v4463, 4
        %v4465 = vrot.slane %v3544, 5
        %v4466 = vsel %vm1834, %v4464, %v4465
        %v4467 = vrot.slane %v4465, 4
        %v4468 = vrot.slane %v3545, 5
        %v4469 = vsel %vm1834, %v4467, %v4468
        %v4470 = vrot.slane %v3546, 5
        %v4471 = vrot.slane %v4470, 4
        %v4472 = vrot.slane %v3547, 5
        %v4473 = vsel %vm1834, %v4471, %v4472
        %v4474 = vrot.slane %v4472, 4
        %v4475 = vrot.slane %v3548, 5
        %v4476 = vsel %vm1834, %v4474, %v4475
        %v4477 = vrot.slane %v3549, 5
        %v4478 = vrot.slane %v4477, 4
        %v4479 = vrot.slane %v3550, 5
        %v4480 = vsel %vm1834, %v4478, %v4479
        %v4481 = vrot.slane %v4479, 4
        %v4482 = vrot.slane %v3551, 5
        %v4483 = vsel %vm1834, %v4481, %v4482
        %v4484 = vrot.slane %v3552, 5
        %v4485 = vrot.slane %v4484, 4
        %v4486 = vrot.slane %v3553, 5
        %v4487 = vsel %vm1834, %v4485, %v4486
        %v4488 = vrot.slane %v4486, 4
        %v4489 = vrot.slane %v3554, 5
        %v4490 = vsel %vm1834, %v4488, %v4489
        %v4491 = vrot.slane %v3555, 5
        %v4492 = vrot.slane %v4491, 4
        %v4493 = vrot.slane %v3556, 5
        %v4494 = vsel %vm1834, %v4492, %v4493
        %v4495 = vrot.slane %v4493, 4
        %v4496 = vrot.slane %v3557, 5
        %v4497 = vsel %vm1834, %v4495, %v4496
        %v4498 = vrot.slane %v3558, 5
        %v4499 = vrot.slane %v4498, 4
        %v4500 = vrot.slane %v3559, 5
        %v4501 = vsel %vm1834, %v4499, %v4500
        %v4502 = vrot.slane %v4500, 4
        %v4503 = vrot.slane %v3560, 5
        %v4504 = vsel %vm1834, %v4502, %v4503
        %v4505 = vrot.slane %v3561, 5
        %v4506 = vrot.slane %v4505, 4
        %v4507 = vrot.slane %v3562, 5
        %v4508 = vsel %vm1834, %v4506, %v4507
        %v4509 = vrot.slane %v4507, 4
        %v4510 = vrot.slane %v3563, 5
        %v4511 = vsel %vm1834, %v4509, %v4510
        %v4512 = vld [vmem:[#allocation3] sm:$0xff]
        %v4513 = vld [vmem:[#allocation3 + $0x8] sm:$0xff]
        %v4514 = vld [vmem:[#allocation3 + $0x10] sm:$0xff]
        %v4515 = vld [vmem:[#allocation3 + $0x18] sm:$0xff]
        %v4516 = vld [vmem:[#allocation3 + $0x20] sm:$0xff]
        %v4517 = vld [vmem:[#allocation3 + $0x28] sm:$0xff]
        %v4518 = vld [vmem:[#allocation3 + $0x30] sm:$0xff]
        %v4519 = vld [vmem:[#allocation3 + $0x38] sm:$0xff]
        %v4520 = vld [vmem:[#allocation3 + $0x40] sm:$0xff]
        %v4521 = vld [vmem:[#allocation3 + $0x48] sm:$0xff]
        %v4522 = vld [vmem:[#allocation3 + $0x50] sm:$0xff]
        %v4523 = vld [vmem:[#allocation3 + $0x58] sm:$0xff]
        %v4524 = vld [vmem:[#allocation3 + $0x60] sm:$0xff]
        %v4525 = vld [vmem:[#allocation3 + $0x68] sm:$0xff]
        %v4526 = vld [vmem:[#allocation3 + $0x70] sm:$0xff]
        %v4527 = vld [vmem:[#allocation3 + $0x78] sm:$0xff]
        %v4528 = vld [vmem:[#allocation3 + $0x80] sm:$0xff]
        %v4529 = vld [vmem:[#allocation3 + $0x88] sm:$0xff]
        %v4530 = vld [vmem:[#allocation3 + $0x90] sm:$0xff]
        %v4531 = vld [vmem:[#allocation3 + $0x98] sm:$0xff]
        %v4532 = vld [vmem:[#allocation3 + $0xa0] sm:$0xff]
        %v4533 = vld [vmem:[#allocation3 + $0xa8] sm:$0xff]
        %v4534 = vld [vmem:[#allocation3 + $0xb0] sm:$0xff]
        %v4535 = vld [vmem:[#allocation3 + $0xb8] sm:$0xff]
        %v4536 = vld [vmem:[#allocation3 + $0xc0] sm:$0xff]
        %v4537 = vld [vmem:[#allocation3 + $0xc8] sm:$0xff]
        %v4538 = vld [vmem:[#allocation3 + $0xd0] sm:$0xff]
        %v4539 = vld [vmem:[#allocation3 + $0xd8] sm:$0xff]
        %v4540 = vld [vmem:[#allocation3 + $0xe0] sm:$0xff]
        %v4541 = vld [vmem:[#allocation3 + $0xe8] sm:$0xff]
        %v4542 = vld [vmem:[#allocation3 + $0xf0] sm:$0xff]
        %v4543 = vld [vmem:[#allocation3 + $0xf8] sm:$0xff]
        %s4544 = scalar_lea.vmem [#allocation7], 1024
        %v4545 = vld [vmem:[%s4544] sm:$0xff]
        %v4546 = vld [vmem:[%s4544 + $0x8] sm:$0xff]
        %v4547 = vld [vmem:[%s4544 + $0x10] sm:$0xff]
        %v4548 = vld [vmem:[%s4544 + $0x18] sm:$0xff]
        %v4549 = vld [vmem:[%s4544 + $0x20] sm:$0xff]
        %v4550 = vld [vmem:[%s4544 + $0x28] sm:$0xff]
        %v4551 = vld [vmem:[%s4544 + $0x30] sm:$0xff]
        %v4552 = vld [vmem:[%s4544 + $0x38] sm:$0xff]
        %v4553 = vld [vmem:[%s4544 + $0x40] sm:$0xff]
        %v4554 = vld [vmem:[%s4544 + $0x48] sm:$0xff]
        %v4555 = vld [vmem:[%s4544 + $0x50] sm:$0xff]
        %v4556 = vld [vmem:[%s4544 + $0x58] sm:$0xff]
        %v4557 = vld [vmem:[%s4544 + $0x60] sm:$0xff]
        %v4558 = vld [vmem:[%s4544 + $0x68] sm:$0xff]
        %v4559 = vld [vmem:[%s4544 + $0x70] sm:$0xff]
        %v4560 = vld [vmem:[%s4544 + $0x78] sm:$0xff]
        %v4561 = vunpack.c.l.b16 %v4459
        %v4562 = vunpack.c.l.b16 %v4462
        %v4563 = vunpack.c.l.b16 %v4466
        %v4564 = vunpack.c.l.b16 %v4469
        %v4565 = vunpack.c.l.b16 %v4473
        %v4566 = vunpack.c.l.b16 %v4476
        %v4567 = vunpack.c.l.b16 %v4480
        %v4568 = vunpack.c.l.b16 %v4483
        %v4569 = vunpack.c.l.b16 %v4487
        %v4570 = vunpack.c.l.b16 %v4490
        %v4571 = vunpack.c.l.b16 %v4494
        %v4572 = vunpack.c.l.b16 %v4497
        %v4573 = vunpack.c.l.b16 %v4501
        %v4574 = vunpack.c.l.b16 %v4504
        %v4575 = vunpack.c.l.b16 %v4508
        %v4576 = vunpack.c.l.b16 %v4511
        %v4577 = vpack.c.b16 %v4562, %v4561
        %v4578 = vpack.c.b16 %v4564, %v4563
        %v4579 = vpack.c.b16 %v4566, %v4565
        %v4580 = vpack.c.b16 %v4568, %v4567
        %v4581 = vpack.c.b16 %v4570, %v4569
        %v4582 = vpack.c.b16 %v4572, %v4571
        %v4583 = vpack.c.b16 %v4574, %v4573
        %v4584 = vpack.c.b16 %v4576, %v4575
        %v4609 = vunpack.c.l.b16 %v4545
        %v4610 = vunpack.c.h.b16 %v4545
        %v4611 = vunpack.c.l.b16 %v4546
        %v4612 = vunpack.c.h.b16 %v4546
        %v4613 = vunpack.c.l.b16 %v4547
        %v4614 = vunpack.c.h.b16 %v4547
        %v4615 = vunpack.c.l.b16 %v4548
        %v4616 = vunpack.c.h.b16 %v4548
        %v4617 = vunpack.c.l.b16 %v4549
        %v4618 = vunpack.c.h.b16 %v4549
        %v4619 = vunpack.c.l.b16 %v4550
        %v4620 = vunpack.c.h.b16 %v4550
        %v4621 = vunpack.c.l.b16 %v4551
        %v4622 = vunpack.c.h.b16 %v4551
        %v4623 = vunpack.c.l.b16 %v4552
        %v4624 = vunpack.c.h.b16 %v4552
        %v4625 = vunpack.c.l.b16 %v4553
        %v4626 = vunpack.c.h.b16 %v4553
        %v4627 = vunpack.c.l.b16 %v4554
        %v4628 = vunpack.c.h.b16 %v4554
        %v4629 = vunpack.c.l.b16 %v4555
        %v4630 = vunpack.c.h.b16 %v4555
        %v4631 = vunpack.c.l.b16 %v4556
        %v4632 = vunpack.c.h.b16 %v4556
        %v4633 = vunpack.c.l.b16 %v4557
        %v4634 = vunpack.c.h.b16 %v4557
        %v4635 = vunpack.c.l.b16 %v4558
        %v4636 = vunpack.c.h.b16 %v4558
        %v4637 = vunpack.c.l.b16 %v4559
        %v4638 = vunpack.c.h.b16 %v4559
        %v4639 = vunpack.c.l.b16 %v4560
        %v4640 = vunpack.c.h.b16 %v4560
        %v4641 = vpack.c.b16 %v4611, %v4609
        %v4642 = vpack.c.b16 %v4612, %v4610
        %v4643 = vpack.c.b16 %v4615, %v4613
        %v4644 = vpack.c.b16 %v4616, %v4614
        %v4645 = vpack.c.b16 %v4619, %v4617
        %v4646 = vpack.c.b16 %v4620, %v4618
        %v4647 = vpack.c.b16 %v4623, %v4621
        %v4648 = vpack.c.b16 %v4624, %v4622
        %v4649 = vpack.c.b16 %v4627, %v4625
        %v4650 = vpack.c.b16 %v4628, %v4626
        %v4651 = vpack.c.b16 %v4631, %v4629
        %v4652 = vpack.c.b16 %v4632, %v4630
        %v4653 = vpack.c.b16 %v4635, %v4633
        %v4654 = vpack.c.b16 %v4636, %v4634
        %v4655 = vpack.c.b16 %v4639, %v4637
        %v4656 = vpack.c.b16 %v4640, %v4638
        %4673 = vmatprep.subr.bf16.mxu0 %v4656
        %4674 = vmatpush1.bf16.msra.mxu0 %v4655
        %4675 = vmatprep.subr.bf16.mxu0 %v4654
        %4676 = vmatpush1.bf16.msra.mxu0 %v4653
        %4677 = vmatprep.subr.bf16.mxu0 %v4652
        %4678 = vmatpush1.bf16.msra.mxu0 %v4651
        %4679 = vmatprep.subr.bf16.mxu0 %v4650
        %4680 = vmatpush1.bf16.msra.mxu0 %v4649
        %4681 = vmatprep.subr.bf16.mxu0 %v4648
        %4682 = vmatpush1.bf16.msra.mxu0 %v4647
        %4683 = vmatprep.subr.bf16.mxu0 %v4646
        %4684 = vmatpush1.bf16.msra.mxu0 %v4645
        %4685 = vmatprep.subr.bf16.mxu0 %v4644
        %4686 = vmatpush1.bf16.msra.mxu0 %v4643
        %4687 = vmatprep.subr.bf16.mxu0 %v4642
        %4688 = vmatpush1.bf16.msra.mxu0 %v4641
        %4689 = vmatprep.subr.bf16.mxu0 0
        %4690 = vmatpush2.bf16.msra.mxu0 0
        %4691 = vmatprep.subr.bf16.mxu0 0
        %4692 = vmatpush2.bf16.msra.mxu0 0
        %4693 = vmatprep.subr.bf16.mxu0 0
        %4694 = vmatpush2.bf16.msra.mxu0 0
        %4695 = vmatprep.subr.bf16.mxu0 0
        %4696 = vmatpush2.bf16.msra.mxu0 0
        %4697 = vmatprep.subr.bf16.mxu0 0
        %4698 = vmatpush2.bf16.msra.mxu0 0
        %4699 = vmatprep.subr.bf16.mxu0 0
        %4700 = vmatpush2.bf16.msra.mxu0 0
        %4701 = vmatprep.subr.bf16.mxu0 0
        %4702 = vmatpush2.bf16.msra.mxu0 0
        %4703 = vmatprep.subr.bf16.mxu0 0
        %4704 = vmatpush2.bf16.msra.mxu0 0
        %4705 = vmatprep.mubr.bf16.mxu0 0
        %4706 = vmatmul.mubr.bf16.gmra.mxu0 %v4577
        %v4707 = vpop.f32.mrf.mxu0
        %v4708 = vadd.f32 0.0, %v4707
        %v4709 = vpop.f32.mrf.mxu0
        %v4710 = vadd.f32 0.0, %v4709
        %v4711 = vpop.f32.mrf.mxu0
        %v4712 = vadd.f32 0.0, %v4711
        %v4713 = vpop.f32.mrf.mxu0
        %v4714 = vadd.f32 0.0, %v4713
        %4715 = vmatprep.mubr.bf16.mxu0 0
        %4716 = vmatmul.mubr.bf16.gmra.mxu0 %v4578
        %v4717 = vpop.f32.mrf.mxu0
        %v4718 = vadd.f32 0.0, %v4717
        %v4719 = vpop.f32.mrf.mxu0
        %v4720 = vadd.f32 0.0, %v4719
        %v4721 = vpop.f32.mrf.mxu0
        %v4722 = vadd.f32 0.0, %v4721
        %v4723 = vpop.f32.mrf.mxu0
        %v4724 = vadd.f32 0.0, %v4723
        %4725 = vmatprep.mubr.bf16.mxu0 0
        %4726 = vmatmul.mubr.bf16.gmra.mxu0 %v4579
        %v4727 = vpop.f32.mrf.mxu0
        %v4728 = vadd.f32 0.0, %v4727
        %v4729 = vpop.f32.mrf.mxu0
        %v4730 = vadd.f32 0.0, %v4729
        %v4731 = vpop.f32.mrf.mxu0
        %v4732 = vadd.f32 0.0, %v4731
        %v4733 = vpop.f32.mrf.mxu0
        %v4734 = vadd.f32 0.0, %v4733
        %4735 = vmatprep.mubr.bf16.mxu0 0
        %4736 = vmatmul.mubr.bf16.gmra.mxu0 %v4580
        %v4737 = vpop.f32.mrf.mxu0
        %v4738 = vadd.f32 0.0, %v4737
        %v4739 = vpop.f32.mrf.mxu0
        %v4740 = vadd.f32 0.0, %v4739
        %v4741 = vpop.f32.mrf.mxu0
        %v4742 = vadd.f32 0.0, %v4741
        %v4743 = vpop.f32.mrf.mxu0
        %v4744 = vadd.f32 0.0, %v4743
        %4745 = vmatprep.mubr.bf16.mxu0 0
        %4746 = vmatmul.mubr.bf16.gmra.mxu0 %v4581
        %v4747 = vpop.f32.mrf.mxu0
        %v4748 = vadd.f32 0.0, %v4747
        %v4749 = vpop.f32.mrf.mxu0
        %v4750 = vadd.f32 0.0, %v4749
        %v4751 = vpop.f32.mrf.mxu0
        %v4752 = vadd.f32 0.0, %v4751
        %v4753 = vpop.f32.mrf.mxu0
        %v4754 = vadd.f32 0.0, %v4753
        %4755 = vmatprep.mubr.bf16.mxu0 0
        %4756 = vmatmul.mubr.bf16.gmra.mxu0 %v4582
        %v4757 = vpop.f32.mrf.mxu0
        %v4758 = vadd.f32 0.0, %v4757
        %v4759 = vpop.f32.mrf.mxu0
        %v4760 = vadd.f32 0.0, %v4759
        %v4761 = vpop.f32.mrf.mxu0
        %v4762 = vadd.f32 0.0, %v4761
        %v4763 = vpop.f32.mrf.mxu0
        %v4764 = vadd.f32 0.0, %v4763
        %4765 = vmatprep.mubr.bf16.mxu0 0
        %4766 = vmatmul.mubr.bf16.gmra.mxu0 %v4583
        %v4767 = vpop.f32.mrf.mxu0
        %v4768 = vadd.f32 0.0, %v4767
        %v4769 = vpop.f32.mrf.mxu0
        %v4770 = vadd.f32 0.0, %v4769
        %v4771 = vpop.f32.mrf.mxu0
        %v4772 = vadd.f32 0.0, %v4771
        %v4773 = vpop.f32.mrf.mxu0
        %v4774 = vadd.f32 0.0, %v4773
        %4775 = vmatprep.mubr.bf16.mxu0 0
        %4776 = vmatmul.mubr.bf16.gmra.mxu0 %v4584
        %v4777 = vpop.f32.mrf.mxu0
        %v4778 = vadd.f32 0.0, %v4777
        %v4779 = vpop.f32.mrf.mxu0
        %v4780 = vadd.f32 0.0, %v4779
        %v4781 = vpop.f32.mrf.mxu0
        %v4782 = vadd.f32 0.0, %v4781
        %v4783 = vpop.f32.mrf.mxu0
        %v4784 = vadd.f32 0.0, %v4783
        %4785 = vdwg.mxu0
        %v4786 = vadd.f32 %v4512, %v4708
        %v4787 = vadd.f32 %v4513, %v4710
        %v4788 = vadd.f32 %v4514, %v4712
        %v4789 = vadd.f32 %v4515, %v4714
        %v4790 = vadd.f32 %v4516, %v4718
        %v4791 = vadd.f32 %v4517, %v4720
        %v4792 = vadd.f32 %v4518, %v4722
        %v4793 = vadd.f32 %v4519, %v4724
        %v4794 = vadd.f32 %v4520, %v4728
        %v4795 = vadd.f32 %v4521, %v4730
        %v4796 = vadd.f32 %v4522, %v4732
        %v4797 = vadd.f32 %v4523, %v4734
        %v4798 = vadd.f32 %v4524, %v4738
        %v4799 = vadd.f32 %v4525, %v4740
        %v4800 = vadd.f32 %v4526, %v4742
        %v4801 = vadd.f32 %v4527, %v4744
        %v4802 = vadd.f32 %v4528, %v4748
        %v4803 = vadd.f32 %v4529, %v4750
        %v4804 = vadd.f32 %v4530, %v4752
        %v4805 = vadd.f32 %v4531, %v4754
        %v4806 = vadd.f32 %v4532, %v4758
        %v4807 = vadd.f32 %v4533, %v4760
        %v4808 = vadd.f32 %v4534, %v4762
        %v4809 = vadd.f32 %v4535, %v4764
        %v4810 = vadd.f32 %v4536, %v4768
        %v4811 = vadd.f32 %v4537, %v4770
        %v4812 = vadd.f32 %v4538, %v4772
        %v4813 = vadd.f32 %v4539, %v4774
        %v4814 = vadd.f32 %v4540, %v4778
        %v4815 = vadd.f32 %v4541, %v4780
        %v4816 = vadd.f32 %v4542, %v4782
        %v4817 = vadd.f32 %v4543, %v4784
        %4818 = vst [vmem:[#allocation3] sm:$0xff] %v4786
        %4819 = vst [vmem:[#allocation3 + $0x8] sm:$0xff] %v4787
        %4820 = vst [vmem:[#allocation3 + $0x10] sm:$0xff] %v4788
        %4821 = vst [vmem:[#allocation3 + $0x18] sm:$0xff] %v4789
        %4822 = vst [vmem:[#allocation3 + $0x20] sm:$0xff] %v4790
        %4823 = vst [vmem:[#allocation3 + $0x28] sm:$0xff] %v4791
        %4824 = vst [vmem:[#allocation3 + $0x30] sm:$0xff] %v4792
        %4825 = vst [vmem:[#allocation3 + $0x38] sm:$0xff] %v4793
        %4826 = vst [vmem:[#allocation3 + $0x40] sm:$0xff] %v4794
        %4827 = vst [vmem:[#allocation3 + $0x48] sm:$0xff] %v4795
        %4828 = vst [vmem:[#allocation3 + $0x50] sm:$0xff] %v4796
        %4829 = vst [vmem:[#allocation3 + $0x58] sm:$0xff] %v4797
        %4830 = vst [vmem:[#allocation3 + $0x60] sm:$0xff] %v4798
        %4831 = vst [vmem:[#allocation3 + $0x68] sm:$0xff] %v4799
        %4832 = vst [vmem:[#allocation3 + $0x70] sm:$0xff] %v4800
        %4833 = vst [vmem:[#allocation3 + $0x78] sm:$0xff] %v4801
        %4834 = vst [vmem:[#allocation3 + $0x80] sm:$0xff] %v4802
        %4835 = vst [vmem:[#allocation3 + $0x88] sm:$0xff] %v4803
        %4836 = vst [vmem:[#allocation3 + $0x90] sm:$0xff] %v4804
        %4837 = vst [vmem:[#allocation3 + $0x98] sm:$0xff] %v4805
        %4838 = vst [vmem:[#allocation3 + $0xa0] sm:$0xff] %v4806
        %4839 = vst [vmem:[#allocation3 + $0xa8] sm:$0xff] %v4807
        %4840 = vst [vmem:[#allocation3 + $0xb0] sm:$0xff] %v4808
        %4841 = vst [vmem:[#allocation3 + $0xb8] sm:$0xff] %v4809
        %4842 = vst [vmem:[#allocation3 + $0xc0] sm:$0xff] %v4810
        %4843 = vst [vmem:[#allocation3 + $0xc8] sm:$0xff] %v4811
        %4844 = vst [vmem:[#allocation3 + $0xd0] sm:$0xff] %v4812
        %4845 = vst [vmem:[#allocation3 + $0xd8] sm:$0xff] %v4813
        %4846 = vst [vmem:[#allocation3 + $0xe0] sm:$0xff] %v4814
        %4847 = vst [vmem:[#allocation3 + $0xe8] sm:$0xff] %v4815
        %4848 = vst [vmem:[#allocation3 + $0xf0] sm:$0xff] %v4816
        %4849 = vst [vmem:[#allocation3 + $0xf8] sm:$0xff] %v4817
        %v4850 = vld [vmem:[#allocation3] sm:$0xff]
        %v4851 = vld [vmem:[#allocation3 + $0x8] sm:$0xff]
        %v4852 = vld [vmem:[#allocation3 + $0x10] sm:$0xff]
        %v4853 = vld [vmem:[#allocation3 + $0x18] sm:$0xff]
        %v4854 = vpack.c.bf16 %v4852, %v4850
        %v4855 = vpack.c.bf16 %v4853, %v4851
        %v4858 = vunpack.c.l.b16 %v4854
        %v4859 = vunpack.c.l.b16 %v4855
        %v4860 = vunpack.c.h.b16 %v4854
        %v4861 = vunpack.c.h.b16 %v4855
        %v4862 = vpack.c.b16 %v4859, %v4858
        %v4863 = vpack.c.b16 %v4861, %v4860
        %4866 = vst [vmem:[%s285] sm:$0xff] %v4862
        %4867 = vst [vmem:[%s285 + $0x8] sm:$0xff] %v4863
        %v4868 = vadd.f32 %v4850, %v4852
        %v4869 = vrot.slane %v4868, 4
        %v4870 = vadd.f32 %v4868, %v4869
        %v4871 = vrot.slane %v4870, 2
        %v4872 = vadd.f32 %v4870, %v4871
        %v4873 = vrot.slane %v4872, 1
        %v4874 = vadd.f32 %v4872, %v4873
        %v4875 = vadd.f32 %v4851, %v4853
        %v4876 = vrot.slane %v4875, 4
        %v4877 = vadd.f32 %v4875, %v4876
        %v4878 = vrot.slane %v4877, 2
        %v4879 = vadd.f32 %v4877, %v4878
        %v4880 = vrot.slane %v4879, 1
        %v4881 = vadd.f32 %v4879, %v4880
        %v4882 = vadd.f32 %v4874, 0.0
        %v4883 = vadd.f32 %v4881, 0.0
        %v4884 = vmul.f32 %v4850, %v4850
        %v4885 = vmul.f32 %v4851, %v4851
        %v4886 = vmul.f32 %v4852, %v4852
        %v4887 = vmul.f32 %v4853, %v4853
        %v4888 = vadd.f32 %v4884, %v4886
        %v4889 = vrot.slane %v4888, 4
        %v4890 = vadd.f32 %v4888, %v4889
        %v4891 = vrot.slane %v4890, 2
        %v4892 = vadd.f32 %v4890, %v4891
        %v4893 = vrot.slane %v4892, 1
        %v4894 = vadd.f32 %v4892, %v4893
        %v4895 = vadd.f32 %v4885, %v4887
        %v4896 = vrot.slane %v4895, 4
        %v4897 = vadd.f32 %v4895, %v4896
        %v4898 = vrot.slane %v4897, 2
        %v4899 = vadd.f32 %v4897, %v4898
        %v4900 = vrot.slane %v4899, 1
        %v4901 = vadd.f32 %v4899, %v4900
        %v4902 = vadd.f32 %v4894, 0.0
        %v4903 = vadd.f32 %v4901, 0.0
        %v4904 = vld [vmem:[#allocation3 + $0x20] sm:$0xff]
        %v4905 = vld [vmem:[#allocation3 + $0x28] sm:$0xff]
        %v4906 = vld [vmem:[#allocation3 + $0x30] sm:$0xff]
        %v4907 = vld [vmem:[#allocation3 + $0x38] sm:$0xff]
        %v4908 = vpack.c.bf16 %v4906, %v4904
        %v4909 = vpack.c.bf16 %v4907, %v4905
        %v4912 = vunpack.c.l.b16 %v4908
        %v4913 = vunpack.c.l.b16 %v4909
        %v4914 = vunpack.c.h.b16 %v4908
        %v4915 = vunpack.c.h.b16 %v4909
        %v4916 = vpack.c.b16 %v4913, %v4912
        %v4917 = vpack.c.b16 %v4915, %v4914
        %s4920 = scalar_lea.vmem %s285, 16 [#allocation9]
        %4921 = vst [vmem:[%s4920] sm:$0xff] %v4916
        %4922 = vst [vmem:[%s4920 + $0x8] sm:$0xff] %v4917
        %v4923 = vadd.f32 %v4904, %v4906
        %v4924 = vrot.slane %v4923, 4
        %v4925 = vadd.f32 %v4923, %v4924
        %v4926 = vrot.slane %v4925, 2
        %v4927 = vadd.f32 %v4925, %v4926
        %v4928 = vrot.slane %v4927, 1
        %v4929 = vadd.f32 %v4927, %v4928
        %v4930 = vadd.f32 %v4905, %v4907
        %v4931 = vrot.slane %v4930, 4
        %v4932 = vadd.f32 %v4930, %v4931
        %v4933 = vrot.slane %v4932, 2
        %v4934 = vadd.f32 %v4932, %v4933
        %v4935 = vrot.slane %v4934, 1
        %v4936 = vadd.f32 %v4934, %v4935
        %v4937 = vadd.f32 %v4882, %v4929
        %v4938 = vadd.f32 %v4883, %v4936
        %v4939 = vmul.f32 %v4904, %v4904
        %v4940 = vmul.f32 %v4905, %v4905
        %v4941 = vmul.f32 %v4906, %v4906
        %v4942 = vmul.f32 %v4907, %v4907
        %v4943 = vadd.f32 %v4939, %v4941
        %v4944 = vrot.slane %v4943, 4
        %v4945 = vadd.f32 %v4943, %v4944
        %v4946 = vrot.slane %v4945, 2
        %v4947 = vadd.f32 %v4945, %v4946
        %v4948 = vrot.slane %v4947, 1
        %v4949 = vadd.f32 %v4947, %v4948
        %v4950 = vadd.f32 %v4940, %v4942
        %v4951 = vrot.slane %v4950, 4
        %v4952 = vadd.f32 %v4950, %v4951
        %v4953 = vrot.slane %v4952, 2
        %v4954 = vadd.f32 %v4952, %v4953
        %v4955 = vrot.slane %v4954, 1
        %v4956 = vadd.f32 %v4954, %v4955
        %v4957 = vadd.f32 %v4902, %v4949
        %v4958 = vadd.f32 %v4903, %v4956
        %v4959 = vld [vmem:[#allocation3 + $0x40] sm:$0xff]
        %v4960 = vld [vmem:[#allocation3 + $0x48] sm:$0xff]
        %v4961 = vld [vmem:[#allocation3 + $0x50] sm:$0xff]
        %v4962 = vld [vmem:[#allocation3 + $0x58] sm:$0xff]
        %v4963 = vpack.c.bf16 %v4961, %v4959
        %v4964 = vpack.c.bf16 %v4962, %v4960
        %v4967 = vunpack.c.l.b16 %v4963
        %v4968 = vunpack.c.l.b16 %v4964
        %v4969 = vunpack.c.h.b16 %v4963
        %v4970 = vunpack.c.h.b16 %v4964
        %v4971 = vpack.c.b16 %v4968, %v4967
        %v4972 = vpack.c.b16 %v4970, %v4969
        %s4975 = scalar_lea.vmem %s285, 32 [#allocation9]
        %4976 = vst [vmem:[%s4975] sm:$0xff] %v4971
        %4977 = vst [vmem:[%s4975 + $0x8] sm:$0xff] %v4972
        %v4978 = vadd.f32 %v4959, %v4961
        %v4979 = vrot.slane %v4978, 4
        %v4980 = vadd.f32 %v4978, %v4979
        %v4981 = vrot.slane %v4980, 2
        %v4982 = vadd.f32 %v4980, %v4981
        %v4983 = vrot.slane %v4982, 1
        %v4984 = vadd.f32 %v4982, %v4983
        %v4985 = vadd.f32 %v4960, %v4962
        %v4986 = vrot.slane %v4985, 4
        %v4987 = vadd.f32 %v4985, %v4986
        %v4988 = vrot.slane %v4987, 2
        %v4989 = vadd.f32 %v4987, %v4988
        %v4990 = vrot.slane %v4989, 1
        %v4991 = vadd.f32 %v4989, %v4990
        %v4992 = vadd.f32 %v4937, %v4984
        %v4993 = vadd.f32 %v4938, %v4991
        %v4994 = vmul.f32 %v4959, %v4959
        %v4995 = vmul.f32 %v4960, %v4960
        %v4996 = vmul.f32 %v4961, %v4961
        %v4997 = vmul.f32 %v4962, %v4962
        %v4998 = vadd.f32 %v4994, %v4996
        %v4999 = vrot.slane %v4998, 4
        %v5000 = vadd.f32 %v4998, %v4999
        %v5001 = vrot.slane %v5000, 2
        %v5002 = vadd.f32 %v5000, %v5001
        %v5003 = vrot.slane %v5002, 1
        %v5004 = vadd.f32 %v5002, %v5003
        %v5005 = vadd.f32 %v4995, %v4997
        %v5006 = vrot.slane %v5005, 4
        %v5007 = vadd.f32 %v5005, %v5006
        %v5008 = vrot.slane %v5007, 2
        %v5009 = vadd.f32 %v5007, %v5008
        %v5010 = vrot.slane %v5009, 1
        %v5011 = vadd.f32 %v5009, %v5010
        %v5012 = vadd.f32 %v4957, %v5004
        %v5013 = vadd.f32 %v4958, %v5011
        %v5014 = vld [vmem:[#allocation3 + $0x60] sm:$0xff]
        %v5015 = vld [vmem:[#allocation3 + $0x68] sm:$0xff]
        %v5016 = vld [vmem:[#allocation3 + $0x70] sm:$0xff]
        %v5017 = vld [vmem:[#allocation3 + $0x78] sm:$0xff]
        %v5018 = vpack.c.bf16 %v5016, %v5014
        %v5019 = vpack.c.bf16 %v5017, %v5015
        %v5022 = vunpack.c.l.b16 %v5018
        %v5023 = vunpack.c.l.b16 %v5019
        %v5024 = vunpack.c.h.b16 %v5018
        %v5025 = vunpack.c.h.b16 %v5019
        %v5026 = vpack.c.b16 %v5023, %v5022
        %v5027 = vpack.c.b16 %v5025, %v5024
        %s5030 = scalar_lea.vmem %s285, 48 [#allocation9]
        %5031 = vst [vmem:[%s5030] sm:$0xff] %v5026
        %5032 = vst [vmem:[%s5030 + $0x8] sm:$0xff] %v5027
        %v5033 = vadd.f32 %v5014, %v5016
        %v5034 = vrot.slane %v5033, 4
        %v5035 = vadd.f32 %v5033, %v5034
        %v5036 = vrot.slane %v5035, 2
        %v5037 = vadd.f32 %v5035, %v5036
        %v5038 = vrot.slane %v5037, 1
        %v5039 = vadd.f32 %v5037, %v5038
        %v5040 = vadd.f32 %v5015, %v5017
        %v5041 = vrot.slane %v5040, 4
        %v5042 = vadd.f32 %v5040, %v5041
        %v5043 = vrot.slane %v5042, 2
        %v5044 = vadd.f32 %v5042, %v5043
        %v5045 = vrot.slane %v5044, 1
        %v5046 = vadd.f32 %v5044, %v5045
        %v5047 = vadd.f32 %v4992, %v5039
        %v5048 = vadd.f32 %v4993, %v5046
        %v5049 = vmul.f32 %v5014, %v5014
        %v5050 = vmul.f32 %v5015, %v5015
        %v5051 = vmul.f32 %v5016, %v5016
        %v5052 = vmul.f32 %v5017, %v5017
        %v5053 = vadd.f32 %v5049, %v5051
        %v5054 = vrot.slane %v5053, 4
        %v5055 = vadd.f32 %v5053, %v5054
        %v5056 = vrot.slane %v5055, 2
        %v5057 = vadd.f32 %v5055, %v5056
        %v5058 = vrot.slane %v5057, 1
        %v5059 = vadd.f32 %v5057, %v5058
        %v5060 = vadd.f32 %v5050, %v5052
        %v5061 = vrot.slane %v5060, 4
        %v5062 = vadd.f32 %v5060, %v5061
        %v5063 = vrot.slane %v5062, 2
        %v5064 = vadd.f32 %v5062, %v5063
        %v5065 = vrot.slane %v5064, 1
        %v5066 = vadd.f32 %v5064, %v5065
        %v5067 = vadd.f32 %v5012, %v5059
        %v5068 = vadd.f32 %v5013, %v5066
        %v5069 = vld [vmem:[#allocation3 + $0x80] sm:$0xff]
        %v5070 = vld [vmem:[#allocation3 + $0x88] sm:$0xff]
        %v5071 = vld [vmem:[#allocation3 + $0x90] sm:$0xff]
        %v5072 = vld [vmem:[#allocation3 + $0x98] sm:$0xff]
        %v5073 = vpack.c.bf16 %v5071, %v5069
        %v5074 = vpack.c.bf16 %v5072, %v5070
        %v5077 = vunpack.c.l.b16 %v5073
        %v5078 = vunpack.c.l.b16 %v5074
        %v5079 = vunpack.c.h.b16 %v5073
        %v5080 = vunpack.c.h.b16 %v5074
        %v5081 = vpack.c.b16 %v5078, %v5077
        %v5082 = vpack.c.b16 %v5080, %v5079
        %s5085 = scalar_lea.vmem %s285, 64 [#allocation9]
        %5086 = vst [vmem:[%s5085] sm:$0xff] %v5081
        %5087 = vst [vmem:[%s5085 + $0x8] sm:$0xff] %v5082
        %v5088 = vadd.f32 %v5069, %v5071
        %v5089 = vrot.slane %v5088, 4
        %v5090 = vadd.f32 %v5088, %v5089
        %v5091 = vrot.slane %v5090, 2
        %v5092 = vadd.f32 %v5090, %v5091
        %v5093 = vrot.slane %v5092, 1
        %v5094 = vadd.f32 %v5092, %v5093
        %v5095 = vadd.f32 %v5070, %v5072
        %v5096 = vrot.slane %v5095, 4
        %v5097 = vadd.f32 %v5095, %v5096
        %v5098 = vrot.slane %v5097, 2
        %v5099 = vadd.f32 %v5097, %v5098
        %v5100 = vrot.slane %v5099, 1
        %v5101 = vadd.f32 %v5099, %v5100
        %v5102 = vadd.f32 %v5047, %v5094
        %v5103 = vadd.f32 %v5048, %v5101
        %v5104 = vmul.f32 %v5069, %v5069
        %v5105 = vmul.f32 %v5070, %v5070
        %v5106 = vmul.f32 %v5071, %v5071
        %v5107 = vmul.f32 %v5072, %v5072
        %v5108 = vadd.f32 %v5104, %v5106
        %v5109 = vrot.slane %v5108, 4
        %v5110 = vadd.f32 %v5108, %v5109
        %v5111 = vrot.slane %v5110, 2
        %v5112 = vadd.f32 %v5110, %v5111
        %v5113 = vrot.slane %v5112, 1
        %v5114 = vadd.f32 %v5112, %v5113
        %v5115 = vadd.f32 %v5105, %v5107
        %v5116 = vrot.slane %v5115, 4
        %v5117 = vadd.f32 %v5115, %v5116
        %v5118 = vrot.slane %v5117, 2
        %v5119 = vadd.f32 %v5117, %v5118
        %v5120 = vrot.slane %v5119, 1
        %v5121 = vadd.f32 %v5119, %v5120
        %v5122 = vadd.f32 %v5067, %v5114
        %v5123 = vadd.f32 %v5068, %v5121
        %v5124 = vld [vmem:[#allocation3 + $0xa0] sm:$0xff]
        %v5125 = vld [vmem:[#allocation3 + $0xa8] sm:$0xff]
        %v5126 = vld [vmem:[#allocation3 + $0xb0] sm:$0xff]
        %v5127 = vld [vmem:[#allocation3 + $0xb8] sm:$0xff]
        %v5128 = vpack.c.bf16 %v5126, %v5124
        %v5129 = vpack.c.bf16 %v5127, %v5125
        %v5132 = vunpack.c.l.b16 %v5128
        %v5133 = vunpack.c.l.b16 %v5129
        %v5134 = vunpack.c.h.b16 %v5128
        %v5135 = vunpack.c.h.b16 %v5129
        %v5136 = vpack.c.b16 %v5133, %v5132
        %v5137 = vpack.c.b16 %v5135, %v5134
        %s5140 = scalar_lea.vmem %s285, 80 [#allocation9]
        %5141 = vst [vmem:[%s5140] sm:$0xff] %v5136
        %5142 = vst [vmem:[%s5140 + $0x8] sm:$0xff] %v5137
        %v5143 = vadd.f32 %v5124, %v5126
        %v5144 = vrot.slane %v5143, 4
        %v5145 = vadd.f32 %v5143, %v5144
        %v5146 = vrot.slane %v5145, 2
        %v5147 = vadd.f32 %v5145, %v5146
        %v5148 = vrot.slane %v5147, 1
        %v5149 = vadd.f32 %v5147, %v5148
        %v5150 = vadd.f32 %v5125, %v5127
        %v5151 = vrot.slane %v5150, 4
        %v5152 = vadd.f32 %v5150, %v5151
        %v5153 = vrot.slane %v5152, 2
        %v5154 = vadd.f32 %v5152, %v5153
        %v5155 = vrot.slane %v5154, 1
        %v5156 = vadd.f32 %v5154, %v5155
        %v5157 = vadd.f32 %v5102, %v5149
        %v5158 = vadd.f32 %v5103, %v5156
        %v5159 = vmul.f32 %v5124, %v5124
        %v5160 = vmul.f32 %v5125, %v5125
        %v5161 = vmul.f32 %v5126, %v5126
        %v5162 = vmul.f32 %v5127, %v5127
        %v5163 = vadd.f32 %v5159, %v5161
        %v5164 = vrot.slane %v5163, 4
        %v5165 = vadd.f32 %v5163, %v5164
        %v5166 = vrot.slane %v5165, 2
        %v5167 = vadd.f32 %v5165, %v5166
        %v5168 = vrot.slane %v5167, 1
        %v5169 = vadd.f32 %v5167, %v5168
        %v5170 = vadd.f32 %v5160, %v5162
        %v5171 = vrot.slane %v5170, 4
        %v5172 = vadd.f32 %v5170, %v5171
        %v5173 = vrot.slane %v5172, 2
        %v5174 = vadd.f32 %v5172, %v5173
        %v5175 = vrot.slane %v5174, 1
        %v5176 = vadd.f32 %v5174, %v5175
        %v5177 = vadd.f32 %v5122, %v5169
        %v5178 = vadd.f32 %v5123, %v5176
        %v5179 = vld [vmem:[#allocation3 + $0xc0] sm:$0xff]
        %v5180 = vld [vmem:[#allocation3 + $0xc8] sm:$0xff]
        %v5181 = vld [vmem:[#allocation3 + $0xd0] sm:$0xff]
        %v5182 = vld [vmem:[#allocation3 + $0xd8] sm:$0xff]
        %v5183 = vpack.c.bf16 %v5181, %v5179
        %v5184 = vpack.c.bf16 %v5182, %v5180
        %v5187 = vunpack.c.l.b16 %v5183
        %v5188 = vunpack.c.l.b16 %v5184
        %v5189 = vunpack.c.h.b16 %v5183
        %v5190 = vunpack.c.h.b16 %v5184
        %v5191 = vpack.c.b16 %v5188, %v5187
        %v5192 = vpack.c.b16 %v5190, %v5189
        %s5195 = scalar_lea.vmem %s285, 96 [#allocation9]
        %5196 = vst [vmem:[%s5195] sm:$0xff] %v5191
        %5197 = vst [vmem:[%s5195 + $0x8] sm:$0xff] %v5192
        %v5198 = vadd.f32 %v5179, %v5181
        %v5199 = vrot.slane %v5198, 4
        %v5200 = vadd.f32 %v5198, %v5199
        %v5201 = vrot.slane %v5200, 2
        %v5202 = vadd.f32 %v5200, %v5201
        %v5203 = vrot.slane %v5202, 1
        %v5204 = vadd.f32 %v5202, %v5203
        %v5205 = vadd.f32 %v5180, %v5182
        %v5206 = vrot.slane %v5205, 4
        %v5207 = vadd.f32 %v5205, %v5206
        %v5208 = vrot.slane %v5207, 2
        %v5209 = vadd.f32 %v5207, %v5208
        %v5210 = vrot.slane %v5209, 1
        %v5211 = vadd.f32 %v5209, %v5210
        %v5212 = vadd.f32 %v5157, %v5204
        %v5213 = vadd.f32 %v5158, %v5211
        %v5214 = vmul.f32 %v5179, %v5179
        %v5215 = vmul.f32 %v5180, %v5180
        %v5216 = vmul.f32 %v5181, %v5181
        %v5217 = vmul.f32 %v5182, %v5182
        %v5218 = vadd.f32 %v5214, %v5216
        %v5219 = vrot.slane %v5218, 4
        %v5220 = vadd.f32 %v5218, %v5219
        %v5221 = vrot.slane %v5220, 2
        %v5222 = vadd.f32 %v5220, %v5221
        %v5223 = vrot.slane %v5222, 1
        %v5224 = vadd.f32 %v5222, %v5223
        %v5225 = vadd.f32 %v5215, %v5217
        %v5226 = vrot.slane %v5225, 4
        %v5227 = vadd.f32 %v5225, %v5226
        %v5228 = vrot.slane %v5227, 2
        %v5229 = vadd.f32 %v5227, %v5228
        %v5230 = vrot.slane %v5229, 1
        %v5231 = vadd.f32 %v5229, %v5230
        %v5232 = vadd.f32 %v5177, %v5224
        %v5233 = vadd.f32 %v5178, %v5231
        %v5234 = vld [vmem:[#allocation3 + $0xe0] sm:$0xff]
        %v5235 = vld [vmem:[#allocation3 + $0xe8] sm:$0xff]
        %v5236 = vld [vmem:[#allocation3 + $0xf0] sm:$0xff]
        %v5237 = vld [vmem:[#allocation3 + $0xf8] sm:$0xff]
        %v5238 = vpack.c.bf16 %v5236, %v5234
        %v5239 = vpack.c.bf16 %v5237, %v5235
        %v5242 = vunpack.c.l.b16 %v5238
        %v5243 = vunpack.c.l.b16 %v5239
        %v5244 = vunpack.c.h.b16 %v5238
        %v5245 = vunpack.c.h.b16 %v5239
        %v5246 = vpack.c.b16 %v5243, %v5242
        %v5247 = vpack.c.b16 %v5245, %v5244
        %s5250 = scalar_lea.vmem %s285, 112 [#allocation9]
        %5251 = vst [vmem:[%s5250] sm:$0xff] %v5246
        %5252 = vst [vmem:[%s5250 + $0x8] sm:$0xff] %v5247
        %v5253 = vadd.f32 %v5234, %v5236
        %v5254 = vrot.slane %v5253, 4
        %v5255 = vadd.f32 %v5253, %v5254
        %v5256 = vrot.slane %v5255, 2
        %v5257 = vadd.f32 %v5255, %v5256
        %v5258 = vrot.slane %v5257, 1
        %v5259 = vadd.f32 %v5257, %v5258
        %v5260 = vadd.f32 %v5235, %v5237
        %v5261 = vrot.slane %v5260, 4
        %v5262 = vadd.f32 %v5260, %v5261
        %v5263 = vrot.slane %v5262, 2
        %v5264 = vadd.f32 %v5262, %v5263
        %v5265 = vrot.slane %v5264, 1
        %v5266 = vadd.f32 %v5264, %v5265
        %v5267 = vadd.f32 %v5212, %v5259
        %v5268 = vadd.f32 %v5213, %v5266
        %v5269 = vmul.f32 %v5234, %v5234
        %v5270 = vmul.f32 %v5235, %v5235
        %v5271 = vmul.f32 %v5236, %v5236
        %v5272 = vmul.f32 %v5237, %v5237
        %v5273 = vadd.f32 %v5269, %v5271
        %v5274 = vrot.slane %v5273, 4
        %v5275 = vadd.f32 %v5273, %v5274
        %v5276 = vrot.slane %v5275, 2
        %v5277 = vadd.f32 %v5275, %v5276
        %v5278 = vrot.slane %v5277, 1
        %v5279 = vadd.f32 %v5277, %v5278
        %v5280 = vadd.f32 %v5270, %v5272
        %v5281 = vrot.slane %v5280, 4
        %v5282 = vadd.f32 %v5280, %v5281
        %v5283 = vrot.slane %v5282, 2
        %v5284 = vadd.f32 %v5282, %v5283
        %v5285 = vrot.slane %v5284, 1
        %v5286 = vadd.f32 %v5284, %v5285
        %v5287 = vadd.f32 %v5232, %v5279
        %v5288 = vadd.f32 %v5233, %v5286
        %5289 = vst [vmem:[#allocation3] sm:$0xff] 0.0
        %5290 = vst [vmem:[#allocation3 + $0x8] sm:$0xff] 0.0
        %5291 = vst [vmem:[#allocation3 + $0x10] sm:$0xff] 0.0
        %5292 = vst [vmem:[#allocation3 + $0x18] sm:$0xff] 0.0
        %5293 = vst [vmem:[#allocation3 + $0x20] sm:$0xff] 0.0
        %5294 = vst [vmem:[#allocation3 + $0x28] sm:$0xff] 0.0
        %5295 = vst [vmem:[#allocation3 + $0x30] sm:$0xff] 0.0
        %5296 = vst [vmem:[#allocation3 + $0x38] sm:$0xff] 0.0
        %5297 = vst [vmem:[#allocation3 + $0x40] sm:$0xff] 0.0
        %5298 = vst [vmem:[#allocation3 + $0x48] sm:$0xff] 0.0
        %5299 = vst [vmem:[#allocation3 + $0x50] sm:$0xff] 0.0
        %5300 = vst [vmem:[#allocation3 + $0x58] sm:$0xff] 0.0
        %5301 = vst [vmem:[#allocation3 + $0x60] sm:$0xff] 0.0
        %5302 = vst [vmem:[#allocation3 + $0x68] sm:$0xff] 0.0
        %5303 = vst [vmem:[#allocation3 + $0x70] sm:$0xff] 0.0
        %5304 = vst [vmem:[#allocation3 + $0x78] sm:$0xff] 0.0
        %5305 = vst [vmem:[#allocation3 + $0x80] sm:$0xff] 0.0
        %5306 = vst [vmem:[#allocation3 + $0x88] sm:$0xff] 0.0
        %5307 = vst [vmem:[#allocation3 + $0x90] sm:$0xff] 0.0
        %5308 = vst [vmem:[#allocation3 + $0x98] sm:$0xff] 0.0
        %5309 = vst [vmem:[#allocation3 + $0xa0] sm:$0xff] 0.0
        %5310 = vst [vmem:[#allocation3 + $0xa8] sm:$0xff] 0.0
        %5311 = vst [vmem:[#allocation3 + $0xb0] sm:$0xff] 0.0
        %5312 = vst [vmem:[#allocation3 + $0xb8] sm:$0xff] 0.0
        %5313 = vst [vmem:[#allocation3 + $0xc0] sm:$0xff] 0.0
        %5314 = vst [vmem:[#allocation3 + $0xc8] sm:$0xff] 0.0
        %5315 = vst [vmem:[#allocation3 + $0xd0] sm:$0xff] 0.0
        %5316 = vst [vmem:[#allocation3 + $0xd8] sm:$0xff] 0.0
        %5317 = vst [vmem:[#allocation3 + $0xe0] sm:$0xff] 0.0
        %5318 = vst [vmem:[#allocation3 + $0xe8] sm:$0xff] 0.0
        %5319 = vst [vmem:[#allocation3 + $0xf0] sm:$0xff] 0.0
        %5320 = vst [vmem:[#allocation3 + $0xf8] sm:$0xff] 0.0
        %s5321 = scalar_lea.vmem [#allocation2], 96
        %v5322 = vld [vmem:[%s5321] sm:$0xf]
        %v5323 = vld [vmem:[%s5321 + $0x4] sm:$0xf]
        %v5324 = vld [vmem:[%s5321 + $0x8] sm:$0x1]
        %v5325 = vld [vmem:[%s5321 + $0xc] sm:$0xf]
        %v5326 = vld [vmem:[%s5321 + $0x10] sm:$0xf]
        %v5327 = vld [vmem:[%s5321 + $0x14] sm:$0x1]
        %v5328 = vld [vmem:[%s5321 + $0x18] sm:$0xf]
        %v5329 = vld [vmem:[%s5321 + $0x1c] sm:$0xf]
        %v5330 = vld [vmem:[%s5321 + $0x20] sm:$0x1]
        %v5331 = vld [vmem:[%s5321 + $0x24] sm:$0xf]
        %v5332 = vld [vmem:[%s5321 + $0x28] sm:$0xf]
        %v5333 = vld [vmem:[%s5321 + $0x2c] sm:$0x1]
        %v5334 = vld [vmem:[%s5321 + $0x30] sm:$0xf]
        %v5335 = vld [vmem:[%s5321 + $0x34] sm:$0xf]
        %v5336 = vld [vmem:[%s5321 + $0x38] sm:$0x1]
        %v5337 = vld [vmem:[%s5321 + $0x3c] sm:$0xf]
        %v5338 = vld [vmem:[%s5321 + $0x40] sm:$0xf]
        %v5339 = vld [vmem:[%s5321 + $0x44] sm:$0x1]
        %v5340 = vld [vmem:[%s5321 + $0x48] sm:$0xf]
        %v5341 = vld [vmem:[%s5321 + $0x4c] sm:$0xf]
        %v5342 = vld [vmem:[%s5321 + $0x50] sm:$0x1]
        %v5343 = vld [vmem:[%s5321 + $0x54] sm:$0xf]
        %v5344 = vld [vmem:[%s5321 + $0x58] sm:$0xf]
        %v5345 = vld [vmem:[%s5321 + $0x5c] sm:$0x1]
        %v5346 = vld [vmem:[#allocation3] sm:$0xff]
        %v5347 = vld [vmem:[#allocation3 + $0x8] sm:$0xff]
        %v5348 = vld [vmem:[#allocation3 + $0x10] sm:$0xff]
        %v5349 = vld [vmem:[#allocation3 + $0x18] sm:$0xff]
        %v5350 = vld [vmem:[#allocation3 + $0x20] sm:$0xff]
        %v5351 = vld [vmem:[#allocation3 + $0x28] sm:$0xff]
        %v5352 = vld [vmem:[#allocation3 + $0x30] sm:$0xff]
        %v5353 = vld [vmem:[#allocation3 + $0x38] sm:$0xff]
        %v5354 = vld [vmem:[#allocation3 + $0x40] sm:$0xff]
        %v5355 = vld [vmem:[#allocation3 + $0x48] sm:$0xff]
        %v5356 = vld [vmem:[#allocation3 + $0x50] sm:$0xff]
        %v5357 = vld [vmem:[#allocation3 + $0x58] sm:$0xff]
        %v5358 = vld [vmem:[#allocation3 + $0x60] sm:$0xff]
        %v5359 = vld [vmem:[#allocation3 + $0x68] sm:$0xff]
        %v5360 = vld [vmem:[#allocation3 + $0x70] sm:$0xff]
        %v5361 = vld [vmem:[#allocation3 + $0x78] sm:$0xff]
        %v5362 = vld [vmem:[#allocation3 + $0x80] sm:$0xff]
        %v5363 = vld [vmem:[#allocation3 + $0x88] sm:$0xff]
        %v5364 = vld [vmem:[#allocation3 + $0x90] sm:$0xff]
        %v5365 = vld [vmem:[#allocation3 + $0x98] sm:$0xff]
        %v5366 = vld [vmem:[#allocation3 + $0xa0] sm:$0xff]
        %v5367 = vld [vmem:[#allocation3 + $0xa8] sm:$0xff]
        %v5368 = vld [vmem:[#allocation3 + $0xb0] sm:$0xff]
        %v5369 = vld [vmem:[#allocation3 + $0xb8] sm:$0xff]
        %v5370 = vld [vmem:[#allocation3 + $0xc0] sm:$0xff]
        %v5371 = vld [vmem:[#allocation3 + $0xc8] sm:$0xff]
        %v5372 = vld [vmem:[#allocation3 + $0xd0] sm:$0xff]
        %v5373 = vld [vmem:[#allocation3 + $0xd8] sm:$0xff]
        %v5374 = vld [vmem:[#allocation3 + $0xe0] sm:$0xff]
        %v5375 = vld [vmem:[#allocation3 + $0xe8] sm:$0xff]
        %v5376 = vld [vmem:[#allocation3 + $0xf0] sm:$0xff]
        %v5377 = vld [vmem:[#allocation3 + $0xf8] sm:$0xff]
        %v5378 = vld [vmem:[#allocation7] sm:$0xff]
        %v5379 = vld [vmem:[#allocation7 + $0x8] sm:$0xff]
        %v5380 = vld [vmem:[#allocation7 + $0x10] sm:$0xff]
        %v5381 = vld [vmem:[#allocation7 + $0x18] sm:$0xff]
        %v5382 = vld [vmem:[#allocation7 + $0x20] sm:$0xff]
        %v5383 = vld [vmem:[#allocation7 + $0x28] sm:$0xff]
        %v5384 = vld [vmem:[#allocation7 + $0x30] sm:$0xff]
        %v5385 = vld [vmem:[#allocation7 + $0x38] sm:$0xff]
        %v5386 = vld [vmem:[#allocation7 + $0x40] sm:$0xff]
        %v5387 = vld [vmem:[#allocation7 + $0x48] sm:$0xff]
        %v5388 = vld [vmem:[#allocation7 + $0x50] sm:$0xff]
        %v5389 = vld [vmem:[#allocation7 + $0x58] sm:$0xff]
        %v5390 = vld [vmem:[#allocation7 + $0x60] sm:$0xff]
        %v5391 = vld [vmem:[#allocation7 + $0x68] sm:$0xff]
        %v5392 = vld [vmem:[#allocation7 + $0x70] sm:$0xff]
        %v5393 = vld [vmem:[#allocation7 + $0x78] sm:$0xff]
        %v5410 = vunpack.c.l.b16 %v5322
        %v5411 = vunpack.c.l.b16 %v5323
        %v5412 = vunpack.c.l.b16 %v5325
        %v5413 = vunpack.c.l.b16 %v5326
        %v5414 = vunpack.c.l.b16 %v5328
        %v5415 = vunpack.c.l.b16 %v5329
        %v5416 = vunpack.c.l.b16 %v5331
        %v5417 = vunpack.c.l.b16 %v5332
        %v5418 = vunpack.c.l.b16 %v5334
        %v5419 = vunpack.c.l.b16 %v5335
        %v5420 = vunpack.c.l.b16 %v5337
        %v5421 = vunpack.c.l.b16 %v5338
        %v5422 = vunpack.c.l.b16 %v5340
        %v5423 = vunpack.c.l.b16 %v5341
        %v5424 = vunpack.c.l.b16 %v5343
        %v5425 = vunpack.c.l.b16 %v5344
        %v5426 = vpack.c.b16 %v5411, %v5410
        %v5427 = vpack.c.b16 %v5413, %v5412
        %v5428 = vpack.c.b16 %v5415, %v5414
        %v5429 = vpack.c.b16 %v5417, %v5416
        %v5430 = vpack.c.b16 %v5419, %v5418
        %v5431 = vpack.c.b16 %v5421, %v5420
        %v5432 = vpack.c.b16 %v5423, %v5422
        %v5433 = vpack.c.b16 %v5425, %v5424
        %v5458 = vunpack.c.l.b16 %v5378
        %v5459 = vunpack.c.h.b16 %v5378
        %v5460 = vunpack.c.l.b16 %v5379
        %v5461 = vunpack.c.h.b16 %v5379
        %v5462 = vunpack.c.l.b16 %v5380
        %v5463 = vunpack.c.h.b16 %v5380
        %v5464 = vunpack.c.l.b16 %v5381
        %v5465 = vunpack.c.h.b16 %v5381
        %v5466 = vunpack.c.l.b16 %v5382
        %v5467 = vunpack.c.h.b16 %v5382
        %v5468 = vunpack.c.l.b16 %v5383
        %v5469 = vunpack.c.h.b16 %v5383
        %v5470 = vunpack.c.l.b16 %v5384
        %v5471 = vunpack.c.h.b16 %v5384
        %v5472 = vunpack.c.l.b16 %v5385
        %v5473 = vunpack.c.h.b16 %v5385
        %v5474 = vunpack.c.l.b16 %v5386
        %v5475 = vunpack.c.h.b16 %v5386
        %v5476 = vunpack.c.l.b16 %v5387
        %v5477 = vunpack.c.h.b16 %v5387
        %v5478 = vunpack.c.l.b16 %v5388
        %v5479 = vunpack.c.h.b16 %v5388
        %v5480 = vunpack.c.l.b16 %v5389
        %v5481 = vunpack.c.h.b16 %v5389
        %v5482 = vunpack.c.l.b16 %v5390
        %v5483 = vunpack.c.h.b16 %v5390
        %v5484 = vunpack.c.l.b16 %v5391
        %v5485 = vunpack.c.h.b16 %v5391
        %v5486 = vunpack.c.l.b16 %v5392
        %v5487 = vunpack.c.h.b16 %v5392
        %v5488 = vunpack.c.l.b16 %v5393
        %v5489 = vunpack.c.h.b16 %v5393
        %v5490 = vpack.c.b16 %v5460, %v5458
        %v5491 = vpack.c.b16 %v5461, %v5459
        %v5492 = vpack.c.b16 %v5464, %v5462
        %v5493 = vpack.c.b16 %v5465, %v5463
        %v5494 = vpack.c.b16 %v5468, %v5466
        %v5495 = vpack.c.b16 %v5469, %v5467
        %v5496 = vpack.c.b16 %v5472, %v5470
        %v5497 = vpack.c.b16 %v5473, %v5471
        %v5498 = vpack.c.b16 %v5476, %v5474
        %v5499 = vpack.c.b16 %v5477, %v5475
        %v5500 = vpack.c.b16 %v5480, %v5478
        %v5501 = vpack.c.b16 %v5481, %v5479
        %v5502 = vpack.c.b16 %v5484, %v5482
        %v5503 = vpack.c.b16 %v5485, %v5483
        %v5504 = vpack.c.b16 %v5488, %v5486
        %v5505 = vpack.c.b16 %v5489, %v5487
        %5522 = vmatprep.subr.bf16.mxu0 %v5505
        %5523 = vmatpush1.bf16.msra.mxu0 %v5504
        %5524 = vmatprep.subr.bf16.mxu0 %v5503
        %5525 = vmatpush1.bf16.msra.mxu0 %v5502
        %5526 = vmatprep.subr.bf16.mxu0 %v5501
        %5527 = vmatpush1.bf16.msra.mxu0 %v5500
        %5528 = vmatprep.subr.bf16.mxu0 %v5499
        %5529 = vmatpush1.bf16.msra.mxu0 %v5498
        %5530 = vmatprep.subr.bf16.mxu0 %v5497
        %5531 = vmatpush1.bf16.msra.mxu0 %v5496
        %5532 = vmatprep.subr.bf16.mxu0 %v5495
        %5533 = vmatpush1.bf16.msra.mxu0 %v5494
        %5534 = vmatprep.subr.bf16.mxu0 %v5493
        %5535 = vmatpush1.bf16.msra.mxu0 %v5492
        %5536 = vmatprep.subr.bf16.mxu0 %v5491
        %5537 = vmatpush1.bf16.msra.mxu0 %v5490
        %5538 = vmatprep.subr.bf16.mxu0 0
        %5539 = vmatpush2.bf16.msra.mxu0 0
        %5540 = vmatprep.subr.bf16.mxu0 0
        %5541 = vmatpush2.bf16.msra.mxu0 0
        %5542 = vmatprep.subr.bf16.mxu0 0
        %5543 = vmatpush2.bf16.msra.mxu0 0
        %5544 = vmatprep.subr.bf16.mxu0 0
        %5545 = vmatpush2.bf16.msra.mxu0 0
        %5546 = vmatprep.subr.bf16.mxu0 0
        %5547 = vmatpush2.bf16.msra.mxu0 0
        %5548 = vmatprep.subr.bf16.mxu0 0
        %5549 = vmatpush2.bf16.msra.mxu0 0
        %5550 = vmatprep.subr.bf16.mxu0 0
        %5551 = vmatpush2.bf16.msra.mxu0 0
        %5552 = vmatprep.subr.bf16.mxu0 0
        %5553 = vmatpush2.bf16.msra.mxu0 0
        %5554 = vmatprep.mubr.bf16.mxu0 0
        %5555 = vmatmul.mubr.bf16.gmra.mxu0 %v5426
        %v5556 = vpop.f32.mrf.mxu0
        %v5557 = vadd.f32 0.0, %v5556
        %v5558 = vpop.f32.mrf.mxu0
        %v5559 = vadd.f32 0.0, %v5558
        %v5560 = vpop.f32.mrf.mxu0
        %v5561 = vadd.f32 0.0, %v5560
        %v5562 = vpop.f32.mrf.mxu0
        %v5563 = vadd.f32 0.0, %v5562
        %5564 = vmatprep.mubr.bf16.mxu0 0
        %5565 = vmatmul.mubr.bf16.gmra.mxu0 %v5427
        %v5566 = vpop.f32.mrf.mxu0
        %v5567 = vadd.f32 0.0, %v5566
        %v5568 = vpop.f32.mrf.mxu0
        %v5569 = vadd.f32 0.0, %v5568
        %v5570 = vpop.f32.mrf.mxu0
        %v5571 = vadd.f32 0.0, %v5570
        %v5572 = vpop.f32.mrf.mxu0
        %v5573 = vadd.f32 0.0, %v5572
        %5574 = vmatprep.mubr.bf16.mxu0 0
        %5575 = vmatmul.mubr.bf16.gmra.mxu0 %v5428
        %v5576 = vpop.f32.mrf.mxu0
        %v5577 = vadd.f32 0.0, %v5576
        %v5578 = vpop.f32.mrf.mxu0
        %v5579 = vadd.f32 0.0, %v5578
        %v5580 = vpop.f32.mrf.mxu0
        %v5581 = vadd.f32 0.0, %v5580
        %v5582 = vpop.f32.mrf.mxu0
        %v5583 = vadd.f32 0.0, %v5582
        %5584 = vmatprep.mubr.bf16.mxu0 0
        %5585 = vmatmul.mubr.bf16.gmra.mxu0 %v5429
        %v5586 = vpop.f32.mrf.mxu0
        %v5587 = vadd.f32 0.0, %v5586
        %v5588 = vpop.f32.mrf.mxu0
        %v5589 = vadd.f32 0.0, %v5588
        %v5590 = vpop.f32.mrf.mxu0
        %v5591 = vadd.f32 0.0, %v5590
        %v5592 = vpop.f32.mrf.mxu0
        %v5593 = vadd.f32 0.0, %v5592
        %5594 = vmatprep.mubr.bf16.mxu0 0
        %5595 = vmatmul.mubr.bf16.gmra.mxu0 %v5430
        %v5596 = vpop.f32.mrf.mxu0
        %v5597 = vadd.f32 0.0, %v5596
        %v5598 = vpop.f32.mrf.mxu0
        %v5599 = vadd.f32 0.0, %v5598
        %v5600 = vpop.f32.mrf.mxu0
        %v5601 = vadd.f32 0.0, %v5600
        %v5602 = vpop.f32.mrf.mxu0
        %v5603 = vadd.f32 0.0, %v5602
        %5604 = vmatprep.mubr.bf16.mxu0 0
        %5605 = vmatmul.mubr.bf16.gmra.mxu0 %v5431
        %v5606 = vpop.f32.mrf.mxu0
        %v5607 = vadd.f32 0.0, %v5606
        %v5608 = vpop.f32.mrf.mxu0
        %v5609 = vadd.f32 0.0, %v5608
        %v5610 = vpop.f32.mrf.mxu0
        %v5611 = vadd.f32 0.0, %v5610
        %v5612 = vpop.f32.mrf.mxu0
        %v5613 = vadd.f32 0.0, %v5612
        %5614 = vmatprep.mubr.bf16.mxu0 0
        %5615 = vmatmul.mubr.bf16.gmra.mxu0 %v5432
        %v5616 = vpop.f32.mrf.mxu0
        %v5617 = vadd.f32 0.0, %v5616
        %v5618 = vpop.f32.mrf.mxu0
        %v5619 = vadd.f32 0.0, %v5618
        %v5620 = vpop.f32.mrf.mxu0
        %v5621 = vadd.f32 0.0, %v5620
        %v5622 = vpop.f32.mrf.mxu0
        %v5623 = vadd.f32 0.0, %v5622
        %5624 = vmatprep.mubr.bf16.mxu0 0
        %5625 = vmatmul.mubr.bf16.gmra.mxu0 %v5433
        %v5626 = vpop.f32.mrf.mxu0
        %v5627 = vadd.f32 0.0, %v5626
        %v5628 = vpop.f32.mrf.mxu0
        %v5629 = vadd.f32 0.0, %v5628
        %v5630 = vpop.f32.mrf.mxu0
        %v5631 = vadd.f32 0.0, %v5630
        %v5632 = vpop.f32.mrf.mxu0
        %v5633 = vadd.f32 0.0, %v5632
        %5634 = vdwg.mxu0
        %v5635 = vadd.f32 %v5346, %v5557
        %v5636 = vadd.f32 %v5347, %v5559
        %v5637 = vadd.f32 %v5348, %v5561
        %v5638 = vadd.f32 %v5349, %v5563
        %v5639 = vadd.f32 %v5350, %v5567
        %v5640 = vadd.f32 %v5351, %v5569
        %v5641 = vadd.f32 %v5352, %v5571
        %v5642 = vadd.f32 %v5353, %v5573
        %v5643 = vadd.f32 %v5354, %v5577
        %v5644 = vadd.f32 %v5355, %v5579
        %v5645 = vadd.f32 %v5356, %v5581
        %v5646 = vadd.f32 %v5357, %v5583
        %v5647 = vadd.f32 %v5358, %v5587
        %v5648 = vadd.f32 %v5359, %v5589
        %v5649 = vadd.f32 %v5360, %v5591
        %v5650 = vadd.f32 %v5361, %v5593
        %v5651 = vadd.f32 %v5362, %v5597
        %v5652 = vadd.f32 %v5363, %v5599
        %v5653 = vadd.f32 %v5364, %v5601
        %v5654 = vadd.f32 %v5365, %v5603
        %v5655 = vadd.f32 %v5366, %v5607
        %v5656 = vadd.f32 %v5367, %v5609
        %v5657 = vadd.f32 %v5368, %v5611
        %v5658 = vadd.f32 %v5369, %v5613
        %v5659 = vadd.f32 %v5370, %v5617
        %v5660 = vadd.f32 %v5371, %v5619
        %v5661 = vadd.f32 %v5372, %v5621
        %v5662 = vadd.f32 %v5373, %v5623
        %v5663 = vadd.f32 %v5374, %v5627
        %v5664 = vadd.f32 %v5375, %v5629
        %v5665 = vadd.f32 %v5376, %v5631
        %v5666 = vadd.f32 %v5377, %v5633
        %5667 = vst [vmem:[#allocation3] sm:$0xff] %v5635
        %5668 = vst [vmem:[#allocation3 + $0x8] sm:$0xff] %v5636
        %5669 = vst [vmem:[#allocation3 + $0x10] sm:$0xff] %v5637
        %5670 = vst [vmem:[#allocation3 + $0x18] sm:$0xff] %v5638
        %5671 = vst [vmem:[#allocation3 + $0x20] sm:$0xff] %v5639
        %5672 = vst [vmem:[#allocation3 + $0x28] sm:$0xff] %v5640
        %5673 = vst [vmem:[#allocation3 + $0x30] sm:$0xff] %v5641
        %5674 = vst [vmem:[#allocation3 + $0x38] sm:$0xff] %v5642
        %5675 = vst [vmem:[#allocation3 + $0x40] sm:$0xff] %v5643
        %5676 = vst [vmem:[#allocation3 + $0x48] sm:$0xff] %v5644
        %5677 = vst [vmem:[#allocation3 + $0x50] sm:$0xff] %v5645
        %5678 = vst [vmem:[#allocation3 + $0x58] sm:$0xff] %v5646
        %5679 = vst [vmem:[#allocation3 + $0x60] sm:$0xff] %v5647
        %5680 = vst [vmem:[#allocation3 + $0x68] sm:$0xff] %v5648
        %5681 = vst [vmem:[#allocation3 + $0x70] sm:$0xff] %v5649
        %5682 = vst [vmem:[#allocation3 + $0x78] sm:$0xff] %v5650
        %5683 = vst [vmem:[#allocation3 + $0x80] sm:$0xff] %v5651
        %5684 = vst [vmem:[#allocation3 + $0x88] sm:$0xff] %v5652
        %5685 = vst [vmem:[#allocation3 + $0x90] sm:$0xff] %v5653
        %5686 = vst [vmem:[#allocation3 + $0x98] sm:$0xff] %v5654
        %5687 = vst [vmem:[#allocation3 + $0xa0] sm:$0xff] %v5655
        %5688 = vst [vmem:[#allocation3 + $0xa8] sm:$0xff] %v5656
        %5689 = vst [vmem:[#allocation3 + $0xb0] sm:$0xff] %v5657
        %5690 = vst [vmem:[#allocation3 + $0xb8] sm:$0xff] %v5658
        %5691 = vst [vmem:[#allocation3 + $0xc0] sm:$0xff] %v5659
        %5692 = vst [vmem:[#allocation3 + $0xc8] sm:$0xff] %v5660
        %5693 = vst [vmem:[#allocation3 + $0xd0] sm:$0xff] %v5661
        %5694 = vst [vmem:[#allocation3 + $0xd8] sm:$0xff] %v5662
        %5695 = vst [vmem:[#allocation3 + $0xe0] sm:$0xff] %v5663
        %5696 = vst [vmem:[#allocation3 + $0xe8] sm:$0xff] %v5664
        %5697 = vst [vmem:[#allocation3 + $0xf0] sm:$0xff] %v5665
        %5698 = vst [vmem:[#allocation3 + $0xf8] sm:$0xff] %v5666
        %v5700 = vshrl.u32 %v5322, 16
        %v5702 = vrot.slane %v5700, 4
        %v5703 = vshll.u32 %v5322, 16
        %v5705 = vrot.slane %v5703, 5
        %v5706 = vor.u32 %v5702, %v5705
        %v5707 = vrot.slane %v5706, 4
        %v5709 = vshll.u32 %v5323, 16
        %v5711 = vrot.slane %v5709, 5
        %v5712 = vsel %vm1293, %v5707, %v5711
        %v5713 = vshrl.u32 %v5323, 16
        %v5715 = vrot.slane %v5713, 4
        %v5716 = vor.u32 %v5715, %v5711
        %v5717 = vrot.slane %v5716, 4
        %v5719 = vshll.u32 %v5324, 16
        %v5721 = vrot.slane %v5719, 5
        %v5722 = vsel %vm1293, %v5717, %v5721
        %v5724 = vshrl.u32 %v5325, 16
        %v5726 = vrot.slane %v5724, 4
        %v5727 = vshll.u32 %v5325, 16
        %v5729 = vrot.slane %v5727, 5
        %v5730 = vor.u32 %v5726, %v5729
        %v5731 = vrot.slane %v5730, 4
        %v5733 = vshll.u32 %v5326, 16
        %v5735 = vrot.slane %v5733, 5
        %v5736 = vsel %vm1293, %v5731, %v5735
        %v5737 = vshrl.u32 %v5326, 16
        %v5739 = vrot.slane %v5737, 4
        %v5740 = vor.u32 %v5739, %v5735
        %v5741 = vrot.slane %v5740, 4
        %v5743 = vshll.u32 %v5327, 16
        %v5745 = vrot.slane %v5743, 5
        %v5746 = vsel %vm1293, %v5741, %v5745
        %v5748 = vshrl.u32 %v5328, 16
        %v5750 = vrot.slane %v5748, 4
        %v5751 = vshll.u32 %v5328, 16
        %v5753 = vrot.slane %v5751, 5
        %v5754 = vor.u32 %v5750, %v5753
        %v5755 = vrot.slane %v5754, 4
        %v5757 = vshll.u32 %v5329, 16
        %v5759 = vrot.slane %v5757, 5
        %v5760 = vsel %vm1293, %v5755, %v5759
        %v5761 = vshrl.u32 %v5329, 16
        %v5763 = vrot.slane %v5761, 4
        %v5764 = vor.u32 %v5763, %v5759
        %v5765 = vrot.slane %v5764, 4
        %v5767 = vshll.u32 %v5330, 16
        %v5769 = vrot.slane %v5767, 5
        %v5770 = vsel %vm1293, %v5765, %v5769
        %v5772 = vshrl.u32 %v5331, 16
        %v5774 = vrot.slane %v5772, 4
        %v5775 = vshll.u32 %v5331, 16
        %v5777 = vrot.slane %v5775, 5
        %v5778 = vor.u32 %v5774, %v5777
        %v5779 = vrot.slane %v5778, 4
        %v5781 = vshll.u32 %v5332, 16
        %v5783 = vrot.slane %v5781, 5
        %v5784 = vsel %vm1293, %v5779, %v5783
        %v5785 = vshrl.u32 %v5332, 16
        %v5787 = vrot.slane %v5785, 4
        %v5788 = vor.u32 %v5787, %v5783
        %v5789 = vrot.slane %v5788, 4
        %v5791 = vshll.u32 %v5333, 16
        %v5793 = vrot.slane %v5791, 5
        %v5794 = vsel %vm1293, %v5789, %v5793
        %v5796 = vshrl.u32 %v5334, 16
        %v5798 = vrot.slane %v5796, 4
        %v5799 = vshll.u32 %v5334, 16
        %v5801 = vrot.slane %v5799, 5
        %v5802 = vor.u32 %v5798, %v5801
        %v5803 = vrot.slane %v5802, 4
        %v5805 = vshll.u32 %v5335, 16
        %v5807 = vrot.slane %v5805, 5
        %v5808 = vsel %vm1293, %v5803, %v5807
        %v5809 = vshrl.u32 %v5335, 16
        %v5811 = vrot.slane %v5809, 4
        %v5812 = vor.u32 %v5811, %v5807
        %v5813 = vrot.slane %v5812, 4
        %v5815 = vshll.u32 %v5336, 16
        %v5817 = vrot.slane %v5815, 5
        %v5818 = vsel %vm1293, %v5813, %v5817
        %v5820 = vshrl.u32 %v5337, 16
        %v5822 = vrot.slane %v5820, 4
        %v5823 = vshll.u32 %v5337, 16
        %v5825 = vrot.slane %v5823, 5
        %v5826 = vor.u32 %v5822, %v5825
        %v5827 = vrot.slane %v5826, 4
        %v5829 = vshll.u32 %v5338, 16
        %v5831 = vrot.slane %v5829, 5
        %v5832 = vsel %vm1293, %v5827, %v5831
        %v5833 = vshrl.u32 %v5338, 16
        %v5835 = vrot.slane %v5833, 4
        %v5836 = vor.u32 %v5835, %v5831
        %v5837 = vrot.slane %v5836, 4
        %v5839 = vshll.u32 %v5339, 16
        %v5841 = vrot.slane %v5839, 5
        %v5842 = vsel %vm1293, %v5837, %v5841
        %v5844 = vshrl.u32 %v5340, 16
        %v5846 = vrot.slane %v5844, 4
        %v5847 = vshll.u32 %v5340, 16
        %v5849 = vrot.slane %v5847, 5
        %v5850 = vor.u32 %v5846, %v5849
        %v5851 = vrot.slane %v5850, 4
        %v5853 = vshll.u32 %v5341, 16
        %v5855 = vrot.slane %v5853, 5
        %v5856 = vsel %vm1293, %v5851, %v5855
        %v5857 = vshrl.u32 %v5341, 16
        %v5859 = vrot.slane %v5857, 4
        %v5860 = vor.u32 %v5859, %v5855
        %v5861 = vrot.slane %v5860, 4
        %v5863 = vshll.u32 %v5342, 16
        %v5865 = vrot.slane %v5863, 5
        %v5866 = vsel %vm1293, %v5861, %v5865
        %v5868 = vshrl.u32 %v5343, 16
        %v5870 = vrot.slane %v5868, 4
        %v5871 = vshll.u32 %v5343, 16
        %v5873 = vrot.slane %v5871, 5
        %v5874 = vor.u32 %v5870, %v5873
        %v5875 = vrot.slane %v5874, 4
        %v5877 = vshll.u32 %v5344, 16
        %v5879 = vrot.slane %v5877, 5
        %v5880 = vsel %vm1293, %v5875, %v5879
        %v5881 = vshrl.u32 %v5344, 16
        %v5883 = vrot.slane %v5881, 4
        %v5884 = vor.u32 %v5883, %v5879
        %v5885 = vrot.slane %v5884, 4
        %v5887 = vshll.u32 %v5345, 16
        %v5889 = vrot.slane %v5887, 5
        %v5890 = vsel %vm1293, %v5885, %v5889
        %v5891 = vld [vmem:[#allocation3] sm:$0xff]
        %v5892 = vld [vmem:[#allocation3 + $0x8] sm:$0xff]
        %v5893 = vld [vmem:[#allocation3 + $0x10] sm:$0xff]
        %v5894 = vld [vmem:[#allocation3 + $0x18] sm:$0xff]
        %v5895 = vld [vmem:[#allocation3 + $0x20] sm:$0xff]
        %v5896 = vld [vmem:[#allocation3 + $0x28] sm:$0xff]
        %v5897 = vld [vmem:[#allocation3 + $0x30] sm:$0xff]
        %v5898 = vld [vmem:[#allocation3 + $0x38] sm:$0xff]
        %v5899 = vld [vmem:[#allocation3 + $0x40] sm:$0xff]
        %v5900 = vld [vmem:[#allocation3 + $0x48] sm:$0xff]
        %v5901 = vld [vmem:[#allocation3 + $0x50] sm:$0xff]
        %v5902 = vld [vmem:[#allocation3 + $0x58] sm:$0xff]
        %v5903 = vld [vmem:[#allocation3 + $0x60] sm:$0xff]
        %v5904 = vld [vmem:[#allocation3 + $0x68] sm:$0xff]
        %v5905 = vld [vmem:[#allocation3 + $0x70] sm:$0xff]
        %v5906 = vld [vmem:[#allocation3 + $0x78] sm:$0xff]
        %v5907 = vld [vmem:[#allocation3 + $0x80] sm:$0xff]
        %v5908 = vld [vmem:[#allocation3 + $0x88] sm:$0xff]
        %v5909 = vld [vmem:[#allocation3 + $0x90] sm:$0xff]
        %v5910 = vld [vmem:[#allocation3 + $0x98] sm:$0xff]
        %v5911 = vld [vmem:[#allocation3 + $0xa0] sm:$0xff]
        %v5912 = vld [vmem:[#allocation3 + $0xa8] sm:$0xff]
        %v5913 = vld [vmem:[#allocation3 + $0xb0] sm:$0xff]
        %v5914 = vld [vmem:[#allocation3 + $0xb8] sm:$0xff]
        %v5915 = vld [vmem:[#allocation3 + $0xc0] sm:$0xff]
        %v5916 = vld [vmem:[#allocation3 + $0xc8] sm:$0xff]
        %v5917 = vld [vmem:[#allocation3 + $0xd0] sm:$0xff]
        %v5918 = vld [vmem:[#allocation3 + $0xd8] sm:$0xff]
        %v5919 = vld [vmem:[#allocation3 + $0xe0] sm:$0xff]
        %v5920 = vld [vmem:[#allocation3 + $0xe8] sm:$0xff]
        %v5921 = vld [vmem:[#allocation3 + $0xf0] sm:$0xff]
        %v5922 = vld [vmem:[#allocation3 + $0xf8] sm:$0xff]
        %v5923 = vld [vmem:[%s1518] sm:$0xff]
        %v5924 = vld [vmem:[%s1518 + $0x8] sm:$0xff]
        %v5925 = vld [vmem:[%s1518 + $0x10] sm:$0xff]
        %v5926 = vld [vmem:[%s1518 + $0x18] sm:$0xff]
        %v5927 = vld [vmem:[%s1518 + $0x20] sm:$0xff]
        %v5928 = vld [vmem:[%s1518 + $0x28] sm:$0xff]
        %v5929 = vld [vmem:[%s1518 + $0x30] sm:$0xff]
        %v5930 = vld [vmem:[%s1518 + $0x38] sm:$0xff]
        %v5931 = vld [vmem:[%s1518 + $0x40] sm:$0xff]
        %v5932 = vld [vmem:[%s1518 + $0x48] sm:$0xff]
        %v5933 = vld [vmem:[%s1518 + $0x50] sm:$0xff]
        %v5934 = vld [vmem:[%s1518 + $0x58] sm:$0xff]
        %v5935 = vld [vmem:[%s1518 + $0x60] sm:$0xff]
        %v5936 = vld [vmem:[%s1518 + $0x68] sm:$0xff]
        %v5937 = vld [vmem:[%s1518 + $0x70] sm:$0xff]
        %v5938 = vld [vmem:[%s1518 + $0x78] sm:$0xff]
        %v5939 = vunpack.c.l.b16 %v5712
        %v5940 = vunpack.c.l.b16 %v5722
        %v5941 = vunpack.c.l.b16 %v5736
        %v5942 = vunpack.c.l.b16 %v5746
        %v5943 = vunpack.c.l.b16 %v5760
        %v5944 = vunpack.c.l.b16 %v5770
        %v5945 = vunpack.c.l.b16 %v5784
        %v5946 = vunpack.c.l.b16 %v5794
        %v5947 = vunpack.c.l.b16 %v5808
        %v5948 = vunpack.c.l.b16 %v5818
        %v5949 = vunpack.c.l.b16 %v5832
        %v5950 = vunpack.c.l.b16 %v5842
        %v5951 = vunpack.c.l.b16 %v5856
        %v5952 = vunpack.c.l.b16 %v5866
        %v5953 = vunpack.c.l.b16 %v5880
        %v5954 = vunpack.c.l.b16 %v5890
        %v5955 = vpack.c.b16 %v5940, %v5939
        %v5956 = vpack.c.b16 %v5942, %v5941
        %v5957 = vpack.c.b16 %v5944, %v5943
        %v5958 = vpack.c.b16 %v5946, %v5945
        %v5959 = vpack.c.b16 %v5948, %v5947
        %v5960 = vpack.c.b16 %v5950, %v5949
        %v5961 = vpack.c.b16 %v5952, %v5951
        %v5962 = vpack.c.b16 %v5954, %v5953
        %v5987 = vunpack.c.l.b16 %v5923
        %v5988 = vunpack.c.h.b16 %v5923
        %v5989 = vunpack.c.l.b16 %v5924
        %v5990 = vunpack.c.h.b16 %v5924
        %v5991 = vunpack.c.l.b16 %v5925
        %v5992 = vunpack.c.h.b16 %v5925
        %v5993 = vunpack.c.l.b16 %v5926
        %v5994 = vunpack.c.h.b16 %v5926
        %v5995 = vunpack.c.l.b16 %v5927
        %v5996 = vunpack.c.h.b16 %v5927
        %v5997 = vunpack.c.l.b16 %v5928
        %v5998 = vunpack.c.h.b16 %v5928
        %v5999 = vunpack.c.l.b16 %v5929
        %v6000 = vunpack.c.h.b16 %v5929
        %v6001 = vunpack.c.l.b16 %v5930
        %v6002 = vunpack.c.h.b16 %v5930
        %v6003 = vunpack.c.l.b16 %v5931
        %v6004 = vunpack.c.h.b16 %v5931
        %v6005 = vunpack.c.l.b16 %v5932
        %v6006 = vunpack.c.h.b16 %v5932
        %v6007 = vunpack.c.l.b16 %v5933
        %v6008 = vunpack.c.h.b16 %v5933
        %v6009 = vunpack.c.l.b16 %v5934
        %v6010 = vunpack.c.h.b16 %v5934
        %v6011 = vunpack.c.l.b16 %v5935
        %v6012 = vunpack.c.h.b16 %v5935
        %v6013 = vunpack.c.l.b16 %v5936
        %v6014 = vunpack.c.h.b16 %v5936
        %v6015 = vunpack.c.l.b16 %v5937
        %v6016 = vunpack.c.h.b16 %v5937
        %v6017 = vunpack.c.l.b16 %v5938
        %v6018 = vunpack.c.h.b16 %v5938
        %v6019 = vpack.c.b16 %v5989, %v5987
        %v6020 = vpack.c.b16 %v5990, %v5988
        %v6021 = vpack.c.b16 %v5993, %v5991
        %v6022 = vpack.c.b16 %v5994, %v5992
        %v6023 = vpack.c.b16 %v5997, %v5995
        %v6024 = vpack.c.b16 %v5998, %v5996
        %v6025 = vpack.c.b16 %v6001, %v5999
        %v6026 = vpack.c.b16 %v6002, %v6000
        %v6027 = vpack.c.b16 %v6005, %v6003
        %v6028 = vpack.c.b16 %v6006, %v6004
        %v6029 = vpack.c.b16 %v6009, %v6007
        %v6030 = vpack.c.b16 %v6010, %v6008
        %v6031 = vpack.c.b16 %v6013, %v6011
        %v6032 = vpack.c.b16 %v6014, %v6012
        %v6033 = vpack.c.b16 %v6017, %v6015
        %v6034 = vpack.c.b16 %v6018, %v6016
        %6051 = vmatprep.subr.bf16.mxu0 %v6034
        %6052 = vmatpush1.bf16.msra.mxu0 %v6033
        %6053 = vmatprep.subr.bf16.mxu0 %v6032
        %6054 = vmatpush1.bf16.msra.mxu0 %v6031
        %6055 = vmatprep.subr.bf16.mxu0 %v6030
        %6056 = vmatpush1.bf16.msra.mxu0 %v6029
        %6057 = vmatprep.subr.bf16.mxu0 %v6028
        %6058 = vmatpush1.bf16.msra.mxu0 %v6027
        %6059 = vmatprep.subr.bf16.mxu0 %v6026
        %6060 = vmatpush1.bf16.msra.mxu0 %v6025
        %6061 = vmatprep.subr.bf16.mxu0 %v6024
        %6062 = vmatpush1.bf16.msra.mxu0 %v6023
        %6063 = vmatprep.subr.bf16.mxu0 %v6022
        %6064 = vmatpush1.bf16.msra.mxu0 %v6021
        %6065 = vmatprep.subr.bf16.mxu0 %v6020
        %6066 = vmatpush1.bf16.msra.mxu0 %v6019
        %6067 = vmatprep.subr.bf16.mxu0 0
        %6068 = vmatpush2.bf16.msra.mxu0 0
        %6069 = vmatprep.subr.bf16.mxu0 0
        %6070 = vmatpush2.bf16.msra.mxu0 0
        %6071 = vmatprep.subr.bf16.mxu0 0
        %6072 = vmatpush2.bf16.msra.mxu0 0
        %6073 = vmatprep.subr.bf16.mxu0 0
        %6074 = vmatpush2.bf16.msra.mxu0 0
        %6075 = vmatprep.subr.bf16.mxu0 0
        %6076 = vmatpush2.bf16.msra.mxu0 0
        %6077 = vmatprep.subr.bf16.mxu0 0
        %6078 = vmatpush2.bf16.msra.mxu0 0
        %6079 = vmatprep.subr.bf16.mxu0 0
        %6080 = vmatpush2.bf16.msra.mxu0 0
        %6081 = vmatprep.subr.bf16.mxu0 0
        %6082 = vmatpush2.bf16.msra.mxu0 0
        %6083 = vmatprep.mubr.bf16.mxu0 0
        %6084 = vmatmul.mubr.bf16.gmra.mxu0 %v5955
        %v6085 = vpop.f32.mrf.mxu0
        %v6086 = vadd.f32 0.0, %v6085
        %v6087 = vpop.f32.mrf.mxu0
        %v6088 = vadd.f32 0.0, %v6087
        %v6089 = vpop.f32.mrf.mxu0
        %v6090 = vadd.f32 0.0, %v6089
        %v6091 = vpop.f32.mrf.mxu0
        %v6092 = vadd.f32 0.0, %v6091
        %6093 = vmatprep.mubr.bf16.mxu0 0
        %6094 = vmatmul.mubr.bf16.gmra.mxu0 %v5956
        %v6095 = vpop.f32.mrf.mxu0
        %v6096 = vadd.f32 0.0, %v6095
        %v6097 = vpop.f32.mrf.mxu0
        %v6098 = vadd.f32 0.0, %v6097
        %v6099 = vpop.f32.mrf.mxu0
        %v6100 = vadd.f32 0.0, %v6099
        %v6101 = vpop.f32.mrf.mxu0
        %v6102 = vadd.f32 0.0, %v6101
        %6103 = vmatprep.mubr.bf16.mxu0 0
        %6104 = vmatmul.mubr.bf16.gmra.mxu0 %v5957
        %v6105 = vpop.f32.mrf.mxu0
        %v6106 = vadd.f32 0.0, %v6105
        %v6107 = vpop.f32.mrf.mxu0
        %v6108 = vadd.f32 0.0, %v6107
        %v6109 = vpop.f32.mrf.mxu0
        %v6110 = vadd.f32 0.0, %v6109
        %v6111 = vpop.f32.mrf.mxu0
        %v6112 = vadd.f32 0.0, %v6111
        %6113 = vmatprep.mubr.bf16.mxu0 0
        %6114 = vmatmul.mubr.bf16.gmra.mxu0 %v5958
        %v6115 = vpop.f32.mrf.mxu0
        %v6116 = vadd.f32 0.0, %v6115
        %v6117 = vpop.f32.mrf.mxu0
        %v6118 = vadd.f32 0.0, %v6117
        %v6119 = vpop.f32.mrf.mxu0
        %v6120 = vadd.f32 0.0, %v6119
        %v6121 = vpop.f32.mrf.mxu0
        %v6122 = vadd.f32 0.0, %v6121
        %6123 = vmatprep.mubr.bf16.mxu0 0
        %6124 = vmatmul.mubr.bf16.gmra.mxu0 %v5959
        %v6125 = vpop.f32.mrf.mxu0
        %v6126 = vadd.f32 0.0, %v6125
        %v6127 = vpop.f32.mrf.mxu0
        %v6128 = vadd.f32 0.0, %v6127
        %v6129 = vpop.f32.mrf.mxu0
        %v6130 = vadd.f32 0.0, %v6129
        %v6131 = vpop.f32.mrf.mxu0
        %v6132 = vadd.f32 0.0, %v6131
        %6133 = vmatprep.mubr.bf16.mxu0 0
        %6134 = vmatmul.mubr.bf16.gmra.mxu0 %v5960
        %v6135 = vpop.f32.mrf.mxu0
        %v6136 = vadd.f32 0.0, %v6135
        %v6137 = vpop.f32.mrf.mxu0
        %v6138 = vadd.f32 0.0, %v6137
        %v6139 = vpop.f32.mrf.mxu0
        %v6140 = vadd.f32 0.0, %v6139
        %v6141 = vpop.f32.mrf.mxu0
        %v6142 = vadd.f32 0.0, %v6141
        %6143 = vmatprep.mubr.bf16.mxu0 0
        %6144 = vmatmul.mubr.bf16.gmra.mxu0 %v5961
        %v6145 = vpop.f32.mrf.mxu0
        %v6146 = vadd.f32 0.0, %v6145
        %v6147 = vpop.f32.mrf.mxu0
        %v6148 = vadd.f32 0.0, %v6147
        %v6149 = vpop.f32.mrf.mxu0
        %v6150 = vadd.f32 0.0, %v6149
        %v6151 = vpop.f32.mrf.mxu0
        %v6152 = vadd.f32 0.0, %v6151
        %6153 = vmatprep.mubr.bf16.mxu0 0
        %6154 = vmatmul.mubr.bf16.gmra.mxu0 %v5962
        %v6155 = vpop.f32.mrf.mxu0
        %v6156 = vadd.f32 0.0, %v6155
        %v6157 = vpop.f32.mrf.mxu0
        %v6158 = vadd.f32 0.0, %v6157
        %v6159 = vpop.f32.mrf.mxu0
        %v6160 = vadd.f32 0.0, %v6159
        %v6161 = vpop.f32.mrf.mxu0
        %v6162 = vadd.f32 0.0, %v6161
        %6163 = vdwg.mxu0
        %v6164 = vadd.f32 %v5891, %v6086
        %v6165 = vadd.f32 %v5892, %v6088
        %v6166 = vadd.f32 %v5893, %v6090
        %v6167 = vadd.f32 %v5894, %v6092
        %v6168 = vadd.f32 %v5895, %v6096
        %v6169 = vadd.f32 %v5896, %v6098
        %v6170 = vadd.f32 %v5897, %v6100
        %v6171 = vadd.f32 %v5898, %v6102
        %v6172 = vadd.f32 %v5899, %v6106
        %v6173 = vadd.f32 %v5900, %v6108
        %v6174 = vadd.f32 %v5901, %v6110
        %v6175 = vadd.f32 %v5902, %v6112
        %v6176 = vadd.f32 %v5903, %v6116
        %v6177 = vadd.f32 %v5904, %v6118
        %v6178 = vadd.f32 %v5905, %v6120
        %v6179 = vadd.f32 %v5906, %v6122
        %v6180 = vadd.f32 %v5907, %v6126
        %v6181 = vadd.f32 %v5908, %v6128
        %v6182 = vadd.f32 %v5909, %v6130
        %v6183 = vadd.f32 %v5910, %v6132
        %v6184 = vadd.f32 %v5911, %v6136
        %v6185 = vadd.f32 %v5912, %v6138
        %v6186 = vadd.f32 %v5913, %v6140
        %v6187 = vadd.f32 %v5914, %v6142
        %v6188 = vadd.f32 %v5915, %v6146
        %v6189 = vadd.f32 %v5916, %v6148
        %v6190 = vadd.f32 %v5917, %v6150
        %v6191 = vadd.f32 %v5918, %v6152
        %v6192 = vadd.f32 %v5919, %v6156
        %v6193 = vadd.f32 %v5920, %v6158
        %v6194 = vadd.f32 %v5921, %v6160
        %v6195 = vadd.f32 %v5922, %v6162
        %6196 = vst [vmem:[#allocation3] sm:$0xff] %v6164
        %6197 = vst [vmem:[#allocation3 + $0x8] sm:$0xff] %v6165
        %6198 = vst [vmem:[#allocation3 + $0x10] sm:$0xff] %v6166
        %6199 = vst [vmem:[#allocation3 + $0x18] sm:$0xff] %v6167
        %6200 = vst [vmem:[#allocation3 + $0x20] sm:$0xff] %v6168
        %6201 = vst [vmem:[#allocation3 + $0x28] sm:$0xff] %v6169
        %6202 = vst [vmem:[#allocation3 + $0x30] sm:$0xff] %v6170
        %6203 = vst [vmem:[#allocation3 + $0x38] sm:$0xff] %v6171
        %6204 = vst [vmem:[#allocation3 + $0x40] sm:$0xff] %v6172
        %6205 = vst [vmem:[#allocation3 + $0x48] sm:$0xff] %v6173
        %6206 = vst [vmem:[#allocation3 + $0x50] sm:$0xff] %v6174
        %6207 = vst [vmem:[#allocation3 + $0x58] sm:$0xff] %v6175
        %6208 = vst [vmem:[#allocation3 + $0x60] sm:$0xff] %v6176
        %6209 = vst [vmem:[#allocation3 + $0x68] sm:$0xff] %v6177
        %6210 = vst [vmem:[#allocation3 + $0x70] sm:$0xff] %v6178
        %6211 = vst [vmem:[#allocation3 + $0x78] sm:$0xff] %v6179
        %6212 = vst [vmem:[#allocation3 + $0x80] sm:$0xff] %v6180
        %6213 = vst [vmem:[#allocation3 + $0x88] sm:$0xff] %v6181
        %6214 = vst [vmem:[#allocation3 + $0x90] sm:$0xff] %v6182
        %6215 = vst [vmem:[#allocation3 + $0x98] sm:$0xff] %v6183
        %6216 = vst [vmem:[#allocation3 + $0xa0] sm:$0xff] %v6184
        %6217 = vst [vmem:[#allocation3 + $0xa8] sm:$0xff] %v6185
        %6218 = vst [vmem:[#allocation3 + $0xb0] sm:$0xff] %v6186
        %6219 = vst [vmem:[#allocation3 + $0xb8] sm:$0xff] %v6187
        %6220 = vst [vmem:[#allocation3 + $0xc0] sm:$0xff] %v6188
        %6221 = vst [vmem:[#allocation3 + $0xc8] sm:$0xff] %v6189
        %6222 = vst [vmem:[#allocation3 + $0xd0] sm:$0xff] %v6190
        %6223 = vst [vmem:[#allocation3 + $0xd8] sm:$0xff] %v6191
        %6224 = vst [vmem:[#allocation3 + $0xe0] sm:$0xff] %v6192
        %6225 = vst [vmem:[#allocation3 + $0xe8] sm:$0xff] %v6193
        %6226 = vst [vmem:[#allocation3 + $0xf0] sm:$0xff] %v6194
        %6227 = vst [vmem:[#allocation3 + $0xf8] sm:$0xff] %v6195
        %v6236 = vrot.slane %v5322, 5
        %v6237 = vrot.slane %v6236, 4
        %v6238 = vrot.slane %v5323, 5
        %v6239 = vsel %vm1834, %v6237, %v6238
        %v6240 = vrot.slane %v6238, 4
        %v6241 = vrot.slane %v5324, 5
        %v6242 = vsel %vm1834, %v6240, %v6241
        %v6243 = vrot.slane %v5325, 5
        %v6244 = vrot.slane %v6243, 4
        %v6245 = vrot.slane %v5326, 5
        %v6246 = vsel %vm1834, %v6244, %v6245
        %v6247 = vrot.slane %v6245, 4
        %v6248 = vrot.slane %v5327, 5
        %v6249 = vsel %vm1834, %v6247, %v6248
        %v6250 = vrot.slane %v5328, 5
        %v6251 = vrot.slane %v6250, 4
        %v6252 = vrot.slane %v5329, 5
        %v6253 = vsel %vm1834, %v6251, %v6252
        %v6254 = vrot.slane %v6252, 4
        %v6255 = vrot.slane %v5330, 5
        %v6256 = vsel %vm1834, %v6254, %v6255
        %v6257 = vrot.slane %v5331, 5
        %v6258 = vrot.slane %v6257, 4
        %v6259 = vrot.slane %v5332, 5
        %v6260 = vsel %vm1834, %v6258, %v6259
        %v6261 = vrot.slane %v6259, 4
        %v6262 = vrot.slane %v5333, 5
        %v6263 = vsel %vm1834, %v6261, %v6262
        %v6264 = vrot.slane %v5334, 5
        %v6265 = vrot.slane %v6264, 4
        %v6266 = vrot.slane %v5335, 5
        %v6267 = vsel %vm1834, %v6265, %v6266
        %v6268 = vrot.slane %v6266, 4
        %v6269 = vrot.slane %v5336, 5
        %v6270 = vsel %vm1834, %v6268, %v6269
        %v6271 = vrot.slane %v5337, 5
        %v6272 = vrot.slane %v6271, 4
        %v6273 = vrot.slane %v5338, 5
        %v6274 = vsel %vm1834, %v6272, %v6273
        %v6275 = vrot.slane %v6273, 4
        %v6276 = vrot.slane %v5339, 5
        %v6277 = vsel %vm1834, %v6275, %v6276
        %v6278 = vrot.slane %v5340, 5
        %v6279 = vrot.slane %v6278, 4
        %v6280 = vrot.slane %v5341, 5
        %v6281 = vsel %vm1834, %v6279, %v6280
        %v6282 = vrot.slane %v6280, 4
        %v6283 = vrot.slane %v5342, 5
        %v6284 = vsel %vm1834, %v6282, %v6283
        %v6285 = vrot.slane %v5343, 5
        %v6286 = vrot.slane %v6285, 4
        %v6287 = vrot.slane %v5344, 5
        %v6288 = vsel %vm1834, %v6286, %v6287
        %v6289 = vrot.slane %v6287, 4
        %v6290 = vrot.slane %v5345, 5
        %v6291 = vsel %vm1834, %v6289, %v6290
        %v6292 = vld [vmem:[#allocation3] sm:$0xff]
        %v6293 = vld [vmem:[#allocation3 + $0x8] sm:$0xff]
        %v6294 = vld [vmem:[#allocation3 + $0x10] sm:$0xff]
        %v6295 = vld [vmem:[#allocation3 + $0x18] sm:$0xff]
        %v6296 = vld [vmem:[#allocation3 + $0x20] sm:$0xff]
        %v6297 = vld [vmem:[#allocation3 + $0x28] sm:$0xff]
        %v6298 = vld [vmem:[#allocation3 + $0x30] sm:$0xff]
        %v6299 = vld [vmem:[#allocation3 + $0x38] sm:$0xff]
        %v6300 = vld [vmem:[#allocation3 + $0x40] sm:$0xff]
        %v6301 = vld [vmem:[#allocation3 + $0x48] sm:$0xff]
        %v6302 = vld [vmem:[#allocation3 + $0x50] sm:$0xff]
        %v6303 = vld [vmem:[#allocation3 + $0x58] sm:$0xff]
        %v6304 = vld [vmem:[#allocation3 + $0x60] sm:$0xff]
        %v6305 = vld [vmem:[#allocation3 + $0x68] sm:$0xff]
        %v6306 = vld [vmem:[#allocation3 + $0x70] sm:$0xff]
        %v6307 = vld [vmem:[#allocation3 + $0x78] sm:$0xff]
        %v6308 = vld [vmem:[#allocation3 + $0x80] sm:$0xff]
        %v6309 = vld [vmem:[#allocation3 + $0x88] sm:$0xff]
        %v6310 = vld [vmem:[#allocation3 + $0x90] sm:$0xff]
        %v6311 = vld [vmem:[#allocation3 + $0x98] sm:$0xff]
        %v6312 = vld [vmem:[#allocation3 + $0xa0] sm:$0xff]
        %v6313 = vld [vmem:[#allocation3 + $0xa8] sm:$0xff]
        %v6314 = vld [vmem:[#allocation3 + $0xb0] sm:$0xff]
        %v6315 = vld [vmem:[#allocation3 + $0xb8] sm:$0xff]
        %v6316 = vld [vmem:[#allocation3 + $0xc0] sm:$0xff]
        %v6317 = vld [vmem:[#allocation3 + $0xc8] sm:$0xff]
        %v6318 = vld [vmem:[#allocation3 + $0xd0] sm:$0xff]
        %v6319 = vld [vmem:[#allocation3 + $0xd8] sm:$0xff]
        %v6320 = vld [vmem:[#allocation3 + $0xe0] sm:$0xff]
        %v6321 = vld [vmem:[#allocation3 + $0xe8] sm:$0xff]
        %v6322 = vld [vmem:[#allocation3 + $0xf0] sm:$0xff]
        %v6323 = vld [vmem:[#allocation3 + $0xf8] sm:$0xff]
        %v6324 = vld [vmem:[%s1923] sm:$0xff]
        %v6325 = vld [vmem:[%s1923 + $0x8] sm:$0xff]
        %v6326 = vld [vmem:[%s1923 + $0x10] sm:$0xff]
        %v6327 = vld [vmem:[%s1923 + $0x18] sm:$0xff]
        %v6328 = vld [vmem:[%s1923 + $0x20] sm:$0xff]
        %v6329 = vld [vmem:[%s1923 + $0x28] sm:$0xff]
        %v6330 = vld [vmem:[%s1923 + $0x30] sm:$0xff]
        %v6331 = vld [vmem:[%s1923 + $0x38] sm:$0xff]
        %v6332 = vld [vmem:[%s1923 + $0x40] sm:$0xff]
        %v6333 = vld [vmem:[%s1923 + $0x48] sm:$0xff]
        %v6334 = vld [vmem:[%s1923 + $0x50] sm:$0xff]
        %v6335 = vld [vmem:[%s1923 + $0x58] sm:$0xff]
        %v6336 = vld [vmem:[%s1923 + $0x60] sm:$0xff]
        %v6337 = vld [vmem:[%s1923 + $0x68] sm:$0xff]
        %v6338 = vld [vmem:[%s1923 + $0x70] sm:$0xff]
        %v6339 = vld [vmem:[%s1923 + $0x78] sm:$0xff]
        %v6340 = vunpack.c.l.b16 %v6239
        %v6341 = vunpack.c.l.b16 %v6242
        %v6342 = vunpack.c.l.b16 %v6246
        %v6343 = vunpack.c.l.b16 %v6249
        %v6344 = vunpack.c.l.b16 %v6253
        %v6345 = vunpack.c.l.b16 %v6256
        %v6346 = vunpack.c.l.b16 %v6260
        %v6347 = vunpack.c.l.b16 %v6263
        %v6348 = vunpack.c.l.b16 %v6267
        %v6349 = vunpack.c.l.b16 %v6270
        %v6350 = vunpack.c.l.b16 %v6274
        %v6351 = vunpack.c.l.b16 %v6277
        %v6352 = vunpack.c.l.b16 %v6281
        %v6353 = vunpack.c.l.b16 %v6284
        %v6354 = vunpack.c.l.b16 %v6288
        %v6355 = vunpack.c.l.b16 %v6291
        %v6356 = vpack.c.b16 %v6341, %v6340
        %v6357 = vpack.c.b16 %v6343, %v6342
        %v6358 = vpack.c.b16 %v6345, %v6344
        %v6359 = vpack.c.b16 %v6347, %v6346
        %v6360 = vpack.c.b16 %v6349, %v6348
        %v6361 = vpack.c.b16 %v6351, %v6350
        %v6362 = vpack.c.b16 %v6353, %v6352
        %v6363 = vpack.c.b16 %v6355, %v6354
        %v6388 = vunpack.c.l.b16 %v6324
        %v6389 = vunpack.c.h.b16 %v6324
        %v6390 = vunpack.c.l.b16 %v6325
        %v6391 = vunpack.c.h.b16 %v6325
        %v6392 = vunpack.c.l.b16 %v6326
        %v6393 = vunpack.c.h.b16 %v6326
        %v6394 = vunpack.c.l.b16 %v6327
        %v6395 = vunpack.c.h.b16 %v6327
        %v6396 = vunpack.c.l.b16 %v6328
        %v6397 = vunpack.c.h.b16 %v6328
        %v6398 = vunpack.c.l.b16 %v6329
        %v6399 = vunpack.c.h.b16 %v6329
        %v6400 = vunpack.c.l.b16 %v6330
        %v6401 = vunpack.c.h.b16 %v6330
        %v6402 = vunpack.c.l.b16 %v6331
        %v6403 = vunpack.c.h.b16 %v6331
        %v6404 = vunpack.c.l.b16 %v6332
        %v6405 = vunpack.c.h.b16 %v6332
        %v6406 = vunpack.c.l.b16 %v6333
        %v6407 = vunpack.c.h.b16 %v6333
        %v6408 = vunpack.c.l.b16 %v6334
        %v6409 = vunpack.c.h.b16 %v6334
        %v6410 = vunpack.c.l.b16 %v6335
        %v6411 = vunpack.c.h.b16 %v6335
        %v6412 = vunpack.c.l.b16 %v6336
        %v6413 = vunpack.c.h.b16 %v6336
        %v6414 = vunpack.c.l.b16 %v6337
        %v6415 = vunpack.c.h.b16 %v6337
        %v6416 = vunpack.c.l.b16 %v6338
        %v6417 = vunpack.c.h.b16 %v6338
        %v6418 = vunpack.c.l.b16 %v6339
        %v6419 = vunpack.c.h.b16 %v6339
        %v6420 = vpack.c.b16 %v6390, %v6388
        %v6421 = vpack.c.b16 %v6391, %v6389
        %v6422 = vpack.c.b16 %v6394, %v6392
        %v6423 = vpack.c.b16 %v6395, %v6393
        %v6424 = vpack.c.b16 %v6398, %v6396
        %v6425 = vpack.c.b16 %v6399, %v6397
        %v6426 = vpack.c.b16 %v6402, %v6400
        %v6427 = vpack.c.b16 %v6403, %v6401
        %v6428 = vpack.c.b16 %v6406, %v6404
        %v6429 = vpack.c.b16 %v6407, %v6405
        %v6430 = vpack.c.b16 %v6410, %v6408
        %v6431 = vpack.c.b16 %v6411, %v6409
        %v6432 = vpack.c.b16 %v6414, %v6412
        %v6433 = vpack.c.b16 %v6415, %v6413
        %v6434 = vpack.c.b16 %v6418, %v6416
        %v6435 = vpack.c.b16 %v6419, %v6417
        %6452 = vmatprep.subr.bf16.mxu0 %v6435
        %6453 = vmatpush1.bf16.msra.mxu0 %v6434
        %6454 = vmatprep.subr.bf16.mxu0 %v6433
        %6455 = vmatpush1.bf16.msra.mxu0 %v6432
        %6456 = vmatprep.subr.bf16.mxu0 %v6431
        %6457 = vmatpush1.bf16.msra.mxu0 %v6430
        %6458 = vmatprep.subr.bf16.mxu0 %v6429
        %6459 = vmatpush1.bf16.msra.mxu0 %v6428
        %6460 = vmatprep.subr.bf16.mxu0 %v6427
        %6461 = vmatpush1.bf16.msra.mxu0 %v6426
        %6462 = vmatprep.subr.bf16.mxu0 %v6425
        %6463 = vmatpush1.bf16.msra.mxu0 %v6424
        %6464 = vmatprep.subr.bf16.mxu0 %v6423
        %6465 = vmatpush1.bf16.msra.mxu0 %v6422
        %6466 = vmatprep.subr.bf16.mxu0 %v6421
        %6467 = vmatpush1.bf16.msra.mxu0 %v6420
        %6468 = vmatprep.subr.bf16.mxu0 0
        %6469 = vmatpush2.bf16.msra.mxu0 0
        %6470 = vmatprep.subr.bf16.mxu0 0
        %6471 = vmatpush2.bf16.msra.mxu0 0
        %6472 = vmatprep.subr.bf16.mxu0 0
        %6473 = vmatpush2.bf16.msra.mxu0 0
        %6474 = vmatprep.subr.bf16.mxu0 0
        %6475 = vmatpush2.bf16.msra.mxu0 0
        %6476 = vmatprep.subr.bf16.mxu0 0
        %6477 = vmatpush2.bf16.msra.mxu0 0
        %6478 = vmatprep.subr.bf16.mxu0 0
        %6479 = vmatpush2.bf16.msra.mxu0 0
        %6480 = vmatprep.subr.bf16.mxu0 0
        %6481 = vmatpush2.bf16.msra.mxu0 0
        %6482 = vmatprep.subr.bf16.mxu0 0
        %6483 = vmatpush2.bf16.msra.mxu0 0
        %6484 = vmatprep.mubr.bf16.mxu0 0
        %6485 = vmatmul.mubr.bf16.gmra.mxu0 %v6356
        %v6486 = vpop.f32.mrf.mxu0
        %v6487 = vadd.f32 0.0, %v6486
        %v6488 = vpop.f32.mrf.mxu0
        %v6489 = vadd.f32 0.0, %v6488
        %v6490 = vpop.f32.mrf.mxu0
        %v6491 = vadd.f32 0.0, %v6490
        %v6492 = vpop.f32.mrf.mxu0
        %v6493 = vadd.f32 0.0, %v6492
        %6494 = vmatprep.mubr.bf16.mxu0 0
        %6495 = vmatmul.mubr.bf16.gmra.mxu0 %v6357
        %v6496 = vpop.f32.mrf.mxu0
        %v6497 = vadd.f32 0.0, %v6496
        %v6498 = vpop.f32.mrf.mxu0
        %v6499 = vadd.f32 0.0, %v6498
        %v6500 = vpop.f32.mrf.mxu0
        %v6501 = vadd.f32 0.0, %v6500
        %v6502 = vpop.f32.mrf.mxu0
        %v6503 = vadd.f32 0.0, %v6502
        %6504 = vmatprep.mubr.bf16.mxu0 0
        %6505 = vmatmul.mubr.bf16.gmra.mxu0 %v6358
        %v6506 = vpop.f32.mrf.mxu0
        %v6507 = vadd.f32 0.0, %v6506
        %v6508 = vpop.f32.mrf.mxu0
        %v6509 = vadd.f32 0.0, %v6508
        %v6510 = vpop.f32.mrf.mxu0
        %v6511 = vadd.f32 0.0, %v6510
        %v6512 = vpop.f32.mrf.mxu0
        %v6513 = vadd.f32 0.0, %v6512
        %6514 = vmatprep.mubr.bf16.mxu0 0
        %6515 = vmatmul.mubr.bf16.gmra.mxu0 %v6359
        %v6516 = vpop.f32.mrf.mxu0
        %v6517 = vadd.f32 0.0, %v6516
        %v6518 = vpop.f32.mrf.mxu0
        %v6519 = vadd.f32 0.0, %v6518
        %v6520 = vpop.f32.mrf.mxu0
        %v6521 = vadd.f32 0.0, %v6520
        %v6522 = vpop.f32.mrf.mxu0
        %v6523 = vadd.f32 0.0, %v6522
        %6524 = vmatprep.mubr.bf16.mxu0 0
        %6525 = vmatmul.mubr.bf16.gmra.mxu0 %v6360
        %v6526 = vpop.f32.mrf.mxu0
        %v6527 = vadd.f32 0.0, %v6526
        %v6528 = vpop.f32.mrf.mxu0
        %v6529 = vadd.f32 0.0, %v6528
        %v6530 = vpop.f32.mrf.mxu0
        %v6531 = vadd.f32 0.0, %v6530
        %v6532 = vpop.f32.mrf.mxu0
        %v6533 = vadd.f32 0.0, %v6532
        %6534 = vmatprep.mubr.bf16.mxu0 0
        %6535 = vmatmul.mubr.bf16.gmra.mxu0 %v6361
        %v6536 = vpop.f32.mrf.mxu0
        %v6537 = vadd.f32 0.0, %v6536
        %v6538 = vpop.f32.mrf.mxu0
        %v6539 = vadd.f32 0.0, %v6538
        %v6540 = vpop.f32.mrf.mxu0
        %v6541 = vadd.f32 0.0, %v6540
        %v6542 = vpop.f32.mrf.mxu0
        %v6543 = vadd.f32 0.0, %v6542
        %6544 = vmatprep.mubr.bf16.mxu0 0
        %6545 = vmatmul.mubr.bf16.gmra.mxu0 %v6362
        %v6546 = vpop.f32.mrf.mxu0
        %v6547 = vadd.f32 0.0, %v6546
        %v6548 = vpop.f32.mrf.mxu0
        %v6549 = vadd.f32 0.0, %v6548
        %v6550 = vpop.f32.mrf.mxu0
        %v6551 = vadd.f32 0.0, %v6550
        %v6552 = vpop.f32.mrf.mxu0
        %v6553 = vadd.f32 0.0, %v6552
        %6554 = vmatprep.mubr.bf16.mxu0 0
        %6555 = vmatmul.mubr.bf16.gmra.mxu0 %v6363
        %v6556 = vpop.f32.mrf.mxu0
        %v6557 = vadd.f32 0.0, %v6556
        %v6558 = vpop.f32.mrf.mxu0
        %v6559 = vadd.f32 0.0, %v6558
        %v6560 = vpop.f32.mrf.mxu0
        %v6561 = vadd.f32 0.0, %v6560
        %v6562 = vpop.f32.mrf.mxu0
        %v6563 = vadd.f32 0.0, %v6562
        %6564 = vdwg.mxu0
        %v6565 = vadd.f32 %v6292, %v6487
        %v6566 = vadd.f32 %v6293, %v6489
        %v6567 = vadd.f32 %v6294, %v6491
        %v6568 = vadd.f32 %v6295, %v6493
        %v6569 = vadd.f32 %v6296, %v6497
        %v6570 = vadd.f32 %v6297, %v6499
        %v6571 = vadd.f32 %v6298, %v6501
        %v6572 = vadd.f32 %v6299, %v6503
        %v6573 = vadd.f32 %v6300, %v6507
        %v6574 = vadd.f32 %v6301, %v6509
        %v6575 = vadd.f32 %v6302, %v6511
        %v6576 = vadd.f32 %v6303, %v6513
        %v6577 = vadd.f32 %v6304, %v6517
        %v6578 = vadd.f32 %v6305, %v6519
        %v6579 = vadd.f32 %v6306, %v6521
        %v6580 = vadd.f32 %v6307, %v6523
        %v6581 = vadd.f32 %v6308, %v6527
        %v6582 = vadd.f32 %v6309, %v6529
        %v6583 = vadd.f32 %v6310, %v6531
        %v6584 = vadd.f32 %v6311, %v6533
        %v6585 = vadd.f32 %v6312, %v6537
        %v6586 = vadd.f32 %v6313, %v6539
        %v6587 = vadd.f32 %v6314, %v6541
        %v6588 = vadd.f32 %v6315, %v6543
        %v6589 = vadd.f32 %v6316, %v6547
        %v6590 = vadd.f32 %v6317, %v6549
        %v6591 = vadd.f32 %v6318, %v6551
        %v6592 = vadd.f32 %v6319, %v6553
        %v6593 = vadd.f32 %v6320, %v6557
        %v6594 = vadd.f32 %v6321, %v6559
        %v6595 = vadd.f32 %v6322, %v6561
        %v6596 = vadd.f32 %v6323, %v6563
        %6597 = vst [vmem:[#allocation3] sm:$0xff] %v6565
        %6598 = vst [vmem:[#allocation3 + $0x8] sm:$0xff] %v6566
        %6599 = vst [vmem:[#allocation3 + $0x10] sm:$0xff] %v6567
        %6600 = vst [vmem:[#allocation3 + $0x18] sm:$0xff] %v6568
        %6601 = vst [vmem:[#allocation3 + $0x20] sm:$0xff] %v6569
        %6602 = vst [vmem:[#allocation3 + $0x28] sm:$0xff] %v6570
        %6603 = vst [vmem:[#allocation3 + $0x30] sm:$0xff] %v6571
        %6604 = vst [vmem:[#allocation3 + $0x38] sm:$0xff] %v6572
        %6605 = vst [vmem:[#allocation3 + $0x40] sm:$0xff] %v6573
        %6606 = vst [vmem:[#allocation3 + $0x48] sm:$0xff] %v6574
        %6607 = vst [vmem:[#allocation3 + $0x50] sm:$0xff] %v6575
        %6608 = vst [vmem:[#allocation3 + $0x58] sm:$0xff] %v6576
        %6609 = vst [vmem:[#allocation3 + $0x60] sm:$0xff] %v6577
        %6610 = vst [vmem:[#allocation3 + $0x68] sm:$0xff] %v6578
        %6611 = vst [vmem:[#allocation3 + $0x70] sm:$0xff] %v6579
        %6612 = vst [vmem:[#allocation3 + $0x78] sm:$0xff] %v6580
        %6613 = vst [vmem:[#allocation3 + $0x80] sm:$0xff] %v6581
        %6614 = vst [vmem:[#allocation3 + $0x88] sm:$0xff] %v6582
        %6615 = vst [vmem:[#allocation3 + $0x90] sm:$0xff] %v6583
        %6616 = vst [vmem:[#allocation3 + $0x98] sm:$0xff] %v6584
        %6617 = vst [vmem:[#allocation3 + $0xa0] sm:$0xff] %v6585
        %6618 = vst [vmem:[#allocation3 + $0xa8] sm:$0xff] %v6586
        %6619 = vst [vmem:[#allocation3 + $0xb0] sm:$0xff] %v6587
        %6620 = vst [vmem:[#allocation3 + $0xb8] sm:$0xff] %v6588
        %6621 = vst [vmem:[#allocation3 + $0xc0] sm:$0xff] %v6589
        %6622 = vst [vmem:[#allocation3 + $0xc8] sm:$0xff] %v6590
        %6623 = vst [vmem:[#allocation3 + $0xd0] sm:$0xff] %v6591
        %6624 = vst [vmem:[#allocation3 + $0xd8] sm:$0xff] %v6592
        %6625 = vst [vmem:[#allocation3 + $0xe0] sm:$0xff] %v6593
        %6626 = vst [vmem:[#allocation3 + $0xe8] sm:$0xff] %v6594
        %6627 = vst [vmem:[#allocation3 + $0xf0] sm:$0xff] %v6595
        %6628 = vst [vmem:[#allocation3 + $0xf8] sm:$0xff] %v6596
        %v6629 = vld [vmem:[%s857] sm:$0xf]
        %v6630 = vld [vmem:[%s857 + $0x4] sm:$0xf]
        %v6631 = vld [vmem:[%s857 + $0x8] sm:$0x1]
        %v6632 = vld [vmem:[%s857 + $0xc] sm:$0xf]
        %v6633 = vld [vmem:[%s857 + $0x10] sm:$0xf]
        %v6634 = vld [vmem:[%s857 + $0x14] sm:$0x1]
        %v6635 = vld [vmem:[%s857 + $0x18] sm:$0xf]
        %v6636 = vld [vmem:[%s857 + $0x1c] sm:$0xf]
        %v6637 = vld [vmem:[%s857 + $0x20] sm:$0x1]
        %v6638 = vld [vmem:[%s857 + $0x24] sm:$0xf]
        %v6639 = vld [vmem:[%s857 + $0x28] sm:$0xf]
        %v6640 = vld [vmem:[%s857 + $0x2c] sm:$0x1]
        %v6641 = vld [vmem:[%s857 + $0x30] sm:$0xf]
        %v6642 = vld [vmem:[%s857 + $0x34] sm:$0xf]
        %v6643 = vld [vmem:[%s857 + $0x38] sm:$0x1]
        %v6644 = vld [vmem:[%s857 + $0x3c] sm:$0xf]
        %v6645 = vld [vmem:[%s857 + $0x40] sm:$0xf]
        %v6646 = vld [vmem:[%s857 + $0x44] sm:$0x1]
        %v6647 = vld [vmem:[%s857 + $0x48] sm:$0xf]
        %v6648 = vld [vmem:[%s857 + $0x4c] sm:$0xf]
        %v6649 = vld [vmem:[%s857 + $0x50] sm:$0x1]
        %v6650 = vld [vmem:[%s857 + $0x54] sm:$0xf]
        %v6651 = vld [vmem:[%s857 + $0x58] sm:$0xf]
        %v6652 = vld [vmem:[%s857 + $0x5c] sm:$0x1]
        %v6653 = vld [vmem:[#allocation3] sm:$0xff]
        %v6654 = vld [vmem:[#allocation3 + $0x8] sm:$0xff]
        %v6655 = vld [vmem:[#allocation3 + $0x10] sm:$0xff]
        %v6656 = vld [vmem:[#allocation3 + $0x18] sm:$0xff]
        %v6657 = vld [vmem:[#allocation3 + $0x20] sm:$0xff]
        %v6658 = vld [vmem:[#allocation3 + $0x28] sm:$0xff]
        %v6659 = vld [vmem:[#allocation3 + $0x30] sm:$0xff]
        %v6660 = vld [vmem:[#allocation3 + $0x38] sm:$0xff]
        %v6661 = vld [vmem:[#allocation3 + $0x40] sm:$0xff]
        %v6662 = vld [vmem:[#allocation3 + $0x48] sm:$0xff]
        %v6663 = vld [vmem:[#allocation3 + $0x50] sm:$0xff]
        %v6664 = vld [vmem:[#allocation3 + $0x58] sm:$0xff]
        %v6665 = vld [vmem:[#allocation3 + $0x60] sm:$0xff]
        %v6666 = vld [vmem:[#allocation3 + $0x68] sm:$0xff]
        %v6667 = vld [vmem:[#allocation3 + $0x70] sm:$0xff]
        %v6668 = vld [vmem:[#allocation3 + $0x78] sm:$0xff]
        %v6669 = vld [vmem:[#allocation3 + $0x80] sm:$0xff]
        %v6670 = vld [vmem:[#allocation3 + $0x88] sm:$0xff]
        %v6671 = vld [vmem:[#allocation3 + $0x90] sm:$0xff]
        %v6672 = vld [vmem:[#allocation3 + $0x98] sm:$0xff]
        %v6673 = vld [vmem:[#allocation3 + $0xa0] sm:$0xff]
        %v6674 = vld [vmem:[#allocation3 + $0xa8] sm:$0xff]
        %v6675 = vld [vmem:[#allocation3 + $0xb0] sm:$0xff]
        %v6676 = vld [vmem:[#allocation3 + $0xb8] sm:$0xff]
        %v6677 = vld [vmem:[#allocation3 + $0xc0] sm:$0xff]
        %v6678 = vld [vmem:[#allocation3 + $0xc8] sm:$0xff]
        %v6679 = vld [vmem:[#allocation3 + $0xd0] sm:$0xff]
        %v6680 = vld [vmem:[#allocation3 + $0xd8] sm:$0xff]
        %v6681 = vld [vmem:[#allocation3 + $0xe0] sm:$0xff]
        %v6682 = vld [vmem:[#allocation3 + $0xe8] sm:$0xff]
        %v6683 = vld [vmem:[#allocation3 + $0xf0] sm:$0xff]
        %v6684 = vld [vmem:[#allocation3 + $0xf8] sm:$0xff]
        %v6685 = vld [vmem:[%s2285] sm:$0xff]
        %v6686 = vld [vmem:[%s2285 + $0x8] sm:$0xff]
        %v6687 = vld [vmem:[%s2285 + $0x10] sm:$0xff]
        %v6688 = vld [vmem:[%s2285 + $0x18] sm:$0xff]
        %v6689 = vld [vmem:[%s2285 + $0x20] sm:$0xff]
        %v6690 = vld [vmem:[%s2285 + $0x28] sm:$0xff]
        %v6691 = vld [vmem:[%s2285 + $0x30] sm:$0xff]
        %v6692 = vld [vmem:[%s2285 + $0x38] sm:$0xff]
        %v6693 = vld [vmem:[%s2285 + $0x40] sm:$0xff]
        %v6694 = vld [vmem:[%s2285 + $0x48] sm:$0xff]
        %v6695 = vld [vmem:[%s2285 + $0x50] sm:$0xff]
        %v6696 = vld [vmem:[%s2285 + $0x58] sm:$0xff]
        %v6697 = vld [vmem:[%s2285 + $0x60] sm:$0xff]
        %v6698 = vld [vmem:[%s2285 + $0x68] sm:$0xff]
        %v6699 = vld [vmem:[%s2285 + $0x70] sm:$0xff]
        %v6700 = vld [vmem:[%s2285 + $0x78] sm:$0xff]
        %v6717 = vunpack.c.l.b16 %v6629
        %v6718 = vunpack.c.l.b16 %v6630
        %v6719 = vunpack.c.l.b16 %v6632
        %v6720 = vunpack.c.l.b16 %v6633
        %v6721 = vunpack.c.l.b16 %v6635
        %v6722 = vunpack.c.l.b16 %v6636
        %v6723 = vunpack.c.l.b16 %v6638
        %v6724 = vunpack.c.l.b16 %v6639
        %v6725 = vunpack.c.l.b16 %v6641
        %v6726 = vunpack.c.l.b16 %v6642
        %v6727 = vunpack.c.l.b16 %v6644
        %v6728 = vunpack.c.l.b16 %v6645
        %v6729 = vunpack.c.l.b16 %v6647
        %v6730 = vunpack.c.l.b16 %v6648
        %v6731 = vunpack.c.l.b16 %v6650
        %v6732 = vunpack.c.l.b16 %v6651
        %v6733 = vpack.c.b16 %v6718, %v6717
        %v6734 = vpack.c.b16 %v6720, %v6719
        %v6735 = vpack.c.b16 %v6722, %v6721
        %v6736 = vpack.c.b16 %v6724, %v6723
        %v6737 = vpack.c.b16 %v6726, %v6725
        %v6738 = vpack.c.b16 %v6728, %v6727
        %v6739 = vpack.c.b16 %v6730, %v6729
        %v6740 = vpack.c.b16 %v6732, %v6731
        %v6765 = vunpack.c.l.b16 %v6685
        %v6766 = vunpack.c.h.b16 %v6685
        %v6767 = vunpack.c.l.b16 %v6686
        %v6768 = vunpack.c.h.b16 %v6686
        %v6769 = vunpack.c.l.b16 %v6687
        %v6770 = vunpack.c.h.b16 %v6687
        %v6771 = vunpack.c.l.b16 %v6688
        %v6772 = vunpack.c.h.b16 %v6688
        %v6773 = vunpack.c.l.b16 %v6689
        %v6774 = vunpack.c.h.b16 %v6689
        %v6775 = vunpack.c.l.b16 %v6690
        %v6776 = vunpack.c.h.b16 %v6690
        %v6777 = vunpack.c.l.b16 %v6691
        %v6778 = vunpack.c.h.b16 %v6691
        %v6779 = vunpack.c.l.b16 %v6692
        %v6780 = vunpack.c.h.b16 %v6692
        %v6781 = vunpack.c.l.b16 %v6693
        %v6782 = vunpack.c.h.b16 %v6693
        %v6783 = vunpack.c.l.b16 %v6694
        %v6784 = vunpack.c.h.b16 %v6694
        %v6785 = vunpack.c.l.b16 %v6695
        %v6786 = vunpack.c.h.b16 %v6695
        %v6787 = vunpack.c.l.b16 %v6696
        %v6788 = vunpack.c.h.b16 %v6696
        %v6789 = vunpack.c.l.b16 %v6697
        %v6790 = vunpack.c.h.b16 %v6697
        %v6791 = vunpack.c.l.b16 %v6698
        %v6792 = vunpack.c.h.b16 %v6698
        %v6793 = vunpack.c.l.b16 %v6699
        %v6794 = vunpack.c.h.b16 %v6699
        %v6795 = vunpack.c.l.b16 %v6700
        %v6796 = vunpack.c.h.b16 %v6700
        %v6797 = vpack.c.b16 %v6767, %v6765
        %v6798 = vpack.c.b16 %v6768, %v6766
        %v6799 = vpack.c.b16 %v6771, %v6769
        %v6800 = vpack.c.b16 %v6772, %v6770
        %v6801 = vpack.c.b16 %v6775, %v6773
        %v6802 = vpack.c.b16 %v6776, %v6774
        %v6803 = vpack.c.b16 %v6779, %v6777
        %v6804 = vpack.c.b16 %v6780, %v6778
        %v6805 = vpack.c.b16 %v6783, %v6781
        %v6806 = vpack.c.b16 %v6784, %v6782
        %v6807 = vpack.c.b16 %v6787, %v6785
        %v6808 = vpack.c.b16 %v6788, %v6786
        %v6809 = vpack.c.b16 %v6791, %v6789
        %v6810 = vpack.c.b16 %v6792, %v6790
        %v6811 = vpack.c.b16 %v6795, %v6793
        %v6812 = vpack.c.b16 %v6796, %v6794
        %6829 = vmatprep.subr.bf16.mxu0 %v6812
        %6830 = vmatpush1.bf16.msra.mxu0 %v6811
        %6831 = vmatprep.subr.bf16.mxu0 %v6810
        %6832 = vmatpush1.bf16.msra.mxu0 %v6809
        %6833 = vmatprep.subr.bf16.mxu0 %v6808
        %6834 = vmatpush1.bf16.msra.mxu0 %v6807
        %6835 = vmatprep.subr.bf16.mxu0 %v6806
        %6836 = vmatpush1.bf16.msra.mxu0 %v6805
        %6837 = vmatprep.subr.bf16.mxu0 %v6804
        %6838 = vmatpush1.bf16.msra.mxu0 %v6803
        %6839 = vmatprep.subr.bf16.mxu0 %v6802
        %6840 = vmatpush1.bf16.msra.mxu0 %v6801
        %6841 = vmatprep.subr.bf16.mxu0 %v6800
        %6842 = vmatpush1.bf16.msra.mxu0 %v6799
        %6843 = vmatprep.subr.bf16.mxu0 %v6798
        %6844 = vmatpush1.bf16.msra.mxu0 %v6797
        %6845 = vmatprep.subr.bf16.mxu0 0
        %6846 = vmatpush2.bf16.msra.mxu0 0
        %6847 = vmatprep.subr.bf16.mxu0 0
        %6848 = vmatpush2.bf16.msra.mxu0 0
        %6849 = vmatprep.subr.bf16.mxu0 0
        %6850 = vmatpush2.bf16.msra.mxu0 0
        %6851 = vmatprep.subr.bf16.mxu0 0
        %6852 = vmatpush2.bf16.msra.mxu0 0
        %6853 = vmatprep.subr.bf16.mxu0 0
        %6854 = vmatpush2.bf16.msra.mxu0 0
        %6855 = vmatprep.subr.bf16.mxu0 0
        %6856 = vmatpush2.bf16.msra.mxu0 0
        %6857 = vmatprep.subr.bf16.mxu0 0
        %6858 = vmatpush2.bf16.msra.mxu0 0
        %6859 = vmatprep.subr.bf16.mxu0 0
        %6860 = vmatpush2.bf16.msra.mxu0 0
        %6861 = vmatprep.mubr.bf16.mxu0 0
        %6862 = vmatmul.mubr.bf16.gmra.mxu0 %v6733
        %v6863 = vpop.f32.mrf.mxu0
        %v6864 = vadd.f32 0.0, %v6863
        %v6865 = vpop.f32.mrf.mxu0
        %v6866 = vadd.f32 0.0, %v6865
        %v6867 = vpop.f32.mrf.mxu0
        %v6868 = vadd.f32 0.0, %v6867
        %v6869 = vpop.f32.mrf.mxu0
        %v6870 = vadd.f32 0.0, %v6869
        %6871 = vmatprep.mubr.bf16.mxu0 0
        %6872 = vmatmul.mubr.bf16.gmra.mxu0 %v6734
        %v6873 = vpop.f32.mrf.mxu0
        %v6874 = vadd.f32 0.0, %v6873
        %v6875 = vpop.f32.mrf.mxu0
        %v6876 = vadd.f32 0.0, %v6875
        %v6877 = vpop.f32.mrf.mxu0
        %v6878 = vadd.f32 0.0, %v6877
        %v6879 = vpop.f32.mrf.mxu0
        %v6880 = vadd.f32 0.0, %v6879
        %6881 = vmatprep.mubr.bf16.mxu0 0
        %6882 = vmatmul.mubr.bf16.gmra.mxu0 %v6735
        %v6883 = vpop.f32.mrf.mxu0
        %v6884 = vadd.f32 0.0, %v6883
        %v6885 = vpop.f32.mrf.mxu0
        %v6886 = vadd.f32 0.0, %v6885
        %v6887 = vpop.f32.mrf.mxu0
        %v6888 = vadd.f32 0.0, %v6887
        %v6889 = vpop.f32.mrf.mxu0
        %v6890 = vadd.f32 0.0, %v6889
        %6891 = vmatprep.mubr.bf16.mxu0 0
        %6892 = vmatmul.mubr.bf16.gmra.mxu0 %v6736
        %v6893 = vpop.f32.mrf.mxu0
        %v6894 = vadd.f32 0.0, %v6893
        %v6895 = vpop.f32.mrf.mxu0
        %v6896 = vadd.f32 0.0, %v6895
        %v6897 = vpop.f32.mrf.mxu0
        %v6898 = vadd.f32 0.0, %v6897
        %v6899 = vpop.f32.mrf.mxu0
        %v6900 = vadd.f32 0.0, %v6899
        %6901 = vmatprep.mubr.bf16.mxu0 0
        %6902 = vmatmul.mubr.bf16.gmra.mxu0 %v6737
        %v6903 = vpop.f32.mrf.mxu0
        %v6904 = vadd.f32 0.0, %v6903
        %v6905 = vpop.f32.mrf.mxu0
        %v6906 = vadd.f32 0.0, %v6905
        %v6907 = vpop.f32.mrf.mxu0
        %v6908 = vadd.f32 0.0, %v6907
        %v6909 = vpop.f32.mrf.mxu0
        %v6910 = vadd.f32 0.0, %v6909
        %6911 = vmatprep.mubr.bf16.mxu0 0
        %6912 = vmatmul.mubr.bf16.gmra.mxu0 %v6738
        %v6913 = vpop.f32.mrf.mxu0
        %v6914 = vadd.f32 0.0, %v6913
        %v6915 = vpop.f32.mrf.mxu0
        %v6916 = vadd.f32 0.0, %v6915
        %v6917 = vpop.f32.mrf.mxu0
        %v6918 = vadd.f32 0.0, %v6917
        %v6919 = vpop.f32.mrf.mxu0
        %v6920 = vadd.f32 0.0, %v6919
        %6921 = vmatprep.mubr.bf16.mxu0 0
        %6922 = vmatmul.mubr.bf16.gmra.mxu0 %v6739
        %v6923 = vpop.f32.mrf.mxu0
        %v6924 = vadd.f32 0.0, %v6923
        %v6925 = vpop.f32.mrf.mxu0
        %v6926 = vadd.f32 0.0, %v6925
        %v6927 = vpop.f32.mrf.mxu0
        %v6928 = vadd.f32 0.0, %v6927
        %v6929 = vpop.f32.mrf.mxu0
        %v6930 = vadd.f32 0.0, %v6929
        %6931 = vmatprep.mubr.bf16.mxu0 0
        %6932 = vmatmul.mubr.bf16.gmra.mxu0 %v6740
        %v6933 = vpop.f32.mrf.mxu0
        %v6934 = vadd.f32 0.0, %v6933
        %v6935 = vpop.f32.mrf.mxu0
        %v6936 = vadd.f32 0.0, %v6935
        %v6937 = vpop.f32.mrf.mxu0
        %v6938 = vadd.f32 0.0, %v6937
        %v6939 = vpop.f32.mrf.mxu0
        %v6940 = vadd.f32 0.0, %v6939
        %6941 = vdwg.mxu0
        %v6942 = vadd.f32 %v6653, %v6864
        %v6943 = vadd.f32 %v6654, %v6866
        %v6944 = vadd.f32 %v6655, %v6868
        %v6945 = vadd.f32 %v6656, %v6870
        %v6946 = vadd.f32 %v6657, %v6874
        %v6947 = vadd.f32 %v6658, %v6876
        %v6948 = vadd.f32 %v6659, %v6878
        %v6949 = vadd.f32 %v6660, %v6880
        %v6950 = vadd.f32 %v6661, %v6884
        %v6951 = vadd.f32 %v6662, %v6886
        %v6952 = vadd.f32 %v6663, %v6888
        %v6953 = vadd.f32 %v6664, %v6890
        %v6954 = vadd.f32 %v6665, %v6894
        %v6955 = vadd.f32 %v6666, %v6896
        %v6956 = vadd.f32 %v6667, %v6898
        %v6957 = vadd.f32 %v6668, %v6900
        %v6958 = vadd.f32 %v6669, %v6904
        %v6959 = vadd.f32 %v6670, %v6906
        %v6960 = vadd.f32 %v6671, %v6908
        %v6961 = vadd.f32 %v6672, %v6910
        %v6962 = vadd.f32 %v6673, %v6914
        %v6963 = vadd.f32 %v6674, %v6916
        %v6964 = vadd.f32 %v6675, %v6918
        %v6965 = vadd.f32 %v6676, %v6920
        %v6966 = vadd.f32 %v6677, %v6924
        %v6967 = vadd.f32 %v6678, %v6926
        %v6968 = vadd.f32 %v6679, %v6928
        %v6969 = vadd.f32 %v6680, %v6930
        %v6970 = vadd.f32 %v6681, %v6934
        %v6971 = vadd.f32 %v6682, %v6936
        %v6972 = vadd.f32 %v6683, %v6938
        %v6973 = vadd.f32 %v6684, %v6940
        %6974 = vst [vmem:[#allocation3] sm:$0xff] %v6942
        %6975 = vst [vmem:[#allocation3 + $0x8] sm:$0xff] %v6943
        %6976 = vst [vmem:[#allocation3 + $0x10] sm:$0xff] %v6944
        %6977 = vst [vmem:[#allocation3 + $0x18] sm:$0xff] %v6945
        %6978 = vst [vmem:[#allocation3 + $0x20] sm:$0xff] %v6946
        %6979 = vst [vmem:[#allocation3 + $0x28] sm:$0xff] %v6947
        %6980 = vst [vmem:[#allocation3 + $0x30] sm:$0xff] %v6948
        %6981 = vst [vmem:[#allocation3 + $0x38] sm:$0xff] %v6949
        %6982 = vst [vmem:[#allocation3 + $0x40] sm:$0xff] %v6950
        %6983 = vst [vmem:[#allocation3 + $0x48] sm:$0xff] %v6951
        %6984 = vst [vmem:[#allocation3 + $0x50] sm:$0xff] %v6952
        %6985 = vst [vmem:[#allocation3 + $0x58] sm:$0xff] %v6953
        %6986 = vst [vmem:[#allocation3 + $0x60] sm:$0xff] %v6954
        %6987 = vst [vmem:[#allocation3 + $0x68] sm:$0xff] %v6955
        %6988 = vst [vmem:[#allocation3 + $0x70] sm:$0xff] %v6956
        %6989 = vst [vmem:[#allocation3 + $0x78] sm:$0xff] %v6957
        %6990 = vst [vmem:[#allocation3 + $0x80] sm:$0xff] %v6958
        %6991 = vst [vmem:[#allocation3 + $0x88] sm:$0xff] %v6959
        %6992 = vst [vmem:[#allocation3 + $0x90] sm:$0xff] %v6960
        %6993 = vst [vmem:[#allocation3 + $0x98] sm:$0xff] %v6961
        %6994 = vst [vmem:[#allocation3 + $0xa0] sm:$0xff] %v6962
        %6995 = vst [vmem:[#allocation3 + $0xa8] sm:$0xff] %v6963
        %6996 = vst [vmem:[#allocation3 + $0xb0] sm:$0xff] %v6964
        %6997 = vst [vmem:[#allocation3 + $0xb8] sm:$0xff] %v6965
        %6998 = vst [vmem:[#allocation3 + $0xc0] sm:$0xff] %v6966
        %6999 = vst [vmem:[#allocation3 + $0xc8] sm:$0xff] %v6967
        %7000 = vst [vmem:[#allocation3 + $0xd0] sm:$0xff] %v6968
        %7001 = vst [vmem:[#allocation3 + $0xd8] sm:$0xff] %v6969
        %7002 = vst [vmem:[#allocation3 + $0xe0] sm:$0xff] %v6970
        %7003 = vst [vmem:[#allocation3 + $0xe8] sm:$0xff] %v6971
        %7004 = vst [vmem:[#allocation3 + $0xf0] sm:$0xff] %v6972
        %7005 = vst [vmem:[#allocation3 + $0xf8] sm:$0xff] %v6973
        %v7007 = vshrl.u32 %v6629, 16
        %v7009 = vrot.slane %v7007, 4
        %v7010 = vshll.u32 %v6629, 16
        %v7012 = vrot.slane %v7010, 5
        %v7013 = vor.u32 %v7009, %v7012
        %v7014 = vrot.slane %v7013, 4
        %v7016 = vshll.u32 %v6630, 16
        %v7018 = vrot.slane %v7016, 5
        %v7019 = vsel %vm1293, %v7014, %v7018
        %v7020 = vshrl.u32 %v6630, 16
        %v7022 = vrot.slane %v7020, 4
        %v7023 = vor.u32 %v7022, %v7018
        %v7024 = vrot.slane %v7023, 4
        %v7026 = vshll.u32 %v6631, 16
        %v7028 = vrot.slane %v7026, 5
        %v7029 = vsel %vm1293, %v7024, %v7028
        %v7031 = vshrl.u32 %v6632, 16
        %v7033 = vrot.slane %v7031, 4
        %v7034 = vshll.u32 %v6632, 16
        %v7036 = vrot.slane %v7034, 5
        %v7037 = vor.u32 %v7033, %v7036
        %v7038 = vrot.slane %v7037, 4
        %v7040 = vshll.u32 %v6633, 16
        %v7042 = vrot.slane %v7040, 5
        %v7043 = vsel %vm1293, %v7038, %v7042
        %v7044 = vshrl.u32 %v6633, 16
        %v7046 = vrot.slane %v7044, 4
        %v7047 = vor.u32 %v7046, %v7042
        %v7048 = vrot.slane %v7047, 4
        %v7050 = vshll.u32 %v6634, 16
        %v7052 = vrot.slane %v7050, 5
        %v7053 = vsel %vm1293, %v7048, %v7052
        %v7055 = vshrl.u32 %v6635, 16
        %v7057 = vrot.slane %v7055, 4
        %v7058 = vshll.u32 %v6635, 16
        %v7060 = vrot.slane %v7058, 5
        %v7061 = vor.u32 %v7057, %v7060
        %v7062 = vrot.slane %v7061, 4
        %v7064 = vshll.u32 %v6636, 16
        %v7066 = vrot.slane %v7064, 5
        %v7067 = vsel %vm1293, %v7062, %v7066
        %v7068 = vshrl.u32 %v6636, 16
        %v7070 = vrot.slane %v7068, 4
        %v7071 = vor.u32 %v7070, %v7066
        %v7072 = vrot.slane %v7071, 4
        %v7074 = vshll.u32 %v6637, 16
        %v7076 = vrot.slane %v7074, 5
        %v7077 = vsel %vm1293, %v7072, %v7076
        %v7079 = vshrl.u32 %v6638, 16
        %v7081 = vrot.slane %v7079, 4
        %v7082 = vshll.u32 %v6638, 16
        %v7084 = vrot.slane %v7082, 5
        %v7085 = vor.u32 %v7081, %v7084
        %v7086 = vrot.slane %v7085, 4
        %v7088 = vshll.u32 %v6639, 16
        %v7090 = vrot.slane %v7088, 5
        %v7091 = vsel %vm1293, %v7086, %v7090
        %v7092 = vshrl.u32 %v6639, 16
        %v7094 = vrot.slane %v7092, 4
        %v7095 = vor.u32 %v7094, %v7090
        %v7096 = vrot.slane %v7095, 4
        %v7098 = vshll.u32 %v6640, 16
        %v7100 = vrot.slane %v7098, 5
        %v7101 = vsel %vm1293, %v7096, %v7100
        %v7103 = vshrl.u32 %v6641, 16
        %v7105 = vrot.slane %v7103, 4
        %v7106 = vshll.u32 %v6641, 16
        %v7108 = vrot.slane %v7106, 5
        %v7109 = vor.u32 %v7105, %v7108
        %v7110 = vrot.slane %v7109, 4
        %v7112 = vshll.u32 %v6642, 16
        %v7114 = vrot.slane %v7112, 5
        %v7115 = vsel %vm1293, %v7110, %v7114
        %v7116 = vshrl.u32 %v6642, 16
        %v7118 = vrot.slane %v7116, 4
        %v7119 = vor.u32 %v7118, %v7114
        %v7120 = vrot.slane %v7119, 4
        %v7122 = vshll.u32 %v6643, 16
        %v7124 = vrot.slane %v7122, 5
        %v7125 = vsel %vm1293, %v7120, %v7124
        %v7127 = vshrl.u32 %v6644, 16
        %v7129 = vrot.slane %v7127, 4
        %v7130 = vshll.u32 %v6644, 16
        %v7132 = vrot.slane %v7130, 5
        %v7133 = vor.u32 %v7129, %v7132
        %v7134 = vrot.slane %v7133, 4
        %v7136 = vshll.u32 %v6645, 16
        %v7138 = vrot.slane %v7136, 5
        %v7139 = vsel %vm1293, %v7134, %v7138
        %v7140 = vshrl.u32 %v6645, 16
        %v7142 = vrot.slane %v7140, 4
        %v7143 = vor.u32 %v7142, %v7138
        %v7144 = vrot.slane %v7143, 4
        %v7146 = vshll.u32 %v6646, 16
        %v7148 = vrot.slane %v7146, 5
        %v7149 = vsel %vm1293, %v7144, %v7148
        %v7151 = vshrl.u32 %v6647, 16
        %v7153 = vrot.slane %v7151, 4
        %v7154 = vshll.u32 %v6647, 16
        %v7156 = vrot.slane %v7154, 5
        %v7157 = vor.u32 %v7153, %v7156
        %v7158 = vrot.slane %v7157, 4
        %v7160 = vshll.u32 %v6648, 16
        %v7162 = vrot.slane %v7160, 5
        %v7163 = vsel %vm1293, %v7158, %v7162
        %v7164 = vshrl.u32 %v6648, 16
        %v7166 = vrot.slane %v7164, 4
        %v7167 = vor.u32 %v7166, %v7162
        %v7168 = vrot.slane %v7167, 4
        %v7170 = vshll.u32 %v6649, 16
        %v7172 = vrot.slane %v7170, 5
        %v7173 = vsel %vm1293, %v7168, %v7172
        %v7175 = vshrl.u32 %v6650, 16
        %v7177 = vrot.slane %v7175, 4
        %v7178 = vshll.u32 %v6650, 16
        %v7180 = vrot.slane %v7178, 5
        %v7181 = vor.u32 %v7177, %v7180
        %v7182 = vrot.slane %v7181, 4
        %v7184 = vshll.u32 %v6651, 16
        %v7186 = vrot.slane %v7184, 5
        %v7187 = vsel %vm1293, %v7182, %v7186
        %v7188 = vshrl.u32 %v6651, 16
        %v7190 = vrot.slane %v7188, 4
        %v7191 = vor.u32 %v7190, %v7186
        %v7192 = vrot.slane %v7191, 4
        %v7194 = vshll.u32 %v6652, 16
        %v7196 = vrot.slane %v7194, 5
        %v7197 = vsel %vm1293, %v7192, %v7196
        %v7198 = vld [vmem:[#allocation3] sm:$0xff]
        %v7199 = vld [vmem:[#allocation3 + $0x8] sm:$0xff]
        %v7200 = vld [vmem:[#allocation3 + $0x10] sm:$0xff]
        %v7201 = vld [vmem:[#allocation3 + $0x18] sm:$0xff]
        %v7202 = vld [vmem:[#allocation3 + $0x20] sm:$0xff]
        %v7203 = vld [vmem:[#allocation3 + $0x28] sm:$0xff]
        %v7204 = vld [vmem:[#allocation3 + $0x30] sm:$0xff]
        %v7205 = vld [vmem:[#allocation3 + $0x38] sm:$0xff]
        %v7206 = vld [vmem:[#allocation3 + $0x40] sm:$0xff]
        %v7207 = vld [vmem:[#allocation3 + $0x48] sm:$0xff]
        %v7208 = vld [vmem:[#allocation3 + $0x50] sm:$0xff]
        %v7209 = vld [vmem:[#allocation3 + $0x58] sm:$0xff]
        %v7210 = vld [vmem:[#allocation3 + $0x60] sm:$0xff]
        %v7211 = vld [vmem:[#allocation3 + $0x68] sm:$0xff]
        %v7212 = vld [vmem:[#allocation3 + $0x70] sm:$0xff]
        %v7213 = vld [vmem:[#allocation3 + $0x78] sm:$0xff]
        %v7214 = vld [vmem:[#allocation3 + $0x80] sm:$0xff]
        %v7215 = vld [vmem:[#allocation3 + $0x88] sm:$0xff]
        %v7216 = vld [vmem:[#allocation3 + $0x90] sm:$0xff]
        %v7217 = vld [vmem:[#allocation3 + $0x98] sm:$0xff]
        %v7218 = vld [vmem:[#allocation3 + $0xa0] sm:$0xff]
        %v7219 = vld [vmem:[#allocation3 + $0xa8] sm:$0xff]
        %v7220 = vld [vmem:[#allocation3 + $0xb0] sm:$0xff]
        %v7221 = vld [vmem:[#allocation3 + $0xb8] sm:$0xff]
        %v7222 = vld [vmem:[#allocation3 + $0xc0] sm:$0xff]
        %v7223 = vld [vmem:[#allocation3 + $0xc8] sm:$0xff]
        %v7224 = vld [vmem:[#allocation3 + $0xd0] sm:$0xff]
        %v7225 = vld [vmem:[#allocation3 + $0xd8] sm:$0xff]
        %v7226 = vld [vmem:[#allocation3 + $0xe0] sm:$0xff]
        %v7227 = vld [vmem:[#allocation3 + $0xe8] sm:$0xff]
        %v7228 = vld [vmem:[#allocation3 + $0xf0] sm:$0xff]
        %v7229 = vld [vmem:[#allocation3 + $0xf8] sm:$0xff]
        %v7230 = vld [vmem:[%s2831] sm:$0xff]
        %v7231 = vld [vmem:[%s2831 + $0x8] sm:$0xff]
        %v7232 = vld [vmem:[%s2831 + $0x10] sm:$0xff]
        %v7233 = vld [vmem:[%s2831 + $0x18] sm:$0xff]
        %v7234 = vld [vmem:[%s2831 + $0x20] sm:$0xff]
        %v7235 = vld [vmem:[%s2831 + $0x28] sm:$0xff]
        %v7236 = vld [vmem:[%s2831 + $0x30] sm:$0xff]
        %v7237 = vld [vmem:[%s2831 + $0x38] sm:$0xff]
        %v7238 = vld [vmem:[%s2831 + $0x40] sm:$0xff]
        %v7239 = vld [vmem:[%s2831 + $0x48] sm:$0xff]
        %v7240 = vld [vmem:[%s2831 + $0x50] sm:$0xff]
        %v7241 = vld [vmem:[%s2831 + $0x58] sm:$0xff]
        %v7242 = vld [vmem:[%s2831 + $0x60] sm:$0xff]
        %v7243 = vld [vmem:[%s2831 + $0x68] sm:$0xff]
        %v7244 = vld [vmem:[%s2831 + $0x70] sm:$0xff]
        %v7245 = vld [vmem:[%s2831 + $0x78] sm:$0xff]
        %v7246 = vunpack.c.l.b16 %v7019
        %v7247 = vunpack.c.l.b16 %v7029
        %v7248 = vunpack.c.l.b16 %v7043
        %v7249 = vunpack.c.l.b16 %v7053
        %v7250 = vunpack.c.l.b16 %v7067
        %v7251 = vunpack.c.l.b16 %v7077
        %v7252 = vunpack.c.l.b16 %v7091
        %v7253 = vunpack.c.l.b16 %v7101
        %v7254 = vunpack.c.l.b16 %v7115
        %v7255 = vunpack.c.l.b16 %v7125
        %v7256 = vunpack.c.l.b16 %v7139
        %v7257 = vunpack.c.l.b16 %v7149
        %v7258 = vunpack.c.l.b16 %v7163
        %v7259 = vunpack.c.l.b16 %v7173
        %v7260 = vunpack.c.l.b16 %v7187
        %v7261 = vunpack.c.l.b16 %v7197
        %v7262 = vpack.c.b16 %v7247, %v7246
        %v7263 = vpack.c.b16 %v7249, %v7248
        %v7264 = vpack.c.b16 %v7251, %v7250
        %v7265 = vpack.c.b16 %v7253, %v7252
        %v7266 = vpack.c.b16 %v7255, %v7254
        %v7267 = vpack.c.b16 %v7257, %v7256
        %v7268 = vpack.c.b16 %v7259, %v7258
        %v7269 = vpack.c.b16 %v7261, %v7260
        %v7294 = vunpack.c.l.b16 %v7230
        %v7295 = vunpack.c.h.b16 %v7230
        %v7296 = vunpack.c.l.b16 %v7231
        %v7297 = vunpack.c.h.b16 %v7231
        %v7298 = vunpack.c.l.b16 %v7232
        %v7299 = vunpack.c.h.b16 %v7232
        %v7300 = vunpack.c.l.b16 %v7233
        %v7301 = vunpack.c.h.b16 %v7233
        %v7302 = vunpack.c.l.b16 %v7234
        %v7303 = vunpack.c.h.b16 %v7234
        %v7304 = vunpack.c.l.b16 %v7235
        %v7305 = vunpack.c.h.b16 %v7235
        %v7306 = vunpack.c.l.b16 %v7236
        %v7307 = vunpack.c.h.b16 %v7236
        %v7308 = vunpack.c.l.b16 %v7237
        %v7309 = vunpack.c.h.b16 %v7237
        %v7310 = vunpack.c.l.b16 %v7238
        %v7311 = vunpack.c.h.b16 %v7238
        %v7312 = vunpack.c.l.b16 %v7239
        %v7313 = vunpack.c.h.b16 %v7239
        %v7314 = vunpack.c.l.b16 %v7240
        %v7315 = vunpack.c.h.b16 %v7240
        %v7316 = vunpack.c.l.b16 %v7241
        %v7317 = vunpack.c.h.b16 %v7241
        %v7318 = vunpack.c.l.b16 %v7242
        %v7319 = vunpack.c.h.b16 %v7242
        %v7320 = vunpack.c.l.b16 %v7243
        %v7321 = vunpack.c.h.b16 %v7243
        %v7322 = vunpack.c.l.b16 %v7244
        %v7323 = vunpack.c.h.b16 %v7244
        %v7324 = vunpack.c.l.b16 %v7245
        %v7325 = vunpack.c.h.b16 %v7245
        %v7326 = vpack.c.b16 %v7296, %v7294
        %v7327 = vpack.c.b16 %v7297, %v7295
        %v7328 = vpack.c.b16 %v7300, %v7298
        %v7329 = vpack.c.b16 %v7301, %v7299
        %v7330 = vpack.c.b16 %v7304, %v7302
        %v7331 = vpack.c.b16 %v7305, %v7303
        %v7332 = vpack.c.b16 %v7308, %v7306
        %v7333 = vpack.c.b16 %v7309, %v7307
        %v7334 = vpack.c.b16 %v7312, %v7310
        %v7335 = vpack.c.b16 %v7313, %v7311
        %v7336 = vpack.c.b16 %v7316, %v7314
        %v7337 = vpack.c.b16 %v7317, %v7315
        %v7338 = vpack.c.b16 %v7320, %v7318
        %v7339 = vpack.c.b16 %v7321, %v7319
        %v7340 = vpack.c.b16 %v7324, %v7322
        %v7341 = vpack.c.b16 %v7325, %v7323
        %7358 = vmatprep.subr.bf16.mxu0 %v7341
        %7359 = vmatpush1.bf16.msra.mxu0 %v7340
        %7360 = vmatprep.subr.bf16.mxu0 %v7339
        %7361 = vmatpush1.bf16.msra.mxu0 %v7338
        %7362 = vmatprep.subr.bf16.mxu0 %v7337
        %7363 = vmatpush1.bf16.msra.mxu0 %v7336
        %7364 = vmatprep.subr.bf16.mxu0 %v7335
        %7365 = vmatpush1.bf16.msra.mxu0 %v7334
        %7366 = vmatprep.subr.bf16.mxu0 %v7333
        %7367 = vmatpush1.bf16.msra.mxu0 %v7332
        %7368 = vmatprep.subr.bf16.mxu0 %v7331
        %7369 = vmatpush1.bf16.msra.mxu0 %v7330
        %7370 = vmatprep.subr.bf16.mxu0 %v7329
        %7371 = vmatpush1.bf16.msra.mxu0 %v7328
        %7372 = vmatprep.subr.bf16.mxu0 %v7327
        %7373 = vmatpush1.bf16.msra.mxu0 %v7326
        %7374 = vmatprep.subr.bf16.mxu0 0
        %7375 = vmatpush2.bf16.msra.mxu0 0
        %7376 = vmatprep.subr.bf16.mxu0 0
        %7377 = vmatpush2.bf16.msra.mxu0 0
        %7378 = vmatprep.subr.bf16.mxu0 0
        %7379 = vmatpush2.bf16.msra.mxu0 0
        %7380 = vmatprep.subr.bf16.mxu0 0
        %7381 = vmatpush2.bf16.msra.mxu0 0
        %7382 = vmatprep.subr.bf16.mxu0 0
        %7383 = vmatpush2.bf16.msra.mxu0 0
        %7384 = vmatprep.subr.bf16.mxu0 0
        %7385 = vmatpush2.bf16.msra.mxu0 0
        %7386 = vmatprep.subr.bf16.mxu0 0
        %7387 = vmatpush2.bf16.msra.mxu0 0
        %7388 = vmatprep.subr.bf16.mxu0 0
        %7389 = vmatpush2.bf16.msra.mxu0 0
        %7390 = vmatprep.mubr.bf16.mxu0 0
        %7391 = vmatmul.mubr.bf16.gmra.mxu0 %v7262
        %v7392 = vpop.f32.mrf.mxu0
        %v7393 = vadd.f32 0.0, %v7392
        %v7394 = vpop.f32.mrf.mxu0
        %v7395 = vadd.f32 0.0, %v7394
        %v7396 = vpop.f32.mrf.mxu0
        %v7397 = vadd.f32 0.0, %v7396
        %v7398 = vpop.f32.mrf.mxu0
        %v7399 = vadd.f32 0.0, %v7398
        %7400 = vmatprep.mubr.bf16.mxu0 0
        %7401 = vmatmul.mubr.bf16.gmra.mxu0 %v7263
        %v7402 = vpop.f32.mrf.mxu0
        %v7403 = vadd.f32 0.0, %v7402
        %v7404 = vpop.f32.mrf.mxu0
        %v7405 = vadd.f32 0.0, %v7404
        %v7406 = vpop.f32.mrf.mxu0
        %v7407 = vadd.f32 0.0, %v7406
        %v7408 = vpop.f32.mrf.mxu0
        %v7409 = vadd.f32 0.0, %v7408
        %7410 = vmatprep.mubr.bf16.mxu0 0
        %7411 = vmatmul.mubr.bf16.gmra.mxu0 %v7264
        %v7412 = vpop.f32.mrf.mxu0
        %v7413 = vadd.f32 0.0, %v7412
        %v7414 = vpop.f32.mrf.mxu0
        %v7415 = vadd.f32 0.0, %v7414
        %v7416 = vpop.f32.mrf.mxu0
        %v7417 = vadd.f32 0.0, %v7416
        %v7418 = vpop.f32.mrf.mxu0
        %v7419 = vadd.f32 0.0, %v7418
        %7420 = vmatprep.mubr.bf16.mxu0 0
        %7421 = vmatmul.mubr.bf16.gmra.mxu0 %v7265
        %v7422 = vpop.f32.mrf.mxu0
        %v7423 = vadd.f32 0.0, %v7422
        %v7424 = vpop.f32.mrf.mxu0
        %v7425 = vadd.f32 0.0, %v7424
        %v7426 = vpop.f32.mrf.mxu0
        %v7427 = vadd.f32 0.0, %v7426
        %v7428 = vpop.f32.mrf.mxu0
        %v7429 = vadd.f32 0.0, %v7428
        %7430 = vmatprep.mubr.bf16.mxu0 0
        %7431 = vmatmul.mubr.bf16.gmra.mxu0 %v7266
        %v7432 = vpop.f32.mrf.mxu0
        %v7433 = vadd.f32 0.0, %v7432
        %v7434 = vpop.f32.mrf.mxu0
        %v7435 = vadd.f32 0.0, %v7434
        %v7436 = vpop.f32.mrf.mxu0
        %v7437 = vadd.f32 0.0, %v7436
        %v7438 = vpop.f32.mrf.mxu0
        %v7439 = vadd.f32 0.0, %v7438
        %7440 = vmatprep.mubr.bf16.mxu0 0
        %7441 = vmatmul.mubr.bf16.gmra.mxu0 %v7267
        %v7442 = vpop.f32.mrf.mxu0
        %v7443 = vadd.f32 0.0, %v7442
        %v7444 = vpop.f32.mrf.mxu0
        %v7445 = vadd.f32 0.0, %v7444
        %v7446 = vpop.f32.mrf.mxu0
        %v7447 = vadd.f32 0.0, %v7446
        %v7448 = vpop.f32.mrf.mxu0
        %v7449 = vadd.f32 0.0, %v7448
        %7450 = vmatprep.mubr.bf16.mxu0 0
        %7451 = vmatmul.mubr.bf16.gmra.mxu0 %v7268
        %v7452 = vpop.f32.mrf.mxu0
        %v7453 = vadd.f32 0.0, %v7452
        %v7454 = vpop.f32.mrf.mxu0
        %v7455 = vadd.f32 0.0, %v7454
        %v7456 = vpop.f32.mrf.mxu0
        %v7457 = vadd.f32 0.0, %v7456
        %v7458 = vpop.f32.mrf.mxu0
        %v7459 = vadd.f32 0.0, %v7458
        %7460 = vmatprep.mubr.bf16.mxu0 0
        %7461 = vmatmul.mubr.bf16.gmra.mxu0 %v7269
        %v7462 = vpop.f32.mrf.mxu0
        %v7463 = vadd.f32 0.0, %v7462
        %v7464 = vpop.f32.mrf.mxu0
        %v7465 = vadd.f32 0.0, %v7464
        %v7466 = vpop.f32.mrf.mxu0
        %v7467 = vadd.f32 0.0, %v7466
        %v7468 = vpop.f32.mrf.mxu0
        %v7469 = vadd.f32 0.0, %v7468
        %7470 = vdwg.mxu0
        %v7471 = vadd.f32 %v7198, %v7393
        %v7472 = vadd.f32 %v7199, %v7395
        %v7473 = vadd.f32 %v7200, %v7397
        %v7474 = vadd.f32 %v7201, %v7399
        %v7475 = vadd.f32 %v7202, %v7403
        %v7476 = vadd.f32 %v7203, %v7405
        %v7477 = vadd.f32 %v7204, %v7407
        %v7478 = vadd.f32 %v7205, %v7409
        %v7479 = vadd.f32 %v7206, %v7413
        %v7480 = vadd.f32 %v7207, %v7415
        %v7481 = vadd.f32 %v7208, %v7417
        %v7482 = vadd.f32 %v7209, %v7419
        %v7483 = vadd.f32 %v7210, %v7423
        %v7484 = vadd.f32 %v7211, %v7425
        %v7485 = vadd.f32 %v7212, %v7427
        %v7486 = vadd.f32 %v7213, %v7429
        %v7487 = vadd.f32 %v7214, %v7433
        %v7488 = vadd.f32 %v7215, %v7435
        %v7489 = vadd.f32 %v7216, %v7437
        %v7490 = vadd.f32 %v7217, %v7439
        %v7491 = vadd.f32 %v7218, %v7443
        %v7492 = vadd.f32 %v7219, %v7445
        %v7493 = vadd.f32 %v7220, %v7447
        %v7494 = vadd.f32 %v7221, %v7449
        %v7495 = vadd.f32 %v7222, %v7453
        %v7496 = vadd.f32 %v7223, %v7455
        %v7497 = vadd.f32 %v7224, %v7457
        %v7498 = vadd.f32 %v7225, %v7459
        %v7499 = vadd.f32 %v7226, %v7463
        %v7500 = vadd.f32 %v7227, %v7465
        %v7501 = vadd.f32 %v7228, %v7467
        %v7502 = vadd.f32 %v7229, %v7469
        %7503 = vst [vmem:[#allocation3] sm:$0xff] %v7471
        %7504 = vst [vmem:[#allocation3 + $0x8] sm:$0xff] %v7472
        %7505 = vst [vmem:[#allocation3 + $0x10] sm:$0xff] %v7473
        %7506 = vst [vmem:[#allocation3 + $0x18] sm:$0xff] %v7474
        %7507 = vst [vmem:[#allocation3 + $0x20] sm:$0xff] %v7475
        %7508 = vst [vmem:[#allocation3 + $0x28] sm:$0xff] %v7476
        %7509 = vst [vmem:[#allocation3 + $0x30] sm:$0xff] %v7477
        %7510 = vst [vmem:[#allocation3 + $0x38] sm:$0xff] %v7478
        %7511 = vst [vmem:[#allocation3 + $0x40] sm:$0xff] %v7479
        %7512 = vst [vmem:[#allocation3 + $0x48] sm:$0xff] %v7480
        %7513 = vst [vmem:[#allocation3 + $0x50] sm:$0xff] %v7481
        %7514 = vst [vmem:[#allocation3 + $0x58] sm:$0xff] %v7482
        %7515 = vst [vmem:[#allocation3 + $0x60] sm:$0xff] %v7483
        %7516 = vst [vmem:[#allocation3 + $0x68] sm:$0xff] %v7484
        %7517 = vst [vmem:[#allocation3 + $0x70] sm:$0xff] %v7485
        %7518 = vst [vmem:[#allocation3 + $0x78] sm:$0xff] %v7486
        %7519 = vst [vmem:[#allocation3 + $0x80] sm:$0xff] %v7487
        %7520 = vst [vmem:[#allocation3 + $0x88] sm:$0xff] %v7488
        %7521 = vst [vmem:[#allocation3 + $0x90] sm:$0xff] %v7489
        %7522 = vst [vmem:[#allocation3 + $0x98] sm:$0xff] %v7490
        %7523 = vst [vmem:[#allocation3 + $0xa0] sm:$0xff] %v7491
        %7524 = vst [vmem:[#allocation3 + $0xa8] sm:$0xff] %v7492
        %7525 = vst [vmem:[#allocation3 + $0xb0] sm:$0xff] %v7493
        %7526 = vst [vmem:[#allocation3 + $0xb8] sm:$0xff] %v7494
        %7527 = vst [vmem:[#allocation3 + $0xc0] sm:$0xff] %v7495
        %7528 = vst [vmem:[#allocation3 + $0xc8] sm:$0xff] %v7496
        %7529 = vst [vmem:[#allocation3 + $0xd0] sm:$0xff] %v7497
        %7530 = vst [vmem:[#allocation3 + $0xd8] sm:$0xff] %v7498
        %7531 = vst [vmem:[#allocation3 + $0xe0] sm:$0xff] %v7499
        %7532 = vst [vmem:[#allocation3 + $0xe8] sm:$0xff] %v7500
        %7533 = vst [vmem:[#allocation3 + $0xf0] sm:$0xff] %v7501
        %7534 = vst [vmem:[#allocation3 + $0xf8] sm:$0xff] %v7502
        %v7543 = vrot.slane %v6629, 5
        %v7544 = vrot.slane %v7543, 4
        %v7545 = vrot.slane %v6630, 5
        %v7546 = vsel %vm1834, %v7544, %v7545
        %v7547 = vrot.slane %v7545, 4
        %v7548 = vrot.slane %v6631, 5
        %v7549 = vsel %vm1834, %v7547, %v7548
        %v7550 = vrot.slane %v6632, 5
        %v7551 = vrot.slane %v7550, 4
        %v7552 = vrot.slane %v6633, 5
        %v7553 = vsel %vm1834, %v7551, %v7552
        %v7554 = vrot.slane %v7552, 4
        %v7555 = vrot.slane %v6634, 5
        %v7556 = vsel %vm1834, %v7554, %v7555
        %v7557 = vrot.slane %v6635, 5
        %v7558 = vrot.slane %v7557, 4
        %v7559 = vrot.slane %v6636, 5
        %v7560 = vsel %vm1834, %v7558, %v7559
        %v7561 = vrot.slane %v7559, 4
        %v7562 = vrot.slane %v6637, 5
        %v7563 = vsel %vm1834, %v7561, %v7562
        %v7564 = vrot.slane %v6638, 5
        %v7565 = vrot.slane %v7564, 4
        %v7566 = vrot.slane %v6639, 5
        %v7567 = vsel %vm1834, %v7565, %v7566
        %v7568 = vrot.slane %v7566, 4
        %v7569 = vrot.slane %v6640, 5
        %v7570 = vsel %vm1834, %v7568, %v7569
        %v7571 = vrot.slane %v6641, 5
        %v7572 = vrot.slane %v7571, 4
        %v7573 = vrot.slane %v6642, 5
        %v7574 = vsel %vm1834, %v7572, %v7573
        %v7575 = vrot.slane %v7573, 4
        %v7576 = vrot.slane %v6643, 5
        %v7577 = vsel %vm1834, %v7575, %v7576
        %v7578 = vrot.slane %v6644, 5
        %v7579 = vrot.slane %v7578, 4
        %v7580 = vrot.slane %v6645, 5
        %v7581 = vsel %vm1834, %v7579, %v7580
        %v7582 = vrot.slane %v7580, 4
        %v7583 = vrot.slane %v6646, 5
        %v7584 = vsel %vm1834, %v7582, %v7583
        %v7585 = vrot.slane %v6647, 5
        %v7586 = vrot.slane %v7585, 4
        %v7587 = vrot.slane %v6648, 5
        %v7588 = vsel %vm1834, %v7586, %v7587
        %v7589 = vrot.slane %v7587, 4
        %v7590 = vrot.slane %v6649, 5
        %v7591 = vsel %vm1834, %v7589, %v7590
        %v7592 = vrot.slane %v6650, 5
        %v7593 = vrot.slane %v7592, 4
        %v7594 = vrot.slane %v6651, 5
        %v7595 = vsel %vm1834, %v7593, %v7594
        %v7596 = vrot.slane %v7594, 4
        %v7597 = vrot.slane %v6652, 5
        %v7598 = vsel %vm1834, %v7596, %v7597
        %v7599 = vld [vmem:[#allocation3] sm:$0xff]
        %v7600 = vld [vmem:[#allocation3 + $0x8] sm:$0xff]
        %v7601 = vld [vmem:[#allocation3 + $0x10] sm:$0xff]
        %v7602 = vld [vmem:[#allocation3 + $0x18] sm:$0xff]
        %v7603 = vld [vmem:[#allocation3 + $0x20] sm:$0xff]
        %v7604 = vld [vmem:[#allocation3 + $0x28] sm:$0xff]
        %v7605 = vld [vmem:[#allocation3 + $0x30] sm:$0xff]
        %v7606 = vld [vmem:[#allocation3 + $0x38] sm:$0xff]
        %v7607 = vld [vmem:[#allocation3 + $0x40] sm:$0xff]
        %v7608 = vld [vmem:[#allocation3 + $0x48] sm:$0xff]
        %v7609 = vld [vmem:[#allocation3 + $0x50] sm:$0xff]
        %v7610 = vld [vmem:[#allocation3 + $0x58] sm:$0xff]
        %v7611 = vld [vmem:[#allocation3 + $0x60] sm:$0xff]
        %v7612 = vld [vmem:[#allocation3 + $0x68] sm:$0xff]
        %v7613 = vld [vmem:[#allocation3 + $0x70] sm:$0xff]
        %v7614 = vld [vmem:[#allocation3 + $0x78] sm:$0xff]
        %v7615 = vld [vmem:[#allocation3 + $0x80] sm:$0xff]
        %v7616 = vld [vmem:[#allocation3 + $0x88] sm:$0xff]
        %v7617 = vld [vmem:[#allocation3 + $0x90] sm:$0xff]
        %v7618 = vld [vmem:[#allocation3 + $0x98] sm:$0xff]
        %v7619 = vld [vmem:[#allocation3 + $0xa0] sm:$0xff]
        %v7620 = vld [vmem:[#allocation3 + $0xa8] sm:$0xff]
        %v7621 = vld [vmem:[#allocation3 + $0xb0] sm:$0xff]
        %v7622 = vld [vmem:[#allocation3 + $0xb8] sm:$0xff]
        %v7623 = vld [vmem:[#allocation3 + $0xc0] sm:$0xff]
        %v7624 = vld [vmem:[#allocation3 + $0xc8] sm:$0xff]
        %v7625 = vld [vmem:[#allocation3 + $0xd0] sm:$0xff]
        %v7626 = vld [vmem:[#allocation3 + $0xd8] sm:$0xff]
        %v7627 = vld [vmem:[#allocation3 + $0xe0] sm:$0xff]
        %v7628 = vld [vmem:[#allocation3 + $0xe8] sm:$0xff]
        %v7629 = vld [vmem:[#allocation3 + $0xf0] sm:$0xff]
        %v7630 = vld [vmem:[#allocation3 + $0xf8] sm:$0xff]
        %v7631 = vld [vmem:[%s3233] sm:$0xff]
        %v7632 = vld [vmem:[%s3233 + $0x8] sm:$0xff]
        %v7633 = vld [vmem:[%s3233 + $0x10] sm:$0xff]
        %v7634 = vld [vmem:[%s3233 + $0x18] sm:$0xff]
        %v7635 = vld [vmem:[%s3233 + $0x20] sm:$0xff]
        %v7636 = vld [vmem:[%s3233 + $0x28] sm:$0xff]
        %v7637 = vld [vmem:[%s3233 + $0x30] sm:$0xff]
        %v7638 = vld [vmem:[%s3233 + $0x38] sm:$0xff]
        %v7639 = vld [vmem:[%s3233 + $0x40] sm:$0xff]
        %v7640 = vld [vmem:[%s3233 + $0x48] sm:$0xff]
        %v7641 = vld [vmem:[%s3233 + $0x50] sm:$0xff]
        %v7642 = vld [vmem:[%s3233 + $0x58] sm:$0xff]
        %v7643 = vld [vmem:[%s3233 + $0x60] sm:$0xff]
        %v7644 = vld [vmem:[%s3233 + $0x68] sm:$0xff]
        %v7645 = vld [vmem:[%s3233 + $0x70] sm:$0xff]
        %v7646 = vld [vmem:[%s3233 + $0x78] sm:$0xff]
        %v7647 = vunpack.c.l.b16 %v7546
        %v7648 = vunpack.c.l.b16 %v7549
        %v7649 = vunpack.c.l.b16 %v7553
        %v7650 = vunpack.c.l.b16 %v7556
        %v7651 = vunpack.c.l.b16 %v7560
        %v7652 = vunpack.c.l.b16 %v7563
        %v7653 = vunpack.c.l.b16 %v7567
        %v7654 = vunpack.c.l.b16 %v7570
        %v7655 = vunpack.c.l.b16 %v7574
        %v7656 = vunpack.c.l.b16 %v7577
        %v7657 = vunpack.c.l.b16 %v7581
        %v7658 = vunpack.c.l.b16 %v7584
        %v7659 = vunpack.c.l.b16 %v7588
        %v7660 = vunpack.c.l.b16 %v7591
        %v7661 = vunpack.c.l.b16 %v7595
        %v7662 = vunpack.c.l.b16 %v7598
        %v7663 = vpack.c.b16 %v7648, %v7647
        %v7664 = vpack.c.b16 %v7650, %v7649
        %v7665 = vpack.c.b16 %v7652, %v7651
        %v7666 = vpack.c.b16 %v7654, %v7653
        %v7667 = vpack.c.b16 %v7656, %v7655
        %v7668 = vpack.c.b16 %v7658, %v7657
        %v7669 = vpack.c.b16 %v7660, %v7659
        %v7670 = vpack.c.b16 %v7662, %v7661
        %v7695 = vunpack.c.l.b16 %v7631
        %v7696 = vunpack.c.h.b16 %v7631
        %v7697 = vunpack.c.l.b16 %v7632
        %v7698 = vunpack.c.h.b16 %v7632
        %v7699 = vunpack.c.l.b16 %v7633
        %v7700 = vunpack.c.h.b16 %v7633
        %v7701 = vunpack.c.l.b16 %v7634
        %v7702 = vunpack.c.h.b16 %v7634
        %v7703 = vunpack.c.l.b16 %v7635
        %v7704 = vunpack.c.h.b16 %v7635
        %v7705 = vunpack.c.l.b16 %v7636
        %v7706 = vunpack.c.h.b16 %v7636
        %v7707 = vunpack.c.l.b16 %v7637
        %v7708 = vunpack.c.h.b16 %v7637
        %v7709 = vunpack.c.l.b16 %v7638
        %v7710 = vunpack.c.h.b16 %v7638
        %v7711 = vunpack.c.l.b16 %v7639
        %v7712 = vunpack.c.h.b16 %v7639
        %v7713 = vunpack.c.l.b16 %v7640
        %v7714 = vunpack.c.h.b16 %v7640
        %v7715 = vunpack.c.l.b16 %v7641
        %v7716 = vunpack.c.h.b16 %v7641
        %v7717 = vunpack.c.l.b16 %v7642
        %v7718 = vunpack.c.h.b16 %v7642
        %v7719 = vunpack.c.l.b16 %v7643
        %v7720 = vunpack.c.h.b16 %v7643
        %v7721 = vunpack.c.l.b16 %v7644
        %v7722 = vunpack.c.h.b16 %v7644
        %v7723 = vunpack.c.l.b16 %v7645
        %v7724 = vunpack.c.h.b16 %v7645
        %v7725 = vunpack.c.l.b16 %v7646
        %v7726 = vunpack.c.h.b16 %v7646
        %v7727 = vpack.c.b16 %v7697, %v7695
        %v7728 = vpack.c.b16 %v7698, %v7696
        %v7729 = vpack.c.b16 %v7701, %v7699
        %v7730 = vpack.c.b16 %v7702, %v7700
        %v7731 = vpack.c.b16 %v7705, %v7703
        %v7732 = vpack.c.b16 %v7706, %v7704
        %v7733 = vpack.c.b16 %v7709, %v7707
        %v7734 = vpack.c.b16 %v7710, %v7708
        %v7735 = vpack.c.b16 %v7713, %v7711
        %v7736 = vpack.c.b16 %v7714, %v7712
        %v7737 = vpack.c.b16 %v7717, %v7715
        %v7738 = vpack.c.b16 %v7718, %v7716
        %v7739 = vpack.c.b16 %v7721, %v7719
        %v7740 = vpack.c.b16 %v7722, %v7720
        %v7741 = vpack.c.b16 %v7725, %v7723
        %v7742 = vpack.c.b16 %v7726, %v7724
        %7759 = vmatprep.subr.bf16.mxu0 %v7742
        %7760 = vmatpush1.bf16.msra.mxu0 %v7741
        %7761 = vmatprep.subr.bf16.mxu0 %v7740
        %7762 = vmatpush1.bf16.msra.mxu0 %v7739
        %7763 = vmatprep.subr.bf16.mxu0 %v7738
        %7764 = vmatpush1.bf16.msra.mxu0 %v7737
        %7765 = vmatprep.subr.bf16.mxu0 %v7736
        %7766 = vmatpush1.bf16.msra.mxu0 %v7735
        %7767 = vmatprep.subr.bf16.mxu0 %v7734
        %7768 = vmatpush1.bf16.msra.mxu0 %v7733
        %7769 = vmatprep.subr.bf16.mxu0 %v7732
        %7770 = vmatpush1.bf16.msra.mxu0 %v7731
        %7771 = vmatprep.subr.bf16.mxu0 %v7730
        %7772 = vmatpush1.bf16.msra.mxu0 %v7729
        %7773 = vmatprep.subr.bf16.mxu0 %v7728
        %7774 = vmatpush1.bf16.msra.mxu0 %v7727
        %7775 = vmatprep.subr.bf16.mxu0 0
        %7776 = vmatpush2.bf16.msra.mxu0 0
        %7777 = vmatprep.subr.bf16.mxu0 0
        %7778 = vmatpush2.bf16.msra.mxu0 0
        %7779 = vmatprep.subr.bf16.mxu0 0
        %7780 = vmatpush2.bf16.msra.mxu0 0
        %7781 = vmatprep.subr.bf16.mxu0 0
        %7782 = vmatpush2.bf16.msra.mxu0 0
        %7783 = vmatprep.subr.bf16.mxu0 0
        %7784 = vmatpush2.bf16.msra.mxu0 0
        %7785 = vmatprep.subr.bf16.mxu0 0
        %7786 = vmatpush2.bf16.msra.mxu0 0
        %7787 = vmatprep.subr.bf16.mxu0 0
        %7788 = vmatpush2.bf16.msra.mxu0 0
        %7789 = vmatprep.subr.bf16.mxu0 0
        %7790 = vmatpush2.bf16.msra.mxu0 0
        %7791 = vmatprep.mubr.bf16.mxu0 0
        %7792 = vmatmul.mubr.bf16.gmra.mxu0 %v7663
        %v7793 = vpop.f32.mrf.mxu0
        %v7794 = vadd.f32 0.0, %v7793
        %v7795 = vpop.f32.mrf.mxu0
        %v7796 = vadd.f32 0.0, %v7795
        %v7797 = vpop.f32.mrf.mxu0
        %v7798 = vadd.f32 0.0, %v7797
        %v7799 = vpop.f32.mrf.mxu0
        %v7800 = vadd.f32 0.0, %v7799
        %7801 = vmatprep.mubr.bf16.mxu0 0
        %7802 = vmatmul.mubr.bf16.gmra.mxu0 %v7664
        %v7803 = vpop.f32.mrf.mxu0
        %v7804 = vadd.f32 0.0, %v7803
        %v7805 = vpop.f32.mrf.mxu0
        %v7806 = vadd.f32 0.0, %v7805
        %v7807 = vpop.f32.mrf.mxu0
        %v7808 = vadd.f32 0.0, %v7807
        %v7809 = vpop.f32.mrf.mxu0
        %v7810 = vadd.f32 0.0, %v7809
        %7811 = vmatprep.mubr.bf16.mxu0 0
        %7812 = vmatmul.mubr.bf16.gmra.mxu0 %v7665
        %v7813 = vpop.f32.mrf.mxu0
        %v7814 = vadd.f32 0.0, %v7813
        %v7815 = vpop.f32.mrf.mxu0
        %v7816 = vadd.f32 0.0, %v7815
        %v7817 = vpop.f32.mrf.mxu0
        %v7818 = vadd.f32 0.0, %v7817
        %v7819 = vpop.f32.mrf.mxu0
        %v7820 = vadd.f32 0.0, %v7819
        %7821 = vmatprep.mubr.bf16.mxu0 0
        %7822 = vmatmul.mubr.bf16.gmra.mxu0 %v7666
        %v7823 = vpop.f32.mrf.mxu0
        %v7824 = vadd.f32 0.0, %v7823
        %v7825 = vpop.f32.mrf.mxu0
        %v7826 = vadd.f32 0.0, %v7825
        %v7827 = vpop.f32.mrf.mxu0
        %v7828 = vadd.f32 0.0, %v7827
        %v7829 = vpop.f32.mrf.mxu0
        %v7830 = vadd.f32 0.0, %v7829
        %7831 = vmatprep.mubr.bf16.mxu0 0
        %7832 = vmatmul.mubr.bf16.gmra.mxu0 %v7667
        %v7833 = vpop.f32.mrf.mxu0
        %v7834 = vadd.f32 0.0, %v7833
        %v7835 = vpop.f32.mrf.mxu0
        %v7836 = vadd.f32 0.0, %v7835
        %v7837 = vpop.f32.mrf.mxu0
        %v7838 = vadd.f32 0.0, %v7837
        %v7839 = vpop.f32.mrf.mxu0
        %v7840 = vadd.f32 0.0, %v7839
        %7841 = vmatprep.mubr.bf16.mxu0 0
        %7842 = vmatmul.mubr.bf16.gmra.mxu0 %v7668
        %v7843 = vpop.f32.mrf.mxu0
        %v7844 = vadd.f32 0.0, %v7843
        %v7845 = vpop.f32.mrf.mxu0
        %v7846 = vadd.f32 0.0, %v7845
        %v7847 = vpop.f32.mrf.mxu0
        %v7848 = vadd.f32 0.0, %v7847
        %v7849 = vpop.f32.mrf.mxu0
        %v7850 = vadd.f32 0.0, %v7849
        %7851 = vmatprep.mubr.bf16.mxu0 0
        %7852 = vmatmul.mubr.bf16.gmra.mxu0 %v7669
        %v7853 = vpop.f32.mrf.mxu0
        %v7854 = vadd.f32 0.0, %v7853
        %v7855 = vpop.f32.mrf.mxu0
        %v7856 = vadd.f32 0.0, %v7855
        %v7857 = vpop.f32.mrf.mxu0
        %v7858 = vadd.f32 0.0, %v7857
        %v7859 = vpop.f32.mrf.mxu0
        %v7860 = vadd.f32 0.0, %v7859
        %7861 = vmatprep.mubr.bf16.mxu0 0
        %7862 = vmatmul.mubr.bf16.gmra.mxu0 %v7670
        %v7863 = vpop.f32.mrf.mxu0
        %v7864 = vadd.f32 0.0, %v7863
        %v7865 = vpop.f32.mrf.mxu0
        %v7866 = vadd.f32 0.0, %v7865
        %v7867 = vpop.f32.mrf.mxu0
        %v7868 = vadd.f32 0.0, %v7867
        %v7869 = vpop.f32.mrf.mxu0
        %v7870 = vadd.f32 0.0, %v7869
        %7871 = vdwg.mxu0
        %v7872 = vadd.f32 %v7599, %v7794
        %v7873 = vadd.f32 %v7600, %v7796
        %v7874 = vadd.f32 %v7601, %v7798
        %v7875 = vadd.f32 %v7602, %v7800
        %v7876 = vadd.f32 %v7603, %v7804
        %v7877 = vadd.f32 %v7604, %v7806
        %v7878 = vadd.f32 %v7605, %v7808
        %v7879 = vadd.f32 %v7606, %v7810
        %v7880 = vadd.f32 %v7607, %v7814
        %v7881 = vadd.f32 %v7608, %v7816
        %v7882 = vadd.f32 %v7609, %v7818
        %v7883 = vadd.f32 %v7610, %v7820
        %v7884 = vadd.f32 %v7611, %v7824
        %v7885 = vadd.f32 %v7612, %v7826
        %v7886 = vadd.f32 %v7613, %v7828
        %v7887 = vadd.f32 %v7614, %v7830
        %v7888 = vadd.f32 %v7615, %v7834
        %v7889 = vadd.f32 %v7616, %v7836
        %v7890 = vadd.f32 %v7617, %v7838
        %v7891 = vadd.f32 %v7618, %v7840
        %v7892 = vadd.f32 %v7619, %v7844
        %v7893 = vadd.f32 %v7620, %v7846
        %v7894 = vadd.f32 %v7621, %v7848
        %v7895 = vadd.f32 %v7622, %v7850
        %v7896 = vadd.f32 %v7623, %v7854
        %v7897 = vadd.f32 %v7624, %v7856
        %v7898 = vadd.f32 %v7625, %v7858
        %v7899 = vadd.f32 %v7626, %v7860
        %v7900 = vadd.f32 %v7627, %v7864
        %v7901 = vadd.f32 %v7628, %v7866
        %v7902 = vadd.f32 %v7629, %v7868
        %v7903 = vadd.f32 %v7630, %v7870
        %7904 = vst [vmem:[#allocation3] sm:$0xff] %v7872
        %7905 = vst [vmem:[#allocation3 + $0x8] sm:$0xff] %v7873
        %7906 = vst [vmem:[#allocation3 + $0x10] sm:$0xff] %v7874
        %7907 = vst [vmem:[#allocation3 + $0x18] sm:$0xff] %v7875
        %7908 = vst [vmem:[#allocation3 + $0x20] sm:$0xff] %v7876
        %7909 = vst [vmem:[#allocation3 + $0x28] sm:$0xff] %v7877
        %7910 = vst [vmem:[#allocation3 + $0x30] sm:$0xff] %v7878
        %7911 = vst [vmem:[#allocation3 + $0x38] sm:$0xff] %v7879
        %7912 = vst [vmem:[#allocation3 + $0x40] sm:$0xff] %v7880
        %7913 = vst [vmem:[#allocation3 + $0x48] sm:$0xff] %v7881
        %7914 = vst [vmem:[#allocation3 + $0x50] sm:$0xff] %v7882
        %7915 = vst [vmem:[#allocation3 + $0x58] sm:$0xff] %v7883
        %7916 = vst [vmem:[#allocation3 + $0x60] sm:$0xff] %v7884
        %7917 = vst [vmem:[#allocation3 + $0x68] sm:$0xff] %v7885
        %7918 = vst [vmem:[#allocation3 + $0x70] sm:$0xff] %v7886
        %7919 = vst [vmem:[#allocation3 + $0x78] sm:$0xff] %v7887
        %7920 = vst [vmem:[#allocation3 + $0x80] sm:$0xff] %v7888
        %7921 = vst [vmem:[#allocation3 + $0x88] sm:$0xff] %v7889
        %7922 = vst [vmem:[#allocation3 + $0x90] sm:$0xff] %v7890
        %7923 = vst [vmem:[#allocation3 + $0x98] sm:$0xff] %v7891
        %7924 = vst [vmem:[#allocation3 + $0xa0] sm:$0xff] %v7892
        %7925 = vst [vmem:[#allocation3 + $0xa8] sm:$0xff] %v7893
        %7926 = vst [vmem:[#allocation3 + $0xb0] sm:$0xff] %v7894
        %7927 = vst [vmem:[#allocation3 + $0xb8] sm:$0xff] %v7895
        %7928 = vst [vmem:[#allocation3 + $0xc0] sm:$0xff] %v7896
        %7929 = vst [vmem:[#allocation3 + $0xc8] sm:$0xff] %v7897
        %7930 = vst [vmem:[#allocation3 + $0xd0] sm:$0xff] %v7898
        %7931 = vst [vmem:[#allocation3 + $0xd8] sm:$0xff] %v7899
        %7932 = vst [vmem:[#allocation3 + $0xe0] sm:$0xff] %v7900
        %7933 = vst [vmem:[#allocation3 + $0xe8] sm:$0xff] %v7901
        %7934 = vst [vmem:[#allocation3 + $0xf0] sm:$0xff] %v7902
        %7935 = vst [vmem:[#allocation3 + $0xf8] sm:$0xff] %v7903
        %s7936 = scalar_lea.vmem [#allocation2], 120
        %v7937 = vld [vmem:[%s7936] sm:$0xf]
        %v7938 = vld [vmem:[%s7936 + $0x4] sm:$0xf]
        %v7939 = vld [vmem:[%s7936 + $0x8] sm:$0x1]
        %v7940 = vld [vmem:[%s7936 + $0xc] sm:$0xf]
        %v7941 = vld [vmem:[%s7936 + $0x10] sm:$0xf]
        %v7942 = vld [vmem:[%s7936 + $0x14] sm:$0x1]
        %v7943 = vld [vmem:[%s7936 + $0x18] sm:$0xf]
        %v7944 = vld [vmem:[%s7936 + $0x1c] sm:$0xf]
        %v7945 = vld [vmem:[%s7936 + $0x20] sm:$0x1]
        %v7946 = vld [vmem:[%s7936 + $0x24] sm:$0xf]
        %v7947 = vld [vmem:[%s7936 + $0x28] sm:$0xf]
        %v7948 = vld [vmem:[%s7936 + $0x2c] sm:$0x1]
        %v7949 = vld [vmem:[%s7936 + $0x30] sm:$0xf]
        %v7950 = vld [vmem:[%s7936 + $0x34] sm:$0xf]
        %v7951 = vld [vmem:[%s7936 + $0x38] sm:$0x1]
        %v7952 = vld [vmem:[%s7936 + $0x3c] sm:$0xf]
        %v7953 = vld [vmem:[%s7936 + $0x40] sm:$0xf]
        %v7954 = vld [vmem:[%s7936 + $0x44] sm:$0x1]
        %v7955 = vld [vmem:[%s7936 + $0x48] sm:$0xf]
        %v7956 = vld [vmem:[%s7936 + $0x4c] sm:$0xf]
        %v7957 = vld [vmem:[%s7936 + $0x50] sm:$0x1]
        %v7958 = vld [vmem:[%s7936 + $0x54] sm:$0xf]
        %v7959 = vld [vmem:[%s7936 + $0x58] sm:$0xf]
        %v7960 = vld [vmem:[%s7936 + $0x5c] sm:$0x1]
        %v7961 = vld [vmem:[#allocation3] sm:$0xff]
        %v7962 = vld [vmem:[#allocation3 + $0x8] sm:$0xff]
        %v7963 = vld [vmem:[#allocation3 + $0x10] sm:$0xff]
        %v7964 = vld [vmem:[#allocation3 + $0x18] sm:$0xff]
        %v7965 = vld [vmem:[#allocation3 + $0x20] sm:$0xff]
        %v7966 = vld [vmem:[#allocation3 + $0x28] sm:$0xff]
        %v7967 = vld [vmem:[#allocation3 + $0x30] sm:$0xff]
        %v7968 = vld [vmem:[#allocation3 + $0x38] sm:$0xff]
        %v7969 = vld [vmem:[#allocation3 + $0x40] sm:$0xff]
        %v7970 = vld [vmem:[#allocation3 + $0x48] sm:$0xff]
        %v7971 = vld [vmem:[#allocation3 + $0x50] sm:$0xff]
        %v7972 = vld [vmem:[#allocation3 + $0x58] sm:$0xff]
        %v7973 = vld [vmem:[#allocation3 + $0x60] sm:$0xff]
        %v7974 = vld [vmem:[#allocation3 + $0x68] sm:$0xff]
        %v7975 = vld [vmem:[#allocation3 + $0x70] sm:$0xff]
        %v7976 = vld [vmem:[#allocation3 + $0x78] sm:$0xff]
        %v7977 = vld [vmem:[#allocation3 + $0x80] sm:$0xff]
        %v7978 = vld [vmem:[#allocation3 + $0x88] sm:$0xff]
        %v7979 = vld [vmem:[#allocation3 + $0x90] sm:$0xff]
        %v7980 = vld [vmem:[#allocation3 + $0x98] sm:$0xff]
        %v7981 = vld [vmem:[#allocation3 + $0xa0] sm:$0xff]
        %v7982 = vld [vmem:[#allocation3 + $0xa8] sm:$0xff]
        %v7983 = vld [vmem:[#allocation3 + $0xb0] sm:$0xff]
        %v7984 = vld [vmem:[#allocation3 + $0xb8] sm:$0xff]
        %v7985 = vld [vmem:[#allocation3 + $0xc0] sm:$0xff]
        %v7986 = vld [vmem:[#allocation3 + $0xc8] sm:$0xff]
        %v7987 = vld [vmem:[#allocation3 + $0xd0] sm:$0xff]
        %v7988 = vld [vmem:[#allocation3 + $0xd8] sm:$0xff]
        %v7989 = vld [vmem:[#allocation3 + $0xe0] sm:$0xff]
        %v7990 = vld [vmem:[#allocation3 + $0xe8] sm:$0xff]
        %v7991 = vld [vmem:[#allocation3 + $0xf0] sm:$0xff]
        %v7992 = vld [vmem:[#allocation3 + $0xf8] sm:$0xff]
        %v7993 = vld [vmem:[%s3596] sm:$0xff]
        %v7994 = vld [vmem:[%s3596 + $0x8] sm:$0xff]
        %v7995 = vld [vmem:[%s3596 + $0x10] sm:$0xff]
        %v7996 = vld [vmem:[%s3596 + $0x18] sm:$0xff]
        %v7997 = vld [vmem:[%s3596 + $0x20] sm:$0xff]
        %v7998 = vld [vmem:[%s3596 + $0x28] sm:$0xff]
        %v7999 = vld [vmem:[%s3596 + $0x30] sm:$0xff]
        %v8000 = vld [vmem:[%s3596 + $0x38] sm:$0xff]
        %v8001 = vld [vmem:[%s3596 + $0x40] sm:$0xff]
        %v8002 = vld [vmem:[%s3596 + $0x48] sm:$0xff]
        %v8003 = vld [vmem:[%s3596 + $0x50] sm:$0xff]
        %v8004 = vld [vmem:[%s3596 + $0x58] sm:$0xff]
        %v8005 = vld [vmem:[%s3596 + $0x60] sm:$0xff]
        %v8006 = vld [vmem:[%s3596 + $0x68] sm:$0xff]
        %v8007 = vld [vmem:[%s3596 + $0x70] sm:$0xff]
        %v8008 = vld [vmem:[%s3596 + $0x78] sm:$0xff]
        %v8025 = vunpack.c.l.b16 %v7937
        %v8026 = vunpack.c.l.b16 %v7938
        %v8027 = vunpack.c.l.b16 %v7940
        %v8028 = vunpack.c.l.b16 %v7941
        %v8029 = vunpack.c.l.b16 %v7943
        %v8030 = vunpack.c.l.b16 %v7944
        %v8031 = vunpack.c.l.b16 %v7946
        %v8032 = vunpack.c.l.b16 %v7947
        %v8033 = vunpack.c.l.b16 %v7949
        %v8034 = vunpack.c.l.b16 %v7950
        %v8035 = vunpack.c.l.b16 %v7952
        %v8036 = vunpack.c.l.b16 %v7953
        %v8037 = vunpack.c.l.b16 %v7955
        %v8038 = vunpack.c.l.b16 %v7956
        %v8039 = vunpack.c.l.b16 %v7958
        %v8040 = vunpack.c.l.b16 %v7959
        %v8041 = vpack.c.b16 %v8026, %v8025
        %v8042 = vpack.c.b16 %v8028, %v8027
        %v8043 = vpack.c.b16 %v8030, %v8029
        %v8044 = vpack.c.b16 %v8032, %v8031
        %v8045 = vpack.c.b16 %v8034, %v8033
        %v8046 = vpack.c.b16 %v8036, %v8035
        %v8047 = vpack.c.b16 %v8038, %v8037
        %v8048 = vpack.c.b16 %v8040, %v8039
        %v8073 = vunpack.c.l.b16 %v7993
        %v8074 = vunpack.c.h.b16 %v7993
        %v8075 = vunpack.c.l.b16 %v7994
        %v8076 = vunpack.c.h.b16 %v7994
        %v8077 = vunpack.c.l.b16 %v7995
        %v8078 = vunpack.c.h.b16 %v7995
        %v8079 = vunpack.c.l.b16 %v7996
        %v8080 = vunpack.c.h.b16 %v7996
        %v8081 = vunpack.c.l.b16 %v7997
        %v8082 = vunpack.c.h.b16 %v7997
        %v8083 = vunpack.c.l.b16 %v7998
        %v8084 = vunpack.c.h.b16 %v7998
        %v8085 = vunpack.c.l.b16 %v7999
        %v8086 = vunpack.c.h.b16 %v7999
        %v8087 = vunpack.c.l.b16 %v8000
        %v8088 = vunpack.c.h.b16 %v8000
        %v8089 = vunpack.c.l.b16 %v8001
        %v8090 = vunpack.c.h.b16 %v8001
        %v8091 = vunpack.c.l.b16 %v8002
        %v8092 = vunpack.c.h.b16 %v8002
        %v8093 = vunpack.c.l.b16 %v8003
        %v8094 = vunpack.c.h.b16 %v8003
        %v8095 = vunpack.c.l.b16 %v8004
        %v8096 = vunpack.c.h.b16 %v8004
        %v8097 = vunpack.c.l.b16 %v8005
        %v8098 = vunpack.c.h.b16 %v8005
        %v8099 = vunpack.c.l.b16 %v8006
        %v8100 = vunpack.c.h.b16 %v8006
        %v8101 = vunpack.c.l.b16 %v8007
        %v8102 = vunpack.c.h.b16 %v8007
        %v8103 = vunpack.c.l.b16 %v8008
        %v8104 = vunpack.c.h.b16 %v8008
        %v8105 = vpack.c.b16 %v8075, %v8073
        %v8106 = vpack.c.b16 %v8076, %v8074
        %v8107 = vpack.c.b16 %v8079, %v8077
        %v8108 = vpack.c.b16 %v8080, %v8078
        %v8109 = vpack.c.b16 %v8083, %v8081
        %v8110 = vpack.c.b16 %v8084, %v8082
        %v8111 = vpack.c.b16 %v8087, %v8085
        %v8112 = vpack.c.b16 %v8088, %v8086
        %v8113 = vpack.c.b16 %v8091, %v8089
        %v8114 = vpack.c.b16 %v8092, %v8090
        %v8115 = vpack.c.b16 %v8095, %v8093
        %v8116 = vpack.c.b16 %v8096, %v8094
        %v8117 = vpack.c.b16 %v8099, %v8097
        %v8118 = vpack.c.b16 %v8100, %v8098
        %v8119 = vpack.c.b16 %v8103, %v8101
        %v8120 = vpack.c.b16 %v8104, %v8102
        %8137 = vmatprep.subr.bf16.mxu0 %v8120
        %8138 = vmatpush1.bf16.msra.mxu0 %v8119
        %8139 = vmatprep.subr.bf16.mxu0 %v8118
        %8140 = vmatpush1.bf16.msra.mxu0 %v8117
        %8141 = vmatprep.subr.bf16.mxu0 %v8116
        %8142 = vmatpush1.bf16.msra.mxu0 %v8115
        %8143 = vmatprep.subr.bf16.mxu0 %v8114
        %8144 = vmatpush1.bf16.msra.mxu0 %v8113
        %8145 = vmatprep.subr.bf16.mxu0 %v8112
        %8146 = vmatpush1.bf16.msra.mxu0 %v8111
        %8147 = vmatprep.subr.bf16.mxu0 %v8110
        %8148 = vmatpush1.bf16.msra.mxu0 %v8109
        %8149 = vmatprep.subr.bf16.mxu0 %v8108
        %8150 = vmatpush1.bf16.msra.mxu0 %v8107
        %8151 = vmatprep.subr.bf16.mxu0 %v8106
        %8152 = vmatpush1.bf16.msra.mxu0 %v8105
        %8153 = vmatprep.subr.bf16.mxu0 0
        %8154 = vmatpush2.bf16.msra.mxu0 0
        %8155 = vmatprep.subr.bf16.mxu0 0
        %8156 = vmatpush2.bf16.msra.mxu0 0
        %8157 = vmatprep.subr.bf16.mxu0 0
        %8158 = vmatpush2.bf16.msra.mxu0 0
        %8159 = vmatprep.subr.bf16.mxu0 0
        %8160 = vmatpush2.bf16.msra.mxu0 0
        %8161 = vmatprep.subr.bf16.mxu0 0
        %8162 = vmatpush2.bf16.msra.mxu0 0
        %8163 = vmatprep.subr.bf16.mxu0 0
        %8164 = vmatpush2.bf16.msra.mxu0 0
        %8165 = vmatprep.subr.bf16.mxu0 0
        %8166 = vmatpush2.bf16.msra.mxu0 0
        %8167 = vmatprep.subr.bf16.mxu0 0
        %8168 = vmatpush2.bf16.msra.mxu0 0
        %8169 = vmatprep.mubr.bf16.mxu0 0
        %8170 = vmatmul.mubr.bf16.gmra.mxu0 %v8041
        %v8171 = vpop.f32.mrf.mxu0
        %v8172 = vadd.f32 0.0, %v8171
        %v8173 = vpop.f32.mrf.mxu0
        %v8174 = vadd.f32 0.0, %v8173
        %v8175 = vpop.f32.mrf.mxu0
        %v8176 = vadd.f32 0.0, %v8175
        %v8177 = vpop.f32.mrf.mxu0
        %v8178 = vadd.f32 0.0, %v8177
        %8179 = vmatprep.mubr.bf16.mxu0 0
        %8180 = vmatmul.mubr.bf16.gmra.mxu0 %v8042
        %v8181 = vpop.f32.mrf.mxu0
        %v8182 = vadd.f32 0.0, %v8181
        %v8183 = vpop.f32.mrf.mxu0
        %v8184 = vadd.f32 0.0, %v8183
        %v8185 = vpop.f32.mrf.mxu0
        %v8186 = vadd.f32 0.0, %v8185
        %v8187 = vpop.f32.mrf.mxu0
        %v8188 = vadd.f32 0.0, %v8187
        %8189 = vmatprep.mubr.bf16.mxu0 0
        %8190 = vmatmul.mubr.bf16.gmra.mxu0 %v8043
        %v8191 = vpop.f32.mrf.mxu0
        %v8192 = vadd.f32 0.0, %v8191
        %v8193 = vpop.f32.mrf.mxu0
        %v8194 = vadd.f32 0.0, %v8193
        %v8195 = vpop.f32.mrf.mxu0
        %v8196 = vadd.f32 0.0, %v8195
        %v8197 = vpop.f32.mrf.mxu0
        %v8198 = vadd.f32 0.0, %v8197
        %8199 = vmatprep.mubr.bf16.mxu0 0
        %8200 = vmatmul.mubr.bf16.gmra.mxu0 %v8044
        %v8201 = vpop.f32.mrf.mxu0
        %v8202 = vadd.f32 0.0, %v8201
        %v8203 = vpop.f32.mrf.mxu0
        %v8204 = vadd.f32 0.0, %v8203
        %v8205 = vpop.f32.mrf.mxu0
        %v8206 = vadd.f32 0.0, %v8205
        %v8207 = vpop.f32.mrf.mxu0
        %v8208 = vadd.f32 0.0, %v8207
        %8209 = vmatprep.mubr.bf16.mxu0 0
        %8210 = vmatmul.mubr.bf16.gmra.mxu0 %v8045
        %v8211 = vpop.f32.mrf.mxu0
        %v8212 = vadd.f32 0.0, %v8211
        %v8213 = vpop.f32.mrf.mxu0
        %v8214 = vadd.f32 0.0, %v8213
        %v8215 = vpop.f32.mrf.mxu0
        %v8216 = vadd.f32 0.0, %v8215
        %v8217 = vpop.f32.mrf.mxu0
        %v8218 = vadd.f32 0.0, %v8217
        %8219 = vmatprep.mubr.bf16.mxu0 0
        %8220 = vmatmul.mubr.bf16.gmra.mxu0 %v8046
        %v8221 = vpop.f32.mrf.mxu0
        %v8222 = vadd.f32 0.0, %v8221
        %v8223 = vpop.f32.mrf.mxu0
        %v8224 = vadd.f32 0.0, %v8223
        %v8225 = vpop.f32.mrf.mxu0
        %v8226 = vadd.f32 0.0, %v8225
        %v8227 = vpop.f32.mrf.mxu0
        %v8228 = vadd.f32 0.0, %v8227
        %8229 = vmatprep.mubr.bf16.mxu0 0
        %8230 = vmatmul.mubr.bf16.gmra.mxu0 %v8047
        %v8231 = vpop.f32.mrf.mxu0
        %v8232 = vadd.f32 0.0, %v8231
        %v8233 = vpop.f32.mrf.mxu0
        %v8234 = vadd.f32 0.0, %v8233
        %v8235 = vpop.f32.mrf.mxu0
        %v8236 = vadd.f32 0.0, %v8235
        %v8237 = vpop.f32.mrf.mxu0
        %v8238 = vadd.f32 0.0, %v8237
        %8239 = vmatprep.mubr.bf16.mxu0 0
        %8240 = vmatmul.mubr.bf16.gmra.mxu0 %v8048
        %v8241 = vpop.f32.mrf.mxu0
        %v8242 = vadd.f32 0.0, %v8241
        %v8243 = vpop.f32.mrf.mxu0
        %v8244 = vadd.f32 0.0, %v8243
        %v8245 = vpop.f32.mrf.mxu0
        %v8246 = vadd.f32 0.0, %v8245
        %v8247 = vpop.f32.mrf.mxu0
        %v8248 = vadd.f32 0.0, %v8247
        %8249 = vdwg.mxu0
        %v8250 = vadd.f32 %v7961, %v8172
        %v8251 = vadd.f32 %v7962, %v8174
        %v8252 = vadd.f32 %v7963, %v8176
        %v8253 = vadd.f32 %v7964, %v8178
        %v8254 = vadd.f32 %v7965, %v8182
        %v8255 = vadd.f32 %v7966, %v8184
        %v8256 = vadd.f32 %v7967, %v8186
        %v8257 = vadd.f32 %v7968, %v8188
        %v8258 = vadd.f32 %v7969, %v8192
        %v8259 = vadd.f32 %v7970, %v8194
        %v8260 = vadd.f32 %v7971, %v8196
        %v8261 = vadd.f32 %v7972, %v8198
        %v8262 = vadd.f32 %v7973, %v8202
        %v8263 = vadd.f32 %v7974, %v8204
        %v8264 = vadd.f32 %v7975, %v8206
        %v8265 = vadd.f32 %v7976, %v8208
        %v8266 = vadd.f32 %v7977, %v8212
        %v8267 = vadd.f32 %v7978, %v8214
        %v8268 = vadd.f32 %v7979, %v8216
        %v8269 = vadd.f32 %v7980, %v8218
        %v8270 = vadd.f32 %v7981, %v8222
        %v8271 = vadd.f32 %v7982, %v8224
        %v8272 = vadd.f32 %v7983, %v8226
        %v8273 = vadd.f32 %v7984, %v8228
        %v8274 = vadd.f32 %v7985, %v8232
        %v8275 = vadd.f32 %v7986, %v8234
        %v8276 = vadd.f32 %v7987, %v8236
        %v8277 = vadd.f32 %v7988, %v8238
        %v8278 = vadd.f32 %v7989, %v8242
        %v8279 = vadd.f32 %v7990, %v8244
        %v8280 = vadd.f32 %v7991, %v8246
        %v8281 = vadd.f32 %v7992, %v8248
        %8282 = vst [vmem:[#allocation3] sm:$0xff] %v8250
        %8283 = vst [vmem:[#allocation3 + $0x8] sm:$0xff] %v8251
        %8284 = vst [vmem:[#allocation3 + $0x10] sm:$0xff] %v8252
        %8285 = vst [vmem:[#allocation3 + $0x18] sm:$0xff] %v8253
        %8286 = vst [vmem:[#allocation3 + $0x20] sm:$0xff] %v8254
        %8287 = vst [vmem:[#allocation3 + $0x28] sm:$0xff] %v8255
        %8288 = vst [vmem:[#allocation3 + $0x30] sm:$0xff] %v8256
        %8289 = vst [vmem:[#allocation3 + $0x38] sm:$0xff] %v8257
        %8290 = vst [vmem:[#allocation3 + $0x40] sm:$0xff] %v8258
        %8291 = vst [vmem:[#allocation3 + $0x48] sm:$0xff] %v8259
        %8292 = vst [vmem:[#allocation3 + $0x50] sm:$0xff] %v8260
        %8293 = vst [vmem:[#allocation3 + $0x58] sm:$0xff] %v8261
        %8294 = vst [vmem:[#allocation3 + $0x60] sm:$0xff] %v8262
        %8295 = vst [vmem:[#allocation3 + $0x68] sm:$0xff] %v8263
        %8296 = vst [vmem:[#allocation3 + $0x70] sm:$0xff] %v8264
        %8297 = vst [vmem:[#allocation3 + $0x78] sm:$0xff] %v8265
        %8298 = vst [vmem:[#allocation3 + $0x80] sm:$0xff] %v8266
        %8299 = vst [vmem:[#allocation3 + $0x88] sm:$0xff] %v8267
        %8300 = vst [vmem:[#allocation3 + $0x90] sm:$0xff] %v8268
        %8301 = vst [vmem:[#allocation3 + $0x98] sm:$0xff] %v8269
        %8302 = vst [vmem:[#allocation3 + $0xa0] sm:$0xff] %v8270
        %8303 = vst [vmem:[#allocation3 + $0xa8] sm:$0xff] %v8271
        %8304 = vst [vmem:[#allocation3 + $0xb0] sm:$0xff] %v8272
        %8305 = vst [vmem:[#allocation3 + $0xb8] sm:$0xff] %v8273
        %8306 = vst [vmem:[#allocation3 + $0xc0] sm:$0xff] %v8274
        %8307 = vst [vmem:[#allocation3 + $0xc8] sm:$0xff] %v8275
        %8308 = vst [vmem:[#allocation3 + $0xd0] sm:$0xff] %v8276
        %8309 = vst [vmem:[#allocation3 + $0xd8] sm:$0xff] %v8277
        %8310 = vst [vmem:[#allocation3 + $0xe0] sm:$0xff] %v8278
        %8311 = vst [vmem:[#allocation3 + $0xe8] sm:$0xff] %v8279
        %8312 = vst [vmem:[#allocation3 + $0xf0] sm:$0xff] %v8280
        %8313 = vst [vmem:[#allocation3 + $0xf8] sm:$0xff] %v8281
        %v8315 = vshrl.u32 %v7937, 16
        %v8317 = vrot.slane %v8315, 4
        %v8318 = vshll.u32 %v7937, 16
        %v8320 = vrot.slane %v8318, 5
        %v8321 = vor.u32 %v8317, %v8320
        %v8322 = vrot.slane %v8321, 4
        %v8324 = vshll.u32 %v7938, 16
        %v8326 = vrot.slane %v8324, 5
        %v8327 = vsel %vm1293, %v8322, %v8326
        %v8328 = vshrl.u32 %v7938, 16
        %v8330 = vrot.slane %v8328, 4
        %v8331 = vor.u32 %v8330, %v8326
        %v8332 = vrot.slane %v8331, 4
        %v8334 = vshll.u32 %v7939, 16
        %v8336 = vrot.slane %v8334, 5
        %v8337 = vsel %vm1293, %v8332, %v8336
        %v8339 = vshrl.u32 %v7940, 16
        %v8341 = vrot.slane %v8339, 4
        %v8342 = vshll.u32 %v7940, 16
        %v8344 = vrot.slane %v8342, 5
        %v8345 = vor.u32 %v8341, %v8344
        %v8346 = vrot.slane %v8345, 4
        %v8348 = vshll.u32 %v7941, 16
        %v8350 = vrot.slane %v8348, 5
        %v8351 = vsel %vm1293, %v8346, %v8350
        %v8352 = vshrl.u32 %v7941, 16
        %v8354 = vrot.slane %v8352, 4
        %v8355 = vor.u32 %v8354, %v8350
        %v8356 = vrot.slane %v8355, 4
        %v8358 = vshll.u32 %v7942, 16
        %v8360 = vrot.slane %v8358, 5
        %v8361 = vsel %vm1293, %v8356, %v8360
        %v8363 = vshrl.u32 %v7943, 16
        %v8365 = vrot.slane %v8363, 4
        %v8366 = vshll.u32 %v7943, 16
        %v8368 = vrot.slane %v8366, 5
        %v8369 = vor.u32 %v8365, %v8368
        %v8370 = vrot.slane %v8369, 4
        %v8372 = vshll.u32 %v7944, 16
        %v8374 = vrot.slane %v8372, 5
        %v8375 = vsel %vm1293, %v8370, %v8374
        %v8376 = vshrl.u32 %v7944, 16
        %v8378 = vrot.slane %v8376, 4
        %v8379 = vor.u32 %v8378, %v8374
        %v8380 = vrot.slane %v8379, 4
        %v8382 = vshll.u32 %v7945, 16
        %v8384 = vrot.slane %v8382, 5
        %v8385 = vsel %vm1293, %v8380, %v8384
        %v8387 = vshrl.u32 %v7946, 16
        %v8389 = vrot.slane %v8387, 4
        %v8390 = vshll.u32 %v7946, 16
        %v8392 = vrot.slane %v8390, 5
        %v8393 = vor.u32 %v8389, %v8392
        %v8394 = vrot.slane %v8393, 4
        %v8396 = vshll.u32 %v7947, 16
        %v8398 = vrot.slane %v8396, 5
        %v8399 = vsel %vm1293, %v8394, %v8398
        %v8400 = vshrl.u32 %v7947, 16
        %v8402 = vrot.slane %v8400, 4
        %v8403 = vor.u32 %v8402, %v8398
        %v8404 = vrot.slane %v8403, 4
        %v8406 = vshll.u32 %v7948, 16
        %v8408 = vrot.slane %v8406, 5
        %v8409 = vsel %vm1293, %v8404, %v8408
        %v8411 = vshrl.u32 %v7949, 16
        %v8413 = vrot.slane %v8411, 4
        %v8414 = vshll.u32 %v7949, 16
        %v8416 = vrot.slane %v8414, 5
        %v8417 = vor.u32 %v8413, %v8416
        %v8418 = vrot.slane %v8417, 4
        %v8420 = vshll.u32 %v7950, 16
        %v8422 = vrot.slane %v8420, 5
        %v8423 = vsel %vm1293, %v8418, %v8422
        %v8424 = vshrl.u32 %v7950, 16
        %v8426 = vrot.slane %v8424, 4
        %v8427 = vor.u32 %v8426, %v8422
        %v8428 = vrot.slane %v8427, 4
        %v8430 = vshll.u32 %v7951, 16
        %v8432 = vrot.slane %v8430, 5
        %v8433 = vsel %vm1293, %v8428, %v8432
        %v8435 = vshrl.u32 %v7952, 16
        %v8437 = vrot.slane %v8435, 4
        %v8438 = vshll.u32 %v7952, 16
        %v8440 = vrot.slane %v8438, 5
        %v8441 = vor.u32 %v8437, %v8440
        %v8442 = vrot.slane %v8441, 4
        %v8444 = vshll.u32 %v7953, 16
        %v8446 = vrot.slane %v8444, 5
        %v8447 = vsel %vm1293, %v8442, %v8446
        %v8448 = vshrl.u32 %v7953, 16
        %v8450 = vrot.slane %v8448, 4
        %v8451 = vor.u32 %v8450, %v8446
        %v8452 = vrot.slane %v8451, 4
        %v8454 = vshll.u32 %v7954, 16
        %v8456 = vrot.slane %v8454, 5
        %v8457 = vsel %vm1293, %v8452, %v8456
        %v8459 = vshrl.u32 %v7955, 16
        %v8461 = vrot.slane %v8459, 4
        %v8462 = vshll.u32 %v7955, 16
        %v8464 = vrot.slane %v8462, 5
        %v8465 = vor.u32 %v8461, %v8464
        %v8466 = vrot.slane %v8465, 4
        %v8468 = vshll.u32 %v7956, 16
        %v8470 = vrot.slane %v8468, 5
        %v8471 = vsel %vm1293, %v8466, %v8470
        %v8472 = vshrl.u32 %v7956, 16
        %v8474 = vrot.slane %v8472, 4
        %v8475 = vor.u32 %v8474, %v8470
        %v8476 = vrot.slane %v8475, 4
        %v8478 = vshll.u32 %v7957, 16
        %v8480 = vrot.slane %v8478, 5
        %v8481 = vsel %vm1293, %v8476, %v8480
        %v8483 = vshrl.u32 %v7958, 16
        %v8485 = vrot.slane %v8483, 4
        %v8486 = vshll.u32 %v7958, 16
        %v8488 = vrot.slane %v8486, 5
        %v8489 = vor.u32 %v8485, %v8488
        %v8490 = vrot.slane %v8489, 4
        %v8492 = vshll.u32 %v7959, 16
        %v8494 = vrot.slane %v8492, 5
        %v8495 = vsel %vm1293, %v8490, %v8494
        %v8496 = vshrl.u32 %v7959, 16
        %v8498 = vrot.slane %v8496, 4
        %v8499 = vor.u32 %v8498, %v8494
        %v8500 = vrot.slane %v8499, 4
        %v8502 = vshll.u32 %v7960, 16
        %v8504 = vrot.slane %v8502, 5
        %v8505 = vsel %vm1293, %v8500, %v8504
        %v8506 = vld [vmem:[#allocation3] sm:$0xff]
        %v8507 = vld [vmem:[#allocation3 + $0x8] sm:$0xff]
        %v8508 = vld [vmem:[#allocation3 + $0x10] sm:$0xff]
        %v8509 = vld [vmem:[#allocation3 + $0x18] sm:$0xff]
        %v8510 = vld [vmem:[#allocation3 + $0x20] sm:$0xff]
        %v8511 = vld [vmem:[#allocation3 + $0x28] sm:$0xff]
        %v8512 = vld [vmem:[#allocation3 + $0x30] sm:$0xff]
        %v8513 = vld [vmem:[#allocation3 + $0x38] sm:$0xff]
        %v8514 = vld [vmem:[#allocation3 + $0x40] sm:$0xff]
        %v8515 = vld [vmem:[#allocation3 + $0x48] sm:$0xff]
        %v8516 = vld [vmem:[#allocation3 + $0x50] sm:$0xff]
        %v8517 = vld [vmem:[#allocation3 + $0x58] sm:$0xff]
        %v8518 = vld [vmem:[#allocation3 + $0x60] sm:$0xff]
        %v8519 = vld [vmem:[#allocation3 + $0x68] sm:$0xff]
        %v8520 = vld [vmem:[#allocation3 + $0x70] sm:$0xff]
        %v8521 = vld [vmem:[#allocation3 + $0x78] sm:$0xff]
        %v8522 = vld [vmem:[#allocation3 + $0x80] sm:$0xff]
        %v8523 = vld [vmem:[#allocation3 + $0x88] sm:$0xff]
        %v8524 = vld [vmem:[#allocation3 + $0x90] sm:$0xff]
        %v8525 = vld [vmem:[#allocation3 + $0x98] sm:$0xff]
        %v8526 = vld [vmem:[#allocation3 + $0xa0] sm:$0xff]
        %v8527 = vld [vmem:[#allocation3 + $0xa8] sm:$0xff]
        %v8528 = vld [vmem:[#allocation3 + $0xb0] sm:$0xff]
        %v8529 = vld [vmem:[#allocation3 + $0xb8] sm:$0xff]
        %v8530 = vld [vmem:[#allocation3 + $0xc0] sm:$0xff]
        %v8531 = vld [vmem:[#allocation3 + $0xc8] sm:$0xff]
        %v8532 = vld [vmem:[#allocation3 + $0xd0] sm:$0xff]
        %v8533 = vld [vmem:[#allocation3 + $0xd8] sm:$0xff]
        %v8534 = vld [vmem:[#allocation3 + $0xe0] sm:$0xff]
        %v8535 = vld [vmem:[#allocation3 + $0xe8] sm:$0xff]
        %v8536 = vld [vmem:[#allocation3 + $0xf0] sm:$0xff]
        %v8537 = vld [vmem:[#allocation3 + $0xf8] sm:$0xff]
        %v8538 = vld [vmem:[%s4142] sm:$0xff]
        %v8539 = vld [vmem:[%s4142 + $0x8] sm:$0xff]
        %v8540 = vld [vmem:[%s4142 + $0x10] sm:$0xff]
        %v8541 = vld [vmem:[%s4142 + $0x18] sm:$0xff]
        %v8542 = vld [vmem:[%s4142 + $0x20] sm:$0xff]
        %v8543 = vld [vmem:[%s4142 + $0x28] sm:$0xff]
        %v8544 = vld [vmem:[%s4142 + $0x30] sm:$0xff]
        %v8545 = vld [vmem:[%s4142 + $0x38] sm:$0xff]
        %v8546 = vld [vmem:[%s4142 + $0x40] sm:$0xff]
        %v8547 = vld [vmem:[%s4142 + $0x48] sm:$0xff]
        %v8548 = vld [vmem:[%s4142 + $0x50] sm:$0xff]
        %v8549 = vld [vmem:[%s4142 + $0x58] sm:$0xff]
        %v8550 = vld [vmem:[%s4142 + $0x60] sm:$0xff]
        %v8551 = vld [vmem:[%s4142 + $0x68] sm:$0xff]
        %v8552 = vld [vmem:[%s4142 + $0x70] sm:$0xff]
        %v8553 = vld [vmem:[%s4142 + $0x78] sm:$0xff]
        %v8554 = vunpack.c.l.b16 %v8327
        %v8555 = vunpack.c.l.b16 %v8337
        %v8556 = vunpack.c.l.b16 %v8351
        %v8557 = vunpack.c.l.b16 %v8361
        %v8558 = vunpack.c.l.b16 %v8375
        %v8559 = vunpack.c.l.b16 %v8385
        %v8560 = vunpack.c.l.b16 %v8399
        %v8561 = vunpack.c.l.b16 %v8409
        %v8562 = vunpack.c.l.b16 %v8423
        %v8563 = vunpack.c.l.b16 %v8433
        %v8564 = vunpack.c.l.b16 %v8447
        %v8565 = vunpack.c.l.b16 %v8457
        %v8566 = vunpack.c.l.b16 %v8471
        %v8567 = vunpack.c.l.b16 %v8481
        %v8568 = vunpack.c.l.b16 %v8495
        %v8569 = vunpack.c.l.b16 %v8505
        %v8570 = vpack.c.b16 %v8555, %v8554
        %v8571 = vpack.c.b16 %v8557, %v8556
        %v8572 = vpack.c.b16 %v8559, %v8558
        %v8573 = vpack.c.b16 %v8561, %v8560
        %v8574 = vpack.c.b16 %v8563, %v8562
        %v8575 = vpack.c.b16 %v8565, %v8564
        %v8576 = vpack.c.b16 %v8567, %v8566
        %v8577 = vpack.c.b16 %v8569, %v8568
        %v8602 = vunpack.c.l.b16 %v8538
        %v8603 = vunpack.c.h.b16 %v8538
        %v8604 = vunpack.c.l.b16 %v8539
        %v8605 = vunpack.c.h.b16 %v8539
        %v8606 = vunpack.c.l.b16 %v8540
        %v8607 = vunpack.c.h.b16 %v8540
        %v8608 = vunpack.c.l.b16 %v8541
        %v8609 = vunpack.c.h.b16 %v8541
        %v8610 = vunpack.c.l.b16 %v8542
        %v8611 = vunpack.c.h.b16 %v8542
        %v8612 = vunpack.c.l.b16 %v8543
        %v8613 = vunpack.c.h.b16 %v8543
        %v8614 = vunpack.c.l.b16 %v8544
        %v8615 = vunpack.c.h.b16 %v8544
        %v8616 = vunpack.c.l.b16 %v8545
        %v8617 = vunpack.c.h.b16 %v8545
        %v8618 = vunpack.c.l.b16 %v8546
        %v8619 = vunpack.c.h.b16 %v8546
        %v8620 = vunpack.c.l.b16 %v8547
        %v8621 = vunpack.c.h.b16 %v8547
        %v8622 = vunpack.c.l.b16 %v8548
        %v8623 = vunpack.c.h.b16 %v8548
        %v8624 = vunpack.c.l.b16 %v8549
        %v8625 = vunpack.c.h.b16 %v8549
        %v8626 = vunpack.c.l.b16 %v8550
        %v8627 = vunpack.c.h.b16 %v8550
        %v8628 = vunpack.c.l.b16 %v8551
        %v8629 = vunpack.c.h.b16 %v8551
        %v8630 = vunpack.c.l.b16 %v8552
        %v8631 = vunpack.c.h.b16 %v8552
        %v8632 = vunpack.c.l.b16 %v8553
        %v8633 = vunpack.c.h.b16 %v8553
        %v8634 = vpack.c.b16 %v8604, %v8602
        %v8635 = vpack.c.b16 %v8605, %v8603
        %v8636 = vpack.c.b16 %v8608, %v8606
        %v8637 = vpack.c.b16 %v8609, %v8607
        %v8638 = vpack.c.b16 %v8612, %v8610
        %v8639 = vpack.c.b16 %v8613, %v8611
        %v8640 = vpack.c.b16 %v8616, %v8614
        %v8641 = vpack.c.b16 %v8617, %v8615
        %v8642 = vpack.c.b16 %v8620, %v8618
        %v8643 = vpack.c.b16 %v8621, %v8619
        %v8644 = vpack.c.b16 %v8624, %v8622
        %v8645 = vpack.c.b16 %v8625, %v8623
        %v8646 = vpack.c.b16 %v8628, %v8626
        %v8647 = vpack.c.b16 %v8629, %v8627
        %v8648 = vpack.c.b16 %v8632, %v8630
        %v8649 = vpack.c.b16 %v8633, %v8631
        %8666 = vmatprep.subr.bf16.mxu0 %v8649
        %8667 = vmatpush1.bf16.msra.mxu0 %v8648
        %8668 = vmatprep.subr.bf16.mxu0 %v8647
        %8669 = vmatpush1.bf16.msra.mxu0 %v8646
        %8670 = vmatprep.subr.bf16.mxu0 %v8645
        %8671 = vmatpush1.bf16.msra.mxu0 %v8644
        %8672 = vmatprep.subr.bf16.mxu0 %v8643
        %8673 = vmatpush1.bf16.msra.mxu0 %v8642
        %8674 = vmatprep.subr.bf16.mxu0 %v8641
        %8675 = vmatpush1.bf16.msra.mxu0 %v8640
        %8676 = vmatprep.subr.bf16.mxu0 %v8639
        %8677 = vmatpush1.bf16.msra.mxu0 %v8638
        %8678 = vmatprep.subr.bf16.mxu0 %v8637
        %8679 = vmatpush1.bf16.msra.mxu0 %v8636
        %8680 = vmatprep.subr.bf16.mxu0 %v8635
        %8681 = vmatpush1.bf16.msra.mxu0 %v8634
        %8682 = vmatprep.subr.bf16.mxu0 0
        %8683 = vmatpush2.bf16.msra.mxu0 0
        %8684 = vmatprep.subr.bf16.mxu0 0
        %8685 = vmatpush2.bf16.msra.mxu0 0
        %8686 = vmatprep.subr.bf16.mxu0 0
        %8687 = vmatpush2.bf16.msra.mxu0 0
        %8688 = vmatprep.subr.bf16.mxu0 0
        %8689 = vmatpush2.bf16.msra.mxu0 0
        %8690 = vmatprep.subr.bf16.mxu0 0
        %8691 = vmatpush2.bf16.msra.mxu0 0
        %8692 = vmatprep.subr.bf16.mxu0 0
        %8693 = vmatpush2.bf16.msra.mxu0 0
        %8694 = vmatprep.subr.bf16.mxu0 0
        %8695 = vmatpush2.bf16.msra.mxu0 0
        %8696 = vmatprep.subr.bf16.mxu0 0
        %8697 = vmatpush2.bf16.msra.mxu0 0
        %8698 = vmatprep.mubr.bf16.mxu0 0
        %8699 = vmatmul.mubr.bf16.gmra.mxu0 %v8570
        %v8700 = vpop.f32.mrf.mxu0
        %v8701 = vadd.f32 0.0, %v8700
        %v8702 = vpop.f32.mrf.mxu0
        %v8703 = vadd.f32 0.0, %v8702
        %v8704 = vpop.f32.mrf.mxu0
        %v8705 = vadd.f32 0.0, %v8704
        %v8706 = vpop.f32.mrf.mxu0
        %v8707 = vadd.f32 0.0, %v8706
        %8708 = vmatprep.mubr.bf16.mxu0 0
        %8709 = vmatmul.mubr.bf16.gmra.mxu0 %v8571
        %v8710 = vpop.f32.mrf.mxu0
        %v8711 = vadd.f32 0.0, %v8710
        %v8712 = vpop.f32.mrf.mxu0
        %v8713 = vadd.f32 0.0, %v8712
        %v8714 = vpop.f32.mrf.mxu0
        %v8715 = vadd.f32 0.0, %v8714
        %v8716 = vpop.f32.mrf.mxu0
        %v8717 = vadd.f32 0.0, %v8716
        %8718 = vmatprep.mubr.bf16.mxu0 0
        %8719 = vmatmul.mubr.bf16.gmra.mxu0 %v8572
        %v8720 = vpop.f32.mrf.mxu0
        %v8721 = vadd.f32 0.0, %v8720
        %v8722 = vpop.f32.mrf.mxu0
        %v8723 = vadd.f32 0.0, %v8722
        %v8724 = vpop.f32.mrf.mxu0
        %v8725 = vadd.f32 0.0, %v8724
        %v8726 = vpop.f32.mrf.mxu0
        %v8727 = vadd.f32 0.0, %v8726
        %8728 = vmatprep.mubr.bf16.mxu0 0
        %8729 = vmatmul.mubr.bf16.gmra.mxu0 %v8573
        %v8730 = vpop.f32.mrf.mxu0
        %v8731 = vadd.f32 0.0, %v8730
        %v8732 = vpop.f32.mrf.mxu0
        %v8733 = vadd.f32 0.0, %v8732
        %v8734 = vpop.f32.mrf.mxu0
        %v8735 = vadd.f32 0.0, %v8734
        %v8736 = vpop.f32.mrf.mxu0
        %v8737 = vadd.f32 0.0, %v8736
        %8738 = vmatprep.mubr.bf16.mxu0 0
        %8739 = vmatmul.mubr.bf16.gmra.mxu0 %v8574
        %v8740 = vpop.f32.mrf.mxu0
        %v8741 = vadd.f32 0.0, %v8740
        %v8742 = vpop.f32.mrf.mxu0
        %v8743 = vadd.f32 0.0, %v8742
        %v8744 = vpop.f32.mrf.mxu0
        %v8745 = vadd.f32 0.0, %v8744
        %v8746 = vpop.f32.mrf.mxu0
        %v8747 = vadd.f32 0.0, %v8746
        %8748 = vmatprep.mubr.bf16.mxu0 0
        %8749 = vmatmul.mubr.bf16.gmra.mxu0 %v8575
        %v8750 = vpop.f32.mrf.mxu0
        %v8751 = vadd.f32 0.0, %v8750
        %v8752 = vpop.f32.mrf.mxu0
        %v8753 = vadd.f32 0.0, %v8752
        %v8754 = vpop.f32.mrf.mxu0
        %v8755 = vadd.f32 0.0, %v8754
        %v8756 = vpop.f32.mrf.mxu0
        %v8757 = vadd.f32 0.0, %v8756
        %8758 = vmatprep.mubr.bf16.mxu0 0
        %8759 = vmatmul.mubr.bf16.gmra.mxu0 %v8576
        %v8760 = vpop.f32.mrf.mxu0
        %v8761 = vadd.f32 0.0, %v8760
        %v8762 = vpop.f32.mrf.mxu0
        %v8763 = vadd.f32 0.0, %v8762
        %v8764 = vpop.f32.mrf.mxu0
        %v8765 = vadd.f32 0.0, %v8764
        %v8766 = vpop.f32.mrf.mxu0
        %v8767 = vadd.f32 0.0, %v8766
        %8768 = vmatprep.mubr.bf16.mxu0 0
        %8769 = vmatmul.mubr.bf16.gmra.mxu0 %v8577
        %v8770 = vpop.f32.mrf.mxu0
        %v8771 = vadd.f32 0.0, %v8770
        %v8772 = vpop.f32.mrf.mxu0
        %v8773 = vadd.f32 0.0, %v8772
        %v8774 = vpop.f32.mrf.mxu0
        %v8775 = vadd.f32 0.0, %v8774
        %v8776 = vpop.f32.mrf.mxu0
        %v8777 = vadd.f32 0.0, %v8776
        %8778 = vdwg.mxu0
        %v8779 = vadd.f32 %v8506, %v8701
        %v8780 = vadd.f32 %v8507, %v8703
        %v8781 = vadd.f32 %v8508, %v8705
        %v8782 = vadd.f32 %v8509, %v8707
        %v8783 = vadd.f32 %v8510, %v8711
        %v8784 = vadd.f32 %v8511, %v8713
        %v8785 = vadd.f32 %v8512, %v8715
        %v8786 = vadd.f32 %v8513, %v8717
        %v8787 = vadd.f32 %v8514, %v8721
        %v8788 = vadd.f32 %v8515, %v8723
        %v8789 = vadd.f32 %v8516, %v8725
        %v8790 = vadd.f32 %v8517, %v8727
        %v8791 = vadd.f32 %v8518, %v8731
        %v8792 = vadd.f32 %v8519, %v8733
        %v8793 = vadd.f32 %v8520, %v8735
        %v8794 = vadd.f32 %v8521, %v8737
        %v8795 = vadd.f32 %v8522, %v8741
        %v8796 = vadd.f32 %v8523, %v8743
        %v8797 = vadd.f32 %v8524, %v8745
        %v8798 = vadd.f32 %v8525, %v8747
        %v8799 = vadd.f32 %v8526, %v8751
        %v8800 = vadd.f32 %v8527, %v8753
        %v8801 = vadd.f32 %v8528, %v8755
        %v8802 = vadd.f32 %v8529, %v8757
        %v8803 = vadd.f32 %v8530, %v8761
        %v8804 = vadd.f32 %v8531, %v8763
        %v8805 = vadd.f32 %v8532, %v8765
        %v8806 = vadd.f32 %v8533, %v8767
        %v8807 = vadd.f32 %v8534, %v8771
        %v8808 = vadd.f32 %v8535, %v8773
        %v8809 = vadd.f32 %v8536, %v8775
        %v8810 = vadd.f32 %v8537, %v8777
        %8811 = vst [vmem:[#allocation3] sm:$0xff] %v8779
        %8812 = vst [vmem:[#allocation3 + $0x8] sm:$0xff] %v8780
        %8813 = vst [vmem:[#allocation3 + $0x10] sm:$0xff] %v8781
        %8814 = vst [vmem:[#allocation3 + $0x18] sm:$0xff] %v8782
        %8815 = vst [vmem:[#allocation3 + $0x20] sm:$0xff] %v8783
        %8816 = vst [vmem:[#allocation3 + $0x28] sm:$0xff] %v8784
        %8817 = vst [vmem:[#allocation3 + $0x30] sm:$0xff] %v8785
        %8818 = vst [vmem:[#allocation3 + $0x38] sm:$0xff] %v8786
        %8819 = vst [vmem:[#allocation3 + $0x40] sm:$0xff] %v8787
        %8820 = vst [vmem:[#allocation3 + $0x48] sm:$0xff] %v8788
        %8821 = vst [vmem:[#allocation3 + $0x50] sm:$0xff] %v8789
        %8822 = vst [vmem:[#allocation3 + $0x58] sm:$0xff] %v8790
        %8823 = vst [vmem:[#allocation3 + $0x60] sm:$0xff] %v8791
        %8824 = vst [vmem:[#allocation3 + $0x68] sm:$0xff] %v8792
        %8825 = vst [vmem:[#allocation3 + $0x70] sm:$0xff] %v8793
        %8826 = vst [vmem:[#allocation3 + $0x78] sm:$0xff] %v8794
        %8827 = vst [vmem:[#allocation3 + $0x80] sm:$0xff] %v8795
        %8828 = vst [vmem:[#allocation3 + $0x88] sm:$0xff] %v8796
        %8829 = vst [vmem:[#allocation3 + $0x90] sm:$0xff] %v8797
        %8830 = vst [vmem:[#allocation3 + $0x98] sm:$0xff] %v8798
        %8831 = vst [vmem:[#allocation3 + $0xa0] sm:$0xff] %v8799
        %8832 = vst [vmem:[#allocation3 + $0xa8] sm:$0xff] %v8800
        %8833 = vst [vmem:[#allocation3 + $0xb0] sm:$0xff] %v8801
        %8834 = vst [vmem:[#allocation3 + $0xb8] sm:$0xff] %v8802
        %8835 = vst [vmem:[#allocation3 + $0xc0] sm:$0xff] %v8803
        %8836 = vst [vmem:[#allocation3 + $0xc8] sm:$0xff] %v8804
        %8837 = vst [vmem:[#allocation3 + $0xd0] sm:$0xff] %v8805
        %8838 = vst [vmem:[#allocation3 + $0xd8] sm:$0xff] %v8806
        %8839 = vst [vmem:[#allocation3 + $0xe0] sm:$0xff] %v8807
        %8840 = vst [vmem:[#allocation3 + $0xe8] sm:$0xff] %v8808
        %8841 = vst [vmem:[#allocation3 + $0xf0] sm:$0xff] %v8809
        %8842 = vst [vmem:[#allocation3 + $0xf8] sm:$0xff] %v8810
        %v8851 = vrot.slane %v7937, 5
        %v8852 = vrot.slane %v8851, 4
        %v8853 = vrot.slane %v7938, 5
        %v8854 = vsel %vm1834, %v8852, %v8853
        %v8855 = vrot.slane %v8853, 4
        %v8856 = vrot.slane %v7939, 5
        %v8857 = vsel %vm1834, %v8855, %v8856
        %v8858 = vrot.slane %v7940, 5
        %v8859 = vrot.slane %v8858, 4
        %v8860 = vrot.slane %v7941, 5
        %v8861 = vsel %vm1834, %v8859, %v8860
        %v8862 = vrot.slane %v8860, 4
        %v8863 = vrot.slane %v7942, 5
        %v8864 = vsel %vm1834, %v8862, %v8863
        %v8865 = vrot.slane %v7943, 5
        %v8866 = vrot.slane %v8865, 4
        %v8867 = vrot.slane %v7944, 5
        %v8868 = vsel %vm1834, %v8866, %v8867
        %v8869 = vrot.slane %v8867, 4
        %v8870 = vrot.slane %v7945, 5
        %v8871 = vsel %vm1834, %v8869, %v8870
        %v8872 = vrot.slane %v7946, 5
        %v8873 = vrot.slane %v8872, 4
        %v8874 = vrot.slane %v7947, 5
        %v8875 = vsel %vm1834, %v8873, %v8874
        %v8876 = vrot.slane %v8874, 4
        %v8877 = vrot.slane %v7948, 5
        %v8878 = vsel %vm1834, %v8876, %v8877
        %v8879 = vrot.slane %v7949, 5
        %v8880 = vrot.slane %v8879, 4
        %v8881 = vrot.slane %v7950, 5
        %v8882 = vsel %vm1834, %v8880, %v8881
        %v8883 = vrot.slane %v8881, 4
        %v8884 = vrot.slane %v7951, 5
        %v8885 = vsel %vm1834, %v8883, %v8884
        %v8886 = vrot.slane %v7952, 5
        %v8887 = vrot.slane %v8886, 4
        %v8888 = vrot.slane %v7953, 5
        %v8889 = vsel %vm1834, %v8887, %v8888
        %v8890 = vrot.slane %v8888, 4
        %v8891 = vrot.slane %v7954, 5
        %v8892 = vsel %vm1834, %v8890, %v8891
        %v8893 = vrot.slane %v7955, 5
        %v8894 = vrot.slane %v8893, 4
        %v8895 = vrot.slane %v7956, 5
        %v8896 = vsel %vm1834, %v8894, %v8895
        %v8897 = vrot.slane %v8895, 4
        %v8898 = vrot.slane %v7957, 5
        %v8899 = vsel %vm1834, %v8897, %v8898
        %v8900 = vrot.slane %v7958, 5
        %v8901 = vrot.slane %v8900, 4
        %v8902 = vrot.slane %v7959, 5
        %v8903 = vsel %vm1834, %v8901, %v8902
        %v8904 = vrot.slane %v8902, 4
        %v8905 = vrot.slane %v7960, 5
        %v8906 = vsel %vm1834, %v8904, %v8905
        %v8907 = vld [vmem:[#allocation3] sm:$0xff]
        %v8908 = vld [vmem:[#allocation3 + $0x8] sm:$0xff]
        %v8909 = vld [vmem:[#allocation3 + $0x10] sm:$0xff]
        %v8910 = vld [vmem:[#allocation3 + $0x18] sm:$0xff]
        %v8911 = vld [vmem:[#allocation3 + $0x20] sm:$0xff]
        %v8912 = vld [vmem:[#allocation3 + $0x28] sm:$0xff]
        %v8913 = vld [vmem:[#allocation3 + $0x30] sm:$0xff]
        %v8914 = vld [vmem:[#allocation3 + $0x38] sm:$0xff]
        %v8915 = vld [vmem:[#allocation3 + $0x40] sm:$0xff]
        %v8916 = vld [vmem:[#allocation3 + $0x48] sm:$0xff]
        %v8917 = vld [vmem:[#allocation3 + $0x50] sm:$0xff]
        %v8918 = vld [vmem:[#allocation3 + $0x58] sm:$0xff]
        %v8919 = vld [vmem:[#allocation3 + $0x60] sm:$0xff]
        %v8920 = vld [vmem:[#allocation3 + $0x68] sm:$0xff]
        %v8921 = vld [vmem:[#allocation3 + $0x70] sm:$0xff]
        %v8922 = vld [vmem:[#allocation3 + $0x78] sm:$0xff]
        %v8923 = vld [vmem:[#allocation3 + $0x80] sm:$0xff]
        %v8924 = vld [vmem:[#allocation3 + $0x88] sm:$0xff]
        %v8925 = vld [vmem:[#allocation3 + $0x90] sm:$0xff]
        %v8926 = vld [vmem:[#allocation3 + $0x98] sm:$0xff]
        %v8927 = vld [vmem:[#allocation3 + $0xa0] sm:$0xff]
        %v8928 = vld [vmem:[#allocation3 + $0xa8] sm:$0xff]
        %v8929 = vld [vmem:[#allocation3 + $0xb0] sm:$0xff]
        %v8930 = vld [vmem:[#allocation3 + $0xb8] sm:$0xff]
        %v8931 = vld [vmem:[#allocation3 + $0xc0] sm:$0xff]
        %v8932 = vld [vmem:[#allocation3 + $0xc8] sm:$0xff]
        %v8933 = vld [vmem:[#allocation3 + $0xd0] sm:$0xff]
        %v8934 = vld [vmem:[#allocation3 + $0xd8] sm:$0xff]
        %v8935 = vld [vmem:[#allocation3 + $0xe0] sm:$0xff]
        %v8936 = vld [vmem:[#allocation3 + $0xe8] sm:$0xff]
        %v8937 = vld [vmem:[#allocation3 + $0xf0] sm:$0xff]
        %v8938 = vld [vmem:[#allocation3 + $0xf8] sm:$0xff]
        %v8939 = vld [vmem:[%s4544] sm:$0xff]
        %v8940 = vld [vmem:[%s4544 + $0x8] sm:$0xff]
        %v8941 = vld [vmem:[%s4544 + $0x10] sm:$0xff]
        %v8942 = vld [vmem:[%s4544 + $0x18] sm:$0xff]
        %v8943 = vld [vmem:[%s4544 + $0x20] sm:$0xff]
        %v8944 = vld [vmem:[%s4544 + $0x28] sm:$0xff]
        %v8945 = vld [vmem:[%s4544 + $0x30] sm:$0xff]
        %v8946 = vld [vmem:[%s4544 + $0x38] sm:$0xff]
        %v8947 = vld [vmem:[%s4544 + $0x40] sm:$0xff]
        %v8948 = vld [vmem:[%s4544 + $0x48] sm:$0xff]
        %v8949 = vld [vmem:[%s4544 + $0x50] sm:$0xff]
        %v8950 = vld [vmem:[%s4544 + $0x58] sm:$0xff]
        %v8951 = vld [vmem:[%s4544 + $0x60] sm:$0xff]
        %v8952 = vld [vmem:[%s4544 + $0x68] sm:$0xff]
        %v8953 = vld [vmem:[%s4544 + $0x70] sm:$0xff]
        %v8954 = vld [vmem:[%s4544 + $0x78] sm:$0xff]
        %v8955 = vunpack.c.l.b16 %v8854
        %v8956 = vunpack.c.l.b16 %v8857
        %v8957 = vunpack.c.l.b16 %v8861
        %v8958 = vunpack.c.l.b16 %v8864
        %v8959 = vunpack.c.l.b16 %v8868
        %v8960 = vunpack.c.l.b16 %v8871
        %v8961 = vunpack.c.l.b16 %v8875
        %v8962 = vunpack.c.l.b16 %v8878
        %v8963 = vunpack.c.l.b16 %v8882
        %v8964 = vunpack.c.l.b16 %v8885
        %v8965 = vunpack.c.l.b16 %v8889
        %v8966 = vunpack.c.l.b16 %v8892
        %v8967 = vunpack.c.l.b16 %v8896
        %v8968 = vunpack.c.l.b16 %v8899
        %v8969 = vunpack.c.l.b16 %v8903
        %v8970 = vunpack.c.l.b16 %v8906
        %v8971 = vpack.c.b16 %v8956, %v8955
        %v8972 = vpack.c.b16 %v8958, %v8957
        %v8973 = vpack.c.b16 %v8960, %v8959
        %v8974 = vpack.c.b16 %v8962, %v8961
        %v8975 = vpack.c.b16 %v8964, %v8963
        %v8976 = vpack.c.b16 %v8966, %v8965
        %v8977 = vpack.c.b16 %v8968, %v8967
        %v8978 = vpack.c.b16 %v8970, %v8969
        %v9003 = vunpack.c.l.b16 %v8939
        %v9004 = vunpack.c.h.b16 %v8939
        %v9005 = vunpack.c.l.b16 %v8940
        %v9006 = vunpack.c.h.b16 %v8940
        %v9007 = vunpack.c.l.b16 %v8941
        %v9008 = vunpack.c.h.b16 %v8941
        %v9009 = vunpack.c.l.b16 %v8942
        %v9010 = vunpack.c.h.b16 %v8942
        %v9011 = vunpack.c.l.b16 %v8943
        %v9012 = vunpack.c.h.b16 %v8943
        %v9013 = vunpack.c.l.b16 %v8944
        %v9014 = vunpack.c.h.b16 %v8944
        %v9015 = vunpack.c.l.b16 %v8945
        %v9016 = vunpack.c.h.b16 %v8945
        %v9017 = vunpack.c.l.b16 %v8946
        %v9018 = vunpack.c.h.b16 %v8946
        %v9019 = vunpack.c.l.b16 %v8947
        %v9020 = vunpack.c.h.b16 %v8947
        %v9021 = vunpack.c.l.b16 %v8948
        %v9022 = vunpack.c.h.b16 %v8948
        %v9023 = vunpack.c.l.b16 %v8949
        %v9024 = vunpack.c.h.b16 %v8949
        %v9025 = vunpack.c.l.b16 %v8950
        %v9026 = vunpack.c.h.b16 %v8950
        %v9027 = vunpack.c.l.b16 %v8951
        %v9028 = vunpack.c.h.b16 %v8951
        %v9029 = vunpack.c.l.b16 %v8952
        %v9030 = vunpack.c.h.b16 %v8952
        %v9031 = vunpack.c.l.b16 %v8953
        %v9032 = vunpack.c.h.b16 %v8953
        %v9033 = vunpack.c.l.b16 %v8954
        %v9034 = vunpack.c.h.b16 %v8954
        %v9035 = vpack.c.b16 %v9005, %v9003
        %v9036 = vpack.c.b16 %v9006, %v9004
        %v9037 = vpack.c.b16 %v9009, %v9007
        %v9038 = vpack.c.b16 %v9010, %v9008
        %v9039 = vpack.c.b16 %v9013, %v9011
        %v9040 = vpack.c.b16 %v9014, %v9012
        %v9041 = vpack.c.b16 %v9017, %v9015
        %v9042 = vpack.c.b16 %v9018, %v9016
        %v9043 = vpack.c.b16 %v9021, %v9019
        %v9044 = vpack.c.b16 %v9022, %v9020
        %v9045 = vpack.c.b16 %v9025, %v9023
        %v9046 = vpack.c.b16 %v9026, %v9024
        %v9047 = vpack.c.b16 %v9029, %v9027
        %v9048 = vpack.c.b16 %v9030, %v9028
        %v9049 = vpack.c.b16 %v9033, %v9031
        %v9050 = vpack.c.b16 %v9034, %v9032
        %9067 = vmatprep.subr.bf16.mxu0 %v9050
        %9068 = vmatpush1.bf16.msra.mxu0 %v9049
        %9069 = vmatprep.subr.bf16.mxu0 %v9048
        %9070 = vmatpush1.bf16.msra.mxu0 %v9047
        %9071 = vmatprep.subr.bf16.mxu0 %v9046
        %9072 = vmatpush1.bf16.msra.mxu0 %v9045
        %9073 = vmatprep.subr.bf16.mxu0 %v9044
        %9074 = vmatpush1.bf16.msra.mxu0 %v9043
        %9075 = vmatprep.subr.bf16.mxu0 %v9042
        %9076 = vmatpush1.bf16.msra.mxu0 %v9041
        %9077 = vmatprep.subr.bf16.mxu0 %v9040
        %9078 = vmatpush1.bf16.msra.mxu0 %v9039
        %9079 = vmatprep.subr.bf16.mxu0 %v9038
        %9080 = vmatpush1.bf16.msra.mxu0 %v9037
        %9081 = vmatprep.subr.bf16.mxu0 %v9036
        %9082 = vmatpush1.bf16.msra.mxu0 %v9035
        %9083 = vmatprep.subr.bf16.mxu0 0
        %9084 = vmatpush2.bf16.msra.mxu0 0
        %9085 = vmatprep.subr.bf16.mxu0 0
        %9086 = vmatpush2.bf16.msra.mxu0 0
        %9087 = vmatprep.subr.bf16.mxu0 0
        %9088 = vmatpush2.bf16.msra.mxu0 0
        %9089 = vmatprep.subr.bf16.mxu0 0
        %9090 = vmatpush2.bf16.msra.mxu0 0
        %9091 = vmatprep.subr.bf16.mxu0 0
        %9092 = vmatpush2.bf16.msra.mxu0 0
        %9093 = vmatprep.subr.bf16.mxu0 0
        %9094 = vmatpush2.bf16.msra.mxu0 0
        %9095 = vmatprep.subr.bf16.mxu0 0
        %9096 = vmatpush2.bf16.msra.mxu0 0
        %9097 = vmatprep.subr.bf16.mxu0 0
        %9098 = vmatpush2.bf16.msra.mxu0 0
        %9099 = vmatprep.mubr.bf16.mxu0 0
        %9100 = vmatmul.mubr.bf16.gmra.mxu0 %v8971
        %v9101 = vpop.f32.mrf.mxu0
        %v9102 = vadd.f32 0.0, %v9101
        %v9103 = vpop.f32.mrf.mxu0
        %v9104 = vadd.f32 0.0, %v9103
        %v9105 = vpop.f32.mrf.mxu0
        %v9106 = vadd.f32 0.0, %v9105
        %v9107 = vpop.f32.mrf.mxu0
        %v9108 = vadd.f32 0.0, %v9107
        %9109 = vmatprep.mubr.bf16.mxu0 0
        %9110 = vmatmul.mubr.bf16.gmra.mxu0 %v8972
        %v9111 = vpop.f32.mrf.mxu0
        %v9112 = vadd.f32 0.0, %v9111
        %v9113 = vpop.f32.mrf.mxu0
        %v9114 = vadd.f32 0.0, %v9113
        %v9115 = vpop.f32.mrf.mxu0
        %v9116 = vadd.f32 0.0, %v9115
        %v9117 = vpop.f32.mrf.mxu0
        %v9118 = vadd.f32 0.0, %v9117
        %9119 = vmatprep.mubr.bf16.mxu0 0
        %9120 = vmatmul.mubr.bf16.gmra.mxu0 %v8973
        %v9121 = vpop.f32.mrf.mxu0
        %v9122 = vadd.f32 0.0, %v9121
        %v9123 = vpop.f32.mrf.mxu0
        %v9124 = vadd.f32 0.0, %v9123
        %v9125 = vpop.f32.mrf.mxu0
        %v9126 = vadd.f32 0.0, %v9125
        %v9127 = vpop.f32.mrf.mxu0
        %v9128 = vadd.f32 0.0, %v9127
        %9129 = vmatprep.mubr.bf16.mxu0 0
        %9130 = vmatmul.mubr.bf16.gmra.mxu0 %v8974
        %v9131 = vpop.f32.mrf.mxu0
        %v9132 = vadd.f32 0.0, %v9131
        %v9133 = vpop.f32.mrf.mxu0
        %v9134 = vadd.f32 0.0, %v9133
        %v9135 = vpop.f32.mrf.mxu0
        %v9136 = vadd.f32 0.0, %v9135
        %v9137 = vpop.f32.mrf.mxu0
        %v9138 = vadd.f32 0.0, %v9137
        %9139 = vmatprep.mubr.bf16.mxu0 0
        %9140 = vmatmul.mubr.bf16.gmra.mxu0 %v8975
        %v9141 = vpop.f32.mrf.mxu0
        %v9142 = vadd.f32 0.0, %v9141
        %v9143 = vpop.f32.mrf.mxu0
        %v9144 = vadd.f32 0.0, %v9143
        %v9145 = vpop.f32.mrf.mxu0
        %v9146 = vadd.f32 0.0, %v9145
        %v9147 = vpop.f32.mrf.mxu0
        %v9148 = vadd.f32 0.0, %v9147
        %9149 = vmatprep.mubr.bf16.mxu0 0
        %9150 = vmatmul.mubr.bf16.gmra.mxu0 %v8976
        %v9151 = vpop.f32.mrf.mxu0
        %v9152 = vadd.f32 0.0, %v9151
        %v9153 = vpop.f32.mrf.mxu0
        %v9154 = vadd.f32 0.0, %v9153
        %v9155 = vpop.f32.mrf.mxu0
        %v9156 = vadd.f32 0.0, %v9155
        %v9157 = vpop.f32.mrf.mxu0
        %v9158 = vadd.f32 0.0, %v9157
        %9159 = vmatprep.mubr.bf16.mxu0 0
        %9160 = vmatmul.mubr.bf16.gmra.mxu0 %v8977
        %v9161 = vpop.f32.mrf.mxu0
        %v9162 = vadd.f32 0.0, %v9161
        %v9163 = vpop.f32.mrf.mxu0
        %v9164 = vadd.f32 0.0, %v9163
        %v9165 = vpop.f32.mrf.mxu0
        %v9166 = vadd.f32 0.0, %v9165
        %v9167 = vpop.f32.mrf.mxu0
        %v9168 = vadd.f32 0.0, %v9167
        %9169 = vmatprep.mubr.bf16.mxu0 0
        %9170 = vmatmul.mubr.bf16.gmra.mxu0 %v8978
        %v9171 = vpop.f32.mrf.mxu0
        %v9172 = vadd.f32 0.0, %v9171
        %v9173 = vpop.f32.mrf.mxu0
        %v9174 = vadd.f32 0.0, %v9173
        %v9175 = vpop.f32.mrf.mxu0
        %v9176 = vadd.f32 0.0, %v9175
        %v9177 = vpop.f32.mrf.mxu0
        %v9178 = vadd.f32 0.0, %v9177
        %9179 = vdwg.mxu0
        %v9180 = vadd.f32 %v8907, %v9102
        %v9181 = vadd.f32 %v8908, %v9104
        %v9182 = vadd.f32 %v8909, %v9106
        %v9183 = vadd.f32 %v8910, %v9108
        %v9184 = vadd.f32 %v8911, %v9112
        %v9185 = vadd.f32 %v8912, %v9114
        %v9186 = vadd.f32 %v8913, %v9116
        %v9187 = vadd.f32 %v8914, %v9118
        %v9188 = vadd.f32 %v8915, %v9122
        %v9189 = vadd.f32 %v8916, %v9124
        %v9190 = vadd.f32 %v8917, %v9126
        %v9191 = vadd.f32 %v8918, %v9128
        %v9192 = vadd.f32 %v8919, %v9132
        %v9193 = vadd.f32 %v8920, %v9134
        %v9194 = vadd.f32 %v8921, %v9136
        %v9195 = vadd.f32 %v8922, %v9138
        %v9196 = vadd.f32 %v8923, %v9142
        %v9197 = vadd.f32 %v8924, %v9144
        %v9198 = vadd.f32 %v8925, %v9146
        %v9199 = vadd.f32 %v8926, %v9148
        %v9200 = vadd.f32 %v8927, %v9152
        %v9201 = vadd.f32 %v8928, %v9154
        %v9202 = vadd.f32 %v8929, %v9156
        %v9203 = vadd.f32 %v8930, %v9158
        %v9204 = vadd.f32 %v8931, %v9162
        %v9205 = vadd.f32 %v8932, %v9164
        %v9206 = vadd.f32 %v8933, %v9166
        %v9207 = vadd.f32 %v8934, %v9168
        %v9208 = vadd.f32 %v8935, %v9172
        %v9209 = vadd.f32 %v8936, %v9174
        %v9210 = vadd.f32 %v8937, %v9176
        %v9211 = vadd.f32 %v8938, %v9178
        %9212 = vst [vmem:[#allocation3] sm:$0xff] %v9180
        %9213 = vst [vmem:[#allocation3 + $0x8] sm:$0xff] %v9181
        %9214 = vst [vmem:[#allocation3 + $0x10] sm:$0xff] %v9182
        %9215 = vst [vmem:[#allocation3 + $0x18] sm:$0xff] %v9183
        %9216 = vst [vmem:[#allocation3 + $0x20] sm:$0xff] %v9184
        %9217 = vst [vmem:[#allocation3 + $0x28] sm:$0xff] %v9185
        %9218 = vst [vmem:[#allocation3 + $0x30] sm:$0xff] %v9186
        %9219 = vst [vmem:[#allocation3 + $0x38] sm:$0xff] %v9187
        %9220 = vst [vmem:[#allocation3 + $0x40] sm:$0xff] %v9188
        %9221 = vst [vmem:[#allocation3 + $0x48] sm:$0xff] %v9189
        %9222 = vst [vmem:[#allocation3 + $0x50] sm:$0xff] %v9190
        %9223 = vst [vmem:[#allocation3 + $0x58] sm:$0xff] %v9191
        %9224 = vst [vmem:[#allocation3 + $0x60] sm:$0xff] %v9192
        %9225 = vst [vmem:[#allocation3 + $0x68] sm:$0xff] %v9193
        %9226 = vst [vmem:[#allocation3 + $0x70] sm:$0xff] %v9194
        %9227 = vst [vmem:[#allocation3 + $0x78] sm:$0xff] %v9195
        %9228 = vst [vmem:[#allocation3 + $0x80] sm:$0xff] %v9196
        %9229 = vst [vmem:[#allocation3 + $0x88] sm:$0xff] %v9197
        %9230 = vst [vmem:[#allocation3 + $0x90] sm:$0xff] %v9198
        %9231 = vst [vmem:[#allocation3 + $0x98] sm:$0xff] %v9199
        %9232 = vst [vmem:[#allocation3 + $0xa0] sm:$0xff] %v9200
        %9233 = vst [vmem:[#allocation3 + $0xa8] sm:$0xff] %v9201
        %9234 = vst [vmem:[#allocation3 + $0xb0] sm:$0xff] %v9202
        %9235 = vst [vmem:[#allocation3 + $0xb8] sm:$0xff] %v9203
        %9236 = vst [vmem:[#allocation3 + $0xc0] sm:$0xff] %v9204
        %9237 = vst [vmem:[#allocation3 + $0xc8] sm:$0xff] %v9205
        %9238 = vst [vmem:[#allocation3 + $0xd0] sm:$0xff] %v9206
        %9239 = vst [vmem:[#allocation3 + $0xd8] sm:$0xff] %v9207
        %9240 = vst [vmem:[#allocation3 + $0xe0] sm:$0xff] %v9208
        %9241 = vst [vmem:[#allocation3 + $0xe8] sm:$0xff] %v9209
        %9242 = vst [vmem:[#allocation3 + $0xf0] sm:$0xff] %v9210
        %9243 = vst [vmem:[#allocation3 + $0xf8] sm:$0xff] %v9211
        %v9244 = vld [vmem:[#allocation3] sm:$0xff]
        %v9245 = vld [vmem:[#allocation3 + $0x8] sm:$0xff]
        %v9246 = vld [vmem:[#allocation3 + $0x10] sm:$0xff]
        %v9247 = vld [vmem:[#allocation3 + $0x18] sm:$0xff]
        %v9248 = vpack.c.bf16 %v9246, %v9244
        %v9249 = vpack.c.bf16 %v9247, %v9245
        %v9252 = vunpack.c.l.b16 %v9248
        %v9253 = vunpack.c.l.b16 %v9249
        %v9254 = vunpack.c.h.b16 %v9248
        %v9255 = vunpack.c.h.b16 %v9249
        %v9256 = vpack.c.b16 %v9253, %v9252
        %v9257 = vpack.c.b16 %v9255, %v9254
        %s9260 = scalar_lea.vmem %s285, 128 [#allocation9]
        %9261 = vst [vmem:[%s9260] sm:$0xff] %v9256
        %9262 = vst [vmem:[%s9260 + $0x8] sm:$0xff] %v9257
        %v9263 = vadd.f32 %v9244, %v9246
        %v9264 = vrot.slane %v9263, 4
        %v9265 = vadd.f32 %v9263, %v9264
        %v9266 = vrot.slane %v9265, 2
        %v9267 = vadd.f32 %v9265, %v9266
        %v9268 = vrot.slane %v9267, 1
        %v9269 = vadd.f32 %v9267, %v9268
        %v9270 = vadd.f32 %v9245, %v9247
        %v9271 = vrot.slane %v9270, 4
        %v9272 = vadd.f32 %v9270, %v9271
        %v9273 = vrot.slane %v9272, 2
        %v9274 = vadd.f32 %v9272, %v9273
        %v9275 = vrot.slane %v9274, 1
        %v9276 = vadd.f32 %v9274, %v9275
        %v9277 = vadd.f32 %v5267, %v9269
        %v9278 = vadd.f32 %v5268, %v9276
        %v9279 = vmul.f32 %v9244, %v9244
        %v9280 = vmul.f32 %v9245, %v9245
        %v9281 = vmul.f32 %v9246, %v9246
        %v9282 = vmul.f32 %v9247, %v9247
        %v9283 = vadd.f32 %v9279, %v9281
        %v9284 = vrot.slane %v9283, 4
        %v9285 = vadd.f32 %v9283, %v9284
        %v9286 = vrot.slane %v9285, 2
        %v9287 = vadd.f32 %v9285, %v9286
        %v9288 = vrot.slane %v9287, 1
        %v9289 = vadd.f32 %v9287, %v9288
        %v9290 = vadd.f32 %v9280, %v9282
        %v9291 = vrot.slane %v9290, 4
        %v9292 = vadd.f32 %v9290, %v9291
        %v9293 = vrot.slane %v9292, 2
        %v9294 = vadd.f32 %v9292, %v9293
        %v9295 = vrot.slane %v9294, 1
        %v9296 = vadd.f32 %v9294, %v9295
        %v9297 = vadd.f32 %v5287, %v9289
        %v9298 = vadd.f32 %v5288, %v9296
        %v9299 = vld [vmem:[#allocation3 + $0x20] sm:$0xff]
        %v9300 = vld [vmem:[#allocation3 + $0x28] sm:$0xff]
        %v9301 = vld [vmem:[#allocation3 + $0x30] sm:$0xff]
        %v9302 = vld [vmem:[#allocation3 + $0x38] sm:$0xff]
        %v9303 = vpack.c.bf16 %v9301, %v9299
        %v9304 = vpack.c.bf16 %v9302, %v9300
        %v9307 = vunpack.c.l.b16 %v9303
        %v9308 = vunpack.c.l.b16 %v9304
        %v9309 = vunpack.c.h.b16 %v9303
        %v9310 = vunpack.c.h.b16 %v9304
        %v9311 = vpack.c.b16 %v9308, %v9307
        %v9312 = vpack.c.b16 %v9310, %v9309
        %s9315 = scalar_lea.vmem %s285, 144 [#allocation9]
        %9316 = vst [vmem:[%s9315] sm:$0xff] %v9311
        %9317 = vst [vmem:[%s9315 + $0x8] sm:$0xff] %v9312
        %v9318 = vadd.f32 %v9299, %v9301
        %v9319 = vrot.slane %v9318, 4
        %v9320 = vadd.f32 %v9318, %v9319
        %v9321 = vrot.slane %v9320, 2
        %v9322 = vadd.f32 %v9320, %v9321
        %v9323 = vrot.slane %v9322, 1
        %v9324 = vadd.f32 %v9322, %v9323
        %v9325 = vadd.f32 %v9300, %v9302
        %v9326 = vrot.slane %v9325, 4
        %v9327 = vadd.f32 %v9325, %v9326
        %v9328 = vrot.slane %v9327, 2
        %v9329 = vadd.f32 %v9327, %v9328
        %v9330 = vrot.slane %v9329, 1
        %v9331 = vadd.f32 %v9329, %v9330
        %v9332 = vadd.f32 %v9277, %v9324
        %v9333 = vadd.f32 %v9278, %v9331
        %v9334 = vmul.f32 %v9299, %v9299
        %v9335 = vmul.f32 %v9300, %v9300
        %v9336 = vmul.f32 %v9301, %v9301
        %v9337 = vmul.f32 %v9302, %v9302
        %v9338 = vadd.f32 %v9334, %v9336
        %v9339 = vrot.slane %v9338, 4
        %v9340 = vadd.f32 %v9338, %v9339
        %v9341 = vrot.slane %v9340, 2
        %v9342 = vadd.f32 %v9340, %v9341
        %v9343 = vrot.slane %v9342, 1
        %v9344 = vadd.f32 %v9342, %v9343
        %v9345 = vadd.f32 %v9335, %v9337
        %v9346 = vrot.slane %v9345, 4
        %v9347 = vadd.f32 %v9345, %v9346
        %v9348 = vrot.slane %v9347, 2
        %v9349 = vadd.f32 %v9347, %v9348
        %v9350 = vrot.slane %v9349, 1
        %v9351 = vadd.f32 %v9349, %v9350
        %v9352 = vadd.f32 %v9297, %v9344
        %v9353 = vadd.f32 %v9298, %v9351
        %v9354 = vld [vmem:[#allocation3 + $0x40] sm:$0xff]
        %v9355 = vld [vmem:[#allocation3 + $0x48] sm:$0xff]
        %v9356 = vld [vmem:[#allocation3 + $0x50] sm:$0xff]
        %v9357 = vld [vmem:[#allocation3 + $0x58] sm:$0xff]
        %v9358 = vpack.c.bf16 %v9356, %v9354
        %v9359 = vpack.c.bf16 %v9357, %v9355
        %v9362 = vunpack.c.l.b16 %v9358
        %v9363 = vunpack.c.l.b16 %v9359
        %v9364 = vunpack.c.h.b16 %v9358
        %v9365 = vunpack.c.h.b16 %v9359
        %v9366 = vpack.c.b16 %v9363, %v9362
        %v9367 = vpack.c.b16 %v9365, %v9364
        %s9370 = scalar_lea.vmem %s285, 160 [#allocation9]
        %9371 = vst [vmem:[%s9370] sm:$0xff] %v9366
        %9372 = vst [vmem:[%s9370 + $0x8] sm:$0xff] %v9367
        %v9373 = vadd.f32 %v9354, %v9356
        %v9374 = vrot.slane %v9373, 4
        %v9375 = vadd.f32 %v9373, %v9374
        %v9376 = vrot.slane %v9375, 2
        %v9377 = vadd.f32 %v9375, %v9376
        %v9378 = vrot.slane %v9377, 1
        %v9379 = vadd.f32 %v9377, %v9378
        %v9380 = vadd.f32 %v9355, %v9357
        %v9381 = vrot.slane %v9380, 4
        %v9382 = vadd.f32 %v9380, %v9381
        %v9383 = vrot.slane %v9382, 2
        %v9384 = vadd.f32 %v9382, %v9383
        %v9385 = vrot.slane %v9384, 1
        %v9386 = vadd.f32 %v9384, %v9385
        %v9387 = vadd.f32 %v9332, %v9379
        %v9388 = vadd.f32 %v9333, %v9386
        %v9389 = vmul.f32 %v9354, %v9354
        %v9390 = vmul.f32 %v9355, %v9355
        %v9391 = vmul.f32 %v9356, %v9356
        %v9392 = vmul.f32 %v9357, %v9357
        %v9393 = vadd.f32 %v9389, %v9391
        %v9394 = vrot.slane %v9393, 4
        %v9395 = vadd.f32 %v9393, %v9394
        %v9396 = vrot.slane %v9395, 2
        %v9397 = vadd.f32 %v9395, %v9396
        %v9398 = vrot.slane %v9397, 1
        %v9399 = vadd.f32 %v9397, %v9398
        %v9400 = vadd.f32 %v9390, %v9392
        %v9401 = vrot.slane %v9400, 4
        %v9402 = vadd.f32 %v9400, %v9401
        %v9403 = vrot.slane %v9402, 2
        %v9404 = vadd.f32 %v9402, %v9403
        %v9405 = vrot.slane %v9404, 1
        %v9406 = vadd.f32 %v9404, %v9405
        %v9407 = vadd.f32 %v9352, %v9399
        %v9408 = vadd.f32 %v9353, %v9406
        %v9409 = vld [vmem:[#allocation3 + $0x60] sm:$0xff]
        %v9410 = vld [vmem:[#allocation3 + $0x68] sm:$0xff]
        %v9411 = vld [vmem:[#allocation3 + $0x70] sm:$0xff]
        %v9412 = vld [vmem:[#allocation3 + $0x78] sm:$0xff]
        %v9413 = vpack.c.bf16 %v9411, %v9409
        %v9414 = vpack.c.bf16 %v9412, %v9410
        %v9417 = vunpack.c.l.b16 %v9413
        %v9418 = vunpack.c.l.b16 %v9414
        %v9419 = vunpack.c.h.b16 %v9413
        %v9420 = vunpack.c.h.b16 %v9414
        %v9421 = vpack.c.b16 %v9418, %v9417
        %v9422 = vpack.c.b16 %v9420, %v9419
        %s9425 = scalar_lea.vmem %s285, 176 [#allocation9]
        %9426 = vst [vmem:[%s9425] sm:$0xff] %v9421
        %9427 = vst [vmem:[%s9425 + $0x8] sm:$0xff] %v9422
        %v9428 = vadd.f32 %v9409, %v9411
        %v9429 = vrot.slane %v9428, 4
        %v9430 = vadd.f32 %v9428, %v9429
        %v9431 = vrot.slane %v9430, 2
        %v9432 = vadd.f32 %v9430, %v9431
        %v9433 = vrot.slane %v9432, 1
        %v9434 = vadd.f32 %v9432, %v9433
        %v9435 = vadd.f32 %v9410, %v9412
        %v9436 = vrot.slane %v9435, 4
        %v9437 = vadd.f32 %v9435, %v9436
        %v9438 = vrot.slane %v9437, 2
        %v9439 = vadd.f32 %v9437, %v9438
        %v9440 = vrot.slane %v9439, 1
        %v9441 = vadd.f32 %v9439, %v9440
        %v9442 = vadd.f32 %v9387, %v9434
        %v9443 = vadd.f32 %v9388, %v9441
        %v9444 = vmul.f32 %v9409, %v9409
        %v9445 = vmul.f32 %v9410, %v9410
        %v9446 = vmul.f32 %v9411, %v9411
        %v9447 = vmul.f32 %v9412, %v9412
        %v9448 = vadd.f32 %v9444, %v9446
        %v9449 = vrot.slane %v9448, 4
        %v9450 = vadd.f32 %v9448, %v9449
        %v9451 = vrot.slane %v9450, 2
        %v9452 = vadd.f32 %v9450, %v9451
        %v9453 = vrot.slane %v9452, 1
        %v9454 = vadd.f32 %v9452, %v9453
        %v9455 = vadd.f32 %v9445, %v9447
        %v9456 = vrot.slane %v9455, 4
        %v9457 = vadd.f32 %v9455, %v9456
        %v9458 = vrot.slane %v9457, 2
        %v9459 = vadd.f32 %v9457, %v9458
        %v9460 = vrot.slane %v9459, 1
        %v9461 = vadd.f32 %v9459, %v9460
        %v9462 = vadd.f32 %v9407, %v9454
        %v9463 = vadd.f32 %v9408, %v9461
        %v9464 = vld [vmem:[#allocation3 + $0x80] sm:$0xff]
        %v9465 = vld [vmem:[#allocation3 + $0x88] sm:$0xff]
        %v9466 = vld [vmem:[#allocation3 + $0x90] sm:$0xff]
        %v9467 = vld [vmem:[#allocation3 + $0x98] sm:$0xff]
        %v9468 = vpack.c.bf16 %v9466, %v9464
        %v9469 = vpack.c.bf16 %v9467, %v9465
        %v9472 = vunpack.c.l.b16 %v9468
        %v9473 = vunpack.c.l.b16 %v9469
        %v9474 = vunpack.c.h.b16 %v9468
        %v9475 = vunpack.c.h.b16 %v9469
        %v9476 = vpack.c.b16 %v9473, %v9472
        %v9477 = vpack.c.b16 %v9475, %v9474
        %s9480 = scalar_lea.vmem %s285, 192 [#allocation9]
        %9481 = vst [vmem:[%s9480] sm:$0xff] %v9476
        %9482 = vst [vmem:[%s9480 + $0x8] sm:$0xff] %v9477
        %v9483 = vadd.f32 %v9464, %v9466
        %v9484 = vrot.slane %v9483, 4
        %v9485 = vadd.f32 %v9483, %v9484
        %v9486 = vrot.slane %v9485, 2
        %v9487 = vadd.f32 %v9485, %v9486
        %v9488 = vrot.slane %v9487, 1
        %v9489 = vadd.f32 %v9487, %v9488
        %v9490 = vadd.f32 %v9465, %v9467
        %v9491 = vrot.slane %v9490, 4
        %v9492 = vadd.f32 %v9490, %v9491
        %v9493 = vrot.slane %v9492, 2
        %v9494 = vadd.f32 %v9492, %v9493
        %v9495 = vrot.slane %v9494, 1
        %v9496 = vadd.f32 %v9494, %v9495
        %v9497 = vadd.f32 %v9442, %v9489
        %v9498 = vadd.f32 %v9443, %v9496
        %v9499 = vmul.f32 %v9464, %v9464
        %v9500 = vmul.f32 %v9465, %v9465
        %v9501 = vmul.f32 %v9466, %v9466
        %v9502 = vmul.f32 %v9467, %v9467
        %v9503 = vadd.f32 %v9499, %v9501
        %v9504 = vrot.slane %v9503, 4
        %v9505 = vadd.f32 %v9503, %v9504
        %v9506 = vrot.slane %v9505, 2
        %v9507 = vadd.f32 %v9505, %v9506
        %v9508 = vrot.slane %v9507, 1
        %v9509 = vadd.f32 %v9507, %v9508
        %v9510 = vadd.f32 %v9500, %v9502
        %v9511 = vrot.slane %v9510, 4
        %v9512 = vadd.f32 %v9510, %v9511
        %v9513 = vrot.slane %v9512, 2
        %v9514 = vadd.f32 %v9512, %v9513
        %v9515 = vrot.slane %v9514, 1
        %v9516 = vadd.f32 %v9514, %v9515
        %v9517 = vadd.f32 %v9462, %v9509
        %v9518 = vadd.f32 %v9463, %v9516
        %v9519 = vld [vmem:[#allocation3 + $0xa0] sm:$0xff]
        %v9520 = vld [vmem:[#allocation3 + $0xa8] sm:$0xff]
        %v9521 = vld [vmem:[#allocation3 + $0xb0] sm:$0xff]
        %v9522 = vld [vmem:[#allocation3 + $0xb8] sm:$0xff]
        %v9523 = vpack.c.bf16 %v9521, %v9519
        %v9524 = vpack.c.bf16 %v9522, %v9520
        %v9527 = vunpack.c.l.b16 %v9523
        %v9528 = vunpack.c.l.b16 %v9524
        %v9529 = vunpack.c.h.b16 %v9523
        %v9530 = vunpack.c.h.b16 %v9524
        %v9531 = vpack.c.b16 %v9528, %v9527
        %v9532 = vpack.c.b16 %v9530, %v9529
        %s9535 = scalar_lea.vmem %s285, 208 [#allocation9]
        %9536 = vst [vmem:[%s9535] sm:$0xff] %v9531
        %9537 = vst [vmem:[%s9535 + $0x8] sm:$0xff] %v9532
        %v9538 = vadd.f32 %v9519, %v9521
        %v9539 = vrot.slane %v9538, 4
        %v9540 = vadd.f32 %v9538, %v9539
        %v9541 = vrot.slane %v9540, 2
        %v9542 = vadd.f32 %v9540, %v9541
        %v9543 = vrot.slane %v9542, 1
        %v9544 = vadd.f32 %v9542, %v9543
        %v9545 = vadd.f32 %v9520, %v9522
        %v9546 = vrot.slane %v9545, 4
        %v9547 = vadd.f32 %v9545, %v9546
        %v9548 = vrot.slane %v9547, 2
        %v9549 = vadd.f32 %v9547, %v9548
        %v9550 = vrot.slane %v9549, 1
        %v9551 = vadd.f32 %v9549, %v9550
        %v9552 = vadd.f32 %v9497, %v9544
        %v9553 = vadd.f32 %v9498, %v9551
        %v9554 = vmul.f32 %v9519, %v9519
        %v9555 = vmul.f32 %v9520, %v9520
        %v9556 = vmul.f32 %v9521, %v9521
        %v9557 = vmul.f32 %v9522, %v9522
        %v9558 = vadd.f32 %v9554, %v9556
        %v9559 = vrot.slane %v9558, 4
        %v9560 = vadd.f32 %v9558, %v9559
        %v9561 = vrot.slane %v9560, 2
        %v9562 = vadd.f32 %v9560, %v9561
        %v9563 = vrot.slane %v9562, 1
        %v9564 = vadd.f32 %v9562, %v9563
        %v9565 = vadd.f32 %v9555, %v9557
        %v9566 = vrot.slane %v9565, 4
        %v9567 = vadd.f32 %v9565, %v9566
        %v9568 = vrot.slane %v9567, 2
        %v9569 = vadd.f32 %v9567, %v9568
        %v9570 = vrot.slane %v9569, 1
        %v9571 = vadd.f32 %v9569, %v9570
        %v9572 = vadd.f32 %v9517, %v9564
        %v9573 = vadd.f32 %v9518, %v9571
        %v9574 = vld [vmem:[#allocation3 + $0xc0] sm:$0xff]
        %v9575 = vld [vmem:[#allocation3 + $0xc8] sm:$0xff]
        %v9576 = vld [vmem:[#allocation3 + $0xd0] sm:$0xff]
        %v9577 = vld [vmem:[#allocation3 + $0xd8] sm:$0xff]
        %v9578 = vpack.c.bf16 %v9576, %v9574
        %v9579 = vpack.c.bf16 %v9577, %v9575
        %v9582 = vunpack.c.l.b16 %v9578
        %v9583 = vunpack.c.l.b16 %v9579
        %v9584 = vunpack.c.h.b16 %v9578
        %v9585 = vunpack.c.h.b16 %v9579
        %v9586 = vpack.c.b16 %v9583, %v9582
        %v9587 = vpack.c.b16 %v9585, %v9584
        %s9590 = scalar_lea.vmem %s285, 224 [#allocation9]
        %9591 = vst [vmem:[%s9590] sm:$0xff] %v9586
        %9592 = vst [vmem:[%s9590 + $0x8] sm:$0xff] %v9587
        %v9593 = vadd.f32 %v9574, %v9576
        %v9594 = vrot.slane %v9593, 4
        %v9595 = vadd.f32 %v9593, %v9594
        %v9596 = vrot.slane %v9595, 2
        %v9597 = vadd.f32 %v9595, %v9596
        %v9598 = vrot.slane %v9597, 1
        %v9599 = vadd.f32 %v9597, %v9598
        %v9600 = vadd.f32 %v9575, %v9577
        %v9601 = vrot.slane %v9600, 4
        %v9602 = vadd.f32 %v9600, %v9601
        %v9603 = vrot.slane %v9602, 2
        %v9604 = vadd.f32 %v9602, %v9603
        %v9605 = vrot.slane %v9604, 1
        %v9606 = vadd.f32 %v9604, %v9605
        %v9607 = vadd.f32 %v9552, %v9599
        %v9608 = vadd.f32 %v9553, %v9606
        %v9609 = vmul.f32 %v9574, %v9574
        %v9610 = vmul.f32 %v9575, %v9575
        %v9611 = vmul.f32 %v9576, %v9576
        %v9612 = vmul.f32 %v9577, %v9577
        %v9613 = vadd.f32 %v9609, %v9611
        %v9614 = vrot.slane %v9613, 4
        %v9615 = vadd.f32 %v9613, %v9614
        %v9616 = vrot.slane %v9615, 2
        %v9617 = vadd.f32 %v9615, %v9616
        %v9618 = vrot.slane %v9617, 1
        %v9619 = vadd.f32 %v9617, %v9618
        %v9620 = vadd.f32 %v9610, %v9612
        %v9621 = vrot.slane %v9620, 4
        %v9622 = vadd.f32 %v9620, %v9621
        %v9623 = vrot.slane %v9622, 2
        %v9624 = vadd.f32 %v9622, %v9623
        %v9625 = vrot.slane %v9624, 1
        %v9626 = vadd.f32 %v9624, %v9625
        %v9627 = vadd.f32 %v9572, %v9619
        %v9628 = vadd.f32 %v9573, %v9626
        %v9629 = vld [vmem:[#allocation3 + $0xe0] sm:$0xff]
        %v9630 = vld [vmem:[#allocation3 + $0xe8] sm:$0xff]
        %v9631 = vld [vmem:[#allocation3 + $0xf0] sm:$0xff]
        %v9632 = vld [vmem:[#allocation3 + $0xf8] sm:$0xff]
        %v9633 = vpack.c.bf16 %v9631, %v9629
        %v9634 = vpack.c.bf16 %v9632, %v9630
        %v9637 = vunpack.c.l.b16 %v9633
        %v9638 = vunpack.c.l.b16 %v9634
        %v9639 = vunpack.c.h.b16 %v9633
        %v9640 = vunpack.c.h.b16 %v9634
        %v9641 = vpack.c.b16 %v9638, %v9637
        %v9642 = vpack.c.b16 %v9640, %v9639
        %s9645 = scalar_lea.vmem %s285, 240 [#allocation9]
        %9646 = vst [vmem:[%s9645] sm:$0xff] %v9641
        %9647 = vst [vmem:[%s9645 + $0x8] sm:$0xff] %v9642
        %v9648 = vadd.f32 %v9629, %v9631
        %v9649 = vrot.slane %v9648, 4
        %v9650 = vadd.f32 %v9648, %v9649
        %v9651 = vrot.slane %v9650, 2
        %v9652 = vadd.f32 %v9650, %v9651
        %v9653 = vrot.slane %v9652, 1
        %v9654 = vadd.f32 %v9652, %v9653
        %v9655 = vadd.f32 %v9630, %v9632
        %v9656 = vrot.slane %v9655, 4
        %v9657 = vadd.f32 %v9655, %v9656
        %v9658 = vrot.slane %v9657, 2
        %v9659 = vadd.f32 %v9657, %v9658
        %v9660 = vrot.slane %v9659, 1
        %v9661 = vadd.f32 %v9659, %v9660
        %v9662 = vadd.f32 %v9607, %v9654
        %v9663 = vadd.f32 %v9608, %v9661
        %v9664 = vmul.f32 %v9629, %v9629
        %v9665 = vmul.f32 %v9630, %v9630
        %v9666 = vmul.f32 %v9631, %v9631
        %v9667 = vmul.f32 %v9632, %v9632
        %v9668 = vadd.f32 %v9664, %v9666
        %v9669 = vrot.slane %v9668, 4
        %v9670 = vadd.f32 %v9668, %v9669
        %v9671 = vrot.slane %v9670, 2
        %v9672 = vadd.f32 %v9670, %v9671
        %v9673 = vrot.slane %v9672, 1
        %v9674 = vadd.f32 %v9672, %v9673
        %v9675 = vadd.f32 %v9665, %v9667
        %v9676 = vrot.slane %v9675, 4
        %v9677 = vadd.f32 %v9675, %v9676
        %v9678 = vrot.slane %v9677, 2
        %v9679 = vadd.f32 %v9677, %v9678
        %v9680 = vrot.slane %v9679, 1
        %v9681 = vadd.f32 %v9679, %v9680
        %v9682 = vadd.f32 %v9627, %v9674
        %v9683 = vadd.f32 %v9628, %v9681
        %vm9684 = vcmask 1040384
        %v9685 = vsel %vm9684, %v9662, %v9682
        %v9686 = vsel %vm9684, %v9663, %v9683
        %vm9687 = vcmask 1041408
        %v9688 = vsel %vm9687, %v9685, 0.0
        %v9689 = vsel %vm9687, %v9686, 0.0
        %9690 = vst [vmem:[%s292] sm:$0xff] %v9688
        %9691 = vst [vmem:[%s292 + $0x8] sm:$0xff] %v9689
        %s9692 = sand.u32 %s143, 1
        %s9693 = scalar_lea.sflag [#allocation6], %s9692
        %s9694 = sand.u32 %s143, 1
        %s9695 = smul.addr %s9694, 256
        %s9696 = scalar_lea.vmem [#allocation9], %s9695
        %s9697 = sand.u32 %s171, 1
        %s9698 = scalar_lea.sflag [#allocation11], %s9697
        %s9699 = sand.u32 %s171, 1
        %s9700 = smul.addr %s9699, 16
        %s9701 = scalar_lea.vmem [#allocation10], %s9700
        // Predicated region
        $region45: #{tpu_custom_call.1} parent=35 // pred_check
          %p9702 = pneg %p153
        $region46: #{tpu_custom_call.1} parent=35 // pred_check_branch
          %9704 = sbr.rel (%p9702) target = $region48
        $region47: #{tpu_custom_call.1} parent=35 // pred_region
          %s9705 = smul.u32 2, %s31
          %s9707 = ssub.s32 4096, 4096
          %9708 = vsyncadd %s9693, %s9707
          %s9709 = smul.addr %s32, 64
          %s9710 = sadd.s32 %s9705, %s9709
          %s9711 = smul.addr %s9710, 64
          %s9712 = scalar_lea.hbm %s4, %s9711
          %s9713 = sshll.u32 %s9696, 4
          %s9714 = int_to_ptr.vmem [resolvable:$true] %s9713
          %9719 = dma.vmem_to_hbm [thread:$0]  %s9714, 4096, %s9712, %s9693, 128, 128, 8
        $region48: #{tpu_custom_call.1} parent=35 // pred_fallthru
          _
        // Predicated region
        $region49: #{tpu_custom_call.1} parent=35 // pred_check
          %p9720 = pneg %p181
        $region50: #{tpu_custom_call.1} parent=35 // pred_check_branch
          %9722 = sbr.rel (%p9720) target = $region52
        $region51: #{tpu_custom_call.1} parent=35 // pred_region
          %s9723 = smul.u32 2, %s31
          %s9725 = ssub.s32 256, 256
          %9726 = vsyncadd %s9698, %s9725
          %s9727 = smul.addr %s32, 2
          %s9728 = sadd.s32 %s9723, %s9727
          %s9729 = smul.addr %s9728, 128
          %s9730 = scalar_lea.hbm %s5, %s9729
          %s9732 = sshll.u32 %s9701, 4
          %s9733 = int_to_ptr.vmem [resolvable:$true] %s9732
          %9735 = dma.vmem_to_hbm [thread:$0]  %s9733, 256, %s9730, %s9698
        $region52: #{tpu_custom_call.1} parent=35 // pred_fallthru
          _
      $region36: #{tpu_custom_call.1} parent=5 // pred_fallthru
        _
      %p9736 = scmp.le.s32.totalorder 2, %s22
      // Predicated region
      $region53: #{tpu_custom_call.1} parent=5 // pred_check
        %p9737 = pneg %p9736
      $region54: #{tpu_custom_call.1} parent=5 // pred_check_branch
        %9739 = sbr.rel (%p9737) target = $region56
      $region55: #{tpu_custom_call.1} parent=5 // pred_region
        %s9740 = ssub.s32 %s22, 2
        // Predicated region
        $region57: #{tpu_custom_call.1} parent=55 // pred_check
          %p9741 = pneg %p159
        $region58: #{tpu_custom_call.1} parent=55 // pred_check_branch
          %9743 = sbr.rel (%p9741) target = $region60
        $region59: #{tpu_custom_call.1} parent=55 // pred_region
          %s9744 = sand.u32 %s144, 1
          %s9745 = scalar_lea.sflag [#allocation6], %s9744
          %s9746 = sand.u32 %s144, 1
          %s9747 = smul.addr %s9746, 256
          %s9748 = scalar_lea.vmem [#allocation9], %s9747
          %9749 = dma.done %s9745, 4096
        $region60: #{tpu_custom_call.1} parent=55 // pred_fallthru
          _
        // Predicated region
        $region61: #{tpu_custom_call.1} parent=55 // pred_check
          %p9750 = pneg %p187
        $region62: #{tpu_custom_call.1} parent=55 // pred_check_branch
          %9752 = sbr.rel (%p9750) target = $region64
        $region63: #{tpu_custom_call.1} parent=55 // pred_region
          %s9753 = sand.u32 %s172, 1
          %s9754 = scalar_lea.sflag [#allocation11], %s9753
          %s9755 = sand.u32 %s172, 1
          %s9756 = smul.addr %s9755, 16
          %s9757 = scalar_lea.vmem [#allocation10], %s9756
          %9758 = dma.done %s9754, 256
        $region64: #{tpu_custom_call.1} parent=55 // pred_fallthru
          _
      $region56: #{tpu_custom_call.1} parent=5 // pred_fallthru
        _
    $region6: #{tpu_custom_call.1} parent=1 // loop_footer
      %s26 = sadd.s32 1, %s22
    $region7: #{tpu_custom_call.1} parent=1 // loop_footer_branch
      %21 = sbr.rel target = $region3
    $region8: #{tpu_custom_call.1} parent=1 // loop_exit
      _
    %9759 = vsyncpa [#allocation5], 1
    %s9760 = scalar_lea.sflag [#allocation5], 1
    %9761 = vsyncpa %s9760, 1
    %9762 = vsyncpa [#allocation8], 1
    %9763 = vsyncpa [#allocation6], 1
    %s9764 = scalar_lea.sflag [#allocation6], 1
    %9765 = vsyncpa %s9764, 1
    %9766 = vsyncpa [#allocation11], 1
    %s9767 = scalar_lea.sflag [#allocation11], 1
    %9768 = vsyncpa %s9767, 1

</llo_original>
